<compile_context>
chip_gen: v5e
topology: v5e:2x2
jax: 0.10.0
libtpu: 0.0.40
codegen_flags: <defaults>
</compile_context>

<pallas_src>
import functools

import jax
import jax.numpy as jnp
from jax.experimental import pallas as pl
from jax.experimental.pallas import tpu as pltpu

_VMEM_LIMIT = 64 * 1024 * 1024


# ---------------------------------------------------------------------------
# Row-tiled matmul + bias (hoisted LSTM input projection), bf16 out, f32 acc.
# ---------------------------------------------------------------------------
def _matmul_bias_kernel(x_ref, w_ref, b_ref, o_ref):
    acc = jnp.dot(x_ref[...].astype(w_ref.dtype), w_ref[...],
                  preferred_element_type=jnp.float32) + b_ref[...]
    o_ref[...] = acc.astype(o_ref.dtype)


def matmul_bias(x2d, w, b, *, row_tile=512):
    N, K = x2d.shape
    G = w.shape[1]
    tn = N if N <= row_tile else row_tile
    return pl.pallas_call(
        _matmul_bias_kernel,
        out_shape=jax.ShapeDtypeStruct((N, G), jnp.bfloat16),
        grid=(pl.cdiv(N, tn),),
        in_specs=[pl.BlockSpec((tn, K), lambda i: (i, 0)),
                  pl.BlockSpec((K, G), lambda i: (0, 0)),
                  pl.BlockSpec((1, G), lambda i: (0, 0))],
        out_specs=pl.BlockSpec((tn, G), lambda i: (i, 0)),
        compiler_params=pltpu.CompilerParams(
            dimension_semantics=("parallel",),
            vmem_limit_bytes=_VMEM_LIMIT),
    )(x2d, w, b)


# Two-input variant: gates = x_f @ W_top + x_b @ W_bot + b.
# Lets the biLSTM keep its fwd/bwd halves as separate arrays (no concat ever).
def _matmul_bias2_kernel(xf_ref, xb_ref, wt_ref, wb_ref, b_ref, o_ref):
    acc = jnp.dot(xf_ref[...], wt_ref[...], preferred_element_type=jnp.float32)
    acc = acc + jnp.dot(xb_ref[...], wb_ref[...],
                        preferred_element_type=jnp.float32)
    o_ref[...] = (acc + b_ref[...]).astype(o_ref.dtype)


def matmul_bias2(xf2d, xb2d, wt, wb, b, *, row_tile=512):
    N, K = xf2d.shape
    G = wt.shape[1]
    tn = N if N <= row_tile else row_tile
    return pl.pallas_call(
        _matmul_bias2_kernel,
        out_shape=jax.ShapeDtypeStruct((N, G), jnp.bfloat16),
        grid=(pl.cdiv(N, tn),),
        in_specs=[pl.BlockSpec((tn, K), lambda i: (i, 0)),
                  pl.BlockSpec((tn, K), lambda i: (i, 0)),
                  pl.BlockSpec((K, G), lambda i: (0, 0)),
                  pl.BlockSpec((K, G), lambda i: (0, 0)),
                  pl.BlockSpec((1, G), lambda i: (0, 0))],
        out_specs=pl.BlockSpec((tn, G), lambda i: (i, 0)),
        compiler_params=pltpu.CompilerParams(
            dimension_semantics=("parallel",),
            vmem_limit_bytes=_VMEM_LIMIT),
    )(xf2d, xb2d, wt, wb, b)


# ---------------------------------------------------------------------------
# Fused bidirectional LSTM recurrence, streamed over T-chunks.
#   fwd gate slab : ascending chunks of gin[:, :, :4H]
#   bwd gate slab : descending chunks of gin[:, :, 4H:]
# h/c carries persist across chunks in small VMEM scratch; ctx halves are written
# directly (lane-dense bf16) inside the time loop.
# ---------------------------------------------------------------------------
def _bilstm_chunk_kernel(gin_f_ref, gin_b_ref, mask_f_ref, mask_b_ref,
                         whh_f_ref, whh_b_ref,
                         ctx_f_ref, ctx_b_ref, hlast_ref, clast_ref,
                         hf_scr, cf_scr, hb_scr, cb_scr):
    TC, B, _ = gin_f_ref.shape
    H = whh_f_ref.shape[0]
    i = pl.program_id(0)
    nc = pl.num_programs(0)

    @pl.when(i == 0)
    def _():
        hf_scr[...] = jnp.zeros_like(hf_scr)
        cf_scr[...] = jnp.zeros_like(cf_scr)
        hb_scr[...] = jnp.zeros_like(hb_scr)
        cb_scr[...] = jnp.zeros_like(cb_scr)

    whh_f = whh_f_ref[...]
    whh_b = whh_b_ref[...]

    def cell(gates_in, h, c, whh, pad):
        gates = gates_in.astype(jnp.float32) + jnp.dot(
            h.astype(whh.dtype), whh, preferred_element_type=jnp.float32)
        i_g = jax.nn.sigmoid(gates[:, 0 * H:1 * H])      # PyTorch order i,f,g,o
        f_g = jax.nn.sigmoid(gates[:, 1 * H:2 * H])
        g_g = jnp.tanh(gates[:, 2 * H:3 * H])
        o_g = jax.nn.sigmoid(gates[:, 3 * H:4 * H])
        c_new = f_g * c + i_g * g_g
        h_new = o_g * jnp.tanh(c_new)
        c_out = jnp.where(pad, c, c_new)                 # carry frozen on pads
        h_out = jnp.where(pad, h, h_new)
        y = jnp.where(pad, jnp.zeros_like(h_new), h_new)  # zero output on pads
        return h_out, c_out, y

    def body(tt, carry):
        h_f, c_f, h_b, c_b = carry
        tb = TC - 1 - tt                                 # descending inside bwd chunk
        pad_f = mask_f_ref[tt] != 0                      # [B, 1] bool
        pad_b = mask_b_ref[tb] != 0
        h_f, c_f, y_f = cell(gin_f_ref[tt], h_f, c_f, whh_f, pad_f)
        h_b, c_b, y_b = cell(gin_b_ref[tb], h_b, c_b, whh_b, pad_b)
        ctx_f_ref[tt] = y_f.astype(ctx_f_ref.dtype)      # direct lane-dense stores
        ctx_b_ref[tb] = y_b.astype(ctx_b_ref.dtype)
        return (h_f, c_f, h_b, c_b)

    carry0 = (hf_scr[...], cf_scr[...], hb_scr[...], cb_scr[...])
    unroll = TC if TC <= 8 else 4
    h_f, c_f, h_b, c_b = jax.lax.fori_loop(0, TC, body, carry0, unroll=unroll)

    hf_scr[...] = h_f
    cf_scr[...] = c_f
    hb_scr[...] = h_b
    cb_scr[...] = c_b

    @pl.when(i == nc - 1)                                # both sweeps end here
    def _():
        hlast_ref[:, :H] = h_f
        hlast_ref[:, H:2 * H] = h_b
        clast_ref[:, :H] = c_f
        clast_ref[:, H:2 * H] = c_b


def bilstm_recurrence(gin, mask, whh_f, whh_b, *, chunk):
    Tp, B, G8 = gin.shape
    H = whh_f.shape[0]
    assert G8 == 8 * H
    assert Tp % chunk == 0
    # TODO(synk): support H not a multiple of 32 (4H must be lane-tile aligned).
    assert (4 * H) % 128 == 0, "hidden_size must be a multiple of 32"
    nc = Tp // chunk

    return pl.pallas_call(
        _bilstm_chunk_kernel,
        out_shape=(jax.ShapeDtypeStruct((Tp, B, H), jnp.bfloat16),   # ctx fwd half
                   jax.ShapeDtypeStruct((Tp, B, H), jnp.bfloat16),   # ctx bwd half
                   jax.ShapeDtypeStruct((B, 2 * H), jnp.float32),    # h last
                   jax.ShapeDtypeStruct((B, 2 * H), jnp.float32)),   # c last
        grid=(nc,),
        in_specs=[
            pl.BlockSpec((chunk, B, 4 * H), lambda i: (i, 0, 0)),           # fwd gates
            pl.BlockSpec((chunk, B, 4 * H), lambda i: (nc - 1 - i, 0, 1)),  # bwd gates
            pl.BlockSpec((chunk, B, 1), lambda i: (i, 0, 0)),               # fwd mask
            pl.BlockSpec((chunk, B, 1), lambda i: (nc - 1 - i, 0, 0)),      # bwd mask
            pl.BlockSpec((H, 4 * H), lambda i: (0, 0)),                     # Whh fwd
            pl.BlockSpec((H, 4 * H), lambda i: (0, 0)),                     # Whh bwd
        ],
        out_specs=[
            pl.BlockSpec((chunk, B, H), lambda i: (i, 0, 0)),
            pl.BlockSpec((chunk, B, H), lambda i: (nc - 1 - i, 0, 0)),
            pl.BlockSpec((B, 2 * H), lambda i: (0, 0)),
            pl.BlockSpec((B, 2 * H), lambda i: (0, 0)),
        ],
        scratch_shapes=[pltpu.VMEM((B, H), jnp.float32),
                        pltpu.VMEM((B, H), jnp.float32),
                        pltpu.VMEM((B, H), jnp.float32),
                        pltpu.VMEM((B, H), jnp.float32)],
        compiler_params=pltpu.CompilerParams(
            dimension_semantics=("arbitrary",),          # recurrent / carried scratch
            vmem_limit_bytes=_VMEM_LIMIT),
    )(gin, gin, mask, mask, whh_f, whh_b)


# ---------------------------------------------------------------------------
# MLP head: relu(xf@W1t + xb@W1b + b1) -> logits -> log_softmax with a V-chunked
# two-pass online logsumexp.  Grid = (row blocks "parallel", pass in {0,1}, V chunks).
#   pass 0: stream W2 chunks, accumulate running max / sum-exp (VMEM scratch)
#   pass 1: re-stream W2 chunks, write logits - lse
# Neither W2 nor a [tn, V] logits slab is ever fully VMEM-resident.
# ---------------------------------------------------------------------------
def _head_kernel(xf_ref, xb_ref, w1t_ref, w1b_ref, b1_ref, w2_ref, b2_ref,
                 ctx_ref, logp_ref, h_scr, m_scr, l_scr, *, v_total, v_tile):
    p = pl.program_id(1)
    j = pl.program_id(2)

    @pl.when((p == 0) & (j == 0))
    def _():
        h = jnp.dot(xf_ref[...], w1t_ref[...], preferred_element_type=jnp.float32)
        h = h + jnp.dot(xb_ref[...], w1b_ref[...],
                        preferred_element_type=jnp.float32)
        h = jnp.maximum(h + b1_ref[...], 0.0)
        ctx_ref[...] = h
        h_scr[...] = h.astype(h_scr.dtype)
        m_scr[...] = jnp.full_like(m_scr, -jnp.inf)
        l_scr[...] = jnp.zeros_like(l_scr)

    logits = (jnp.dot(h_scr[...], w2_ref[...], preferred_element_type=jnp.float32)
              + b2_ref[...])

    if v_total % v_tile != 0:                            # mask partial last V chunk
        col = jax.lax.broadcasted_iota(jnp.int32, logits.shape, 1) + j * v_tile
        logits_m = jnp.where(col < v_total, logits, -jnp.inf)
    else:
        logits_m = logits

    @pl.when(p == 0)                                     # online max / sum-exp
    def _():
        m_prev = m_scr[...]
        m_new = jnp.maximum(m_prev, jnp.max(logits_m, axis=-1, keepdims=True))
        l_scr[...] = (l_scr[...] * jnp.exp(m_prev - m_new)
                      + jnp.sum(jnp.exp(logits_m - m_new), axis=-1, keepdims=True))
        m_scr[...] = m_new

    @pl.when(p == 1)                                     # normalized write
    def _():
        lse = m_scr[...] + jnp.log(l_scr[...])
        logp_ref[...] = logits - lse


def head(xf2d, xb2d, w1t, w1b, b1, w2, b2, *, row_tile=256, v_tile=2048):
    N, H = xf2d.shape
    Dm = w1t.shape[1]
    V = w2.shape[1]
    tn = N if N <= row_tile else row_tile
    tv = V if V <= v_tile else v_tile
    jv = pl.cdiv(V, tv)
    kernel = functools.partial(_head_kernel, v_total=V, v_tile=tv)
    return pl.pallas_call(
        kernel,
        out_shape=(jax.ShapeDtypeStruct((N, Dm), jnp.float32),
                   jax.ShapeDtypeStruct((N, V), jnp.float32)),
        grid=(pl.cdiv(N, tn), 2, jv),
        in_specs=[pl.BlockSpec((tn, H), lambda i, p, j: (i, 0)),
                  pl.BlockSpec((tn, H), lambda i, p, j: (i, 0)),
                  pl.BlockSpec((H, Dm), lambda i, p, j: (0, 0)),
                  pl.BlockSpec((H, Dm), lambda i, p, j: (0, 0)),
                  pl.BlockSpec((1, Dm), lambda i, p, j: (0, 0)),
                  pl.BlockSpec((Dm, tv), lambda i, p, j: (0, j)),
                  pl.BlockSpec((1, tv), lambda i, p, j: (0, j))],
        out_specs=[pl.BlockSpec((tn, Dm), lambda i, p, j: (i, 0)),
                   # pass 0 parks on block (i, 0) (never flushed with stale data
                   # before its pass-1 write); pass 1 walks (i, j).
                   pl.BlockSpec((tn, tv), lambda i, p, j: (i, j * p))],
        scratch_shapes=[pltpu.VMEM((tn, Dm), jnp.bfloat16),
                        pltpu.VMEM((tn, 1), jnp.float32),
                        pltpu.VMEM((tn, 1), jnp.float32)],
        compiler_params=pltpu.CompilerParams(
            dimension_semantics=("parallel", "arbitrary", "arbitrary"),
            vmem_limit_bytes=_VMEM_LIMIT),
    )(xf2d, xb2d, w1t, w1b, b1, w2, b2)


# ---------------------------------------------------------------------------
# Encoder forward: glue in plain JAX, hot paths in the kernels above.
# ---------------------------------------------------------------------------
def encoder_forward(x, params):
    B, T, D = x.shape
    row_sum = jnp.sum(x, axis=-1)                          # [B, T]
    x_mask = (row_sum == 0)                                # [B, T] bool
    encoder_output_length = jnp.sum(row_sum != 0, axis=-1).astype(jnp.int32)

    # time chunking for the streamed recurrence; pad T so chunks divide evenly
    chunk = T if T <= 32 else 16
    Tp = ((T + chunk - 1) // chunk) * chunk

    cur0 = jnp.transpose(x, (1, 0, 2)).astype(jnp.bfloat16)            # [T, B, D]
    mask_tb = jnp.transpose(x_mask, (1, 0)).astype(jnp.int32)[:, :, None]
    if Tp != T:
        cur0 = jnp.pad(cur0, ((0, Tp - T), (0, 0), (0, 0)))
        mask_tb = jnp.pad(mask_tb, ((0, Tp - T), (0, 0), (0, 0)),
                          constant_values=1)               # padded steps = pads

    final_hiddens, final_cells = [], []
    xf = xb = None
    h_prev = None
    for li, layer in enumerate(params["layers"]):
        H = layer["whh_f"].shape[0]
        if li == 0:
            gin2d = matmul_bias(cur0.reshape(Tp * B, D),
                                layer["wih_cat"], layer["b_cat"])
        else:
            gin2d = matmul_bias2(xf.reshape(Tp * B, h_prev),
                                 xb.reshape(Tp * B, h_prev),
                                 layer["wih_top"], layer["wih_bot"],
                                 layer["b_cat"])
        gin = gin2d.reshape(Tp, B, 8 * H)                  # row-major: free
        xf, xb, hlast, clast = bilstm_recurrence(gin, mask_tb, layer["whh_f"],
                                                 layer["whh_b"], chunk=chunk)
        h_prev = H
        final_hiddens.append(hlast)
        final_cells.append(clast)
    final_hiddens = jnp.concatenate(final_hiddens, axis=1)  # [B, 2H*L]
    final_cells = jnp.concatenate(final_cells, axis=1)

    H = h_prev
    xf_t = xf[:T].reshape(T * B, H)
    xb_t = xb[:T].reshape(T * B, H)
    ctx2d, logp2d = head(xf_t, xb_t, params["w1_top"], params["w1_bot"],
                         params["b1"], params["w2"], params["b2"])
    ctx_h = jnp.transpose(ctx2d.reshape(T, B, -1), (1, 0, 2))   # [B, T, 1024]
    logp = jnp.transpose(logp2d.reshape(T, B, -1), (1, 0, 2))   # [B, T, V]
    return (ctx_h, x_mask, final_hiddens, final_cells, logp,
            encoder_output_length)


# ---------------------------------------------------------------------------
# Deterministic parameter construction (shapes per the module __init__).
# MXU operands (Wih, Whh, W1, W2) stored bf16; biases / carries / softmax f32.
# ---------------------------------------------------------------------------
def init_params(key, input_size, hidden_size, n_layers, max_n_words):
    keys = iter(jax.random.split(key, n_layers * 6 + 4))
    H = hidden_size
    layers = []
    in_size = input_size
    for li in range(n_layers):
        def draw(shape, scale=0.1):
            return jax.random.normal(next(keys), shape, jnp.float32) * scale
        wih_f = draw((in_size, 4 * H)); whh_f = draw((H, 4 * H)); b_f = draw((1, 4 * H))
        wih_b = draw((in_size, 4 * H)); whh_b = draw((H, 4 * H)); b_b = draw((1, 4 * H))
        wih_cat = jnp.concatenate([wih_f, wih_b], axis=1).astype(jnp.bfloat16)
        layer = {
            "b_cat": jnp.concatenate([b_f, b_b], axis=1),          # f32
            "whh_f": whh_f.astype(jnp.bfloat16),
            "whh_b": whh_b.astype(jnp.bfloat16),
        }
        if li == 0:
            layer["wih_cat"] = wih_cat                             # [D, 8H]
        else:                                                      # split rows for
            layer["wih_top"] = wih_cat[:H]                         # fwd-half input
            layer["wih_bot"] = wih_cat[H:]                         # bwd-half input
        layers.append(layer)
        in_size = 2 * H
    w1 = jax.random.normal(next(keys), (2 * H, 1024), jnp.float32) * 0.05
    b1 = jax.random.normal(next(keys), (1, 1024), jnp.float32) * 0.05
    w2 = jax.random.normal(next(keys), (1024, max_n_words), jnp.float32) * 0.05
    b2 = jax.random.normal(next(keys), (1, max_n_words), jnp.float32) * 0.05
    return {"layers": layers,
            "w1_top": w1[:H].astype(jnp.bfloat16),
            "w1_bot": w1[H:].astype(jnp.bfloat16),
            "b1": b1,
            "w2": w2.astype(jnp.bfloat16), "b2": b2}


if __name__ == "__main__":
    B, T, D = 2, 8, 16          # batch, seq_len, input_size
    H, L, V = 32, 2, 256        # hidden_size, n_layers, max_n_words

    key = jax.random.PRNGKey(0)
    k_x, k_p = jax.random.split(key)
    x = jax.random.normal(k_x, (B, T, D), jnp.float32)
    # make the tail of batch 1 padding (rows of zeros) to exercise the mask
    x = x.at[1, 6:, :].set(0.0)

    params = init_params(k_p, D, H, L, V)

    fwd = jax.jit(encoder_forward)
    outs = jax.block_until_ready(fwd(x, params))

    ctx, x_mask, final_hiddens, final_cells, logp, out_len = outs
    assert ctx.shape == (B, T, 1024)
    assert x_mask.shape == (B, T)
    assert final_hiddens.shape == (B, 2 * H * L)
    assert final_cells.shape == (B, 2 * H * L)
    assert logp.shape == (B, T, V)
    assert out_len.shape == (B,)
    assert bool(jnp.all(jnp.isfinite(ctx)))
    assert bool(jnp.all(jnp.isfinite(logp)))
    # log_softmax rows sum to 1 in prob space
    assert jnp.allclose(jnp.sum(jnp.exp(logp), axis=-1), 1.0, atol=1e-4)
    print("KERNEL_OK")
</pallas_src>

<mosaic_0001>
module attributes {stable_mosaic.version = 11 : i64} {
  func.func @_matmul_bias_kernel(%arg0: i32, %arg1: memref<16x16xbf16, #tpu.memory_space<vmem>>, %arg2: memref<16x256xbf16, #tpu.memory_space<vmem>>, %arg3: memref<1x256xf32, #tpu.memory_space<vmem>>, %arg4: memref<16x256xbf16, #tpu.memory_space<vmem>>) attributes {dimension_semantics = [#tpu.dimension_semantics<parallel>], iteration_bounds = array<i64: 1>, scalar_prefetch = 0 : i64, scratch_operands = 0 : i64, tpu.core_type = #tpu.core_type<tc>, window_params = [{transform_indices = @transform_0, window_bounds = array<i64: 16, 16>}, {pipeline_mode = #tpu.pipeline_mode<synchronous>, transform_indices = @transform_1, window_bounds = array<i64: 16, 256>}, {pipeline_mode = #tpu.pipeline_mode<synchronous>, transform_indices = @transform_2, window_bounds = array<i64: 1, 256>}, {transform_indices = @transform_3, window_bounds = array<i64: 16, 256>}]} {
    %c0 = arith.constant 0 : index
    %c0_0 = arith.constant 0 : index
    %0 = vector.load %arg1[%c0, %c0_0] : memref<16x16xbf16, #tpu.memory_space<vmem>>, vector<16x16xbf16>
    %c0_1 = arith.constant 0 : index
    %c0_2 = arith.constant 0 : index
    %1 = vector.load %arg2[%c0_1, %c0_2] : memref<16x256xbf16, #tpu.memory_space<vmem>>, vector<16x256xbf16>
    %cst = arith.constant dense<0.000000e+00> : vector<16x256xf32>
    %2 = tpu.matmul %0, %1, %cst {dimension_numbers = #tpu.dot_dimension_numbers<[1], [0], [0], [1], [0, 0, 1, 1], [], []>} : vector<16x16xbf16>, vector<16x256xbf16>, vector<16x256xf32> -> vector<16x256xf32>
    %c0_3 = arith.constant 0 : index
    %c0_4 = arith.constant 0 : index
    %3 = vector.load %arg3[%c0_3, %c0_4] : memref<1x256xf32, #tpu.memory_space<vmem>>, vector<1x256xf32>
    %4 = vector.broadcast %3 : vector<1x256xf32> to vector<16x256xf32>
    %5 = arith.addf %2, %4 : vector<16x256xf32>
    %6 = arith.truncf %5 : vector<16x256xf32> to vector<16x256xbf16>
    %c0_5 = arith.constant 0 : index
    %c0_6 = arith.constant 0 : index
    %7 = vector.load %arg4[%c0_5, %c0_6] : memref<16x256xbf16, #tpu.memory_space<vmem>>, vector<16x256xbf16>
    tpu.vector_store %arg4[%c0_5, %c0_6], %6 {strides = array<i32>} : memref<16x256xbf16, #tpu.memory_space<vmem>>, vector<16x256xbf16>,
    return
  }
  func.func @transform_0(%arg0: i32) -> (i32, i32) {
    %c0_i32 = arith.constant 0 : i32
    %c0_i32_0 = arith.constant 0 : i32
    return %arg0, %c0_i32 : i32, i32
  }
  func.func @transform_1(%arg0: i32) -> (i32, i32) {
    %c0_i32 = arith.constant 0 : i32
    %c0_i32_0 = arith.constant 0 : i32
    %c0_i32_1 = arith.constant 0 : i32
    return %c0_i32, %c0_i32_0 : i32, i32
  }
  func.func @transform_2(%arg0: i32) -> (i32, i32) {
    %c0_i32 = arith.constant 0 : i32
    %c0_i32_0 = arith.constant 0 : i32
    %c0_i32_1 = arith.constant 0 : i32
    return %c0_i32, %c0_i32_0 : i32, i32
  }
  func.func @transform_3(%arg0: i32) -> (i32, i32) {
    %c0_i32 = arith.constant 0 : i32
    %c0_i32_0 = arith.constant 0 : i32
    return %arg0, %c0_i32 : i32, i32
  }
}

module attributes {stable_mosaic.version = 11 : i64} {
  func.func @_matmul_bias2_kernel(%arg0: i32, %arg1: memref<16x32xbf16, #tpu.memory_space<vmem>>, %arg2: memref<16x32xbf16, #tpu.memory_space<vmem>>, %arg3: memref<32x256xbf16, #tpu.memory_space<vmem>>, %arg4: memref<32x256xbf16, #tpu.memory_space<vmem>>, %arg5: memref<1x256xf32, #tpu.memory_space<vmem>>, %arg6: memref<16x256xbf16, #tpu.memory_space<vmem>>) attributes {dimension_semantics = [#tpu.dimension_semantics<parallel>], iteration_bounds = array<i64: 1>, scalar_prefetch = 0 : i64, scratch_operands = 0 : i64, tpu.core_type = #tpu.core_type<tc>, window_params = [{transform_indices = @transform_0, window_bounds = array<i64: 16, 32>}, {transform_indices = @transform_1, window_bounds = array<i64: 16, 32>}, {pipeline_mode = #tpu.pipeline_mode<synchronous>, transform_indices = @transform_2, window_bounds = array<i64: 32, 256>}, {pipeline_mode = #tpu.pipeline_mode<synchronous>, transform_indices = @transform_3, window_bounds = array<i64: 32, 256>}, {pipeline_mode = #tpu.pipeline_mode<synchronous>, transform_indices = @transform_4, window_bounds = array<i64: 1, 256>}, {transform_indices = @transform_5, window_bounds = array<i64: 16, 256>}]} {
    %c0 = arith.constant 0 : index
    %c0_0 = arith.constant 0 : index
    %0 = vector.load %arg1[%c0, %c0_0] : memref<16x32xbf16, #tpu.memory_space<vmem>>, vector<16x32xbf16>
    %c0_1 = arith.constant 0 : index
    %c0_2 = arith.constant 0 : index
    %1 = vector.load %arg3[%c0_1, %c0_2] : memref<32x256xbf16, #tpu.memory_space<vmem>>, vector<32x256xbf16>
    %cst = arith.constant dense<0.000000e+00> : vector<16x256xf32>
    %2 = tpu.matmul %0, %1, %cst {dimension_numbers = #tpu.dot_dimension_numbers<[1], [0], [0], [1], [0, 0, 1, 1], [], []>} : vector<16x32xbf16>, vector<32x256xbf16>, vector<16x256xf32> -> vector<16x256xf32>
    %c0_3 = arith.constant 0 : index
    %c0_4 = arith.constant 0 : index
    %3 = vector.load %arg2[%c0_3, %c0_4] : memref<16x32xbf16, #tpu.memory_space<vmem>>, vector<16x32xbf16>
    %c0_5 = arith.constant 0 : index
    %c0_6 = arith.constant 0 : index
    %4 = vector.load %arg4[%c0_5, %c0_6] : memref<32x256xbf16, #tpu.memory_space<vmem>>, vector<32x256xbf16>
    %cst_7 = arith.constant dense<0.000000e+00> : vector<16x256xf32>
    %5 = tpu.matmul %3, %4, %cst_7 {dimension_numbers = #tpu.dot_dimension_numbers<[1], [0], [0], [1], [0, 0, 1, 1], [], []>} : vector<16x32xbf16>, vector<32x256xbf16>, vector<16x256xf32> -> vector<16x256xf32>
    %6 = arith.addf %2, %5 : vector<16x256xf32>
    %c0_8 = arith.constant 0 : index
    %c0_9 = arith.constant 0 : index
    %7 = vector.load %arg5[%c0_8, %c0_9] : memref<1x256xf32, #tpu.memory_space<vmem>>, vector<1x256xf32>
    %8 = vector.broadcast %7 : vector<1x256xf32> to vector<16x256xf32>
    %9 = arith.addf %6, %8 : vector<16x256xf32>
    %10 = arith.truncf %9 : vector<16x256xf32> to vector<16x256xbf16>
    %c0_10 = arith.constant 0 : index
    %c0_11 = arith.constant 0 : index
    %11 = vector.load %arg6[%c0_10, %c0_11] : memref<16x256xbf16, #tpu.memory_space<vmem>>, vector<16x256xbf16>
    tpu.vector_store %arg6[%c0_10, %c0_11], %10 {strides = array<i32>} : memref<16x256xbf16, #tpu.memory_space<vmem>>, vector<16x256xbf16>,
    return
  }
  func.func @transform_0(%arg0: i32) -> (i32, i32) {
    %c0_i32 = arith.constant 0 : i32
    %c0_i32_0 = arith.constant 0 : i32
    return %arg0, %c0_i32 : i32, i32
  }
  func.func @transform_1(%arg0: i32) -> (i32, i32) {
    %c0_i32 = arith.constant 0 : i32
    %c0_i32_0 = arith.constant 0 : i32
    return %arg0, %c0_i32 : i32, i32
  }
  func.func @transform_2(%arg0: i32) -> (i32, i32) {
    %c0_i32 = arith.constant 0 : i32
    %c0_i32_0 = arith.constant 0 : i32
    %c0_i32_1 = arith.constant 0 : i32
    return %c0_i32, %c0_i32_0 : i32, i32
  }
  func.func @transform_3(%arg0: i32) -> (i32, i32) {
    %c0_i32 = arith.constant 0 : i32
    %c0_i32_0 = arith.constant 0 : i32
    %c0_i32_1 = arith.constant 0 : i32
    return %c0_i32, %c0_i32_0 : i32, i32
  }
  func.func @transform_4(%arg0: i32) -> (i32, i32) {
    %c0_i32 = arith.constant 0 : i32
    %c0_i32_0 = arith.constant 0 : i32
    %c0_i32_1 = arith.constant 0 : i32
    return %c0_i32, %c0_i32_0 : i32, i32
  }
  func.func @transform_5(%arg0: i32) -> (i32, i32) {
    %c0_i32 = arith.constant 0 : i32
    %c0_i32_0 = arith.constant 0 : i32
    return %arg0, %c0_i32 : i32, i32
  }
}

module attributes {stable_mosaic.version = 11 : i64} {
  func.func @_bilstm_chunk_kernel(%arg0: i32, %arg1: memref<8x2x128xbf16, #tpu.memory_space<vmem>>, %arg2: memref<8x2x128xbf16, #tpu.memory_space<vmem>>, %arg3: memref<8x2x1xi32, #tpu.memory_space<vmem>>, %arg4: memref<8x2x1xi32, #tpu.memory_space<vmem>>, %arg5: memref<32x128xbf16, #tpu.memory_space<vmem>>, %arg6: memref<32x128xbf16, #tpu.memory_space<vmem>>, %arg7: memref<8x2x32xbf16, #tpu.memory_space<vmem>>, %arg8: memref<8x2x32xbf16, #tpu.memory_space<vmem>>, %arg9: memref<2x64xf32, #tpu.memory_space<vmem>>, %arg10: memref<2x64xf32, #tpu.memory_space<vmem>>, %arg11: memref<2x32xf32, #tpu.memory_space<vmem>>, %arg12: memref<2x32xf32, #tpu.memory_space<vmem>>, %arg13: memref<2x32xf32, #tpu.memory_space<vmem>>, %arg14: memref<2x32xf32, #tpu.memory_space<vmem>>) attributes {dimension_semantics = [#tpu.dimension_semantics<arbitrary>], iteration_bounds = array<i64: 1>, scalar_prefetch = 0 : i64, scratch_operands = 4 : i64, tpu.core_type = #tpu.core_type<tc>, window_params = [{transform_indices = @transform_0, window_bounds = array<i64: 8, 2, 128>}, {transform_indices = @transform_1, window_bounds = array<i64: 8, 2, 128>}, {transform_indices = @transform_2, window_bounds = array<i64: 8, 2, 1>}, {transform_indices = @transform_3, window_bounds = array<i64: 8, 2, 1>}, {pipeline_mode = #tpu.pipeline_mode<synchronous>, transform_indices = @transform_4, window_bounds = array<i64: 32, 128>}, {pipeline_mode = #tpu.pipeline_mode<synchronous>, transform_indices = @transform_5, window_bounds = array<i64: 32, 128>}, {transform_indices = @transform_6, window_bounds = array<i64: 8, 2, 32>}, {transform_indices = @transform_7, window_bounds = array<i64: 8, 2, 32>}, {pipeline_mode = #tpu.pipeline_mode<synchronous>, transform_indices = @transform_8, window_bounds = array<i64: 2, 64>}, {pipeline_mode = #tpu.pipeline_mode<synchronous>, transform_indices = @transform_9, window_bounds = array<i64: 2, 64>}]} {
    %c0_i32 = arith.constant 0 : i32
    %0 = arith.cmpi eq, %arg0, %c0_i32 : i32
    %1 = arith.extui %0 : i1 to i32
    %c0_i32_0 = arith.constant 0 : i32
    %2 = arith.cmpi ne, %1, %c0_i32_0 : i32
    scf.if %2 {
      %cst_222 = arith.constant 0.000000e+00 : f32
      %856 = vector.broadcast %cst_222 : f32 to vector<2x32xf32>
      %c0_223 = arith.constant 0 : index
      %c0_224 = arith.constant 0 : index
      %857 = vector.load %arg11[%c0_223, %c0_224] : memref<2x32xf32, #tpu.memory_space<vmem>>, vector<2x32xf32>
      tpu.vector_store %arg11[%c0_223, %c0_224], %856 {strides = array<i32>} : memref<2x32xf32, #tpu.memory_space<vmem>>, vector<2x32xf32>,
      %cst_225 = arith.constant 0.000000e+00 : f32
      %858 = vector.broadcast %cst_225 : f32 to vector<2x32xf32>
      %c0_226 = arith.constant 0 : index
      %c0_227 = arith.constant 0 : index
      %859 = vector.load %arg12[%c0_226, %c0_227] : memref<2x32xf32, #tpu.memory_space<vmem>>, vector<2x32xf32>
      tpu.vector_store %arg12[%c0_226, %c0_227], %858 {strides = array<i32>} : memref<2x32xf32, #tpu.memory_space<vmem>>, vector<2x32xf32>,
      %cst_228 = arith.constant 0.000000e+00 : f32
      %860 = vector.broadcast %cst_228 : f32 to vector<2x32xf32>
      %c0_229 = arith.constant 0 : index
      %c0_230 = arith.constant 0 : index
      %861 = vector.load %arg13[%c0_229, %c0_230] : memref<2x32xf32, #tpu.memory_space<vmem>>, vector<2x32xf32>
      tpu.vector_store %arg13[%c0_229, %c0_230], %860 {strides = array<i32>} : memref<2x32xf32, #tpu.memory_space<vmem>>, vector<2x32xf32>,
      %cst_231 = arith.constant 0.000000e+00 : f32
      %862 = vector.broadcast %cst_231 : f32 to vector<2x32xf32>
      %c0_232 = arith.constant 0 : index
      %c0_233 = arith.constant 0 : index
      %863 = vector.load %arg14[%c0_232, %c0_233] : memref<2x32xf32, #tpu.memory_space<vmem>>, vector<2x32xf32>
      tpu.vector_store %arg14[%c0_232, %c0_233], %862 {strides = array<i32>} : memref<2x32xf32, #tpu.memory_space<vmem>>, vector<2x32xf32>,
    } else {
    }
    %c0 = arith.constant 0 : index
    %c0_1 = arith.constant 0 : index
    %3 = vector.load %arg5[%c0, %c0_1] : memref<32x128xbf16, #tpu.memory_space<vmem>>, vector<32x128xbf16>
    %c0_2 = arith.constant 0 : index
    %c0_3 = arith.constant 0 : index
    %4 = vector.load %arg6[%c0_2, %c0_3] : memref<32x128xbf16, #tpu.memory_space<vmem>>, vector<32x128xbf16>
    %c0_4 = arith.constant 0 : index
    %c0_5 = arith.constant 0 : index
    %5 = vector.load %arg11[%c0_4, %c0_5] : memref<2x32xf32, #tpu.memory_space<vmem>>, vector<2x32xf32>
    %c0_6 = arith.constant 0 : index
    %c0_7 = arith.constant 0 : index
    %6 = vector.load %arg12[%c0_6, %c0_7] : memref<2x32xf32, #tpu.memory_space<vmem>>, vector<2x32xf32>
    %c0_8 = arith.constant 0 : index
    %c0_9 = arith.constant 0 : index
    %7 = vector.load %arg13[%c0_8, %c0_9] : memref<2x32xf32, #tpu.memory_space<vmem>>, vector<2x32xf32>
    %c0_10 = arith.constant 0 : index
    %c0_11 = arith.constant 0 : index
    %8 = vector.load %arg14[%c0_10, %c0_11] : memref<2x32xf32, #tpu.memory_space<vmem>>, vector<2x32xf32>
    %c0_i32_12 = arith.constant 0 : i32
    %c7_i32 = arith.constant 7 : i32
    %9 = arith.subi %c7_i32, %c0_i32_12 : i32
    %10 = arith.index_cast %c0_i32_12 : i32 to index
    %c0_13 = arith.constant 0 : index
    %c0_14 = arith.constant 0 : index
    %11 = vector.load %arg3[%10, %c0_13, %c0_14] : memref<8x2x1xi32, #tpu.memory_space<vmem>>, vector<1x2x1xi32>
    %12 = vector.shape_cast %11 : vector<1x2x1xi32> to vector<2x1xi32>
    %c0_i32_15 = arith.constant 0 : i32
    %13 = vector.broadcast %c0_i32_15 : i32 to vector<2x1xi32>
    %14 = arith.cmpi ne, %12, %13 : vector<2x1xi32>
    %15 = arith.index_cast %9 : i32 to index
    %c0_16 = arith.constant 0 : index
    %c0_17 = arith.constant 0 : index
    %16 = vector.load %arg4[%15, %c0_16, %c0_17] : memref<8x2x1xi32, #tpu.memory_space<vmem>>, vector<1x2x1xi32>
    %17 = vector.shape_cast %16 : vector<1x2x1xi32> to vector<2x1xi32>
    %c0_i32_18 = arith.constant 0 : i32
    %18 = vector.broadcast %c0_i32_18 : i32 to vector<2x1xi32>
    %19 = arith.cmpi ne, %17, %18 : vector<2x1xi32>
    %20 = arith.index_cast %c0_i32_12 : i32 to index
    %c0_19 = arith.constant 0 : index
    %c0_20 = arith.constant 0 : index
    %21 = vector.load %arg1[%20, %c0_19, %c0_20] : memref<8x2x128xbf16, #tpu.memory_space<vmem>>, vector<1x2x128xbf16>
    %22 = vector.shape_cast %21 : vector<1x2x128xbf16> to vector<2x128xbf16>
    %23 = arith.extf %22 : vector<2x128xbf16> to vector<2x128xf32>
    %24 = arith.truncf %5 : vector<2x32xf32> to vector<2x32xbf16>
    %cst = arith.constant dense<0.000000e+00> : vector<2x128xf32>
    %25 = tpu.matmul %24, %3, %cst {dimension_numbers = #tpu.dot_dimension_numbers<[1], [0], [0], [1], [0, 0, 1, 1], [], []>} : vector<2x32xbf16>, vector<32x128xbf16>, vector<2x128xf32> -> vector<2x128xf32>
    %26 = arith.addf %23, %25 : vector<2x128xf32>
    %27 = vector.extract_strided_slice %26 {offsets = [0, 0], sizes = [2, 32], strides = [1, 1]} : vector<2x128xf32> to vector<2x32xf32>
    %28 = arith.negf %27 : vector<2x32xf32>
    %29 = math.exp %28 : vector<2x32xf32>
    %cst_21 = arith.constant 1.000000e+00 : f32
    %30 = vector.broadcast %cst_21 : f32 to vector<2x32xf32>
    %31 = arith.addf %30, %29 : vector<2x32xf32>
    %32 = arith.divf %30, %31 : vector<2x32xf32>
    %33 = vector.extract_strided_slice %26 {offsets = [0, 32], sizes = [2, 32], strides = [1, 1]} : vector<2x128xf32> to vector<2x32xf32>
    %34 = arith.negf %33 : vector<2x32xf32>
    %35 = math.exp %34 : vector<2x32xf32>
    %cst_22 = arith.constant 1.000000e+00 : f32
    %36 = vector.broadcast %cst_22 : f32 to vector<2x32xf32>
    %37 = arith.addf %36, %35 : vector<2x32xf32>
    %38 = arith.divf %36, %37 : vector<2x32xf32>
    %39 = vector.extract_strided_slice %26 {offsets = [0, 64], sizes = [2, 32], strides = [1, 1]} : vector<2x128xf32> to vector<2x32xf32>
    %40 = math.tanh %39 : vector<2x32xf32>
    %41 = vector.extract_strided_slice %26 {offsets = [0, 96], sizes = [2, 32], strides = [1, 1]} : vector<2x128xf32> to vector<2x32xf32>
    %42 = arith.negf %41 : vector<2x32xf32>
    %43 = math.exp %42 : vector<2x32xf32>
    %cst_23 = arith.constant 1.000000e+00 : f32
    %44 = vector.broadcast %cst_23 : f32 to vector<2x32xf32>
    %45 = arith.addf %44, %43 : vector<2x32xf32>
    %46 = arith.divf %44, %45 : vector<2x32xf32>
    %47 = arith.mulf %38, %6 : vector<2x32xf32>
    %48 = arith.mulf %32, %40 : vector<2x32xf32>
    %49 = arith.addf %47, %48 : vector<2x32xf32>
    %50 = math.tanh %49 : vector<2x32xf32>
    %51 = arith.mulf %46, %50 : vector<2x32xf32>
    %52 = vector.shape_cast %14 : vector<2x1xi1> to vector<2x1xi1>
    %53 = vector.broadcast %52 : vector<2x1xi1> to vector<2x32xi1>
    %54 = arith.select %53, %6, %49 : vector<2x32xi1>, vector<2x32xf32>
    %55 = vector.shape_cast %14 : vector<2x1xi1> to vector<2x1xi1>
    %56 = vector.broadcast %55 : vector<2x1xi1> to vector<2x32xi1>
    %57 = arith.select %56, %5, %51 : vector<2x32xi1>, vector<2x32xf32>
    %cst_24 = arith.constant 0.000000e+00 : f32
    %58 = vector.broadcast %cst_24 : f32 to vector<2x32xf32>
    %59 = vector.shape_cast %14 : vector<2x1xi1> to vector<2x1xi1>
    %60 = vector.broadcast %59 : vector<2x1xi1> to vector<2x32xi1>
    %61 = arith.select %60, %58, %51 : vector<2x32xi1>, vector<2x32xf32>
    %62 = arith.index_cast %9 : i32 to index
    %c0_25 = arith.constant 0 : index
    %c0_26 = arith.constant 0 : index
    %63 = vector.load %arg2[%62, %c0_25, %c0_26] : memref<8x2x128xbf16, #tpu.memory_space<vmem>>, vector<1x2x128xbf16>
    %64 = vector.shape_cast %63 : vector<1x2x128xbf16> to vector<2x128xbf16>
    %65 = arith.extf %64 : vector<2x128xbf16> to vector<2x128xf32>
    %66 = arith.truncf %7 : vector<2x32xf32> to vector<2x32xbf16>
    %cst_27 = arith.constant dense<0.000000e+00> : vector<2x128xf32>
    %67 = tpu.matmul %66, %4, %cst_27 {dimension_numbers = #tpu.dot_dimension_numbers<[1], [0], [0], [1], [0, 0, 1, 1], [], []>} : vector<2x32xbf16>, vector<32x128xbf16>, vector<2x128xf32> -> vector<2x128xf32>
    %68 = arith.addf %65, %67 : vector<2x128xf32>
    %69 = vector.extract_strided_slice %68 {offsets = [0, 0], sizes = [2, 32], strides = [1, 1]} : vector<2x128xf32> to vector<2x32xf32>
    %70 = arith.negf %69 : vector<2x32xf32>
    %71 = math.exp %70 : vector<2x32xf32>
    %cst_28 = arith.constant 1.000000e+00 : f32
    %72 = vector.broadcast %cst_28 : f32 to vector<2x32xf32>
    %73 = arith.addf %72, %71 : vector<2x32xf32>
    %74 = arith.divf %72, %73 : vector<2x32xf32>
    %75 = vector.extract_strided_slice %68 {offsets = [0, 32], sizes = [2, 32], strides = [1, 1]} : vector<2x128xf32> to vector<2x32xf32>
    %76 = arith.negf %75 : vector<2x32xf32>
    %77 = math.exp %76 : vector<2x32xf32>
    %cst_29 = arith.constant 1.000000e+00 : f32
    %78 = vector.broadcast %cst_29 : f32 to vector<2x32xf32>
    %79 = arith.addf %78, %77 : vector<2x32xf32>
    %80 = arith.divf %78, %79 : vector<2x32xf32>
    %81 = vector.extract_strided_slice %68 {offsets = [0, 64], sizes = [2, 32], strides = [1, 1]} : vector<2x128xf32> to vector<2x32xf32>
    %82 = math.tanh %81 : vector<2x32xf32>
    %83 = vector.extract_strided_slice %68 {offsets = [0, 96], sizes = [2, 32], strides = [1, 1]} : vector<2x128xf32> to vector<2x32xf32>
    %84 = arith.negf %83 : vector<2x32xf32>
    %85 = math.exp %84 : vector<2x32xf32>
    %cst_30 = arith.constant 1.000000e+00 : f32
    %86 = vector.broadcast %cst_30 : f32 to vector<2x32xf32>
    %87 = arith.addf %86, %85 : vector<2x32xf32>
    %88 = arith.divf %86, %87 : vector<2x32xf32>
    %89 = arith.mulf %80, %8 : vector<2x32xf32>
    %90 = arith.mulf %74, %82 : vector<2x32xf32>
    %91 = arith.addf %89, %90 : vector<2x32xf32>
    %92 = math.tanh %91 : vector<2x32xf32>
    %93 = arith.mulf %88, %92 : vector<2x32xf32>
    %94 = vector.shape_cast %19 : vector<2x1xi1> to vector<2x1xi1>
    %95 = vector.broadcast %94 : vector<2x1xi1> to vector<2x32xi1>
    %96 = arith.select %95, %8, %91 : vector<2x32xi1>, vector<2x32xf32>
    %97 = vector.shape_cast %19 : vector<2x1xi1> to vector<2x1xi1>
    %98 = vector.broadcast %97 : vector<2x1xi1> to vector<2x32xi1>
    %99 = arith.select %98, %7, %93 : vector<2x32xi1>, vector<2x32xf32>
    %cst_31 = arith.constant 0.000000e+00 : f32
    %100 = vector.broadcast %cst_31 : f32 to vector<2x32xf32>
    %101 = vector.shape_cast %19 : vector<2x1xi1> to vector<2x1xi1>
    %102 = vector.broadcast %101 : vector<2x1xi1> to vector<2x32xi1>
    %103 = arith.select %102, %100, %93 : vector<2x32xi1>, vector<2x32xf32>
    %104 = arith.truncf %61 : vector<2x32xf32> to vector<2x32xbf16>
    %105 = arith.index_cast %c0_i32_12 : i32 to index
    %c0_32 = arith.constant 0 : index
    %c0_33 = arith.constant 0 : index
    %106 = vector.load %arg7[%105, %c0_32, %c0_33] : memref<8x2x32xbf16, #tpu.memory_space<vmem>>, vector<1x2x32xbf16>
    %107 = vector.shape_cast %106 : vector<1x2x32xbf16> to vector<2x32xbf16>
    %108 = vector.shape_cast %104 : vector<2x32xbf16> to vector<1x2x32xbf16>
    tpu.vector_store %arg7[%105, %c0_32, %c0_33], %108 {strides = array<i32>} : memref<8x2x32xbf16, #tpu.memory_space<vmem>>, vector<1x2x32xbf16>,
    %109 = arith.truncf %103 : vector<2x32xf32> to vector<2x32xbf16>
    %110 = arith.index_cast %9 : i32 to index
    %c0_34 = arith.constant 0 : index
    %c0_35 = arith.constant 0 : index
    %111 = vector.load %arg8[%110, %c0_34, %c0_35] : memref<8x2x32xbf16, #tpu.memory_space<vmem>>, vector<1x2x32xbf16>
    %112 = vector.shape_cast %111 : vector<1x2x32xbf16> to vector<2x32xbf16>
    %113 = vector.shape_cast %109 : vector<2x32xbf16> to vector<1x2x32xbf16>
    tpu.vector_store %arg8[%110, %c0_34, %c0_35], %113 {strides = array<i32>} : memref<8x2x32xbf16, #tpu.memory_space<vmem>>, vector<1x2x32xbf16>,
    %c1_i32 = arith.constant 1 : i32
    %c7_i32_36 = arith.constant 7 : i32
    %114 = arith.subi %c7_i32_36, %c1_i32 : i32
    %115 = arith.index_cast %c1_i32 : i32 to index
    %c0_37 = arith.constant 0 : index
    %c0_38 = arith.constant 0 : index
    %116 = vector.load %arg3[%115, %c0_37, %c0_38] : memref<8x2x1xi32, #tpu.memory_space<vmem>>, vector<1x2x1xi32>
    %117 = vector.shape_cast %116 : vector<1x2x1xi32> to vector<2x1xi32>
    %c0_i32_39 = arith.constant 0 : i32
    %118 = vector.broadcast %c0_i32_39 : i32 to vector<2x1xi32>
    %119 = arith.cmpi ne, %117, %118 : vector<2x1xi32>
    %120 = arith.index_cast %114 : i32 to index
    %c0_40 = arith.constant 0 : index
    %c0_41 = arith.constant 0 : index
    %121 = vector.load %arg4[%120, %c0_40, %c0_41] : memref<8x2x1xi32, #tpu.memory_space<vmem>>, vector<1x2x1xi32>
    %122 = vector.shape_cast %121 : vector<1x2x1xi32> to vector<2x1xi32>
    %c0_i32_42 = arith.constant 0 : i32
    %123 = vector.broadcast %c0_i32_42 : i32 to vector<2x1xi32>
    %124 = arith.cmpi ne, %122, %123 : vector<2x1xi32>
    %125 = arith.index_cast %c1_i32 : i32 to index
    %c0_43 = arith.constant 0 : index
    %c0_44 = arith.constant 0 : index
    %126 = vector.load %arg1[%125, %c0_43, %c0_44] : memref<8x2x128xbf16, #tpu.memory_space<vmem>>, vector<1x2x128xbf16>
    %127 = vector.shape_cast %126 : vector<1x2x128xbf16> to vector<2x128xbf16>
    %128 = arith.extf %127 : vector<2x128xbf16> to vector<2x128xf32>
    %129 = arith.truncf %57 : vector<2x32xf32> to vector<2x32xbf16>
    %cst_45 = arith.constant dense<0.000000e+00> : vector<2x128xf32>
    %130 = tpu.matmul %129, %3, %cst_45 {dimension_numbers = #tpu.dot_dimension_numbers<[1], [0], [0], [1], [0, 0, 1, 1], [], []>} : vector<2x32xbf16>, vector<32x128xbf16>, vector<2x128xf32> -> vector<2x128xf32>
    %131 = arith.addf %128, %130 : vector<2x128xf32>
    %132 = vector.extract_strided_slice %131 {offsets = [0, 0], sizes = [2, 32], strides = [1, 1]} : vector<2x128xf32> to vector<2x32xf32>
    %133 = arith.negf %132 : vector<2x32xf32>
    %134 = math.exp %133 : vector<2x32xf32>
    %cst_46 = arith.constant 1.000000e+00 : f32
    %135 = vector.broadcast %cst_46 : f32 to vector<2x32xf32>
    %136 = arith.addf %135, %134 : vector<2x32xf32>
    %137 = arith.divf %135, %136 : vector<2x32xf32>
    %138 = vector.extract_strided_slice %131 {offsets = [0, 32], sizes = [2, 32], strides = [1, 1]} : vector<2x128xf32> to vector<2x32xf32>
    %139 = arith.negf %138 : vector<2x32xf32>
    %140 = math.exp %139 : vector<2x32xf32>
    %cst_47 = arith.constant 1.000000e+00 : f32
    %141 = vector.broadcast %cst_47 : f32 to vector<2x32xf32>
    %142 = arith.addf %141, %140 : vector<2x32xf32>
    %143 = arith.divf %141, %142 : vector<2x32xf32>
    %144 = vector.extract_strided_slice %131 {offsets = [0, 64], sizes = [2, 32], strides = [1, 1]} : vector<2x128xf32> to vector<2x32xf32>
    %145 = math.tanh %144 : vector<2x32xf32>
    %146 = vector.extract_strided_slice %131 {offsets = [0, 96], sizes = [2, 32], strides = [1, 1]} : vector<2x128xf32> to vector<2x32xf32>
    %147 = arith.negf %146 : vector<2x32xf32>
    %148 = math.exp %147 : vector<2x32xf32>
    %cst_48 = arith.constant 1.000000e+00 : f32
    %149 = vector.broadcast %cst_48 : f32 to vector<2x32xf32>
    %150 = arith.addf %149, %148 : vector<2x32xf32>
    %151 = arith.divf %149, %150 : vector<2x32xf32>
    %152 = arith.mulf %143, %54 : vector<2x32xf32>
    %153 = arith.mulf %137, %145 : vector<2x32xf32>
    %154 = arith.addf %152, %153 : vector<2x32xf32>
    %155 = math.tanh %154 : vector<2x32xf32>
    %156 = arith.mulf %151, %155 : vector<2x32xf32>
    %157 = vector.shape_cast %119 : vector<2x1xi1> to vector<2x1xi1>
    %158 = vector.broadcast %157 : vector<2x1xi1> to vector<2x32xi1>
    %159 = arith.select %158, %54, %154 : vector<2x32xi1>, vector<2x32xf32>
    %160 = vector.shape_cast %119 : vector<2x1xi1> to vector<2x1xi1>
    %161 = vector.broadcast %160 : vector<2x1xi1> to vector<2x32xi1>
    %162 = arith.select %161, %57, %156 : vector<2x32xi1>, vector<2x32xf32>
    %cst_49 = arith.constant 0.000000e+00 : f32
    %163 = vector.broadcast %cst_49 : f32 to vector<2x32xf32>
    %164 = vector.shape_cast %119 : vector<2x1xi1> to vector<2x1xi1>
    %165 = vector.broadcast %164 : vector<2x1xi1> to vector<2x32xi1>
    %166 = arith.select %165, %163, %156 : vector<2x32xi1>, vector<2x32xf32>
    %167 = arith.index_cast %114 : i32 to index
    %c0_50 = arith.constant 0 : index
    %c0_51 = arith.constant 0 : index
    %168 = vector.load %arg2[%167, %c0_50, %c0_51] : memref<8x2x128xbf16, #tpu.memory_space<vmem>>, vector<1x2x128xbf16>
    %169 = vector.shape_cast %168 : vector<1x2x128xbf16> to vector<2x128xbf16>
    %170 = arith.extf %169 : vector<2x128xbf16> to vector<2x128xf32>
    %171 = arith.truncf %99 : vector<2x32xf32> to vector<2x32xbf16>
    %cst_52 = arith.constant dense<0.000000e+00> : vector<2x128xf32>
    %172 = tpu.matmul %171, %4, %cst_52 {dimension_numbers = #tpu.dot_dimension_numbers<[1], [0], [0], [1], [0, 0, 1, 1], [], []>} : vector<2x32xbf16>, vector<32x128xbf16>, vector<2x128xf32> -> vector<2x128xf32>
    %173 = arith.addf %170, %172 : vector<2x128xf32>
    %174 = vector.extract_strided_slice %173 {offsets = [0, 0], sizes = [2, 32], strides = [1, 1]} : vector<2x128xf32> to vector<2x32xf32>
    %175 = arith.negf %174 : vector<2x32xf32>
    %176 = math.exp %175 : vector<2x32xf32>
    %cst_53 = arith.constant 1.000000e+00 : f32
    %177 = vector.broadcast %cst_53 : f32 to vector<2x32xf32>
    %178 = arith.addf %177, %176 : vector<2x32xf32>
    %179 = arith.divf %177, %178 : vector<2x32xf32>
    %180 = vector.extract_strided_slice %173 {offsets = [0, 32], sizes = [2, 32], strides = [1, 1]} : vector<2x128xf32> to vector<2x32xf32>
    %181 = arith.negf %180 : vector<2x32xf32>
    %182 = math.exp %181 : vector<2x32xf32>
    %cst_54 = arith.constant 1.000000e+00 : f32
    %183 = vector.broadcast %cst_54 : f32 to vector<2x32xf32>
    %184 = arith.addf %183, %182 : vector<2x32xf32>
    %185 = arith.divf %183, %184 : vector<2x32xf32>
    %186 = vector.extract_strided_slice %173 {offsets = [0, 64], sizes = [2, 32], strides = [1, 1]} : vector<2x128xf32> to vector<2x32xf32>
    %187 = math.tanh %186 : vector<2x32xf32>
    %188 = vector.extract_strided_slice %173 {offsets = [0, 96], sizes = [2, 32], strides = [1, 1]} : vector<2x128xf32> to vector<2x32xf32>
    %189 = arith.negf %188 : vector<2x32xf32>
    %190 = math.exp %189 : vector<2x32xf32>
    %cst_55 = arith.constant 1.000000e+00 : f32
    %191 = vector.broadcast %cst_55 : f32 to vector<2x32xf32>
    %192 = arith.addf %191, %190 : vector<2x32xf32>
    %193 = arith.divf %191, %192 : vector<2x32xf32>
    %194 = arith.mulf %185, %96 : vector<2x32xf32>
    %195 = arith.mulf %179, %187 : vector<2x32xf32>
    %196 = arith.addf %194, %195 : vector<2x32xf32>
    %197 = math.tanh %196 : vector<2x32xf32>
    %198 = arith.mulf %193, %197 : vector<2x32xf32>
    %199 = vector.shape_cast %124 : vector<2x1xi1> to vector<2x1xi1>
    %200 = vector.broadcast %199 : vector<2x1xi1> to vector<2x32xi1>
    %201 = arith.select %200, %96, %196 : vector<2x32xi1>, vector<2x32xf32>
    %202 = vector.shape_cast %124 : vector<2x1xi1> to vector<2x1xi1>
    %203 = vector.broadcast %202 : vector<2x1xi1> to vector<2x32xi1>
    %204 = arith.select %203, %99, %198 : vector<2x32xi1>, vector<2x32xf32>
    %cst_56 = arith.constant 0.000000e+00 : f32
    %205 = vector.broadcast %cst_56 : f32 to vector<2x32xf32>
    %206 = vector.shape_cast %124 : vector<2x1xi1> to vector<2x1xi1>
    %207 = vector.broadcast %206 : vector<2x1xi1> to vector<2x32xi1>
    %208 = arith.select %207, %205, %198 : vector<2x32xi1>, vector<2x32xf32>
    %209 = arith.truncf %166 : vector<2x32xf32> to vector<2x32xbf16>
    %210 = arith.index_cast %c1_i32 : i32 to index
    %c0_57 = arith.constant 0 : index
    %c0_58 = arith.constant 0 : index
    %211 = vector.load %arg7[%210, %c0_57, %c0_58] : memref<8x2x32xbf16, #tpu.memory_space<vmem>>, vector<1x2x32xbf16>
    %212 = vector.shape_cast %211 : vector<1x2x32xbf16> to vector<2x32xbf16>
    %213 = vector.shape_cast %209 : vector<2x32xbf16> to vector<1x2x32xbf16>
    tpu.vector_store %arg7[%210, %c0_57, %c0_58], %213 {strides = array<i32>} : memref<8x2x32xbf16, #tpu.memory_space<vmem>>, vector<1x2x32xbf16>,
    %214 = arith.truncf %208 : vector<2x32xf32> to vector<2x32xbf16>
    %215 = arith.index_cast %114 : i32 to index
    %c0_59 = arith.constant 0 : index
    %c0_60 = arith.constant 0 : index
    %216 = vector.load %arg8[%215, %c0_59, %c0_60] : memref<8x2x32xbf16, #tpu.memory_space<vmem>>, vector<1x2x32xbf16>
    %217 = vector.shape_cast %216 : vector<1x2x32xbf16> to vector<2x32xbf16>
    %218 = vector.shape_cast %214 : vector<2x32xbf16> to vector<1x2x32xbf16>
    tpu.vector_store %arg8[%215, %c0_59, %c0_60], %218 {strides = array<i32>} : memref<8x2x32xbf16, #tpu.memory_space<vmem>>, vector<1x2x32xbf16>,
    %c2_i32 = arith.constant 2 : i32
    %c7_i32_61 = arith.constant 7 : i32
    %219 = arith.subi %c7_i32_61, %c2_i32 : i32
    %220 = arith.index_cast %c2_i32 : i32 to index
    %c0_62 = arith.constant 0 : index
    %c0_63 = arith.constant 0 : index
    %221 = vector.load %arg3[%220, %c0_62, %c0_63] : memref<8x2x1xi32, #tpu.memory_space<vmem>>, vector<1x2x1xi32>
    %222 = vector.shape_cast %221 : vector<1x2x1xi32> to vector<2x1xi32>
    %c0_i32_64 = arith.constant 0 : i32
    %223 = vector.broadcast %c0_i32_64 : i32 to vector<2x1xi32>
    %224 = arith.cmpi ne, %222, %223 : vector<2x1xi32>
    %225 = arith.index_cast %219 : i32 to index
    %c0_65 = arith.constant 0 : index
    %c0_66 = arith.constant 0 : index
    %226 = vector.load %arg4[%225, %c0_65, %c0_66] : memref<8x2x1xi32, #tpu.memory_space<vmem>>, vector<1x2x1xi32>
    %227 = vector.shape_cast %226 : vector<1x2x1xi32> to vector<2x1xi32>
    %c0_i32_67 = arith.constant 0 : i32
    %228 = vector.broadcast %c0_i32_67 : i32 to vector<2x1xi32>
    %229 = arith.cmpi ne, %227, %228 : vector<2x1xi32>
    %230 = arith.index_cast %c2_i32 : i32 to index
    %c0_68 = arith.constant 0 : index
    %c0_69 = arith.constant 0 : index
    %231 = vector.load %arg1[%230, %c0_68, %c0_69] : memref<8x2x128xbf16, #tpu.memory_space<vmem>>, vector<1x2x128xbf16>
    %232 = vector.shape_cast %231 : vector<1x2x128xbf16> to vector<2x128xbf16>
    %233 = arith.extf %232 : vector<2x128xbf16> to vector<2x128xf32>
    %234 = arith.truncf %162 : vector<2x32xf32> to vector<2x32xbf16>
    %cst_70 = arith.constant dense<0.000000e+00> : vector<2x128xf32>
    %235 = tpu.matmul %234, %3, %cst_70 {dimension_numbers = #tpu.dot_dimension_numbers<[1], [0], [0], [1], [0, 0, 1, 1], [], []>} : vector<2x32xbf16>, vector<32x128xbf16>, vector<2x128xf32> -> vector<2x128xf32>
    %236 = arith.addf %233, %235 : vector<2x128xf32>
    %237 = vector.extract_strided_slice %236 {offsets = [0, 0], sizes = [2, 32], strides = [1, 1]} : vector<2x128xf32> to vector<2x32xf32>
    %238 = arith.negf %237 : vector<2x32xf32>
    %239 = math.exp %238 : vector<2x32xf32>
    %cst_71 = arith.constant 1.000000e+00 : f32
    %240 = vector.broadcast %cst_71 : f32 to vector<2x32xf32>
    %241 = arith.addf %240, %239 : vector<2x32xf32>
    %242 = arith.divf %240, %241 : vector<2x32xf32>
    %243 = vector.extract_strided_slice %236 {offsets = [0, 32], sizes = [2, 32], strides = [1, 1]} : vector<2x128xf32> to vector<2x32xf32>
    %244 = arith.negf %243 : vector<2x32xf32>
    %245 = math.exp %244 : vector<2x32xf32>
    %cst_72 = arith.constant 1.000000e+00 : f32
    %246 = vector.broadcast %cst_72 : f32 to vector<2x32xf32>
    %247 = arith.addf %246, %245 : vector<2x32xf32>
    %248 = arith.divf %246, %247 : vector<2x32xf32>
    %249 = vector.extract_strided_slice %236 {offsets = [0, 64], sizes = [2, 32], strides = [1, 1]} : vector<2x128xf32> to vector<2x32xf32>
    %250 = math.tanh %249 : vector<2x32xf32>
    %251 = vector.extract_strided_slice %236 {offsets = [0, 96], sizes = [2, 32], strides = [1, 1]} : vector<2x128xf32> to vector<2x32xf32>
    %252 = arith.negf %251 : vector<2x32xf32>
    %253 = math.exp %252 : vector<2x32xf32>
    %cst_73 = arith.constant 1.000000e+00 : f32
    %254 = vector.broadcast %cst_73 : f32 to vector<2x32xf32>
    %255 = arith.addf %254, %253 : vector<2x32xf32>
    %256 = arith.divf %254, %255 : vector<2x32xf32>
    %257 = arith.mulf %248, %159 : vector<2x32xf32>
    %258 = arith.mulf %242, %250 : vector<2x32xf32>
    %259 = arith.addf %257, %258 : vector<2x32xf32>
    %260 = math.tanh %259 : vector<2x32xf32>
    %261 = arith.mulf %256, %260 : vector<2x32xf32>
    %262 = vector.shape_cast %224 : vector<2x1xi1> to vector<2x1xi1>
    %263 = vector.broadcast %262 : vector<2x1xi1> to vector<2x32xi1>
    %264 = arith.select %263, %159, %259 : vector<2x32xi1>, vector<2x32xf32>
    %265 = vector.shape_cast %224 : vector<2x1xi1> to vector<2x1xi1>
    %266 = vector.broadcast %265 : vector<2x1xi1> to vector<2x32xi1>
    %267 = arith.select %266, %162, %261 : vector<2x32xi1>, vector<2x32xf32>
    %cst_74 = arith.constant 0.000000e+00 : f32
    %268 = vector.broadcast %cst_74 : f32 to vector<2x32xf32>
    %269 = vector.shape_cast %224 : vector<2x1xi1> to vector<2x1xi1>
    %270 = vector.broadcast %269 : vector<2x1xi1> to vector<2x32xi1>
    %271 = arith.select %270, %268, %261 : vector<2x32xi1>, vector<2x32xf32>
    %272 = arith.index_cast %219 : i32 to index
    %c0_75 = arith.constant 0 : index
    %c0_76 = arith.constant 0 : index
    %273 = vector.load %arg2[%272, %c0_75, %c0_76] : memref<8x2x128xbf16, #tpu.memory_space<vmem>>, vector<1x2x128xbf16>
    %274 = vector.shape_cast %273 : vector<1x2x128xbf16> to vector<2x128xbf16>
    %275 = arith.extf %274 : vector<2x128xbf16> to vector<2x128xf32>
    %276 = arith.truncf %204 : vector<2x32xf32> to vector<2x32xbf16>
    %cst_77 = arith.constant dense<0.000000e+00> : vector<2x128xf32>
    %277 = tpu.matmul %276, %4, %cst_77 {dimension_numbers = #tpu.dot_dimension_numbers<[1], [0], [0], [1], [0, 0, 1, 1], [], []>} : vector<2x32xbf16>, vector<32x128xbf16>, vector<2x128xf32> -> vector<2x128xf32>
    %278 = arith.addf %275, %277 : vector<2x128xf32>
    %279 = vector.extract_strided_slice %278 {offsets = [0, 0], sizes = [2, 32], strides = [1, 1]} : vector<2x128xf32> to vector<2x32xf32>
    %280 = arith.negf %279 : vector<2x32xf32>
    %281 = math.exp %280 : vector<2x32xf32>
    %cst_78 = arith.constant 1.000000e+00 : f32
    %282 = vector.broadcast %cst_78 : f32 to vector<2x32xf32>
    %283 = arith.addf %282, %281 : vector<2x32xf32>
    %284 = arith.divf %282, %283 : vector<2x32xf32>
    %285 = vector.extract_strided_slice %278 {offsets = [0, 32], sizes = [2, 32], strides = [1, 1]} : vector<2x128xf32> to vector<2x32xf32>
    %286 = arith.negf %285 : vector<2x32xf32>
    %287 = math.exp %286 : vector<2x32xf32>
    %cst_79 = arith.constant 1.000000e+00 : f32
    %288 = vector.broadcast %cst_79 : f32 to vector<2x32xf32>
    %289 = arith.addf %288, %287 : vector<2x32xf32>
    %290 = arith.divf %288, %289 : vector<2x32xf32>
    %291 = vector.extract_strided_slice %278 {offsets = [0, 64], sizes = [2, 32], strides = [1, 1]} : vector<2x128xf32> to vector<2x32xf32>
    %292 = math.tanh %291 : vector<2x32xf32>
    %293 = vector.extract_strided_slice %278 {offsets = [0, 96], sizes = [2, 32], strides = [1, 1]} : vector<2x128xf32> to vector<2x32xf32>
    %294 = arith.negf %293 : vector<2x32xf32>
    %295 = math.exp %294 : vector<2x32xf32>
    %cst_80 = arith.constant 1.000000e+00 : f32
    %296 = vector.broadcast %cst_80 : f32 to vector<2x32xf32>
    %297 = arith.addf %296, %295 : vector<2x32xf32>
    %298 = arith.divf %296, %297 : vector<2x32xf32>
    %299 = arith.mulf %290, %201 : vector<2x32xf32>
    %300 = arith.mulf %284, %292 : vector<2x32xf32>
    %301 = arith.addf %299, %300 : vector<2x32xf32>
    %302 = math.tanh %301 : vector<2x32xf32>
    %303 = arith.mulf %298, %302 : vector<2x32xf32>
    %304 = vector.shape_cast %229 : vector<2x1xi1> to vector<2x1xi1>
    %305 = vector.broadcast %304 : vector<2x1xi1> to vector<2x32xi1>
    %306 = arith.select %305, %201, %301 : vector<2x32xi1>, vector<2x32xf32>
    %307 = vector.shape_cast %229 : vector<2x1xi1> to vector<2x1xi1>
    %308 = vector.broadcast %307 : vector<2x1xi1> to vector<2x32xi1>
    %309 = arith.select %308, %204, %303 : vector<2x32xi1>, vector<2x32xf32>
    %cst_81 = arith.constant 0.000000e+00 : f32
    %310 = vector.broadcast %cst_81 : f32 to vector<2x32xf32>
    %311 = vector.shape_cast %229 : vector<2x1xi1> to vector<2x1xi1>
    %312 = vector.broadcast %311 : vector<2x1xi1> to vector<2x32xi1>
    %313 = arith.select %312, %310, %303 : vector<2x32xi1>, vector<2x32xf32>
    %314 = arith.truncf %271 : vector<2x32xf32> to vector<2x32xbf16>
    %315 = arith.index_cast %c2_i32 : i32 to index
    %c0_82 = arith.constant 0 : index
    %c0_83 = arith.constant 0 : index
    %316 = vector.load %arg7[%315, %c0_82, %c0_83] : memref<8x2x32xbf16, #tpu.memory_space<vmem>>, vector<1x2x32xbf16>
    %317 = vector.shape_cast %316 : vector<1x2x32xbf16> to vector<2x32xbf16>
    %318 = vector.shape_cast %314 : vector<2x32xbf16> to vector<1x2x32xbf16>
    tpu.vector_store %arg7[%315, %c0_82, %c0_83], %318 {strides = array<i32>} : memref<8x2x32xbf16, #tpu.memory_space<vmem>>, vector<1x2x32xbf16>,
    %319 = arith.truncf %313 : vector<2x32xf32> to vector<2x32xbf16>
    %320 = arith.index_cast %219 : i32 to index
    %c0_84 = arith.constant 0 : index
    %c0_85 = arith.constant 0 : index
    %321 = vector.load %arg8[%320, %c0_84, %c0_85] : memref<8x2x32xbf16, #tpu.memory_space<vmem>>, vector<1x2x32xbf16>
    %322 = vector.shape_cast %321 : vector<1x2x32xbf16> to vector<2x32xbf16>
    %323 = vector.shape_cast %319 : vector<2x32xbf16> to vector<1x2x32xbf16>
    tpu.vector_store %arg8[%320, %c0_84, %c0_85], %323 {strides = array<i32>} : memref<8x2x32xbf16, #tpu.memory_space<vmem>>, vector<1x2x32xbf16>,
    %c3_i32 = arith.constant 3 : i32
    %c7_i32_86 = arith.constant 7 : i32
    %324 = arith.subi %c7_i32_86, %c3_i32 : i32
    %325 = arith.index_cast %c3_i32 : i32 to index
    %c0_87 = arith.constant 0 : index
    %c0_88 = arith.constant 0 : index
    %326 = vector.load %arg3[%325, %c0_87, %c0_88] : memref<8x2x1xi32, #tpu.memory_space<vmem>>, vector<1x2x1xi32>
    %327 = vector.shape_cast %326 : vector<1x2x1xi32> to vector<2x1xi32>
    %c0_i32_89 = arith.constant 0 : i32
    %328 = vector.broadcast %c0_i32_89 : i32 to vector<2x1xi32>
    %329 = arith.cmpi ne, %327, %328 : vector<2x1xi32>
    %330 = arith.index_cast %324 : i32 to index
    %c0_90 = arith.constant 0 : index
    %c0_91 = arith.constant 0 : index
    %331 = vector.load %arg4[%330, %c0_90, %c0_91] : memref<8x2x1xi32, #tpu.memory_space<vmem>>, vector<1x2x1xi32>
    %332 = vector.shape_cast %331 : vector<1x2x1xi32> to vector<2x1xi32>
    %c0_i32_92 = arith.constant 0 : i32
    %333 = vector.broadcast %c0_i32_92 : i32 to vector<2x1xi32>
    %334 = arith.cmpi ne, %332, %333 : vector<2x1xi32>
    %335 = arith.index_cast %c3_i32 : i32 to index
    %c0_93 = arith.constant 0 : index
    %c0_94 = arith.constant 0 : index
    %336 = vector.load %arg1[%335, %c0_93, %c0_94] : memref<8x2x128xbf16, #tpu.memory_space<vmem>>, vector<1x2x128xbf16>
    %337 = vector.shape_cast %336 : vector<1x2x128xbf16> to vector<2x128xbf16>
    %338 = arith.extf %337 : vector<2x128xbf16> to vector<2x128xf32>
    %339 = arith.truncf %267 : vector<2x32xf32> to vector<2x32xbf16>
    %cst_95 = arith.constant dense<0.000000e+00> : vector<2x128xf32>
    %340 = tpu.matmul %339, %3, %cst_95 {dimension_numbers = #tpu.dot_dimension_numbers<[1], [0], [0], [1], [0, 0, 1, 1], [], []>} : vector<2x32xbf16>, vector<32x128xbf16>, vector<2x128xf32> -> vector<2x128xf32>
    %341 = arith.addf %338, %340 : vector<2x128xf32>
    %342 = vector.extract_strided_slice %341 {offsets = [0, 0], sizes = [2, 32], strides = [1, 1]} : vector<2x128xf32> to vector<2x32xf32>
    %343 = arith.negf %342 : vector<2x32xf32>
    %344 = math.exp %343 : vector<2x32xf32>
    %cst_96 = arith.constant 1.000000e+00 : f32
    %345 = vector.broadcast %cst_96 : f32 to vector<2x32xf32>
    %346 = arith.addf %345, %344 : vector<2x32xf32>
    %347 = arith.divf %345, %346 : vector<2x32xf32>
    %348 = vector.extract_strided_slice %341 {offsets = [0, 32], sizes = [2, 32], strides = [1, 1]} : vector<2x128xf32> to vector<2x32xf32>
    %349 = arith.negf %348 : vector<2x32xf32>
    %350 = math.exp %349 : vector<2x32xf32>
    %cst_97 = arith.constant 1.000000e+00 : f32
    %351 = vector.broadcast %cst_97 : f32 to vector<2x32xf32>
    %352 = arith.addf %351, %350 : vector<2x32xf32>
    %353 = arith.divf %351, %352 : vector<2x32xf32>
    %354 = vector.extract_strided_slice %341 {offsets = [0, 64], sizes = [2, 32], strides = [1, 1]} : vector<2x128xf32> to vector<2x32xf32>
    %355 = math.tanh %354 : vector<2x32xf32>
    %356 = vector.extract_strided_slice %341 {offsets = [0, 96], sizes = [2, 32], strides = [1, 1]} : vector<2x128xf32> to vector<2x32xf32>
    %357 = arith.negf %356 : vector<2x32xf32>
    %358 = math.exp %357 : vector<2x32xf32>
    %cst_98 = arith.constant 1.000000e+00 : f32
    %359 = vector.broadcast %cst_98 : f32 to vector<2x32xf32>
    %360 = arith.addf %359, %358 : vector<2x32xf32>
    %361 = arith.divf %359, %360 : vector<2x32xf32>
    %362 = arith.mulf %353, %264 : vector<2x32xf32>
    %363 = arith.mulf %347, %355 : vector<2x32xf32>
    %364 = arith.addf %362, %363 : vector<2x32xf32>
    %365 = math.tanh %364 : vector<2x32xf32>
    %366 = arith.mulf %361, %365 : vector<2x32xf32>
    %367 = vector.shape_cast %329 : vector<2x1xi1> to vector<2x1xi1>
    %368 = vector.broadcast %367 : vector<2x1xi1> to vector<2x32xi1>
    %369 = arith.select %368, %264, %364 : vector<2x32xi1>, vector<2x32xf32>
    %370 = vector.shape_cast %329 : vector<2x1xi1> to vector<2x1xi1>
    %371 = vector.broadcast %370 : vector<2x1xi1> to vector<2x32xi1>
    %372 = arith.select %371, %267, %366 : vector<2x32xi1>, vector<2x32xf32>
    %cst_99 = arith.constant 0.000000e+00 : f32
    %373 = vector.broadcast %cst_99 : f32 to vector<2x32xf32>
    %374 = vector.shape_cast %329 : vector<2x1xi1> to vector<2x1xi1>
    %375 = vector.broadcast %374 : vector<2x1xi1> to vector<2x32xi1>
    %376 = arith.select %375, %373, %366 : vector<2x32xi1>, vector<2x32xf32>
    %377 = arith.index_cast %324 : i32 to index
    %c0_100 = arith.constant 0 : index
    %c0_101 = arith.constant 0 : index
    %378 = vector.load %arg2[%377, %c0_100, %c0_101] : memref<8x2x128xbf16, #tpu.memory_space<vmem>>, vector<1x2x128xbf16>
    %379 = vector.shape_cast %378 : vector<1x2x128xbf16> to vector<2x128xbf16>
    %380 = arith.extf %379 : vector<2x128xbf16> to vector<2x128xf32>
    %381 = arith.truncf %309 : vector<2x32xf32> to vector<2x32xbf16>
    %cst_102 = arith.constant dense<0.000000e+00> : vector<2x128xf32>
    %382 = tpu.matmul %381, %4, %cst_102 {dimension_numbers = #tpu.dot_dimension_numbers<[1], [0], [0], [1], [0, 0, 1, 1], [], []>} : vector<2x32xbf16>, vector<32x128xbf16>, vector<2x128xf32> -> vector<2x128xf32>
    %383 = arith.addf %380, %382 : vector<2x128xf32>
    %384 = vector.extract_strided_slice %383 {offsets = [0, 0], sizes = [2, 32], strides = [1, 1]} : vector<2x128xf32> to vector<2x32xf32>
    %385 = arith.negf %384 : vector<2x32xf32>
    %386 = math.exp %385 : vector<2x32xf32>
    %cst_103 = arith.constant 1.000000e+00 : f32
    %387 = vector.broadcast %cst_103 : f32 to vector<2x32xf32>
    %388 = arith.addf %387, %386 : vector<2x32xf32>
    %389 = arith.divf %387, %388 : vector<2x32xf32>
    %390 = vector.extract_strided_slice %383 {offsets = [0, 32], sizes = [2, 32], strides = [1, 1]} : vector<2x128xf32> to vector<2x32xf32>
    %391 = arith.negf %390 : vector<2x32xf32>
    %392 = math.exp %391 : vector<2x32xf32>
    %cst_104 = arith.constant 1.000000e+00 : f32
    %393 = vector.broadcast %cst_104 : f32 to vector<2x32xf32>
    %394 = arith.addf %393, %392 : vector<2x32xf32>
    %395 = arith.divf %393, %394 : vector<2x32xf32>
    %396 = vector.extract_strided_slice %383 {offsets = [0, 64], sizes = [2, 32], strides = [1, 1]} : vector<2x128xf32> to vector<2x32xf32>
    %397 = math.tanh %396 : vector<2x32xf32>
    %398 = vector.extract_strided_slice %383 {offsets = [0, 96], sizes = [2, 32], strides = [1, 1]} : vector<2x128xf32> to vector<2x32xf32>
    %399 = arith.negf %398 : vector<2x32xf32>
    %400 = math.exp %399 : vector<2x32xf32>
    %cst_105 = arith.constant 1.000000e+00 : f32
    %401 = vector.broadcast %cst_105 : f32 to vector<2x32xf32>
    %402 = arith.addf %401, %400 : vector<2x32xf32>
    %403 = arith.divf %401, %402 : vector<2x32xf32>
    %404 = arith.mulf %395, %306 : vector<2x32xf32>
    %405 = arith.mulf %389, %397 : vector<2x32xf32>
    %406 = arith.addf %404, %405 : vector<2x32xf32>
    %407 = math.tanh %406 : vector<2x32xf32>
    %408 = arith.mulf %403, %407 : vector<2x32xf32>
    %409 = vector.shape_cast %334 : vector<2x1xi1> to vector<2x1xi1>
    %410 = vector.broadcast %409 : vector<2x1xi1> to vector<2x32xi1>
    %411 = arith.select %410, %306, %406 : vector<2x32xi1>, vector<2x32xf32>
    %412 = vector.shape_cast %334 : vector<2x1xi1> to vector<2x1xi1>
    %413 = vector.broadcast %412 : vector<2x1xi1> to vector<2x32xi1>
    %414 = arith.select %413, %309, %408 : vector<2x32xi1>, vector<2x32xf32>
    %cst_106 = arith.constant 0.000000e+00 : f32
    %415 = vector.broadcast %cst_106 : f32 to vector<2x32xf32>
    %416 = vector.shape_cast %334 : vector<2x1xi1> to vector<2x1xi1>
    %417 = vector.broadcast %416 : vector<2x1xi1> to vector<2x32xi1>
    %418 = arith.select %417, %415, %408 : vector<2x32xi1>, vector<2x32xf32>
    %419 = arith.truncf %376 : vector<2x32xf32> to vector<2x32xbf16>
    %420 = arith.index_cast %c3_i32 : i32 to index
    %c0_107 = arith.constant 0 : index
    %c0_108 = arith.constant 0 : index
    %421 = vector.load %arg7[%420, %c0_107, %c0_108] : memref<8x2x32xbf16, #tpu.memory_space<vmem>>, vector<1x2x32xbf16>
    %422 = vector.shape_cast %421 : vector<1x2x32xbf16> to vector<2x32xbf16>
    %423 = vector.shape_cast %419 : vector<2x32xbf16> to vector<1x2x32xbf16>
    tpu.vector_store %arg7[%420, %c0_107, %c0_108], %423 {strides = array<i32>} : memref<8x2x32xbf16, #tpu.memory_space<vmem>>, vector<1x2x32xbf16>,
    %424 = arith.truncf %418 : vector<2x32xf32> to vector<2x32xbf16>
    %425 = arith.index_cast %324 : i32 to index
    %c0_109 = arith.constant 0 : index
    %c0_110 = arith.constant 0 : index
    %426 = vector.load %arg8[%425, %c0_109, %c0_110] : memref<8x2x32xbf16, #tpu.memory_space<vmem>>, vector<1x2x32xbf16>
    %427 = vector.shape_cast %426 : vector<1x2x32xbf16> to vector<2x32xbf16>
    %428 = vector.shape_cast %424 : vector<2x32xbf16> to vector<1x2x32xbf16>
    tpu.vector_store %arg8[%425, %c0_109, %c0_110], %428 {strides = array<i32>} : memref<8x2x32xbf16, #tpu.memory_space<vmem>>, vector<1x2x32xbf16>,
    %c4_i32 = arith.constant 4 : i32
    %c7_i32_111 = arith.constant 7 : i32
    %429 = arith.subi %c7_i32_111, %c4_i32 : i32
    %430 = arith.index_cast %c4_i32 : i32 to index
    %c0_112 = arith.constant 0 : index
    %c0_113 = arith.constant 0 : index
    %431 = vector.load %arg3[%430, %c0_112, %c0_113] : memref<8x2x1xi32, #tpu.memory_space<vmem>>, vector<1x2x1xi32>
    %432 = vector.shape_cast %431 : vector<1x2x1xi32> to vector<2x1xi32>
    %c0_i32_114 = arith.constant 0 : i32
    %433 = vector.broadcast %c0_i32_114 : i32 to vector<2x1xi32>
    %434 = arith.cmpi ne, %432, %433 : vector<2x1xi32>
    %435 = arith.index_cast %429 : i32 to index
    %c0_115 = arith.constant 0 : index
    %c0_116 = arith.constant 0 : index
    %436 = vector.load %arg4[%435, %c0_115, %c0_116] : memref<8x2x1xi32, #tpu.memory_space<vmem>>, vector<1x2x1xi32>
    %437 = vector.shape_cast %436 : vector<1x2x1xi32> to vector<2x1xi32>
    %c0_i32_117 = arith.constant 0 : i32
    %438 = vector.broadcast %c0_i32_117 : i32 to vector<2x1xi32>
    %439 = arith.cmpi ne, %437, %438 : vector<2x1xi32>
    %440 = arith.index_cast %c4_i32 : i32 to index
    %c0_118 = arith.constant 0 : index
    %c0_119 = arith.constant 0 : index
    %441 = vector.load %arg1[%440, %c0_118, %c0_119] : memref<8x2x128xbf16, #tpu.memory_space<vmem>>, vector<1x2x128xbf16>
    %442 = vector.shape_cast %441 : vector<1x2x128xbf16> to vector<2x128xbf16>
    %443 = arith.extf %442 : vector<2x128xbf16> to vector<2x128xf32>
    %444 = arith.truncf %372 : vector<2x32xf32> to vector<2x32xbf16>
    %cst_120 = arith.constant dense<0.000000e+00> : vector<2x128xf32>
    %445 = tpu.matmul %444, %3, %cst_120 {dimension_numbers = #tpu.dot_dimension_numbers<[1], [0], [0], [1], [0, 0, 1, 1], [], []>} : vector<2x32xbf16>, vector<32x128xbf16>, vector<2x128xf32> -> vector<2x128xf32>
    %446 = arith.addf %443, %445 : vector<2x128xf32>
    %447 = vector.extract_strided_slice %446 {offsets = [0, 0], sizes = [2, 32], strides = [1, 1]} : vector<2x128xf32> to vector<2x32xf32>
    %448 = arith.negf %447 : vector<2x32xf32>
    %449 = math.exp %448 : vector<2x32xf32>
    %cst_121 = arith.constant 1.000000e+00 : f32
    %450 = vector.broadcast %cst_121 : f32 to vector<2x32xf32>
    %451 = arith.addf %450, %449 : vector<2x32xf32>
    %452 = arith.divf %450, %451 : vector<2x32xf32>
    %453 = vector.extract_strided_slice %446 {offsets = [0, 32], sizes = [2, 32], strides = [1, 1]} : vector<2x128xf32> to vector<2x32xf32>
    %454 = arith.negf %453 : vector<2x32xf32>
    %455 = math.exp %454 : vector<2x32xf32>
    %cst_122 = arith.constant 1.000000e+00 : f32
    %456 = vector.broadcast %cst_122 : f32 to vector<2x32xf32>
    %457 = arith.addf %456, %455 : vector<2x32xf32>
    %458 = arith.divf %456, %457 : vector<2x32xf32>
    %459 = vector.extract_strided_slice %446 {offsets = [0, 64], sizes = [2, 32], strides = [1, 1]} : vector<2x128xf32> to vector<2x32xf32>
    %460 = math.tanh %459 : vector<2x32xf32>
    %461 = vector.extract_strided_slice %446 {offsets = [0, 96], sizes = [2, 32], strides = [1, 1]} : vector<2x128xf32> to vector<2x32xf32>
    %462 = arith.negf %461 : vector<2x32xf32>
    %463 = math.exp %462 : vector<2x32xf32>
    %cst_123 = arith.constant 1.000000e+00 : f32
    %464 = vector.broadcast %cst_123 : f32 to vector<2x32xf32>
    %465 = arith.addf %464, %463 : vector<2x32xf32>
    %466 = arith.divf %464, %465 : vector<2x32xf32>
    %467 = arith.mulf %458, %369 : vector<2x32xf32>
    %468 = arith.mulf %452, %460 : vector<2x32xf32>
    %469 = arith.addf %467, %468 : vector<2x32xf32>
    %470 = math.tanh %469 : vector<2x32xf32>
    %471 = arith.mulf %466, %470 : vector<2x32xf32>
    %472 = vector.shape_cast %434 : vector<2x1xi1> to vector<2x1xi1>
    %473 = vector.broadcast %472 : vector<2x1xi1> to vector<2x32xi1>
    %474 = arith.select %473, %369, %469 : vector<2x32xi1>, vector<2x32xf32>
    %475 = vector.shape_cast %434 : vector<2x1xi1> to vector<2x1xi1>
    %476 = vector.broadcast %475 : vector<2x1xi1> to vector<2x32xi1>
    %477 = arith.select %476, %372, %471 : vector<2x32xi1>, vector<2x32xf32>
    %cst_124 = arith.constant 0.000000e+00 : f32
    %478 = vector.broadcast %cst_124 : f32 to vector<2x32xf32>
    %479 = vector.shape_cast %434 : vector<2x1xi1> to vector<2x1xi1>
    %480 = vector.broadcast %479 : vector<2x1xi1> to vector<2x32xi1>
    %481 = arith.select %480, %478, %471 : vector<2x32xi1>, vector<2x32xf32>
    %482 = arith.index_cast %429 : i32 to index
    %c0_125 = arith.constant 0 : index
    %c0_126 = arith.constant 0 : index
    %483 = vector.load %arg2[%482, %c0_125, %c0_126] : memref<8x2x128xbf16, #tpu.memory_space<vmem>>, vector<1x2x128xbf16>
    %484 = vector.shape_cast %483 : vector<1x2x128xbf16> to vector<2x128xbf16>
    %485 = arith.extf %484 : vector<2x128xbf16> to vector<2x128xf32>
    %486 = arith.truncf %414 : vector<2x32xf32> to vector<2x32xbf16>
    %cst_127 = arith.constant dense<0.000000e+00> : vector<2x128xf32>
    %487 = tpu.matmul %486, %4, %cst_127 {dimension_numbers = #tpu.dot_dimension_numbers<[1], [0], [0], [1], [0, 0, 1, 1], [], []>} : vector<2x32xbf16>, vector<32x128xbf16>, vector<2x128xf32> -> vector<2x128xf32>
    %488 = arith.addf %485, %487 : vector<2x128xf32>
    %489 = vector.extract_strided_slice %488 {offsets = [0, 0], sizes = [2, 32], strides = [1, 1]} : vector<2x128xf32> to vector<2x32xf32>
    %490 = arith.negf %489 : vector<2x32xf32>
    %491 = math.exp %490 : vector<2x32xf32>
    %cst_128 = arith.constant 1.000000e+00 : f32
    %492 = vector.broadcast %cst_128 : f32 to vector<2x32xf32>
    %493 = arith.addf %492, %491 : vector<2x32xf32>
    %494 = arith.divf %492, %493 : vector<2x32xf32>
    %495 = vector.extract_strided_slice %488 {offsets = [0, 32], sizes = [2, 32], strides = [1, 1]} : vector<2x128xf32> to vector<2x32xf32>
    %496 = arith.negf %495 : vector<2x32xf32>
    %497 = math.exp %496 : vector<2x32xf32>
    %cst_129 = arith.constant 1.000000e+00 : f32
    %498 = vector.broadcast %cst_129 : f32 to vector<2x32xf32>
    %499 = arith.addf %498, %497 : vector<2x32xf32>
    %500 = arith.divf %498, %499 : vector<2x32xf32>
    %501 = vector.extract_strided_slice %488 {offsets = [0, 64], sizes = [2, 32], strides = [1, 1]} : vector<2x128xf32> to vector<2x32xf32>
    %502 = math.tanh %501 : vector<2x32xf32>
    %503 = vector.extract_strided_slice %488 {offsets = [0, 96], sizes = [2, 32], strides = [1, 1]} : vector<2x128xf32> to vector<2x32xf32>
    %504 = arith.negf %503 : vector<2x32xf32>
    %505 = math.exp %504 : vector<2x32xf32>
    %cst_130 = arith.constant 1.000000e+00 : f32
    %506 = vector.broadcast %cst_130 : f32 to vector<2x32xf32>
    %507 = arith.addf %506, %505 : vector<2x32xf32>
    %508 = arith.divf %506, %507 : vector<2x32xf32>
    %509 = arith.mulf %500, %411 : vector<2x32xf32>
    %510 = arith.mulf %494, %502 : vector<2x32xf32>
    %511 = arith.addf %509, %510 : vector<2x32xf32>
    %512 = math.tanh %511 : vector<2x32xf32>
    %513 = arith.mulf %508, %512 : vector<2x32xf32>
    %514 = vector.shape_cast %439 : vector<2x1xi1> to vector<2x1xi1>
    %515 = vector.broadcast %514 : vector<2x1xi1> to vector<2x32xi1>
    %516 = arith.select %515, %411, %511 : vector<2x32xi1>, vector<2x32xf32>
    %517 = vector.shape_cast %439 : vector<2x1xi1> to vector<2x1xi1>
    %518 = vector.broadcast %517 : vector<2x1xi1> to vector<2x32xi1>
    %519 = arith.select %518, %414, %513 : vector<2x32xi1>, vector<2x32xf32>
    %cst_131 = arith.constant 0.000000e+00 : f32
    %520 = vector.broadcast %cst_131 : f32 to vector<2x32xf32>
    %521 = vector.shape_cast %439 : vector<2x1xi1> to vector<2x1xi1>
    %522 = vector.broadcast %521 : vector<2x1xi1> to vector<2x32xi1>
    %523 = arith.select %522, %520, %513 : vector<2x32xi1>, vector<2x32xf32>
    %524 = arith.truncf %481 : vector<2x32xf32> to vector<2x32xbf16>
    %525 = arith.index_cast %c4_i32 : i32 to index
    %c0_132 = arith.constant 0 : index
    %c0_133 = arith.constant 0 : index
    %526 = vector.load %arg7[%525, %c0_132, %c0_133] : memref<8x2x32xbf16, #tpu.memory_space<vmem>>, vector<1x2x32xbf16>
    %527 = vector.shape_cast %526 : vector<1x2x32xbf16> to vector<2x32xbf16>
    %528 = vector.shape_cast %524 : vector<2x32xbf16> to vector<1x2x32xbf16>
    tpu.vector_store %arg7[%525, %c0_132, %c0_133], %528 {strides = array<i32>} : memref<8x2x32xbf16, #tpu.memory_space<vmem>>, vector<1x2x32xbf16>,
    %529 = arith.truncf %523 : vector<2x32xf32> to vector<2x32xbf16>
    %530 = arith.index_cast %429 : i32 to index
    %c0_134 = arith.constant 0 : index
    %c0_135 = arith.constant 0 : index
    %531 = vector.load %arg8[%530, %c0_134, %c0_135] : memref<8x2x32xbf16, #tpu.memory_space<vmem>>, vector<1x2x32xbf16>
    %532 = vector.shape_cast %531 : vector<1x2x32xbf16> to vector<2x32xbf16>
    %533 = vector.shape_cast %529 : vector<2x32xbf16> to vector<1x2x32xbf16>
    tpu.vector_store %arg8[%530, %c0_134, %c0_135], %533 {strides = array<i32>} : memref<8x2x32xbf16, #tpu.memory_space<vmem>>, vector<1x2x32xbf16>,
    %c5_i32 = arith.constant 5 : i32
    %c7_i32_136 = arith.constant 7 : i32
    %534 = arith.subi %c7_i32_136, %c5_i32 : i32
    %535 = arith.index_cast %c5_i32 : i32 to index
    %c0_137 = arith.constant 0 : index
    %c0_138 = arith.constant 0 : index
    %536 = vector.load %arg3[%535, %c0_137, %c0_138] : memref<8x2x1xi32, #tpu.memory_space<vmem>>, vector<1x2x1xi32>
    %537 = vector.shape_cast %536 : vector<1x2x1xi32> to vector<2x1xi32>
    %c0_i32_139 = arith.constant 0 : i32
    %538 = vector.broadcast %c0_i32_139 : i32 to vector<2x1xi32>
    %539 = arith.cmpi ne, %537, %538 : vector<2x1xi32>
    %540 = arith.index_cast %534 : i32 to index
    %c0_140 = arith.constant 0 : index
    %c0_141 = arith.constant 0 : index
    %541 = vector.load %arg4[%540, %c0_140, %c0_141] : memref<8x2x1xi32, #tpu.memory_space<vmem>>, vector<1x2x1xi32>
    %542 = vector.shape_cast %541 : vector<1x2x1xi32> to vector<2x1xi32>
    %c0_i32_142 = arith.constant 0 : i32
    %543 = vector.broadcast %c0_i32_142 : i32 to vector<2x1xi32>
    %544 = arith.cmpi ne, %542, %543 : vector<2x1xi32>
    %545 = arith.index_cast %c5_i32 : i32 to index
    %c0_143 = arith.constant 0 : index
    %c0_144 = arith.constant 0 : index
    %546 = vector.load %arg1[%545, %c0_143, %c0_144] : memref<8x2x128xbf16, #tpu.memory_space<vmem>>, vector<1x2x128xbf16>
    %547 = vector.shape_cast %546 : vector<1x2x128xbf16> to vector<2x128xbf16>
    %548 = arith.extf %547 : vector<2x128xbf16> to vector<2x128xf32>
    %549 = arith.truncf %477 : vector<2x32xf32> to vector<2x32xbf16>
    %cst_145 = arith.constant dense<0.000000e+00> : vector<2x128xf32>
    %550 = tpu.matmul %549, %3, %cst_145 {dimension_numbers = #tpu.dot_dimension_numbers<[1], [0], [0], [1], [0, 0, 1, 1], [], []>} : vector<2x32xbf16>, vector<32x128xbf16>, vector<2x128xf32> -> vector<2x128xf32>
    %551 = arith.addf %548, %550 : vector<2x128xf32>
    %552 = vector.extract_strided_slice %551 {offsets = [0, 0], sizes = [2, 32], strides = [1, 1]} : vector<2x128xf32> to vector<2x32xf32>
    %553 = arith.negf %552 : vector<2x32xf32>
    %554 = math.exp %553 : vector<2x32xf32>
    %cst_146 = arith.constant 1.000000e+00 : f32
    %555 = vector.broadcast %cst_146 : f32 to vector<2x32xf32>
    %556 = arith.addf %555, %554 : vector<2x32xf32>
    %557 = arith.divf %555, %556 : vector<2x32xf32>
    %558 = vector.extract_strided_slice %551 {offsets = [0, 32], sizes = [2, 32], strides = [1, 1]} : vector<2x128xf32> to vector<2x32xf32>
    %559 = arith.negf %558 : vector<2x32xf32>
    %560 = math.exp %559 : vector<2x32xf32>
    %cst_147 = arith.constant 1.000000e+00 : f32
    %561 = vector.broadcast %cst_147 : f32 to vector<2x32xf32>
    %562 = arith.addf %561, %560 : vector<2x32xf32>
    %563 = arith.divf %561, %562 : vector<2x32xf32>
    %564 = vector.extract_strided_slice %551 {offsets = [0, 64], sizes = [2, 32], strides = [1, 1]} : vector<2x128xf32> to vector<2x32xf32>
    %565 = math.tanh %564 : vector<2x32xf32>
    %566 = vector.extract_strided_slice %551 {offsets = [0, 96], sizes = [2, 32], strides = [1, 1]} : vector<2x128xf32> to vector<2x32xf32>
    %567 = arith.negf %566 : vector<2x32xf32>
    %568 = math.exp %567 : vector<2x32xf32>
    %cst_148 = arith.constant 1.000000e+00 : f32
    %569 = vector.broadcast %cst_148 : f32 to vector<2x32xf32>
    %570 = arith.addf %569, %568 : vector<2x32xf32>
    %571 = arith.divf %569, %570 : vector<2x32xf32>
    %572 = arith.mulf %563, %474 : vector<2x32xf32>
    %573 = arith.mulf %557, %565 : vector<2x32xf32>
    %574 = arith.addf %572, %573 : vector<2x32xf32>
    %575 = math.tanh %574 : vector<2x32xf32>
    %576 = arith.mulf %571, %575 : vector<2x32xf32>
    %577 = vector.shape_cast %539 : vector<2x1xi1> to vector<2x1xi1>
    %578 = vector.broadcast %577 : vector<2x1xi1> to vector<2x32xi1>
    %579 = arith.select %578, %474, %574 : vector<2x32xi1>, vector<2x32xf32>
    %580 = vector.shape_cast %539 : vector<2x1xi1> to vector<2x1xi1>
    %581 = vector.broadcast %580 : vector<2x1xi1> to vector<2x32xi1>
    %582 = arith.select %581, %477, %576 : vector<2x32xi1>, vector<2x32xf32>
    %cst_149 = arith.constant 0.000000e+00 : f32
    %583 = vector.broadcast %cst_149 : f32 to vector<2x32xf32>
    %584 = vector.shape_cast %539 : vector<2x1xi1> to vector<2x1xi1>
    %585 = vector.broadcast %584 : vector<2x1xi1> to vector<2x32xi1>
    %586 = arith.select %585, %583, %576 : vector<2x32xi1>, vector<2x32xf32>
    %587 = arith.index_cast %534 : i32 to index
    %c0_150 = arith.constant 0 : index
    %c0_151 = arith.constant 0 : index
    %588 = vector.load %arg2[%587, %c0_150, %c0_151] : memref<8x2x128xbf16, #tpu.memory_space<vmem>>, vector<1x2x128xbf16>
    %589 = vector.shape_cast %588 : vector<1x2x128xbf16> to vector<2x128xbf16>
    %590 = arith.extf %589 : vector<2x128xbf16> to vector<2x128xf32>
    %591 = arith.truncf %519 : vector<2x32xf32> to vector<2x32xbf16>
    %cst_152 = arith.constant dense<0.000000e+00> : vector<2x128xf32>
    %592 = tpu.matmul %591, %4, %cst_152 {dimension_numbers = #tpu.dot_dimension_numbers<[1], [0], [0], [1], [0, 0, 1, 1], [], []>} : vector<2x32xbf16>, vector<32x128xbf16>, vector<2x128xf32> -> vector<2x128xf32>
    %593 = arith.addf %590, %592 : vector<2x128xf32>
    %594 = vector.extract_strided_slice %593 {offsets = [0, 0], sizes = [2, 32], strides = [1, 1]} : vector<2x128xf32> to vector<2x32xf32>
    %595 = arith.negf %594 : vector<2x32xf32>
    %596 = math.exp %595 : vector<2x32xf32>
    %cst_153 = arith.constant 1.000000e+00 : f32
    %597 = vector.broadcast %cst_153 : f32 to vector<2x32xf32>
    %598 = arith.addf %597, %596 : vector<2x32xf32>
    %599 = arith.divf %597, %598 : vector<2x32xf32>
    %600 = vector.extract_strided_slice %593 {offsets = [0, 32], sizes = [2, 32], strides = [1, 1]} : vector<2x128xf32> to vector<2x32xf32>
    %601 = arith.negf %600 : vector<2x32xf32>
    %602 = math.exp %601 : vector<2x32xf32>
    %cst_154 = arith.constant 1.000000e+00 : f32
    %603 = vector.broadcast %cst_154 : f32 to vector<2x32xf32>
    %604 = arith.addf %603, %602 : vector<2x32xf32>
    %605 = arith.divf %603, %604 : vector<2x32xf32>
    %606 = vector.extract_strided_slice %593 {offsets = [0, 64], sizes = [2, 32], strides = [1, 1]} : vector<2x128xf32> to vector<2x32xf32>
    %607 = math.tanh %606 : vector<2x32xf32>
    %608 = vector.extract_strided_slice %593 {offsets = [0, 96], sizes = [2, 32], strides = [1, 1]} : vector<2x128xf32> to vector<2x32xf32>
    %609 = arith.negf %608 : vector<2x32xf32>
    %610 = math.exp %609 : vector<2x32xf32>
    %cst_155 = arith.constant 1.000000e+00 : f32
    %611 = vector.broadcast %cst_155 : f32 to vector<2x32xf32>
    %612 = arith.addf %611, %610 : vector<2x32xf32>
    %613 = arith.divf %611, %612 : vector<2x32xf32>
    %614 = arith.mulf %605, %516 : vector<2x32xf32>
    %615 = arith.mulf %599, %607 : vector<2x32xf32>
    %616 = arith.addf %614, %615 : vector<2x32xf32>
    %617 = math.tanh %616 : vector<2x32xf32>
    %618 = arith.mulf %613, %617 : vector<2x32xf32>
    %619 = vector.shape_cast %544 : vector<2x1xi1> to vector<2x1xi1>
    %620 = vector.broadcast %619 : vector<2x1xi1> to vector<2x32xi1>
    %621 = arith.select %620, %516, %616 : vector<2x32xi1>, vector<2x32xf32>
    %622 = vector.shape_cast %544 : vector<2x1xi1> to vector<2x1xi1>
    %623 = vector.broadcast %622 : vector<2x1xi1> to vector<2x32xi1>
    %624 = arith.select %623, %519, %618 : vector<2x32xi1>, vector<2x32xf32>
    %cst_156 = arith.constant 0.000000e+00 : f32
    %625 = vector.broadcast %cst_156 : f32 to vector<2x32xf32>
    %626 = vector.shape_cast %544 : vector<2x1xi1> to vector<2x1xi1>
    %627 = vector.broadcast %626 : vector<2x1xi1> to vector<2x32xi1>
    %628 = arith.select %627, %625, %618 : vector<2x32xi1>, vector<2x32xf32>
    %629 = arith.truncf %586 : vector<2x32xf32> to vector<2x32xbf16>
    %630 = arith.index_cast %c5_i32 : i32 to index
    %c0_157 = arith.constant 0 : index
    %c0_158 = arith.constant 0 : index
    %631 = vector.load %arg7[%630, %c0_157, %c0_158] : memref<8x2x32xbf16, #tpu.memory_space<vmem>>, vector<1x2x32xbf16>
    %632 = vector.shape_cast %631 : vector<1x2x32xbf16> to vector<2x32xbf16>
    %633 = vector.shape_cast %629 : vector<2x32xbf16> to vector<1x2x32xbf16>
    tpu.vector_store %arg7[%630, %c0_157, %c0_158], %633 {strides = array<i32>} : memref<8x2x32xbf16, #tpu.memory_space<vmem>>, vector<1x2x32xbf16>,
    %634 = arith.truncf %628 : vector<2x32xf32> to vector<2x32xbf16>
    %635 = arith.index_cast %534 : i32 to index
    %c0_159 = arith.constant 0 : index
    %c0_160 = arith.constant 0 : index
    %636 = vector.load %arg8[%635, %c0_159, %c0_160] : memref<8x2x32xbf16, #tpu.memory_space<vmem>>, vector<1x2x32xbf16>
    %637 = vector.shape_cast %636 : vector<1x2x32xbf16> to vector<2x32xbf16>
    %638 = vector.shape_cast %634 : vector<2x32xbf16> to vector<1x2x32xbf16>
    tpu.vector_store %arg8[%635, %c0_159, %c0_160], %638 {strides = array<i32>} : memref<8x2x32xbf16, #tpu.memory_space<vmem>>, vector<1x2x32xbf16>,
    %c6_i32 = arith.constant 6 : i32
    %c7_i32_161 = arith.constant 7 : i32
    %639 = arith.subi %c7_i32_161, %c6_i32 : i32
    %640 = arith.index_cast %c6_i32 : i32 to index
    %c0_162 = arith.constant 0 : index
    %c0_163 = arith.constant 0 : index
    %641 = vector.load %arg3[%640, %c0_162, %c0_163] : memref<8x2x1xi32, #tpu.memory_space<vmem>>, vector<1x2x1xi32>
    %642 = vector.shape_cast %641 : vector<1x2x1xi32> to vector<2x1xi32>
    %c0_i32_164 = arith.constant 0 : i32
    %643 = vector.broadcast %c0_i32_164 : i32 to vector<2x1xi32>
    %644 = arith.cmpi ne, %642, %643 : vector<2x1xi32>
    %645 = arith.index_cast %639 : i32 to index
    %c0_165 = arith.constant 0 : index
    %c0_166 = arith.constant 0 : index
    %646 = vector.load %arg4[%645, %c0_165, %c0_166] : memref<8x2x1xi32, #tpu.memory_space<vmem>>, vector<1x2x1xi32>
    %647 = vector.shape_cast %646 : vector<1x2x1xi32> to vector<2x1xi32>
    %c0_i32_167 = arith.constant 0 : i32
    %648 = vector.broadcast %c0_i32_167 : i32 to vector<2x1xi32>
    %649 = arith.cmpi ne, %647, %648 : vector<2x1xi32>
    %650 = arith.index_cast %c6_i32 : i32 to index
    %c0_168 = arith.constant 0 : index
    %c0_169 = arith.constant 0 : index
    %651 = vector.load %arg1[%650, %c0_168, %c0_169] : memref<8x2x128xbf16, #tpu.memory_space<vmem>>, vector<1x2x128xbf16>
    %652 = vector.shape_cast %651 : vector<1x2x128xbf16> to vector<2x128xbf16>
    %653 = arith.extf %652 : vector<2x128xbf16> to vector<2x128xf32>
    %654 = arith.truncf %582 : vector<2x32xf32> to vector<2x32xbf16>
    %cst_170 = arith.constant dense<0.000000e+00> : vector<2x128xf32>
    %655 = tpu.matmul %654, %3, %cst_170 {dimension_numbers = #tpu.dot_dimension_numbers<[1], [0], [0], [1], [0, 0, 1, 1], [], []>} : vector<2x32xbf16>, vector<32x128xbf16>, vector<2x128xf32> -> vector<2x128xf32>
    %656 = arith.addf %653, %655 : vector<2x128xf32>
    %657 = vector.extract_strided_slice %656 {offsets = [0, 0], sizes = [2, 32], strides = [1, 1]} : vector<2x128xf32> to vector<2x32xf32>
    %658 = arith.negf %657 : vector<2x32xf32>
    %659 = math.exp %658 : vector<2x32xf32>
    %cst_171 = arith.constant 1.000000e+00 : f32
    %660 = vector.broadcast %cst_171 : f32 to vector<2x32xf32>
    %661 = arith.addf %660, %659 : vector<2x32xf32>
    %662 = arith.divf %660, %661 : vector<2x32xf32>
    %663 = vector.extract_strided_slice %656 {offsets = [0, 32], sizes = [2, 32], strides = [1, 1]} : vector<2x128xf32> to vector<2x32xf32>
    %664 = arith.negf %663 : vector<2x32xf32>
    %665 = math.exp %664 : vector<2x32xf32>
    %cst_172 = arith.constant 1.000000e+00 : f32
    %666 = vector.broadcast %cst_172 : f32 to vector<2x32xf32>
    %667 = arith.addf %666, %665 : vector<2x32xf32>
    %668 = arith.divf %666, %667 : vector<2x32xf32>
    %669 = vector.extract_strided_slice %656 {offsets = [0, 64], sizes = [2, 32], strides = [1, 1]} : vector<2x128xf32> to vector<2x32xf32>
    %670 = math.tanh %669 : vector<2x32xf32>
    %671 = vector.extract_strided_slice %656 {offsets = [0, 96], sizes = [2, 32], strides = [1, 1]} : vector<2x128xf32> to vector<2x32xf32>
    %672 = arith.negf %671 : vector<2x32xf32>
    %673 = math.exp %672 : vector<2x32xf32>
    %cst_173 = arith.constant 1.000000e+00 : f32
    %674 = vector.broadcast %cst_173 : f32 to vector<2x32xf32>
    %675 = arith.addf %674, %673 : vector<2x32xf32>
    %676 = arith.divf %674, %675 : vector<2x32xf32>
    %677 = arith.mulf %668, %579 : vector<2x32xf32>
    %678 = arith.mulf %662, %670 : vector<2x32xf32>
    %679 = arith.addf %677, %678 : vector<2x32xf32>
    %680 = math.tanh %679 : vector<2x32xf32>
    %681 = arith.mulf %676, %680 : vector<2x32xf32>
    %682 = vector.shape_cast %644 : vector<2x1xi1> to vector<2x1xi1>
    %683 = vector.broadcast %682 : vector<2x1xi1> to vector<2x32xi1>
    %684 = arith.select %683, %579, %679 : vector<2x32xi1>, vector<2x32xf32>
    %685 = vector.shape_cast %644 : vector<2x1xi1> to vector<2x1xi1>
    %686 = vector.broadcast %685 : vector<2x1xi1> to vector<2x32xi1>
    %687 = arith.select %686, %582, %681 : vector<2x32xi1>, vector<2x32xf32>
    %cst_174 = arith.constant 0.000000e+00 : f32
    %688 = vector.broadcast %cst_174 : f32 to vector<2x32xf32>
    %689 = vector.shape_cast %644 : vector<2x1xi1> to vector<2x1xi1>
    %690 = vector.broadcast %689 : vector<2x1xi1> to vector<2x32xi1>
    %691 = arith.select %690, %688, %681 : vector<2x32xi1>, vector<2x32xf32>
    %692 = arith.index_cast %639 : i32 to index
    %c0_175 = arith.constant 0 : index
    %c0_176 = arith.constant 0 : index
    %693 = vector.load %arg2[%692, %c0_175, %c0_176] : memref<8x2x128xbf16, #tpu.memory_space<vmem>>, vector<1x2x128xbf16>
    %694 = vector.shape_cast %693 : vector<1x2x128xbf16> to vector<2x128xbf16>
    %695 = arith.extf %694 : vector<2x128xbf16> to vector<2x128xf32>
    %696 = arith.truncf %624 : vector<2x32xf32> to vector<2x32xbf16>
    %cst_177 = arith.constant dense<0.000000e+00> : vector<2x128xf32>
    %697 = tpu.matmul %696, %4, %cst_177 {dimension_numbers = #tpu.dot_dimension_numbers<[1], [0], [0], [1], [0, 0, 1, 1], [], []>} : vector<2x32xbf16>, vector<32x128xbf16>, vector<2x128xf32> -> vector<2x128xf32>
    %698 = arith.addf %695, %697 : vector<2x128xf32>
    %699 = vector.extract_strided_slice %698 {offsets = [0, 0], sizes = [2, 32], strides = [1, 1]} : vector<2x128xf32> to vector<2x32xf32>
    %700 = arith.negf %699 : vector<2x32xf32>
    %701 = math.exp %700 : vector<2x32xf32>
    %cst_178 = arith.constant 1.000000e+00 : f32
    %702 = vector.broadcast %cst_178 : f32 to vector<2x32xf32>
    %703 = arith.addf %702, %701 : vector<2x32xf32>
    %704 = arith.divf %702, %703 : vector<2x32xf32>
    %705 = vector.extract_strided_slice %698 {offsets = [0, 32], sizes = [2, 32], strides = [1, 1]} : vector<2x128xf32> to vector<2x32xf32>
    %706 = arith.negf %705 : vector<2x32xf32>
    %707 = math.exp %706 : vector<2x32xf32>
    %cst_179 = arith.constant 1.000000e+00 : f32
    %708 = vector.broadcast %cst_179 : f32 to vector<2x32xf32>
    %709 = arith.addf %708, %707 : vector<2x32xf32>
    %710 = arith.divf %708, %709 : vector<2x32xf32>
    %711 = vector.extract_strided_slice %698 {offsets = [0, 64], sizes = [2, 32], strides = [1, 1]} : vector<2x128xf32> to vector<2x32xf32>
    %712 = math.tanh %711 : vector<2x32xf32>
    %713 = vector.extract_strided_slice %698 {offsets = [0, 96], sizes = [2, 32], strides = [1, 1]} : vector<2x128xf32> to vector<2x32xf32>
    %714 = arith.negf %713 : vector<2x32xf32>
    %715 = math.exp %714 : vector<2x32xf32>
    %cst_180 = arith.constant 1.000000e+00 : f32
    %716 = vector.broadcast %cst_180 : f32 to vector<2x32xf32>
    %717 = arith.addf %716, %715 : vector<2x32xf32>
    %718 = arith.divf %716, %717 : vector<2x32xf32>
    %719 = arith.mulf %710, %621 : vector<2x32xf32>
    %720 = arith.mulf %704, %712 : vector<2x32xf32>
    %721 = arith.addf %719, %720 : vector<2x32xf32>
    %722 = math.tanh %721 : vector<2x32xf32>
    %723 = arith.mulf %718, %722 : vector<2x32xf32>
    %724 = vector.shape_cast %649 : vector<2x1xi1> to vector<2x1xi1>
    %725 = vector.broadcast %724 : vector<2x1xi1> to vector<2x32xi1>
    %726 = arith.select %725, %621, %721 : vector<2x32xi1>, vector<2x32xf32>
    %727 = vector.shape_cast %649 : vector<2x1xi1> to vector<2x1xi1>
    %728 = vector.broadcast %727 : vector<2x1xi1> to vector<2x32xi1>
    %729 = arith.select %728, %624, %723 : vector<2x32xi1>, vector<2x32xf32>
    %cst_181 = arith.constant 0.000000e+00 : f32
    %730 = vector.broadcast %cst_181 : f32 to vector<2x32xf32>
    %731 = vector.shape_cast %649 : vector<2x1xi1> to vector<2x1xi1>
    %732 = vector.broadcast %731 : vector<2x1xi1> to vector<2x32xi1>
    %733 = arith.select %732, %730, %723 : vector<2x32xi1>, vector<2x32xf32>
    %734 = arith.truncf %691 : vector<2x32xf32> to vector<2x32xbf16>
    %735 = arith.index_cast %c6_i32 : i32 to index
    %c0_182 = arith.constant 0 : index
    %c0_183 = arith.constant 0 : index
    %736 = vector.load %arg7[%735, %c0_182, %c0_183] : memref<8x2x32xbf16, #tpu.memory_space<vmem>>, vector<1x2x32xbf16>
    %737 = vector.shape_cast %736 : vector<1x2x32xbf16> to vector<2x32xbf16>
    %738 = vector.shape_cast %734 : vector<2x32xbf16> to vector<1x2x32xbf16>
    tpu.vector_store %arg7[%735, %c0_182, %c0_183], %738 {strides = array<i32>} : memref<8x2x32xbf16, #tpu.memory_space<vmem>>, vector<1x2x32xbf16>,
    %739 = arith.truncf %733 : vector<2x32xf32> to vector<2x32xbf16>
    %740 = arith.index_cast %639 : i32 to index
    %c0_184 = arith.constant 0 : index
    %c0_185 = arith.constant 0 : index
    %741 = vector.load %arg8[%740, %c0_184, %c0_185] : memref<8x2x32xbf16, #tpu.memory_space<vmem>>, vector<1x2x32xbf16>
    %742 = vector.shape_cast %741 : vector<1x2x32xbf16> to vector<2x32xbf16>
    %743 = vector.shape_cast %739 : vector<2x32xbf16> to vector<1x2x32xbf16>
    tpu.vector_store %arg8[%740, %c0_184, %c0_185], %743 {strides = array<i32>} : memref<8x2x32xbf16, #tpu.memory_space<vmem>>, vector<1x2x32xbf16>,
    %c7_i32_186 = arith.constant 7 : i32
    %c7_i32_187 = arith.constant 7 : i32
    %744 = arith.subi %c7_i32_187, %c7_i32_186 : i32
    %745 = arith.index_cast %c7_i32_186 : i32 to index
    %c0_188 = arith.constant 0 : index
    %c0_189 = arith.constant 0 : index
    %746 = vector.load %arg3[%745, %c0_188, %c0_189] : memref<8x2x1xi32, #tpu.memory_space<vmem>>, vector<1x2x1xi32>
    %747 = vector.shape_cast %746 : vector<1x2x1xi32> to vector<2x1xi32>
    %c0_i32_190 = arith.constant 0 : i32
    %748 = vector.broadcast %c0_i32_190 : i32 to vector<2x1xi32>
    %749 = arith.cmpi ne, %747, %748 : vector<2x1xi32>
    %750 = arith.index_cast %744 : i32 to index
    %c0_191 = arith.constant 0 : index
    %c0_192 = arith.constant 0 : index
    %751 = vector.load %arg4[%750, %c0_191, %c0_192] : memref<8x2x1xi32, #tpu.memory_space<vmem>>, vector<1x2x1xi32>
    %752 = vector.shape_cast %751 : vector<1x2x1xi32> to vector<2x1xi32>
    %c0_i32_193 = arith.constant 0 : i32
    %753 = vector.broadcast %c0_i32_193 : i32 to vector<2x1xi32>
    %754 = arith.cmpi ne, %752, %753 : vector<2x1xi32>
    %755 = arith.index_cast %c7_i32_186 : i32 to index
    %c0_194 = arith.constant 0 : index
    %c0_195 = arith.constant 0 : index
    %756 = vector.load %arg1[%755, %c0_194, %c0_195] : memref<8x2x128xbf16, #tpu.memory_space<vmem>>, vector<1x2x128xbf16>
    %757 = vector.shape_cast %756 : vector<1x2x128xbf16> to vector<2x128xbf16>
    %758 = arith.extf %757 : vector<2x128xbf16> to vector<2x128xf32>
    %759 = arith.truncf %687 : vector<2x32xf32> to vector<2x32xbf16>
    %cst_196 = arith.constant dense<0.000000e+00> : vector<2x128xf32>
    %760 = tpu.matmul %759, %3, %cst_196 {dimension_numbers = #tpu.dot_dimension_numbers<[1], [0], [0], [1], [0, 0, 1, 1], [], []>} : vector<2x32xbf16>, vector<32x128xbf16>, vector<2x128xf32> -> vector<2x128xf32>
    %761 = arith.addf %758, %760 : vector<2x128xf32>
    %762 = vector.extract_strided_slice %761 {offsets = [0, 0], sizes = [2, 32], strides = [1, 1]} : vector<2x128xf32> to vector<2x32xf32>
    %763 = arith.negf %762 : vector<2x32xf32>
    %764 = math.exp %763 : vector<2x32xf32>
    %cst_197 = arith.constant 1.000000e+00 : f32
    %765 = vector.broadcast %cst_197 : f32 to vector<2x32xf32>
    %766 = arith.addf %765, %764 : vector<2x32xf32>
    %767 = arith.divf %765, %766 : vector<2x32xf32>
    %768 = vector.extract_strided_slice %761 {offsets = [0, 32], sizes = [2, 32], strides = [1, 1]} : vector<2x128xf32> to vector<2x32xf32>
    %769 = arith.negf %768 : vector<2x32xf32>
    %770 = math.exp %769 : vector<2x32xf32>
    %cst_198 = arith.constant 1.000000e+00 : f32
    %771 = vector.broadcast %cst_198 : f32 to vector<2x32xf32>
    %772 = arith.addf %771, %770 : vector<2x32xf32>
    %773 = arith.divf %771, %772 : vector<2x32xf32>
    %774 = vector.extract_strided_slice %761 {offsets = [0, 64], sizes = [2, 32], strides = [1, 1]} : vector<2x128xf32> to vector<2x32xf32>
    %775 = math.tanh %774 : vector<2x32xf32>
    %776 = vector.extract_strided_slice %761 {offsets = [0, 96], sizes = [2, 32], strides = [1, 1]} : vector<2x128xf32> to vector<2x32xf32>
    %777 = arith.negf %776 : vector<2x32xf32>
    %778 = math.exp %777 : vector<2x32xf32>
    %cst_199 = arith.constant 1.000000e+00 : f32
    %779 = vector.broadcast %cst_199 : f32 to vector<2x32xf32>
    %780 = arith.addf %779, %778 : vector<2x32xf32>
    %781 = arith.divf %779, %780 : vector<2x32xf32>
    %782 = arith.mulf %773, %684 : vector<2x32xf32>
    %783 = arith.mulf %767, %775 : vector<2x32xf32>
    %784 = arith.addf %782, %783 : vector<2x32xf32>
    %785 = math.tanh %784 : vector<2x32xf32>
    %786 = arith.mulf %781, %785 : vector<2x32xf32>
    %787 = vector.shape_cast %749 : vector<2x1xi1> to vector<2x1xi1>
    %788 = vector.broadcast %787 : vector<2x1xi1> to vector<2x32xi1>
    %789 = arith.select %788, %684, %784 : vector<2x32xi1>, vector<2x32xf32>
    %790 = vector.shape_cast %749 : vector<2x1xi1> to vector<2x1xi1>
    %791 = vector.broadcast %790 : vector<2x1xi1> to vector<2x32xi1>
    %792 = arith.select %791, %687, %786 : vector<2x32xi1>, vector<2x32xf32>
    %cst_200 = arith.constant 0.000000e+00 : f32
    %793 = vector.broadcast %cst_200 : f32 to vector<2x32xf32>
    %794 = vector.shape_cast %749 : vector<2x1xi1> to vector<2x1xi1>
    %795 = vector.broadcast %794 : vector<2x1xi1> to vector<2x32xi1>
    %796 = arith.select %795, %793, %786 : vector<2x32xi1>, vector<2x32xf32>
    %797 = arith.index_cast %744 : i32 to index
    %c0_201 = arith.constant 0 : index
    %c0_202 = arith.constant 0 : index
    %798 = vector.load %arg2[%797, %c0_201, %c0_202] : memref<8x2x128xbf16, #tpu.memory_space<vmem>>, vector<1x2x128xbf16>
    %799 = vector.shape_cast %798 : vector<1x2x128xbf16> to vector<2x128xbf16>
    %800 = arith.extf %799 : vector<2x128xbf16> to vector<2x128xf32>
    %801 = arith.truncf %729 : vector<2x32xf32> to vector<2x32xbf16>
    %cst_203 = arith.constant dense<0.000000e+00> : vector<2x128xf32>
    %802 = tpu.matmul %801, %4, %cst_203 {dimension_numbers = #tpu.dot_dimension_numbers<[1], [0], [0], [1], [0, 0, 1, 1], [], []>} : vector<2x32xbf16>, vector<32x128xbf16>, vector<2x128xf32> -> vector<2x128xf32>
    %803 = arith.addf %800, %802 : vector<2x128xf32>
    %804 = vector.extract_strided_slice %803 {offsets = [0, 0], sizes = [2, 32], strides = [1, 1]} : vector<2x128xf32> to vector<2x32xf32>
    %805 = arith.negf %804 : vector<2x32xf32>
    %806 = math.exp %805 : vector<2x32xf32>
    %cst_204 = arith.constant 1.000000e+00 : f32
    %807 = vector.broadcast %cst_204 : f32 to vector<2x32xf32>
    %808 = arith.addf %807, %806 : vector<2x32xf32>
    %809 = arith.divf %807, %808 : vector<2x32xf32>
    %810 = vector.extract_strided_slice %803 {offsets = [0, 32], sizes = [2, 32], strides = [1, 1]} : vector<2x128xf32> to vector<2x32xf32>
    %811 = arith.negf %810 : vector<2x32xf32>
    %812 = math.exp %811 : vector<2x32xf32>
    %cst_205 = arith.constant 1.000000e+00 : f32
    %813 = vector.broadcast %cst_205 : f32 to vector<2x32xf32>
    %814 = arith.addf %813, %812 : vector<2x32xf32>
    %815 = arith.divf %813, %814 : vector<2x32xf32>
    %816 = vector.extract_strided_slice %803 {offsets = [0, 64], sizes = [2, 32], strides = [1, 1]} : vector<2x128xf32> to vector<2x32xf32>
    %817 = math.tanh %816 : vector<2x32xf32>
    %818 = vector.extract_strided_slice %803 {offsets = [0, 96], sizes = [2, 32], strides = [1, 1]} : vector<2x128xf32> to vector<2x32xf32>
    %819 = arith.negf %818 : vector<2x32xf32>
    %820 = math.exp %819 : vector<2x32xf32>
    %cst_206 = arith.constant 1.000000e+00 : f32
    %821 = vector.broadcast %cst_206 : f32 to vector<2x32xf32>
    %822 = arith.addf %821, %820 : vector<2x32xf32>
    %823 = arith.divf %821, %822 : vector<2x32xf32>
    %824 = arith.mulf %815, %726 : vector<2x32xf32>
    %825 = arith.mulf %809, %817 : vector<2x32xf32>
    %826 = arith.addf %824, %825 : vector<2x32xf32>
    %827 = math.tanh %826 : vector<2x32xf32>
    %828 = arith.mulf %823, %827 : vector<2x32xf32>
    %829 = vector.shape_cast %754 : vector<2x1xi1> to vector<2x1xi1>
    %830 = vector.broadcast %829 : vector<2x1xi1> to vector<2x32xi1>
    %831 = arith.select %830, %726, %826 : vector<2x32xi1>, vector<2x32xf32>
    %832 = vector.shape_cast %754 : vector<2x1xi1> to vector<2x1xi1>
    %833 = vector.broadcast %832 : vector<2x1xi1> to vector<2x32xi1>
    %834 = arith.select %833, %729, %828 : vector<2x32xi1>, vector<2x32xf32>
    %cst_207 = arith.constant 0.000000e+00 : f32
    %835 = vector.broadcast %cst_207 : f32 to vector<2x32xf32>
    %836 = vector.shape_cast %754 : vector<2x1xi1> to vector<2x1xi1>
    %837 = vector.broadcast %836 : vector<2x1xi1> to vector<2x32xi1>
    %838 = arith.select %837, %835, %828 : vector<2x32xi1>, vector<2x32xf32>
    %839 = arith.truncf %796 : vector<2x32xf32> to vector<2x32xbf16>
    %840 = arith.index_cast %c7_i32_186 : i32 to index
    %c0_208 = arith.constant 0 : index
    %c0_209 = arith.constant 0 : index
    %841 = vector.load %arg7[%840, %c0_208, %c0_209] : memref<8x2x32xbf16, #tpu.memory_space<vmem>>, vector<1x2x32xbf16>
    %842 = vector.shape_cast %841 : vector<1x2x32xbf16> to vector<2x32xbf16>
    %843 = vector.shape_cast %839 : vector<2x32xbf16> to vector<1x2x32xbf16>
    tpu.vector_store %arg7[%840, %c0_208, %c0_209], %843 {strides = array<i32>} : memref<8x2x32xbf16, #tpu.memory_space<vmem>>, vector<1x2x32xbf16>,
    %844 = arith.truncf %838 : vector<2x32xf32> to vector<2x32xbf16>
    %845 = arith.index_cast %744 : i32 to index
    %c0_210 = arith.constant 0 : index
    %c0_211 = arith.constant 0 : index
    %846 = vector.load %arg8[%845, %c0_210, %c0_211] : memref<8x2x32xbf16, #tpu.memory_space<vmem>>, vector<1x2x32xbf16>
    %847 = vector.shape_cast %846 : vector<1x2x32xbf16> to vector<2x32xbf16>
    %848 = vector.shape_cast %844 : vector<2x32xbf16> to vector<1x2x32xbf16>
    tpu.vector_store %arg8[%845, %c0_210, %c0_211], %848 {strides = array<i32>} : memref<8x2x32xbf16, #tpu.memory_space<vmem>>, vector<1x2x32xbf16>,
    %c8_i32 = arith.constant 8 : i32
    %c0_212 = arith.constant 0 : index
    %c0_213 = arith.constant 0 : index
    %849 = vector.load %arg11[%c0_212, %c0_213] : memref<2x32xf32, #tpu.memory_space<vmem>>, vector<2x32xf32>
    tpu.vector_store %arg11[%c0_212, %c0_213], %792 {strides = array<i32>} : memref<2x32xf32, #tpu.memory_space<vmem>>, vector<2x32xf32>,
    %c0_214 = arith.constant 0 : index
    %c0_215 = arith.constant 0 : index
    %850 = vector.load %arg12[%c0_214, %c0_215] : memref<2x32xf32, #tpu.memory_space<vmem>>, vector<2x32xf32>
    tpu.vector_store %arg12[%c0_214, %c0_215], %789 {strides = array<i32>} : memref<2x32xf32, #tpu.memory_space<vmem>>, vector<2x32xf32>,
    %c0_216 = arith.constant 0 : index
    %c0_217 = arith.constant 0 : index
    %851 = vector.load %arg13[%c0_216, %c0_217] : memref<2x32xf32, #tpu.memory_space<vmem>>, vector<2x32xf32>
    tpu.vector_store %arg13[%c0_216, %c0_217], %834 {strides = array<i32>} : memref<2x32xf32, #tpu.memory_space<vmem>>, vector<2x32xf32>,
    %c0_218 = arith.constant 0 : index
    %c0_219 = arith.constant 0 : index
    %852 = vector.load %arg14[%c0_218, %c0_219] : memref<2x32xf32, #tpu.memory_space<vmem>>, vector<2x32xf32>
    tpu.vector_store %arg14[%c0_218, %c0_219], %831 {strides = array<i32>} : memref<2x32xf32, #tpu.memory_space<vmem>>, vector<2x32xf32>,
    %c0_i32_220 = arith.constant 0 : i32
    %853 = arith.cmpi eq, %arg0, %c0_i32_220 : i32
    %854 = arith.extui %853 : i1 to i32
    %c0_i32_221 = arith.constant 0 : i32
    %855 = arith.cmpi ne, %854, %c0_i32_221 : i32
    scf.if %855 {
      %c0_222 = arith.constant 0 : index
      %c0_223 = arith.constant 0 : index
      %856 = vector.load %arg9[%c0_222, %c0_223] : memref<2x64xf32, #tpu.memory_space<vmem>>, vector<2x32xf32>
      tpu.vector_store %arg9[%c0_222, %c0_223], %792 {strides = array<i32>} : memref<2x64xf32, #tpu.memory_space<vmem>>, vector<2x32xf32>,
      %c0_224 = arith.constant 0 : index
      %c32 = arith.constant 32 : index
      %857 = vector.load %arg9[%c0_224, %c32] : memref<2x64xf32, #tpu.memory_space<vmem>>, vector<2x32xf32>
      tpu.vector_store %arg9[%c0_224, %c32], %834 {strides = array<i32>} : memref<2x64xf32, #tpu.memory_space<vmem>>, vector<2x32xf32>,
      %c0_225 = arith.constant 0 : index
      %c0_226 = arith.constant 0 : index
      %858 = vector.load %arg10[%c0_225, %c0_226] : memref<2x64xf32, #tpu.memory_space<vmem>>, vector<2x32xf32>
      tpu.vector_store %arg10[%c0_225, %c0_226], %789 {strides = array<i32>} : memref<2x64xf32, #tpu.memory_space<vmem>>, vector<2x32xf32>,
      %c0_227 = arith.constant 0 : index
      %c32_228 = arith.constant 32 : index
      %859 = vector.load %arg10[%c0_227, %c32_228] : memref<2x64xf32, #tpu.memory_space<vmem>>, vector<2x32xf32>
      tpu.vector_store %arg10[%c0_227, %c32_228], %831 {strides = array<i32>} : memref<2x64xf32, #tpu.memory_space<vmem>>, vector<2x32xf32>,
    } else {
    }
    return
  }
  func.func @transform_0(%arg0: i32) -> (i32, i32, i32) {
    %c0_i32 = arith.constant 0 : i32
    %c0_i32_0 = arith.constant 0 : i32
    %c0_i32_1 = arith.constant 0 : i32
    return %arg0, %c0_i32, %c0_i32_0 : i32, i32, i32
  }
  func.func @transform_1(%arg0: i32) -> (i32, i32, i32) {
    %c0_i32 = arith.constant 0 : i32
    %0 = arith.subi %c0_i32, %arg0 : i32
    %c0_i32_0 = arith.constant 0 : i32
    %c1_i32 = arith.constant 1 : i32
    %c0_i32_1 = arith.constant 0 : i32
    return %0, %c0_i32_0, %c1_i32 : i32, i32, i32
  }
  func.func @transform_2(%arg0: i32) -> (i32, i32, i32) {
    %c0_i32 = arith.constant 0 : i32
    %c0_i32_0 = arith.constant 0 : i32
    %c0_i32_1 = arith.constant 0 : i32
    return %arg0, %c0_i32, %c0_i32_0 : i32, i32, i32
  }
  func.func @transform_3(%arg0: i32) -> (i32, i32, i32) {
    %c0_i32 = arith.constant 0 : i32
    %0 = arith.subi %c0_i32, %arg0 : i32
    %c0_i32_0 = arith.constant 0 : i32
    %c0_i32_1 = arith.constant 0 : i32
    %c0_i32_2 = arith.constant 0 : i32
    return %0, %c0_i32_0, %c0_i32_1 : i32, i32, i32
  }
  func.func @transform_4(%arg0: i32) -> (i32, i32) {
    %c0_i32 = arith.constant 0 : i32
    %c0_i32_0 = arith.constant 0 : i32
    %c0_i32_1 = arith.constant 0 : i32
    return %c0_i32, %c0_i32_0 : i32, i32
  }
  func.func @transform_5(%arg0: i32) -> (i32, i32) {
    %c0_i32 = arith.constant 0 : i32
    %c0_i32_0 = arith.constant 0 : i32
    %c0_i32_1 = arith.constant 0 : i32
    return %c0_i32, %c0_i32_0 : i32, i32
  }
  func.func @transform_6(%arg0: i32) -> (i32, i32, i32) {
    %c0_i32 = arith.constant 0 : i32
    %c0_i32_0 = arith.constant 0 : i32
    %c0_i32_1 = arith.constant 0 : i32
    return %arg0, %c0_i32, %c0_i32_0 : i32, i32, i32
  }
  func.func @transform_7(%arg0: i32) -> (i32, i32, i32) {
    %c0_i32 = arith.constant 0 : i32
    %0 = arith.subi %c0_i32, %arg0 : i32
    %c0_i32_0 = arith.constant 0 : i32
    %c0_i32_1 = arith.constant 0 : i32
    %c0_i32_2 = arith.constant 0 : i32
    return %0, %c0_i32_0, %c0_i32_1 : i32, i32, i32
  }
  func.func @transform_8(%arg0: i32) -> (i32, i32) {
    %c0_i32 = arith.constant 0 : i32
    %c0_i32_0 = arith.constant 0 : i32
    %c0_i32_1 = arith.constant 0 : i32
    return %c0_i32, %c0_i32_0 : i32, i32
  }
  func.func @transform_9(%arg0: i32) -> (i32, i32) {
    %c0_i32 = arith.constant 0 : i32
    %c0_i32_0 = arith.constant 0 : i32
    %c0_i32_1 = arith.constant 0 : i32
    return %c0_i32, %c0_i32_0 : i32, i32
  }
}

module attributes {stable_mosaic.version = 11 : i64} {
  func.func @_bilstm_chunk_kernel(%arg0: i32, %arg1: memref<8x2x128xbf16, #tpu.memory_space<vmem>>, %arg2: memref<8x2x128xbf16, #tpu.memory_space<vmem>>, %arg3: memref<8x2x1xi32, #tpu.memory_space<vmem>>, %arg4: memref<8x2x1xi32, #tpu.memory_space<vmem>>, %arg5: memref<32x128xbf16, #tpu.memory_space<vmem>>, %arg6: memref<32x128xbf16, #tpu.memory_space<vmem>>, %arg7: memref<8x2x32xbf16, #tpu.memory_space<vmem>>, %arg8: memref<8x2x32xbf16, #tpu.memory_space<vmem>>, %arg9: memref<2x64xf32, #tpu.memory_space<vmem>>, %arg10: memref<2x64xf32, #tpu.memory_space<vmem>>, %arg11: memref<2x32xf32, #tpu.memory_space<vmem>>, %arg12: memref<2x32xf32, #tpu.memory_space<vmem>>, %arg13: memref<2x32xf32, #tpu.memory_space<vmem>>, %arg14: memref<2x32xf32, #tpu.memory_space<vmem>>) attributes {dimension_semantics = [#tpu.dimension_semantics<arbitrary>], iteration_bounds = array<i64: 1>, scalar_prefetch = 0 : i64, scratch_operands = 4 : i64, tpu.core_type = #tpu.core_type<tc>, window_params = [{transform_indices = @transform_0, window_bounds = array<i64: 8, 2, 128>}, {transform_indices = @transform_1, window_bounds = array<i64: 8, 2, 128>}, {transform_indices = @transform_2, window_bounds = array<i64: 8, 2, 1>}, {transform_indices = @transform_3, window_bounds = array<i64: 8, 2, 1>}, {pipeline_mode = #tpu.pipeline_mode<synchronous>, transform_indices = @transform_4, window_bounds = array<i64: 32, 128>}, {pipeline_mode = #tpu.pipeline_mode<synchronous>, transform_indices = @transform_5, window_bounds = array<i64: 32, 128>}, {transform_indices = @transform_6, window_bounds = array<i64: 8, 2, 32>}, {transform_indices = @transform_7, window_bounds = array<i64: 8, 2, 32>}, {pipeline_mode = #tpu.pipeline_mode<synchronous>, transform_indices = @transform_8, window_bounds = array<i64: 2, 64>}, {pipeline_mode = #tpu.pipeline_mode<synchronous>, transform_indices = @transform_9, window_bounds = array<i64: 2, 64>}]} {
    %c0_i32 = arith.constant 0 : i32
    %0 = arith.cmpi eq, %arg0, %c0_i32 : i32
    %1 = arith.extui %0 : i1 to i32
    %c0_i32_0 = arith.constant 0 : i32
    %2 = arith.cmpi ne, %1, %c0_i32_0 : i32
    scf.if %2 {
      %cst_222 = arith.constant 0.000000e+00 : f32
      %856 = vector.broadcast %cst_222 : f32 to vector<2x32xf32>
      %c0_223 = arith.constant 0 : index
      %c0_224 = arith.constant 0 : index
      %857 = vector.load %arg11[%c0_223, %c0_224] : memref<2x32xf32, #tpu.memory_space<vmem>>, vector<2x32xf32>
      tpu.vector_store %arg11[%c0_223, %c0_224], %856 {strides = array<i32>} : memref<2x32xf32, #tpu.memory_space<vmem>>, vector<2x32xf32>,
      %cst_225 = arith.constant 0.000000e+00 : f32
      %858 = vector.broadcast %cst_225 : f32 to vector<2x32xf32>
      %c0_226 = arith.constant 0 : index
      %c0_227 = arith.constant 0 : index
      %859 = vector.load %arg12[%c0_226, %c0_227] : memref<2x32xf32, #tpu.memory_space<vmem>>, vector<2x32xf32>
      tpu.vector_store %arg12[%c0_226, %c0_227], %858 {strides = array<i32>} : memref<2x32xf32, #tpu.memory_space<vmem>>, vector<2x32xf32>,
      %cst_228 = arith.constant 0.000000e+00 : f32
      %860 = vector.broadcast %cst_228 : f32 to vector<2x32xf32>
      %c0_229 = arith.constant 0 : index
      %c0_230 = arith.constant 0 : index
      %861 = vector.load %arg13[%c0_229, %c0_230] : memref<2x32xf32, #tpu.memory_space<vmem>>, vector<2x32xf32>
      tpu.vector_store %arg13[%c0_229, %c0_230], %860 {strides = array<i32>} : memref<2x32xf32, #tpu.memory_space<vmem>>, vector<2x32xf32>,
      %cst_231 = arith.constant 0.000000e+00 : f32
      %862 = vector.broadcast %cst_231 : f32 to vector<2x32xf32>
      %c0_232 = arith.constant 0 : index
      %c0_233 = arith.constant 0 : index
      %863 = vector.load %arg14[%c0_232, %c0_233] : memref<2x32xf32, #tpu.memory_space<vmem>>, vector<2x32xf32>
      tpu.vector_store %arg14[%c0_232, %c0_233], %862 {strides = array<i32>} : memref<2x32xf32, #tpu.memory_space<vmem>>, vector<2x32xf32>,
    } else {
    }
    %c0 = arith.constant 0 : index
    %c0_1 = arith.constant 0 : index
    %3 = vector.load %arg5[%c0, %c0_1] : memref<32x128xbf16, #tpu.memory_space<vmem>>, vector<32x128xbf16>
    %c0_2 = arith.constant 0 : index
    %c0_3 = arith.constant 0 : index
    %4 = vector.load %arg6[%c0_2, %c0_3] : memref<32x128xbf16, #tpu.memory_space<vmem>>, vector<32x128xbf16>
    %c0_4 = arith.constant 0 : index
    %c0_5 = arith.constant 0 : index
    %5 = vector.load %arg11[%c0_4, %c0_5] : memref<2x32xf32, #tpu.memory_space<vmem>>, vector<2x32xf32>
    %c0_6 = arith.constant 0 : index
    %c0_7 = arith.constant 0 : index
    %6 = vector.load %arg12[%c0_6, %c0_7] : memref<2x32xf32, #tpu.memory_space<vmem>>, vector<2x32xf32>
    %c0_8 = arith.constant 0 : index
    %c0_9 = arith.constant 0 : index
    %7 = vector.load %arg13[%c0_8, %c0_9] : memref<2x32xf32, #tpu.memory_space<vmem>>, vector<2x32xf32>
    %c0_10 = arith.constant 0 : index
    %c0_11 = arith.constant 0 : index
    %8 = vector.load %arg14[%c0_10, %c0_11] : memref<2x32xf32, #tpu.memory_space<vmem>>, vector<2x32xf32>
    %c0_i32_12 = arith.constant 0 : i32
    %c7_i32 = arith.constant 7 : i32
    %9 = arith.subi %c7_i32, %c0_i32_12 : i32
    %10 = arith.index_cast %c0_i32_12 : i32 to index
    %c0_13 = arith.constant 0 : index
    %c0_14 = arith.constant 0 : index
    %11 = vector.load %arg3[%10, %c0_13, %c0_14] : memref<8x2x1xi32, #tpu.memory_space<vmem>>, vector<1x2x1xi32>
    %12 = vector.shape_cast %11 : vector<1x2x1xi32> to vector<2x1xi32>
    %c0_i32_15 = arith.constant 0 : i32
    %13 = vector.broadcast %c0_i32_15 : i32 to vector<2x1xi32>
    %14 = arith.cmpi ne, %12, %13 : vector<2x1xi32>
    %15 = arith.index_cast %9 : i32 to index
    %c0_16 = arith.constant 0 : index
    %c0_17 = arith.constant 0 : index
    %16 = vector.load %arg4[%15, %c0_16, %c0_17] : memref<8x2x1xi32, #tpu.memory_space<vmem>>, vector<1x2x1xi32>
    %17 = vector.shape_cast %16 : vector<1x2x1xi32> to vector<2x1xi32>
    %c0_i32_18 = arith.constant 0 : i32
    %18 = vector.broadcast %c0_i32_18 : i32 to vector<2x1xi32>
    %19 = arith.cmpi ne, %17, %18 : vector<2x1xi32>
    %20 = arith.index_cast %c0_i32_12 : i32 to index
    %c0_19 = arith.constant 0 : index
    %c0_20 = arith.constant 0 : index
    %21 = vector.load %arg1[%20, %c0_19, %c0_20] : memref<8x2x128xbf16, #tpu.memory_space<vmem>>, vector<1x2x128xbf16>
    %22 = vector.shape_cast %21 : vector<1x2x128xbf16> to vector<2x128xbf16>
    %23 = arith.extf %22 : vector<2x128xbf16> to vector<2x128xf32>
    %24 = arith.truncf %5 : vector<2x32xf32> to vector<2x32xbf16>
    %cst = arith.constant dense<0.000000e+00> : vector<2x128xf32>
    %25 = tpu.matmul %24, %3, %cst {dimension_numbers = #tpu.dot_dimension_numbers<[1], [0], [0], [1], [0, 0, 1, 1], [], []>} : vector<2x32xbf16>, vector<32x128xbf16>, vector<2x128xf32> -> vector<2x128xf32>
    %26 = arith.addf %23, %25 : vector<2x128xf32>
    %27 = vector.extract_strided_slice %26 {offsets = [0, 0], sizes = [2, 32], strides = [1, 1]} : vector<2x128xf32> to vector<2x32xf32>
    %28 = arith.negf %27 : vector<2x32xf32>
    %29 = math.exp %28 : vector<2x32xf32>
    %cst_21 = arith.constant 1.000000e+00 : f32
    %30 = vector.broadcast %cst_21 : f32 to vector<2x32xf32>
    %31 = arith.addf %30, %29 : vector<2x32xf32>
    %32 = arith.divf %30, %31 : vector<2x32xf32>
    %33 = vector.extract_strided_slice %26 {offsets = [0, 32], sizes = [2, 32], strides = [1, 1]} : vector<2x128xf32> to vector<2x32xf32>
    %34 = arith.negf %33 : vector<2x32xf32>
    %35 = math.exp %34 : vector<2x32xf32>
    %cst_22 = arith.constant 1.000000e+00 : f32
    %36 = vector.broadcast %cst_22 : f32 to vector<2x32xf32>
    %37 = arith.addf %36, %35 : vector<2x32xf32>
    %38 = arith.divf %36, %37 : vector<2x32xf32>
    %39 = vector.extract_strided_slice %26 {offsets = [0, 64], sizes = [2, 32], strides = [1, 1]} : vector<2x128xf32> to vector<2x32xf32>
    %40 = math.tanh %39 : vector<2x32xf32>
    %41 = vector.extract_strided_slice %26 {offsets = [0, 96], sizes = [2, 32], strides = [1, 1]} : vector<2x128xf32> to vector<2x32xf32>
    %42 = arith.negf %41 : vector<2x32xf32>
    %43 = math.exp %42 : vector<2x32xf32>
    %cst_23 = arith.constant 1.000000e+00 : f32
    %44 = vector.broadcast %cst_23 : f32 to vector<2x32xf32>
    %45 = arith.addf %44, %43 : vector<2x32xf32>
    %46 = arith.divf %44, %45 : vector<2x32xf32>
    %47 = arith.mulf %38, %6 : vector<2x32xf32>
    %48 = arith.mulf %32, %40 : vector<2x32xf32>
    %49 = arith.addf %47, %48 : vector<2x32xf32>
    %50 = math.tanh %49 : vector<2x32xf32>
    %51 = arith.mulf %46, %50 : vector<2x32xf32>
    %52 = vector.shape_cast %14 : vector<2x1xi1> to vector<2x1xi1>
    %53 = vector.broadcast %52 : vector<2x1xi1> to vector<2x32xi1>
    %54 = arith.select %53, %6, %49 : vector<2x32xi1>, vector<2x32xf32>
    %55 = vector.shape_cast %14 : vector<2x1xi1> to vector<2x1xi1>
    %56 = vector.broadcast %55 : vector<2x1xi1> to vector<2x32xi1>
    %57 = arith.select %56, %5, %51 : vector<2x32xi1>, vector<2x32xf32>
    %cst_24 = arith.constant 0.000000e+00 : f32
    %58 = vector.broadcast %cst_24 : f32 to vector<2x32xf32>
    %59 = vector.shape_cast %14 : vector<2x1xi1> to vector<2x1xi1>
    %60 = vector.broadcast %59 : vector<2x1xi1> to vector<2x32xi1>
    %61 = arith.select %60, %58, %51 : vector<2x32xi1>, vector<2x32xf32>
    %62 = arith.index_cast %9 : i32 to index
    %c0_25 = arith.constant 0 : index
    %c0_26 = arith.constant 0 : index
    %63 = vector.load %arg2[%62, %c0_25, %c0_26] : memref<8x2x128xbf16, #tpu.memory_space<vmem>>, vector<1x2x128xbf16>
    %64 = vector.shape_cast %63 : vector<1x2x128xbf16> to vector<2x128xbf16>
    %65 = arith.extf %64 : vector<2x128xbf16> to vector<2x128xf32>
    %66 = arith.truncf %7 : vector<2x32xf32> to vector<2x32xbf16>
    %cst_27 = arith.constant dense<0.000000e+00> : vector<2x128xf32>
    %67 = tpu.matmul %66, %4, %cst_27 {dimension_numbers = #tpu.dot_dimension_numbers<[1], [0], [0], [1], [0, 0, 1, 1], [], []>} : vector<2x32xbf16>, vector<32x128xbf16>, vector<2x128xf32> -> vector<2x128xf32>
    %68 = arith.addf %65, %67 : vector<2x128xf32>
    %69 = vector.extract_strided_slice %68 {offsets = [0, 0], sizes = [2, 32], strides = [1, 1]} : vector<2x128xf32> to vector<2x32xf32>
    %70 = arith.negf %69 : vector<2x32xf32>
    %71 = math.exp %70 : vector<2x32xf32>
    %cst_28 = arith.constant 1.000000e+00 : f32
    %72 = vector.broadcast %cst_28 : f32 to vector<2x32xf32>
    %73 = arith.addf %72, %71 : vector<2x32xf32>
    %74 = arith.divf %72, %73 : vector<2x32xf32>
    %75 = vector.extract_strided_slice %68 {offsets = [0, 32], sizes = [2, 32], strides = [1, 1]} : vector<2x128xf32> to vector<2x32xf32>
    %76 = arith.negf %75 : vector<2x32xf32>
    %77 = math.exp %76 : vector<2x32xf32>
    %cst_29 = arith.constant 1.000000e+00 : f32
    %78 = vector.broadcast %cst_29 : f32 to vector<2x32xf32>
    %79 = arith.addf %78, %77 : vector<2x32xf32>
    %80 = arith.divf %78, %79 : vector<2x32xf32>
    %81 = vector.extract_strided_slice %68 {offsets = [0, 64], sizes = [2, 32], strides = [1, 1]} : vector<2x128xf32> to vector<2x32xf32>
    %82 = math.tanh %81 : vector<2x32xf32>
    %83 = vector.extract_strided_slice %68 {offsets = [0, 96], sizes = [2, 32], strides = [1, 1]} : vector<2x128xf32> to vector<2x32xf32>
    %84 = arith.negf %83 : vector<2x32xf32>
    %85 = math.exp %84 : vector<2x32xf32>
    %cst_30 = arith.constant 1.000000e+00 : f32
    %86 = vector.broadcast %cst_30 : f32 to vector<2x32xf32>
    %87 = arith.addf %86, %85 : vector<2x32xf32>
    %88 = arith.divf %86, %87 : vector<2x32xf32>
    %89 = arith.mulf %80, %8 : vector<2x32xf32>
    %90 = arith.mulf %74, %82 : vector<2x32xf32>
    %91 = arith.addf %89, %90 : vector<2x32xf32>
    %92 = math.tanh %91 : vector<2x32xf32>
    %93 = arith.mulf %88, %92 : vector<2x32xf32>
    %94 = vector.shape_cast %19 : vector<2x1xi1> to vector<2x1xi1>
    %95 = vector.broadcast %94 : vector<2x1xi1> to vector<2x32xi1>
    %96 = arith.select %95, %8, %91 : vector<2x32xi1>, vector<2x32xf32>
    %97 = vector.shape_cast %19 : vector<2x1xi1> to vector<2x1xi1>
    %98 = vector.broadcast %97 : vector<2x1xi1> to vector<2x32xi1>
    %99 = arith.select %98, %7, %93 : vector<2x32xi1>, vector<2x32xf32>
    %cst_31 = arith.constant 0.000000e+00 : f32
    %100 = vector.broadcast %cst_31 : f32 to vector<2x32xf32>
    %101 = vector.shape_cast %19 : vector<2x1xi1> to vector<2x1xi1>
    %102 = vector.broadcast %101 : vector<2x1xi1> to vector<2x32xi1>
    %103 = arith.select %102, %100, %93 : vector<2x32xi1>, vector<2x32xf32>
    %104 = arith.truncf %61 : vector<2x32xf32> to vector<2x32xbf16>
    %105 = arith.index_cast %c0_i32_12 : i32 to index
    %c0_32 = arith.constant 0 : index
    %c0_33 = arith.constant 0 : index
    %106 = vector.load %arg7[%105, %c0_32, %c0_33] : memref<8x2x32xbf16, #tpu.memory_space<vmem>>, vector<1x2x32xbf16>
    %107 = vector.shape_cast %106 : vector<1x2x32xbf16> to vector<2x32xbf16>
    %108 = vector.shape_cast %104 : vector<2x32xbf16> to vector<1x2x32xbf16>
    tpu.vector_store %arg7[%105, %c0_32, %c0_33], %108 {strides = array<i32>} : memref<8x2x32xbf16, #tpu.memory_space<vmem>>, vector<1x2x32xbf16>,
    %109 = arith.truncf %103 : vector<2x32xf32> to vector<2x32xbf16>
    %110 = arith.index_cast %9 : i32 to index
    %c0_34 = arith.constant 0 : index
    %c0_35 = arith.constant 0 : index
    %111 = vector.load %arg8[%110, %c0_34, %c0_35] : memref<8x2x32xbf16, #tpu.memory_space<vmem>>, vector<1x2x32xbf16>
    %112 = vector.shape_cast %111 : vector<1x2x32xbf16> to vector<2x32xbf16>
    %113 = vector.shape_cast %109 : vector<2x32xbf16> to vector<1x2x32xbf16>
    tpu.vector_store %arg8[%110, %c0_34, %c0_35], %113 {strides = array<i32>} : memref<8x2x32xbf16, #tpu.memory_space<vmem>>, vector<1x2x32xbf16>,
    %c1_i32 = arith.constant 1 : i32
    %c7_i32_36 = arith.constant 7 : i32
    %114 = arith.subi %c7_i32_36, %c1_i32 : i32
    %115 = arith.index_cast %c1_i32 : i32 to index
    %c0_37 = arith.constant 0 : index
    %c0_38 = arith.constant 0 : index
    %116 = vector.load %arg3[%115, %c0_37, %c0_38] : memref<8x2x1xi32, #tpu.memory_space<vmem>>, vector<1x2x1xi32>
    %117 = vector.shape_cast %116 : vector<1x2x1xi32> to vector<2x1xi32>
    %c0_i32_39 = arith.constant 0 : i32
    %118 = vector.broadcast %c0_i32_39 : i32 to vector<2x1xi32>
    %119 = arith.cmpi ne, %117, %118 : vector<2x1xi32>
    %120 = arith.index_cast %114 : i32 to index
    %c0_40 = arith.constant 0 : index
    %c0_41 = arith.constant 0 : index
    %121 = vector.load %arg4[%120, %c0_40, %c0_41] : memref<8x2x1xi32, #tpu.memory_space<vmem>>, vector<1x2x1xi32>
    %122 = vector.shape_cast %121 : vector<1x2x1xi32> to vector<2x1xi32>
    %c0_i32_42 = arith.constant 0 : i32
    %123 = vector.broadcast %c0_i32_42 : i32 to vector<2x1xi32>
    %124 = arith.cmpi ne, %122, %123 : vector<2x1xi32>
    %125 = arith.index_cast %c1_i32 : i32 to index
    %c0_43 = arith.constant 0 : index
    %c0_44 = arith.constant 0 : index
    %126 = vector.load %arg1[%125, %c0_43, %c0_44] : memref<8x2x128xbf16, #tpu.memory_space<vmem>>, vector<1x2x128xbf16>
    %127 = vector.shape_cast %126 : vector<1x2x128xbf16> to vector<2x128xbf16>
    %128 = arith.extf %127 : vector<2x128xbf16> to vector<2x128xf32>
    %129 = arith.truncf %57 : vector<2x32xf32> to vector<2x32xbf16>
    %cst_45 = arith.constant dense<0.000000e+00> : vector<2x128xf32>
    %130 = tpu.matmul %129, %3, %cst_45 {dimension_numbers = #tpu.dot_dimension_numbers<[1], [0], [0], [1], [0, 0, 1, 1], [], []>} : vector<2x32xbf16>, vector<32x128xbf16>, vector<2x128xf32> -> vector<2x128xf32>
    %131 = arith.addf %128, %130 : vector<2x128xf32>
    %132 = vector.extract_strided_slice %131 {offsets = [0, 0], sizes = [2, 32], strides = [1, 1]} : vector<2x128xf32> to vector<2x32xf32>
    %133 = arith.negf %132 : vector<2x32xf32>
    %134 = math.exp %133 : vector<2x32xf32>
    %cst_46 = arith.constant 1.000000e+00 : f32
    %135 = vector.broadcast %cst_46 : f32 to vector<2x32xf32>
    %136 = arith.addf %135, %134 : vector<2x32xf32>
    %137 = arith.divf %135, %136 : vector<2x32xf32>
    %138 = vector.extract_strided_slice %131 {offsets = [0, 32], sizes = [2, 32], strides = [1, 1]} : vector<2x128xf32> to vector<2x32xf32>
    %139 = arith.negf %138 : vector<2x32xf32>
    %140 = math.exp %139 : vector<2x32xf32>
    %cst_47 = arith.constant 1.000000e+00 : f32
    %141 = vector.broadcast %cst_47 : f32 to vector<2x32xf32>
    %142 = arith.addf %141, %140 : vector<2x32xf32>
    %143 = arith.divf %141, %142 : vector<2x32xf32>
    %144 = vector.extract_strided_slice %131 {offsets = [0, 64], sizes = [2, 32], strides = [1, 1]} : vector<2x128xf32> to vector<2x32xf32>
    %145 = math.tanh %144 : vector<2x32xf32>
    %146 = vector.extract_strided_slice %131 {offsets = [0, 96], sizes = [2, 32], strides = [1, 1]} : vector<2x128xf32> to vector<2x32xf32>
    %147 = arith.negf %146 : vector<2x32xf32>
    %148 = math.exp %147 : vector<2x32xf32>
    %cst_48 = arith.constant 1.000000e+00 : f32
    %149 = vector.broadcast %cst_48 : f32 to vector<2x32xf32>
    %150 = arith.addf %149, %148 : vector<2x32xf32>
    %151 = arith.divf %149, %150 : vector<2x32xf32>
    %152 = arith.mulf %143, %54 : vector<2x32xf32>
    %153 = arith.mulf %137, %145 : vector<2x32xf32>
    %154 = arith.addf %152, %153 : vector<2x32xf32>
    %155 = math.tanh %154 : vector<2x32xf32>
    %156 = arith.mulf %151, %155 : vector<2x32xf32>
    %157 = vector.shape_cast %119 : vector<2x1xi1> to vector<2x1xi1>
    %158 = vector.broadcast %157 : vector<2x1xi1> to vector<2x32xi1>
    %159 = arith.select %158, %54, %154 : vector<2x32xi1>, vector<2x32xf32>
    %160 = vector.shape_cast %119 : vector<2x1xi1> to vector<2x1xi1>
    %161 = vector.broadcast %160 : vector<2x1xi1> to vector<2x32xi1>
    %162 = arith.select %161, %57, %156 : vector<2x32xi1>, vector<2x32xf32>
    %cst_49 = arith.constant 0.000000e+00 : f32
    %163 = vector.broadcast %cst_49 : f32 to vector<2x32xf32>
    %164 = vector.shape_cast %119 : vector<2x1xi1> to vector<2x1xi1>
    %165 = vector.broadcast %164 : vector<2x1xi1> to vector<2x32xi1>
    %166 = arith.select %165, %163, %156 : vector<2x32xi1>, vector<2x32xf32>
    %167 = arith.index_cast %114 : i32 to index
    %c0_50 = arith.constant 0 : index
    %c0_51 = arith.constant 0 : index
    %168 = vector.load %arg2[%167, %c0_50, %c0_51] : memref<8x2x128xbf16, #tpu.memory_space<vmem>>, vector<1x2x128xbf16>
    %169 = vector.shape_cast %168 : vector<1x2x128xbf16> to vector<2x128xbf16>
    %170 = arith.extf %169 : vector<2x128xbf16> to vector<2x128xf32>
    %171 = arith.truncf %99 : vector<2x32xf32> to vector<2x32xbf16>
    %cst_52 = arith.constant dense<0.000000e+00> : vector<2x128xf32>
    %172 = tpu.matmul %171, %4, %cst_52 {dimension_numbers = #tpu.dot_dimension_numbers<[1], [0], [0], [1], [0, 0, 1, 1], [], []>} : vector<2x32xbf16>, vector<32x128xbf16>, vector<2x128xf32> -> vector<2x128xf32>
    %173 = arith.addf %170, %172 : vector<2x128xf32>
    %174 = vector.extract_strided_slice %173 {offsets = [0, 0], sizes = [2, 32], strides = [1, 1]} : vector<2x128xf32> to vector<2x32xf32>
    %175 = arith.negf %174 : vector<2x32xf32>
    %176 = math.exp %175 : vector<2x32xf32>
    %cst_53 = arith.constant 1.000000e+00 : f32
    %177 = vector.broadcast %cst_53 : f32 to vector<2x32xf32>
    %178 = arith.addf %177, %176 : vector<2x32xf32>
    %179 = arith.divf %177, %178 : vector<2x32xf32>
    %180 = vector.extract_strided_slice %173 {offsets = [0, 32], sizes = [2, 32], strides = [1, 1]} : vector<2x128xf32> to vector<2x32xf32>
    %181 = arith.negf %180 : vector<2x32xf32>
    %182 = math.exp %181 : vector<2x32xf32>
    %cst_54 = arith.constant 1.000000e+00 : f32
    %183 = vector.broadcast %cst_54 : f32 to vector<2x32xf32>
    %184 = arith.addf %183, %182 : vector<2x32xf32>
    %185 = arith.divf %183, %184 : vector<2x32xf32>
    %186 = vector.extract_strided_slice %173 {offsets = [0, 64], sizes = [2, 32], strides = [1, 1]} : vector<2x128xf32> to vector<2x32xf32>
    %187 = math.tanh %186 : vector<2x32xf32>
    %188 = vector.extract_strided_slice %173 {offsets = [0, 96], sizes = [2, 32], strides = [1, 1]} : vector<2x128xf32> to vector<2x32xf32>
    %189 = arith.negf %188 : vector<2x32xf32>
    %190 = math.exp %189 : vector<2x32xf32>
    %cst_55 = arith.constant 1.000000e+00 : f32
    %191 = vector.broadcast %cst_55 : f32 to vector<2x32xf32>
    %192 = arith.addf %191, %190 : vector<2x32xf32>
    %193 = arith.divf %191, %192 : vector<2x32xf32>
    %194 = arith.mulf %185, %96 : vector<2x32xf32>
    %195 = arith.mulf %179, %187 : vector<2x32xf32>
    %196 = arith.addf %194, %195 : vector<2x32xf32>
    %197 = math.tanh %196 : vector<2x32xf32>
    %198 = arith.mulf %193, %197 : vector<2x32xf32>
    %199 = vector.shape_cast %124 : vector<2x1xi1> to vector<2x1xi1>
    %200 = vector.broadcast %199 : vector<2x1xi1> to vector<2x32xi1>
    %201 = arith.select %200, %96, %196 : vector<2x32xi1>, vector<2x32xf32>
    %202 = vector.shape_cast %124 : vector<2x1xi1> to vector<2x1xi1>
    %203 = vector.broadcast %202 : vector<2x1xi1> to vector<2x32xi1>
    %204 = arith.select %203, %99, %198 : vector<2x32xi1>, vector<2x32xf32>
    %cst_56 = arith.constant 0.000000e+00 : f32
    %205 = vector.broadcast %cst_56 : f32 to vector<2x32xf32>
    %206 = vector.shape_cast %124 : vector<2x1xi1> to vector<2x1xi1>
    %207 = vector.broadcast %206 : vector<2x1xi1> to vector<2x32xi1>
    %208 = arith.select %207, %205, %198 : vector<2x32xi1>, vector<2x32xf32>
    %209 = arith.truncf %166 : vector<2x32xf32> to vector<2x32xbf16>
    %210 = arith.index_cast %c1_i32 : i32 to index
    %c0_57 = arith.constant 0 : index
    %c0_58 = arith.constant 0 : index
    %211 = vector.load %arg7[%210, %c0_57, %c0_58] : memref<8x2x32xbf16, #tpu.memory_space<vmem>>, vector<1x2x32xbf16>
    %212 = vector.shape_cast %211 : vector<1x2x32xbf16> to vector<2x32xbf16>
    %213 = vector.shape_cast %209 : vector<2x32xbf16> to vector<1x2x32xbf16>
    tpu.vector_store %arg7[%210, %c0_57, %c0_58], %213 {strides = array<i32>} : memref<8x2x32xbf16, #tpu.memory_space<vmem>>, vector<1x2x32xbf16>,
    %214 = arith.truncf %208 : vector<2x32xf32> to vector<2x32xbf16>
    %215 = arith.index_cast %114 : i32 to index
    %c0_59 = arith.constant 0 : index
    %c0_60 = arith.constant 0 : index
    %216 = vector.load %arg8[%215, %c0_59, %c0_60] : memref<8x2x32xbf16, #tpu.memory_space<vmem>>, vector<1x2x32xbf16>
    %217 = vector.shape_cast %216 : vector<1x2x32xbf16> to vector<2x32xbf16>
    %218 = vector.shape_cast %214 : vector<2x32xbf16> to vector<1x2x32xbf16>
    tpu.vector_store %arg8[%215, %c0_59, %c0_60], %218 {strides = array<i32>} : memref<8x2x32xbf16, #tpu.memory_space<vmem>>, vector<1x2x32xbf16>,
    %c2_i32 = arith.constant 2 : i32
    %c7_i32_61 = arith.constant 7 : i32
    %219 = arith.subi %c7_i32_61, %c2_i32 : i32
    %220 = arith.index_cast %c2_i32 : i32 to index
    %c0_62 = arith.constant 0 : index
    %c0_63 = arith.constant 0 : index
    %221 = vector.load %arg3[%220, %c0_62, %c0_63] : memref<8x2x1xi32, #tpu.memory_space<vmem>>, vector<1x2x1xi32>
    %222 = vector.shape_cast %221 : vector<1x2x1xi32> to vector<2x1xi32>
    %c0_i32_64 = arith.constant 0 : i32
    %223 = vector.broadcast %c0_i32_64 : i32 to vector<2x1xi32>
    %224 = arith.cmpi ne, %222, %223 : vector<2x1xi32>
    %225 = arith.index_cast %219 : i32 to index
    %c0_65 = arith.constant 0 : index
    %c0_66 = arith.constant 0 : index
    %226 = vector.load %arg4[%225, %c0_65, %c0_66] : memref<8x2x1xi32, #tpu.memory_space<vmem>>, vector<1x2x1xi32>
    %227 = vector.shape_cast %226 : vector<1x2x1xi32> to vector<2x1xi32>
    %c0_i32_67 = arith.constant 0 : i32
    %228 = vector.broadcast %c0_i32_67 : i32 to vector<2x1xi32>
    %229 = arith.cmpi ne, %227, %228 : vector<2x1xi32>
    %230 = arith.index_cast %c2_i32 : i32 to index
    %c0_68 = arith.constant 0 : index
    %c0_69 = arith.constant 0 : index
    %231 = vector.load %arg1[%230, %c0_68, %c0_69] : memref<8x2x128xbf16, #tpu.memory_space<vmem>>, vector<1x2x128xbf16>
    %232 = vector.shape_cast %231 : vector<1x2x128xbf16> to vector<2x128xbf16>
    %233 = arith.extf %232 : vector<2x128xbf16> to vector<2x128xf32>
    %234 = arith.truncf %162 : vector<2x32xf32> to vector<2x32xbf16>
    %cst_70 = arith.constant dense<0.000000e+00> : vector<2x128xf32>
    %235 = tpu.matmul %234, %3, %cst_70 {dimension_numbers = #tpu.dot_dimension_numbers<[1], [0], [0], [1], [0, 0, 1, 1], [], []>} : vector<2x32xbf16>, vector<32x128xbf16>, vector<2x128xf32> -> vector<2x128xf32>
    %236 = arith.addf %233, %235 : vector<2x128xf32>
    %237 = vector.extract_strided_slice %236 {offsets = [0, 0], sizes = [2, 32], strides = [1, 1]} : vector<2x128xf32> to vector<2x32xf32>
    %238 = arith.negf %237 : vector<2x32xf32>
    %239 = math.exp %238 : vector<2x32xf32>
    %cst_71 = arith.constant 1.000000e+00 : f32
    %240 = vector.broadcast %cst_71 : f32 to vector<2x32xf32>
    %241 = arith.addf %240, %239 : vector<2x32xf32>
    %242 = arith.divf %240, %241 : vector<2x32xf32>
    %243 = vector.extract_strided_slice %236 {offsets = [0, 32], sizes = [2, 32], strides = [1, 1]} : vector<2x128xf32> to vector<2x32xf32>
    %244 = arith.negf %243 : vector<2x32xf32>
    %245 = math.exp %244 : vector<2x32xf32>
    %cst_72 = arith.constant 1.000000e+00 : f32
    %246 = vector.broadcast %cst_72 : f32 to vector<2x32xf32>
    %247 = arith.addf %246, %245 : vector<2x32xf32>
    %248 = arith.divf %246, %247 : vector<2x32xf32>
    %249 = vector.extract_strided_slice %236 {offsets = [0, 64], sizes = [2, 32], strides = [1, 1]} : vector<2x128xf32> to vector<2x32xf32>
    %250 = math.tanh %249 : vector<2x32xf32>
    %251 = vector.extract_strided_slice %236 {offsets = [0, 96], sizes = [2, 32], strides = [1, 1]} : vector<2x128xf32> to vector<2x32xf32>
    %252 = arith.negf %251 : vector<2x32xf32>
    %253 = math.exp %252 : vector<2x32xf32>
    %cst_73 = arith.constant 1.000000e+00 : f32
    %254 = vector.broadcast %cst_73 : f32 to vector<2x32xf32>
    %255 = arith.addf %254, %253 : vector<2x32xf32>
    %256 = arith.divf %254, %255 : vector<2x32xf32>
    %257 = arith.mulf %248, %159 : vector<2x32xf32>
    %258 = arith.mulf %242, %250 : vector<2x32xf32>
    %259 = arith.addf %257, %258 : vector<2x32xf32>
    %260 = math.tanh %259 : vector<2x32xf32>
    %261 = arith.mulf %256, %260 : vector<2x32xf32>
    %262 = vector.shape_cast %224 : vector<2x1xi1> to vector<2x1xi1>
    %263 = vector.broadcast %262 : vector<2x1xi1> to vector<2x32xi1>
    %264 = arith.select %263, %159, %259 : vector<2x32xi1>, vector<2x32xf32>
    %265 = vector.shape_cast %224 : vector<2x1xi1> to vector<2x1xi1>
    %266 = vector.broadcast %265 : vector<2x1xi1> to vector<2x32xi1>
    %267 = arith.select %266, %162, %261 : vector<2x32xi1>, vector<2x32xf32>
    %cst_74 = arith.constant 0.000000e+00 : f32
    %268 = vector.broadcast %cst_74 : f32 to vector<2x32xf32>
    %269 = vector.shape_cast %224 : vector<2x1xi1> to vector<2x1xi1>
    %270 = vector.broadcast %269 : vector<2x1xi1> to vector<2x32xi1>
    %271 = arith.select %270, %268, %261 : vector<2x32xi1>, vector<2x32xf32>
    %272 = arith.index_cast %219 : i32 to index
    %c0_75 = arith.constant 0 : index
    %c0_76 = arith.constant 0 : index
    %273 = vector.load %arg2[%272, %c0_75, %c0_76] : memref<8x2x128xbf16, #tpu.memory_space<vmem>>, vector<1x2x128xbf16>
    %274 = vector.shape_cast %273 : vector<1x2x128xbf16> to vector<2x128xbf16>
    %275 = arith.extf %274 : vector<2x128xbf16> to vector<2x128xf32>
    %276 = arith.truncf %204 : vector<2x32xf32> to vector<2x32xbf16>
    %cst_77 = arith.constant dense<0.000000e+00> : vector<2x128xf32>
    %277 = tpu.matmul %276, %4, %cst_77 {dimension_numbers = #tpu.dot_dimension_numbers<[1], [0], [0], [1], [0, 0, 1, 1], [], []>} : vector<2x32xbf16>, vector<32x128xbf16>, vector<2x128xf32> -> vector<2x128xf32>
    %278 = arith.addf %275, %277 : vector<2x128xf32>
    %279 = vector.extract_strided_slice %278 {offsets = [0, 0], sizes = [2, 32], strides = [1, 1]} : vector<2x128xf32> to vector<2x32xf32>
    %280 = arith.negf %279 : vector<2x32xf32>
    %281 = math.exp %280 : vector<2x32xf32>
    %cst_78 = arith.constant 1.000000e+00 : f32
    %282 = vector.broadcast %cst_78 : f32 to vector<2x32xf32>
    %283 = arith.addf %282, %281 : vector<2x32xf32>
    %284 = arith.divf %282, %283 : vector<2x32xf32>
    %285 = vector.extract_strided_slice %278 {offsets = [0, 32], sizes = [2, 32], strides = [1, 1]} : vector<2x128xf32> to vector<2x32xf32>
    %286 = arith.negf %285 : vector<2x32xf32>
    %287 = math.exp %286 : vector<2x32xf32>
    %cst_79 = arith.constant 1.000000e+00 : f32
    %288 = vector.broadcast %cst_79 : f32 to vector<2x32xf32>
    %289 = arith.addf %288, %287 : vector<2x32xf32>
    %290 = arith.divf %288, %289 : vector<2x32xf32>
    %291 = vector.extract_strided_slice %278 {offsets = [0, 64], sizes = [2, 32], strides = [1, 1]} : vector<2x128xf32> to vector<2x32xf32>
    %292 = math.tanh %291 : vector<2x32xf32>
    %293 = vector.extract_strided_slice %278 {offsets = [0, 96], sizes = [2, 32], strides = [1, 1]} : vector<2x128xf32> to vector<2x32xf32>
    %294 = arith.negf %293 : vector<2x32xf32>
    %295 = math.exp %294 : vector<2x32xf32>
    %cst_80 = arith.constant 1.000000e+00 : f32
    %296 = vector.broadcast %cst_80 : f32 to vector<2x32xf32>
    %297 = arith.addf %296, %295 : vector<2x32xf32>
    %298 = arith.divf %296, %297 : vector<2x32xf32>
    %299 = arith.mulf %290, %201 : vector<2x32xf32>
    %300 = arith.mulf %284, %292 : vector<2x32xf32>
    %301 = arith.addf %299, %300 : vector<2x32xf32>
    %302 = math.tanh %301 : vector<2x32xf32>
    %303 = arith.mulf %298, %302 : vector<2x32xf32>
    %304 = vector.shape_cast %229 : vector<2x1xi1> to vector<2x1xi1>
    %305 = vector.broadcast %304 : vector<2x1xi1> to vector<2x32xi1>
    %306 = arith.select %305, %201, %301 : vector<2x32xi1>, vector<2x32xf32>
    %307 = vector.shape_cast %229 : vector<2x1xi1> to vector<2x1xi1>
    %308 = vector.broadcast %307 : vector<2x1xi1> to vector<2x32xi1>
    %309 = arith.select %308, %204, %303 : vector<2x32xi1>, vector<2x32xf32>
    %cst_81 = arith.constant 0.000000e+00 : f32
    %310 = vector.broadcast %cst_81 : f32 to vector<2x32xf32>
    %311 = vector.shape_cast %229 : vector<2x1xi1> to vector<2x1xi1>
    %312 = vector.broadcast %311 : vector<2x1xi1> to vector<2x32xi1>
    %313 = arith.select %312, %310, %303 : vector<2x32xi1>, vector<2x32xf32>
    %314 = arith.truncf %271 : vector<2x32xf32> to vector<2x32xbf16>
    %315 = arith.index_cast %c2_i32 : i32 to index
    %c0_82 = arith.constant 0 : index
    %c0_83 = arith.constant 0 : index
    %316 = vector.load %arg7[%315, %c0_82, %c0_83] : memref<8x2x32xbf16, #tpu.memory_space<vmem>>, vector<1x2x32xbf16>
    %317 = vector.shape_cast %316 : vector<1x2x32xbf16> to vector<2x32xbf16>
    %318 = vector.shape_cast %314 : vector<2x32xbf16> to vector<1x2x32xbf16>
    tpu.vector_store %arg7[%315, %c0_82, %c0_83], %318 {strides = array<i32>} : memref<8x2x32xbf16, #tpu.memory_space<vmem>>, vector<1x2x32xbf16>,
    %319 = arith.truncf %313 : vector<2x32xf32> to vector<2x32xbf16>
    %320 = arith.index_cast %219 : i32 to index
    %c0_84 = arith.constant 0 : index
    %c0_85 = arith.constant 0 : index
    %321 = vector.load %arg8[%320, %c0_84, %c0_85] : memref<8x2x32xbf16, #tpu.memory_space<vmem>>, vector<1x2x32xbf16>
    %322 = vector.shape_cast %321 : vector<1x2x32xbf16> to vector<2x32xbf16>
    %323 = vector.shape_cast %319 : vector<2x32xbf16> to vector<1x2x32xbf16>
    tpu.vector_store %arg8[%320, %c0_84, %c0_85], %323 {strides = array<i32>} : memref<8x2x32xbf16, #tpu.memory_space<vmem>>, vector<1x2x32xbf16>,
    %c3_i32 = arith.constant 3 : i32
    %c7_i32_86 = arith.constant 7 : i32
    %324 = arith.subi %c7_i32_86, %c3_i32 : i32
    %325 = arith.index_cast %c3_i32 : i32 to index
    %c0_87 = arith.constant 0 : index
    %c0_88 = arith.constant 0 : index
    %326 = vector.load %arg3[%325, %c0_87, %c0_88] : memref<8x2x1xi32, #tpu.memory_space<vmem>>, vector<1x2x1xi32>
    %327 = vector.shape_cast %326 : vector<1x2x1xi32> to vector<2x1xi32>
    %c0_i32_89 = arith.constant 0 : i32
    %328 = vector.broadcast %c0_i32_89 : i32 to vector<2x1xi32>
    %329 = arith.cmpi ne, %327, %328 : vector<2x1xi32>
    %330 = arith.index_cast %324 : i32 to index
    %c0_90 = arith.constant 0 : index
    %c0_91 = arith.constant 0 : index
    %331 = vector.load %arg4[%330, %c0_90, %c0_91] : memref<8x2x1xi32, #tpu.memory_space<vmem>>, vector<1x2x1xi32>
    %332 = vector.shape_cast %331 : vector<1x2x1xi32> to vector<2x1xi32>
    %c0_i32_92 = arith.constant 0 : i32
    %333 = vector.broadcast %c0_i32_92 : i32 to vector<2x1xi32>
    %334 = arith.cmpi ne, %332, %333 : vector<2x1xi32>
    %335 = arith.index_cast %c3_i32 : i32 to index
    %c0_93 = arith.constant 0 : index
    %c0_94 = arith.constant 0 : index
    %336 = vector.load %arg1[%335, %c0_93, %c0_94] : memref<8x2x128xbf16, #tpu.memory_space<vmem>>, vector<1x2x128xbf16>
    %337 = vector.shape_cast %336 : vector<1x2x128xbf16> to vector<2x128xbf16>
    %338 = arith.extf %337 : vector<2x128xbf16> to vector<2x128xf32>
    %339 = arith.truncf %267 : vector<2x32xf32> to vector<2x32xbf16>
    %cst_95 = arith.constant dense<0.000000e+00> : vector<2x128xf32>
    %340 = tpu.matmul %339, %3, %cst_95 {dimension_numbers = #tpu.dot_dimension_numbers<[1], [0], [0], [1], [0, 0, 1, 1], [], []>} : vector<2x32xbf16>, vector<32x128xbf16>, vector<2x128xf32> -> vector<2x128xf32>
    %341 = arith.addf %338, %340 : vector<2x128xf32>
    %342 = vector.extract_strided_slice %341 {offsets = [0, 0], sizes = [2, 32], strides = [1, 1]} : vector<2x128xf32> to vector<2x32xf32>
    %343 = arith.negf %342 : vector<2x32xf32>
    %344 = math.exp %343 : vector<2x32xf32>
    %cst_96 = arith.constant 1.000000e+00 : f32
    %345 = vector.broadcast %cst_96 : f32 to vector<2x32xf32>
    %346 = arith.addf %345, %344 : vector<2x32xf32>
    %347 = arith.divf %345, %346 : vector<2x32xf32>
    %348 = vector.extract_strided_slice %341 {offsets = [0, 32], sizes = [2, 32], strides = [1, 1]} : vector<2x128xf32> to vector<2x32xf32>
    %349 = arith.negf %348 : vector<2x32xf32>
    %350 = math.exp %349 : vector<2x32xf32>
    %cst_97 = arith.constant 1.000000e+00 : f32
    %351 = vector.broadcast %cst_97 : f32 to vector<2x32xf32>
    %352 = arith.addf %351, %350 : vector<2x32xf32>
    %353 = arith.divf %351, %352 : vector<2x32xf32>
    %354 = vector.extract_strided_slice %341 {offsets = [0, 64], sizes = [2, 32], strides = [1, 1]} : vector<2x128xf32> to vector<2x32xf32>
    %355 = math.tanh %354 : vector<2x32xf32>
    %356 = vector.extract_strided_slice %341 {offsets = [0, 96], sizes = [2, 32], strides = [1, 1]} : vector<2x128xf32> to vector<2x32xf32>
    %357 = arith.negf %356 : vector<2x32xf32>
    %358 = math.exp %357 : vector<2x32xf32>
    %cst_98 = arith.constant 1.000000e+00 : f32
    %359 = vector.broadcast %cst_98 : f32 to vector<2x32xf32>
    %360 = arith.addf %359, %358 : vector<2x32xf32>
    %361 = arith.divf %359, %360 : vector<2x32xf32>
    %362 = arith.mulf %353, %264 : vector<2x32xf32>
    %363 = arith.mulf %347, %355 : vector<2x32xf32>
    %364 = arith.addf %362, %363 : vector<2x32xf32>
    %365 = math.tanh %364 : vector<2x32xf32>
    %366 = arith.mulf %361, %365 : vector<2x32xf32>
    %367 = vector.shape_cast %329 : vector<2x1xi1> to vector<2x1xi1>
    %368 = vector.broadcast %367 : vector<2x1xi1> to vector<2x32xi1>
    %369 = arith.select %368, %264, %364 : vector<2x32xi1>, vector<2x32xf32>
    %370 = vector.shape_cast %329 : vector<2x1xi1> to vector<2x1xi1>
    %371 = vector.broadcast %370 : vector<2x1xi1> to vector<2x32xi1>
    %372 = arith.select %371, %267, %366 : vector<2x32xi1>, vector<2x32xf32>
    %cst_99 = arith.constant 0.000000e+00 : f32
    %373 = vector.broadcast %cst_99 : f32 to vector<2x32xf32>
    %374 = vector.shape_cast %329 : vector<2x1xi1> to vector<2x1xi1>
    %375 = vector.broadcast %374 : vector<2x1xi1> to vector<2x32xi1>
    %376 = arith.select %375, %373, %366 : vector<2x32xi1>, vector<2x32xf32>
    %377 = arith.index_cast %324 : i32 to index
    %c0_100 = arith.constant 0 : index
    %c0_101 = arith.constant 0 : index
    %378 = vector.load %arg2[%377, %c0_100, %c0_101] : memref<8x2x128xbf16, #tpu.memory_space<vmem>>, vector<1x2x128xbf16>
    %379 = vector.shape_cast %378 : vector<1x2x128xbf16> to vector<2x128xbf16>
    %380 = arith.extf %379 : vector<2x128xbf16> to vector<2x128xf32>
    %381 = arith.truncf %309 : vector<2x32xf32> to vector<2x32xbf16>
    %cst_102 = arith.constant dense<0.000000e+00> : vector<2x128xf32>
    %382 = tpu.matmul %381, %4, %cst_102 {dimension_numbers = #tpu.dot_dimension_numbers<[1], [0], [0], [1], [0, 0, 1, 1], [], []>} : vector<2x32xbf16>, vector<32x128xbf16>, vector<2x128xf32> -> vector<2x128xf32>
    %383 = arith.addf %380, %382 : vector<2x128xf32>
    %384 = vector.extract_strided_slice %383 {offsets = [0, 0], sizes = [2, 32], strides = [1, 1]} : vector<2x128xf32> to vector<2x32xf32>
    %385 = arith.negf %384 : vector<2x32xf32>
    %386 = math.exp %385 : vector<2x32xf32>
    %cst_103 = arith.constant 1.000000e+00 : f32
    %387 = vector.broadcast %cst_103 : f32 to vector<2x32xf32>
    %388 = arith.addf %387, %386 : vector<2x32xf32>
    %389 = arith.divf %387, %388 : vector<2x32xf32>
    %390 = vector.extract_strided_slice %383 {offsets = [0, 32], sizes = [2, 32], strides = [1, 1]} : vector<2x128xf32> to vector<2x32xf32>
    %391 = arith.negf %390 : vector<2x32xf32>
    %392 = math.exp %391 : vector<2x32xf32>
    %cst_104 = arith.constant 1.000000e+00 : f32
    %393 = vector.broadcast %cst_104 : f32 to vector<2x32xf32>
    %394 = arith.addf %393, %392 : vector<2x32xf32>
    %395 = arith.divf %393, %394 : vector<2x32xf32>
    %396 = vector.extract_strided_slice %383 {offsets = [0, 64], sizes = [2, 32], strides = [1, 1]} : vector<2x128xf32> to vector<2x32xf32>
    %397 = math.tanh %396 : vector<2x32xf32>
    %398 = vector.extract_strided_slice %383 {offsets = [0, 96], sizes = [2, 32], strides = [1, 1]} : vector<2x128xf32> to vector<2x32xf32>
    %399 = arith.negf %398 : vector<2x32xf32>
    %400 = math.exp %399 : vector<2x32xf32>
    %cst_105 = arith.constant 1.000000e+00 : f32
    %401 = vector.broadcast %cst_105 : f32 to vector<2x32xf32>
    %402 = arith.addf %401, %400 : vector<2x32xf32>
    %403 = arith.divf %401, %402 : vector<2x32xf32>
    %404 = arith.mulf %395, %306 : vector<2x32xf32>
    %405 = arith.mulf %389, %397 : vector<2x32xf32>
    %406 = arith.addf %404, %405 : vector<2x32xf32>
    %407 = math.tanh %406 : vector<2x32xf32>
    %408 = arith.mulf %403, %407 : vector<2x32xf32>
    %409 = vector.shape_cast %334 : vector<2x1xi1> to vector<2x1xi1>
    %410 = vector.broadcast %409 : vector<2x1xi1> to vector<2x32xi1>
    %411 = arith.select %410, %306, %406 : vector<2x32xi1>, vector<2x32xf32>
    %412 = vector.shape_cast %334 : vector<2x1xi1> to vector<2x1xi1>
    %413 = vector.broadcast %412 : vector<2x1xi1> to vector<2x32xi1>
    %414 = arith.select %413, %309, %408 : vector<2x32xi1>, vector<2x32xf32>
    %cst_106 = arith.constant 0.000000e+00 : f32
    %415 = vector.broadcast %cst_106 : f32 to vector<2x32xf32>
    %416 = vector.shape_cast %334 : vector<2x1xi1> to vector<2x1xi1>
    %417 = vector.broadcast %416 : vector<2x1xi1> to vector<2x32xi1>
    %418 = arith.select %417, %415, %408 : vector<2x32xi1>, vector<2x32xf32>
    %419 = arith.truncf %376 : vector<2x32xf32> to vector<2x32xbf16>
    %420 = arith.index_cast %c3_i32 : i32 to index
    %c0_107 = arith.constant 0 : index
    %c0_108 = arith.constant 0 : index
    %421 = vector.load %arg7[%420, %c0_107, %c0_108] : memref<8x2x32xbf16, #tpu.memory_space<vmem>>, vector<1x2x32xbf16>
    %422 = vector.shape_cast %421 : vector<1x2x32xbf16> to vector<2x32xbf16>
    %423 = vector.shape_cast %419 : vector<2x32xbf16> to vector<1x2x32xbf16>
    tpu.vector_store %arg7[%420, %c0_107, %c0_108], %423 {strides = array<i32>} : memref<8x2x32xbf16, #tpu.memory_space<vmem>>, vector<1x2x32xbf16>,
    %424 = arith.truncf %418 : vector<2x32xf32> to vector<2x32xbf16>
    %425 = arith.index_cast %324 : i32 to index
    %c0_109 = arith.constant 0 : index
    %c0_110 = arith.constant 0 : index
    %426 = vector.load %arg8[%425, %c0_109, %c0_110] : memref<8x2x32xbf16, #tpu.memory_space<vmem>>, vector<1x2x32xbf16>
    %427 = vector.shape_cast %426 : vector<1x2x32xbf16> to vector<2x32xbf16>
    %428 = vector.shape_cast %424 : vector<2x32xbf16> to vector<1x2x32xbf16>
    tpu.vector_store %arg8[%425, %c0_109, %c0_110], %428 {strides = array<i32>} : memref<8x2x32xbf16, #tpu.memory_space<vmem>>, vector<1x2x32xbf16>,
    %c4_i32 = arith.constant 4 : i32
    %c7_i32_111 = arith.constant 7 : i32
    %429 = arith.subi %c7_i32_111, %c4_i32 : i32
    %430 = arith.index_cast %c4_i32 : i32 to index
    %c0_112 = arith.constant 0 : index
    %c0_113 = arith.constant 0 : index
    %431 = vector.load %arg3[%430, %c0_112, %c0_113] : memref<8x2x1xi32, #tpu.memory_space<vmem>>, vector<1x2x1xi32>
    %432 = vector.shape_cast %431 : vector<1x2x1xi32> to vector<2x1xi32>
    %c0_i32_114 = arith.constant 0 : i32
    %433 = vector.broadcast %c0_i32_114 : i32 to vector<2x1xi32>
    %434 = arith.cmpi ne, %432, %433 : vector<2x1xi32>
    %435 = arith.index_cast %429 : i32 to index
    %c0_115 = arith.constant 0 : index
    %c0_116 = arith.constant 0 : index
    %436 = vector.load %arg4[%435, %c0_115, %c0_116] : memref<8x2x1xi32, #tpu.memory_space<vmem>>, vector<1x2x1xi32>
    %437 = vector.shape_cast %436 : vector<1x2x1xi32> to vector<2x1xi32>
    %c0_i32_117 = arith.constant 0 : i32
    %438 = vector.broadcast %c0_i32_117 : i32 to vector<2x1xi32>
    %439 = arith.cmpi ne, %437, %438 : vector<2x1xi32>
    %440 = arith.index_cast %c4_i32 : i32 to index
    %c0_118 = arith.constant 0 : index
    %c0_119 = arith.constant 0 : index
    %441 = vector.load %arg1[%440, %c0_118, %c0_119] : memref<8x2x128xbf16, #tpu.memory_space<vmem>>, vector<1x2x128xbf16>
    %442 = vector.shape_cast %441 : vector<1x2x128xbf16> to vector<2x128xbf16>
    %443 = arith.extf %442 : vector<2x128xbf16> to vector<2x128xf32>
    %444 = arith.truncf %372 : vector<2x32xf32> to vector<2x32xbf16>
    %cst_120 = arith.constant dense<0.000000e+00> : vector<2x128xf32>
    %445 = tpu.matmul %444, %3, %cst_120 {dimension_numbers = #tpu.dot_dimension_numbers<[1], [0], [0], [1], [0, 0, 1, 1], [], []>} : vector<2x32xbf16>, vector<32x128xbf16>, vector<2x128xf32> -> vector<2x128xf32>
    %446 = arith.addf %443, %445 : vector<2x128xf32>
    %447 = vector.extract_strided_slice %446 {offsets = [0, 0], sizes = [2, 32], strides = [1, 1]} : vector<2x128xf32> to vector<2x32xf32>
    %448 = arith.negf %447 : vector<2x32xf32>
    %449 = math.exp %448 : vector<2x32xf32>
    %cst_121 = arith.constant 1.000000e+00 : f32
    %450 = vector.broadcast %cst_121 : f32 to vector<2x32xf32>
    %451 = arith.addf %450, %449 : vector<2x32xf32>
    %452 = arith.divf %450, %451 : vector<2x32xf32>
    %453 = vector.extract_strided_slice %446 {offsets = [0, 32], sizes = [2, 32], strides = [1, 1]} : vector<2x128xf32> to vector<2x32xf32>
    %454 = arith.negf %453 : vector<2x32xf32>
    %455 = math.exp %454 : vector<2x32xf32>
    %cst_122 = arith.constant 1.000000e+00 : f32
    %456 = vector.broadcast %cst_122 : f32 to vector<2x32xf32>
    %457 = arith.addf %456, %455 : vector<2x32xf32>
    %458 = arith.divf %456, %457 : vector<2x32xf32>
    %459 = vector.extract_strided_slice %446 {offsets = [0, 64], sizes = [2, 32], strides = [1, 1]} : vector<2x128xf32> to vector<2x32xf32>
    %460 = math.tanh %459 : vector<2x32xf32>
    %461 = vector.extract_strided_slice %446 {offsets = [0, 96], sizes = [2, 32], strides = [1, 1]} : vector<2x128xf32> to vector<2x32xf32>
    %462 = arith.negf %461 : vector<2x32xf32>
    %463 = math.exp %462 : vector<2x32xf32>
    %cst_123 = arith.constant 1.000000e+00 : f32
    %464 = vector.broadcast %cst_123 : f32 to vector<2x32xf32>
    %465 = arith.addf %464, %463 : vector<2x32xf32>
    %466 = arith.divf %464, %465 : vector<2x32xf32>
    %467 = arith.mulf %458, %369 : vector<2x32xf32>
    %468 = arith.mulf %452, %460 : vector<2x32xf32>
    %469 = arith.addf %467, %468 : vector<2x32xf32>
    %470 = math.tanh %469 : vector<2x32xf32>
    %471 = arith.mulf %466, %470 : vector<2x32xf32>
    %472 = vector.shape_cast %434 : vector<2x1xi1> to vector<2x1xi1>
    %473 = vector.broadcast %472 : vector<2x1xi1> to vector<2x32xi1>
    %474 = arith.select %473, %369, %469 : vector<2x32xi1>, vector<2x32xf32>
    %475 = vector.shape_cast %434 : vector<2x1xi1> to vector<2x1xi1>
    %476 = vector.broadcast %475 : vector<2x1xi1> to vector<2x32xi1>
    %477 = arith.select %476, %372, %471 : vector<2x32xi1>, vector<2x32xf32>
    %cst_124 = arith.constant 0.000000e+00 : f32
    %478 = vector.broadcast %cst_124 : f32 to vector<2x32xf32>
    %479 = vector.shape_cast %434 : vector<2x1xi1> to vector<2x1xi1>
    %480 = vector.broadcast %479 : vector<2x1xi1> to vector<2x32xi1>
    %481 = arith.select %480, %478, %471 : vector<2x32xi1>, vector<2x32xf32>
    %482 = arith.index_cast %429 : i32 to index
    %c0_125 = arith.constant 0 : index
    %c0_126 = arith.constant 0 : index
    %483 = vector.load %arg2[%482, %c0_125, %c0_126] : memref<8x2x128xbf16, #tpu.memory_space<vmem>>, vector<1x2x128xbf16>
    %484 = vector.shape_cast %483 : vector<1x2x128xbf16> to vector<2x128xbf16>
    %485 = arith.extf %484 : vector<2x128xbf16> to vector<2x128xf32>
    %486 = arith.truncf %414 : vector<2x32xf32> to vector<2x32xbf16>
    %cst_127 = arith.constant dense<0.000000e+00> : vector<2x128xf32>
    %487 = tpu.matmul %486, %4, %cst_127 {dimension_numbers = #tpu.dot_dimension_numbers<[1], [0], [0], [1], [0, 0, 1, 1], [], []>} : vector<2x32xbf16>, vector<32x128xbf16>, vector<2x128xf32> -> vector<2x128xf32>
    %488 = arith.addf %485, %487 : vector<2x128xf32>
    %489 = vector.extract_strided_slice %488 {offsets = [0, 0], sizes = [2, 32], strides = [1, 1]} : vector<2x128xf32> to vector<2x32xf32>
    %490 = arith.negf %489 : vector<2x32xf32>
    %491 = math.exp %490 : vector<2x32xf32>
    %cst_128 = arith.constant 1.000000e+00 : f32
    %492 = vector.broadcast %cst_128 : f32 to vector<2x32xf32>
    %493 = arith.addf %492, %491 : vector<2x32xf32>
    %494 = arith.divf %492, %493 : vector<2x32xf32>
    %495 = vector.extract_strided_slice %488 {offsets = [0, 32], sizes = [2, 32], strides = [1, 1]} : vector<2x128xf32> to vector<2x32xf32>
    %496 = arith.negf %495 : vector<2x32xf32>
    %497 = math.exp %496 : vector<2x32xf32>
    %cst_129 = arith.constant 1.000000e+00 : f32
    %498 = vector.broadcast %cst_129 : f32 to vector<2x32xf32>
    %499 = arith.addf %498, %497 : vector<2x32xf32>
    %500 = arith.divf %498, %499 : vector<2x32xf32>
    %501 = vector.extract_strided_slice %488 {offsets = [0, 64], sizes = [2, 32], strides = [1, 1]} : vector<2x128xf32> to vector<2x32xf32>
    %502 = math.tanh %501 : vector<2x32xf32>
    %503 = vector.extract_strided_slice %488 {offsets = [0, 96], sizes = [2, 32], strides = [1, 1]} : vector<2x128xf32> to vector<2x32xf32>
    %504 = arith.negf %503 : vector<2x32xf32>
    %505 = math.exp %504 : vector<2x32xf32>
    %cst_130 = arith.constant 1.000000e+00 : f32
    %506 = vector.broadcast %cst_130 : f32 to vector<2x32xf32>
    %507 = arith.addf %506, %505 : vector<2x32xf32>
    %508 = arith.divf %506, %507 : vector<2x32xf32>
    %509 = arith.mulf %500, %411 : vector<2x32xf32>
    %510 = arith.mulf %494, %502 : vector<2x32xf32>
    %511 = arith.addf %509, %510 : vector<2x32xf32>
    %512 = math.tanh %511 : vector<2x32xf32>
    %513 = arith.mulf %508, %512 : vector<2x32xf32>
    %514 = vector.shape_cast %439 : vector<2x1xi1> to vector<2x1xi1>
    %515 = vector.broadcast %514 : vector<2x1xi1> to vector<2x32xi1>
    %516 = arith.select %515, %411, %511 : vector<2x32xi1>, vector<2x32xf32>
    %517 = vector.shape_cast %439 : vector<2x1xi1> to vector<2x1xi1>
    %518 = vector.broadcast %517 : vector<2x1xi1> to vector<2x32xi1>
    %519 = arith.select %518, %414, %513 : vector<2x32xi1>, vector<2x32xf32>
    %cst_131 = arith.constant 0.000000e+00 : f32
    %520 = vector.broadcast %cst_131 : f32 to vector<2x32xf32>
    %521 = vector.shape_cast %439 : vector<2x1xi1> to vector<2x1xi1>
    %522 = vector.broadcast %521 : vector<2x1xi1> to vector<2x32xi1>
    %523 = arith.select %522, %520, %513 : vector<2x32xi1>, vector<2x32xf32>
    %524 = arith.truncf %481 : vector<2x32xf32> to vector<2x32xbf16>
    %525 = arith.index_cast %c4_i32 : i32 to index
    %c0_132 = arith.constant 0 : index
    %c0_133 = arith.constant 0 : index
    %526 = vector.load %arg7[%525, %c0_132, %c0_133] : memref<8x2x32xbf16, #tpu.memory_space<vmem>>, vector<1x2x32xbf16>
    %527 = vector.shape_cast %526 : vector<1x2x32xbf16> to vector<2x32xbf16>
    %528 = vector.shape_cast %524 : vector<2x32xbf16> to vector<1x2x32xbf16>
    tpu.vector_store %arg7[%525, %c0_132, %c0_133], %528 {strides = array<i32>} : memref<8x2x32xbf16, #tpu.memory_space<vmem>>, vector<1x2x32xbf16>,
    %529 = arith.truncf %523 : vector<2x32xf32> to vector<2x32xbf16>
    %530 = arith.index_cast %429 : i32 to index
    %c0_134 = arith.constant 0 : index
    %c0_135 = arith.constant 0 : index
    %531 = vector.load %arg8[%530, %c0_134, %c0_135] : memref<8x2x32xbf16, #tpu.memory_space<vmem>>, vector<1x2x32xbf16>
    %532 = vector.shape_cast %531 : vector<1x2x32xbf16> to vector<2x32xbf16>
    %533 = vector.shape_cast %529 : vector<2x32xbf16> to vector<1x2x32xbf16>
    tpu.vector_store %arg8[%530, %c0_134, %c0_135], %533 {strides = array<i32>} : memref<8x2x32xbf16, #tpu.memory_space<vmem>>, vector<1x2x32xbf16>,
    %c5_i32 = arith.constant 5 : i32
    %c7_i32_136 = arith.constant 7 : i32
    %534 = arith.subi %c7_i32_136, %c5_i32 : i32
    %535 = arith.index_cast %c5_i32 : i32 to index
    %c0_137 = arith.constant 0 : index
    %c0_138 = arith.constant 0 : index
    %536 = vector.load %arg3[%535, %c0_137, %c0_138] : memref<8x2x1xi32, #tpu.memory_space<vmem>>, vector<1x2x1xi32>
    %537 = vector.shape_cast %536 : vector<1x2x1xi32> to vector<2x1xi32>
    %c0_i32_139 = arith.constant 0 : i32
    %538 = vector.broadcast %c0_i32_139 : i32 to vector<2x1xi32>
    %539 = arith.cmpi ne, %537, %538 : vector<2x1xi32>
    %540 = arith.index_cast %534 : i32 to index
    %c0_140 = arith.constant 0 : index
    %c0_141 = arith.constant 0 : index
    %541 = vector.load %arg4[%540, %c0_140, %c0_141] : memref<8x2x1xi32, #tpu.memory_space<vmem>>, vector<1x2x1xi32>
    %542 = vector.shape_cast %541 : vector<1x2x1xi32> to vector<2x1xi32>
    %c0_i32_142 = arith.constant 0 : i32
    %543 = vector.broadcast %c0_i32_142 : i32 to vector<2x1xi32>
    %544 = arith.cmpi ne, %542, %543 : vector<2x1xi32>
    %545 = arith.index_cast %c5_i32 : i32 to index
    %c0_143 = arith.constant 0 : index
    %c0_144 = arith.constant 0 : index
    %546 = vector.load %arg1[%545, %c0_143, %c0_144] : memref<8x2x128xbf16, #tpu.memory_space<vmem>>, vector<1x2x128xbf16>
    %547 = vector.shape_cast %546 : vector<1x2x128xbf16> to vector<2x128xbf16>
    %548 = arith.extf %547 : vector<2x128xbf16> to vector<2x128xf32>
    %549 = arith.truncf %477 : vector<2x32xf32> to vector<2x32xbf16>
    %cst_145 = arith.constant dense<0.000000e+00> : vector<2x128xf32>
    %550 = tpu.matmul %549, %3, %cst_145 {dimension_numbers = #tpu.dot_dimension_numbers<[1], [0], [0], [1], [0, 0, 1, 1], [], []>} : vector<2x32xbf16>, vector<32x128xbf16>, vector<2x128xf32> -> vector<2x128xf32>
    %551 = arith.addf %548, %550 : vector<2x128xf32>
    %552 = vector.extract_strided_slice %551 {offsets = [0, 0], sizes = [2, 32], strides = [1, 1]} : vector<2x128xf32> to vector<2x32xf32>
    %553 = arith.negf %552 : vector<2x32xf32>
    %554 = math.exp %553 : vector<2x32xf32>
    %cst_146 = arith.constant 1.000000e+00 : f32
    %555 = vector.broadcast %cst_146 : f32 to vector<2x32xf32>
    %556 = arith.addf %555, %554 : vector<2x32xf32>
    %557 = arith.divf %555, %556 : vector<2x32xf32>
    %558 = vector.extract_strided_slice %551 {offsets = [0, 32], sizes = [2, 32], strides = [1, 1]} : vector<2x128xf32> to vector<2x32xf32>
    %559 = arith.negf %558 : vector<2x32xf32>
    %560 = math.exp %559 : vector<2x32xf32>
    %cst_147 = arith.constant 1.000000e+00 : f32
    %561 = vector.broadcast %cst_147 : f32 to vector<2x32xf32>
    %562 = arith.addf %561, %560 : vector<2x32xf32>
    %563 = arith.divf %561, %562 : vector<2x32xf32>
    %564 = vector.extract_strided_slice %551 {offsets = [0, 64], sizes = [2, 32], strides = [1, 1]} : vector<2x128xf32> to vector<2x32xf32>
    %565 = math.tanh %564 : vector<2x32xf32>
    %566 = vector.extract_strided_slice %551 {offsets = [0, 96], sizes = [2, 32], strides = [1, 1]} : vector<2x128xf32> to vector<2x32xf32>
    %567 = arith.negf %566 : vector<2x32xf32>
    %568 = math.exp %567 : vector<2x32xf32>
    %cst_148 = arith.constant 1.000000e+00 : f32
    %569 = vector.broadcast %cst_148 : f32 to vector<2x32xf32>
    %570 = arith.addf %569, %568 : vector<2x32xf32>
    %571 = arith.divf %569, %570 : vector<2x32xf32>
    %572 = arith.mulf %563, %474 : vector<2x32xf32>
    %573 = arith.mulf %557, %565 : vector<2x32xf32>
    %574 = arith.addf %572, %573 : vector<2x32xf32>
    %575 = math.tanh %574 : vector<2x32xf32>
    %576 = arith.mulf %571, %575 : vector<2x32xf32>
    %577 = vector.shape_cast %539 : vector<2x1xi1> to vector<2x1xi1>
    %578 = vector.broadcast %577 : vector<2x1xi1> to vector<2x32xi1>
    %579 = arith.select %578, %474, %574 : vector<2x32xi1>, vector<2x32xf32>
    %580 = vector.shape_cast %539 : vector<2x1xi1> to vector<2x1xi1>
    %581 = vector.broadcast %580 : vector<2x1xi1> to vector<2x32xi1>
    %582 = arith.select %581, %477, %576 : vector<2x32xi1>, vector<2x32xf32>
    %cst_149 = arith.constant 0.000000e+00 : f32
    %583 = vector.broadcast %cst_149 : f32 to vector<2x32xf32>
    %584 = vector.shape_cast %539 : vector<2x1xi1> to vector<2x1xi1>
    %585 = vector.broadcast %584 : vector<2x1xi1> to vector<2x32xi1>
    %586 = arith.select %585, %583, %576 : vector<2x32xi1>, vector<2x32xf32>
    %587 = arith.index_cast %534 : i32 to index
    %c0_150 = arith.constant 0 : index
    %c0_151 = arith.constant 0 : index
    %588 = vector.load %arg2[%587, %c0_150, %c0_151] : memref<8x2x128xbf16, #tpu.memory_space<vmem>>, vector<1x2x128xbf16>
    %589 = vector.shape_cast %588 : vector<1x2x128xbf16> to vector<2x128xbf16>
    %590 = arith.extf %589 : vector<2x128xbf16> to vector<2x128xf32>
    %591 = arith.truncf %519 : vector<2x32xf32> to vector<2x32xbf16>
    %cst_152 = arith.constant dense<0.000000e+00> : vector<2x128xf32>
    %592 = tpu.matmul %591, %4, %cst_152 {dimension_numbers = #tpu.dot_dimension_numbers<[1], [0], [0], [1], [0, 0, 1, 1], [], []>} : vector<2x32xbf16>, vector<32x128xbf16>, vector<2x128xf32> -> vector<2x128xf32>
    %593 = arith.addf %590, %592 : vector<2x128xf32>
    %594 = vector.extract_strided_slice %593 {offsets = [0, 0], sizes = [2, 32], strides = [1, 1]} : vector<2x128xf32> to vector<2x32xf32>
    %595 = arith.negf %594 : vector<2x32xf32>
    %596 = math.exp %595 : vector<2x32xf32>
    %cst_153 = arith.constant 1.000000e+00 : f32
    %597 = vector.broadcast %cst_153 : f32 to vector<2x32xf32>
    %598 = arith.addf %597, %596 : vector<2x32xf32>
    %599 = arith.divf %597, %598 : vector<2x32xf32>
    %600 = vector.extract_strided_slice %593 {offsets = [0, 32], sizes = [2, 32], strides = [1, 1]} : vector<2x128xf32> to vector<2x32xf32>
    %601 = arith.negf %600 : vector<2x32xf32>
    %602 = math.exp %601 : vector<2x32xf32>
    %cst_154 = arith.constant 1.000000e+00 : f32
    %603 = vector.broadcast %cst_154 : f32 to vector<2x32xf32>
    %604 = arith.addf %603, %602 : vector<2x32xf32>
    %605 = arith.divf %603, %604 : vector<2x32xf32>
    %606 = vector.extract_strided_slice %593 {offsets = [0, 64], sizes = [2, 32], strides = [1, 1]} : vector<2x128xf32> to vector<2x32xf32>
    %607 = math.tanh %606 : vector<2x32xf32>
    %608 = vector.extract_strided_slice %593 {offsets = [0, 96], sizes = [2, 32], strides = [1, 1]} : vector<2x128xf32> to vector<2x32xf32>
    %609 = arith.negf %608 : vector<2x32xf32>
    %610 = math.exp %609 : vector<2x32xf32>
    %cst_155 = arith.constant 1.000000e+00 : f32
    %611 = vector.broadcast %cst_155 : f32 to vector<2x32xf32>
    %612 = arith.addf %611, %610 : vector<2x32xf32>
    %613 = arith.divf %611, %612 : vector<2x32xf32>
    %614 = arith.mulf %605, %516 : vector<2x32xf32>
    %615 = arith.mulf %599, %607 : vector<2x32xf32>
    %616 = arith.addf %614, %615 : vector<2x32xf32>
    %617 = math.tanh %616 : vector<2x32xf32>
    %618 = arith.mulf %613, %617 : vector<2x32xf32>
    %619 = vector.shape_cast %544 : vector<2x1xi1> to vector<2x1xi1>
    %620 = vector.broadcast %619 : vector<2x1xi1> to vector<2x32xi1>
    %621 = arith.select %620, %516, %616 : vector<2x32xi1>, vector<2x32xf32>
    %622 = vector.shape_cast %544 : vector<2x1xi1> to vector<2x1xi1>
    %623 = vector.broadcast %622 : vector<2x1xi1> to vector<2x32xi1>
    %624 = arith.select %623, %519, %618 : vector<2x32xi1>, vector<2x32xf32>
    %cst_156 = arith.constant 0.000000e+00 : f32
    %625 = vector.broadcast %cst_156 : f32 to vector<2x32xf32>
    %626 = vector.shape_cast %544 : vector<2x1xi1> to vector<2x1xi1>
    %627 = vector.broadcast %626 : vector<2x1xi1> to vector<2x32xi1>
    %628 = arith.select %627, %625, %618 : vector<2x32xi1>, vector<2x32xf32>
    %629 = arith.truncf %586 : vector<2x32xf32> to vector<2x32xbf16>
    %630 = arith.index_cast %c5_i32 : i32 to index
    %c0_157 = arith.constant 0 : index
    %c0_158 = arith.constant 0 : index
    %631 = vector.load %arg7[%630, %c0_157, %c0_158] : memref<8x2x32xbf16, #tpu.memory_space<vmem>>, vector<1x2x32xbf16>
    %632 = vector.shape_cast %631 : vector<1x2x32xbf16> to vector<2x32xbf16>
    %633 = vector.shape_cast %629 : vector<2x32xbf16> to vector<1x2x32xbf16>
    tpu.vector_store %arg7[%630, %c0_157, %c0_158], %633 {strides = array<i32>} : memref<8x2x32xbf16, #tpu.memory_space<vmem>>, vector<1x2x32xbf16>,
    %634 = arith.truncf %628 : vector<2x32xf32> to vector<2x32xbf16>
    %635 = arith.index_cast %534 : i32 to index
    %c0_159 = arith.constant 0 : index
    %c0_160 = arith.constant 0 : index
    %636 = vector.load %arg8[%635, %c0_159, %c0_160] : memref<8x2x32xbf16, #tpu.memory_space<vmem>>, vector<1x2x32xbf16>
    %637 = vector.shape_cast %636 : vector<1x2x32xbf16> to vector<2x32xbf16>
    %638 = vector.shape_cast %634 : vector<2x32xbf16> to vector<1x2x32xbf16>
    tpu.vector_store %arg8[%635, %c0_159, %c0_160], %638 {strides = array<i32>} : memref<8x2x32xbf16, #tpu.memory_space<vmem>>, vector<1x2x32xbf16>,
    %c6_i32 = arith.constant 6 : i32
    %c7_i32_161 = arith.constant 7 : i32
    %639 = arith.subi %c7_i32_161, %c6_i32 : i32
    %640 = arith.index_cast %c6_i32 : i32 to index
    %c0_162 = arith.constant 0 : index
    %c0_163 = arith.constant 0 : index
    %641 = vector.load %arg3[%640, %c0_162, %c0_163] : memref<8x2x1xi32, #tpu.memory_space<vmem>>, vector<1x2x1xi32>
    %642 = vector.shape_cast %641 : vector<1x2x1xi32> to vector<2x1xi32>
    %c0_i32_164 = arith.constant 0 : i32
    %643 = vector.broadcast %c0_i32_164 : i32 to vector<2x1xi32>
    %644 = arith.cmpi ne, %642, %643 : vector<2x1xi32>
    %645 = arith.index_cast %639 : i32 to index
    %c0_165 = arith.constant 0 : index
    %c0_166 = arith.constant 0 : index
    %646 = vector.load %arg4[%645, %c0_165, %c0_166] : memref<8x2x1xi32, #tpu.memory_space<vmem>>, vector<1x2x1xi32>
    %647 = vector.shape_cast %646 : vector<1x2x1xi32> to vector<2x1xi32>
    %c0_i32_167 = arith.constant 0 : i32
    %648 = vector.broadcast %c0_i32_167 : i32 to vector<2x1xi32>
    %649 = arith.cmpi ne, %647, %648 : vector<2x1xi32>
    %650 = arith.index_cast %c6_i32 : i32 to index
    %c0_168 = arith.constant 0 : index
    %c0_169 = arith.constant 0 : index
    %651 = vector.load %arg1[%650, %c0_168, %c0_169] : memref<8x2x128xbf16, #tpu.memory_space<vmem>>, vector<1x2x128xbf16>
    %652 = vector.shape_cast %651 : vector<1x2x128xbf16> to vector<2x128xbf16>
    %653 = arith.extf %652 : vector<2x128xbf16> to vector<2x128xf32>
    %654 = arith.truncf %582 : vector<2x32xf32> to vector<2x32xbf16>
    %cst_170 = arith.constant dense<0.000000e+00> : vector<2x128xf32>
    %655 = tpu.matmul %654, %3, %cst_170 {dimension_numbers = #tpu.dot_dimension_numbers<[1], [0], [0], [1], [0, 0, 1, 1], [], []>} : vector<2x32xbf16>, vector<32x128xbf16>, vector<2x128xf32> -> vector<2x128xf32>
    %656 = arith.addf %653, %655 : vector<2x128xf32>
    %657 = vector.extract_strided_slice %656 {offsets = [0, 0], sizes = [2, 32], strides = [1, 1]} : vector<2x128xf32> to vector<2x32xf32>
    %658 = arith.negf %657 : vector<2x32xf32>
    %659 = math.exp %658 : vector<2x32xf32>
    %cst_171 = arith.constant 1.000000e+00 : f32
    %660 = vector.broadcast %cst_171 : f32 to vector<2x32xf32>
    %661 = arith.addf %660, %659 : vector<2x32xf32>
    %662 = arith.divf %660, %661 : vector<2x32xf32>
    %663 = vector.extract_strided_slice %656 {offsets = [0, 32], sizes = [2, 32], strides = [1, 1]} : vector<2x128xf32> to vector<2x32xf32>
    %664 = arith.negf %663 : vector<2x32xf32>
    %665 = math.exp %664 : vector<2x32xf32>
    %cst_172 = arith.constant 1.000000e+00 : f32
    %666 = vector.broadcast %cst_172 : f32 to vector<2x32xf32>
    %667 = arith.addf %666, %665 : vector<2x32xf32>
    %668 = arith.divf %666, %667 : vector<2x32xf32>
    %669 = vector.extract_strided_slice %656 {offsets = [0, 64], sizes = [2, 32], strides = [1, 1]} : vector<2x128xf32> to vector<2x32xf32>
    %670 = math.tanh %669 : vector<2x32xf32>
    %671 = vector.extract_strided_slice %656 {offsets = [0, 96], sizes = [2, 32], strides = [1, 1]} : vector<2x128xf32> to vector<2x32xf32>
    %672 = arith.negf %671 : vector<2x32xf32>
    %673 = math.exp %672 : vector<2x32xf32>
    %cst_173 = arith.constant 1.000000e+00 : f32
    %674 = vector.broadcast %cst_173 : f32 to vector<2x32xf32>
    %675 = arith.addf %674, %673 : vector<2x32xf32>
    %676 = arith.divf %674, %675 : vector<2x32xf32>
    %677 = arith.mulf %668, %579 : vector<2x32xf32>
    %678 = arith.mulf %662, %670 : vector<2x32xf32>
    %679 = arith.addf %677, %678 : vector<2x32xf32>
    %680 = math.tanh %679 : vector<2x32xf32>
    %681 = arith.mulf %676, %680 : vector<2x32xf32>
    %682 = vector.shape_cast %644 : vector<2x1xi1> to vector<2x1xi1>
    %683 = vector.broadcast %682 : vector<2x1xi1> to vector<2x32xi1>
    %684 = arith.select %683, %579, %679 : vector<2x32xi1>, vector<2x32xf32>
    %685 = vector.shape_cast %644 : vector<2x1xi1> to vector<2x1xi1>
    %686 = vector.broadcast %685 : vector<2x1xi1> to vector<2x32xi1>
    %687 = arith.select %686, %582, %681 : vector<2x32xi1>, vector<2x32xf32>
    %cst_174 = arith.constant 0.000000e+00 : f32
    %688 = vector.broadcast %cst_174 : f32 to vector<2x32xf32>
    %689 = vector.shape_cast %644 : vector<2x1xi1> to vector<2x1xi1>
    %690 = vector.broadcast %689 : vector<2x1xi1> to vector<2x32xi1>
    %691 = arith.select %690, %688, %681 : vector<2x32xi1>, vector<2x32xf32>
    %692 = arith.index_cast %639 : i32 to index
    %c0_175 = arith.constant 0 : index
    %c0_176 = arith.constant 0 : index
    %693 = vector.load %arg2[%692, %c0_175, %c0_176] : memref<8x2x128xbf16, #tpu.memory_space<vmem>>, vector<1x2x128xbf16>
    %694 = vector.shape_cast %693 : vector<1x2x128xbf16> to vector<2x128xbf16>
    %695 = arith.extf %694 : vector<2x128xbf16> to vector<2x128xf32>
    %696 = arith.truncf %624 : vector<2x32xf32> to vector<2x32xbf16>
    %cst_177 = arith.constant dense<0.000000e+00> : vector<2x128xf32>
    %697 = tpu.matmul %696, %4, %cst_177 {dimension_numbers = #tpu.dot_dimension_numbers<[1], [0], [0], [1], [0, 0, 1, 1], [], []>} : vector<2x32xbf16>, vector<32x128xbf16>, vector<2x128xf32> -> vector<2x128xf32>
    %698 = arith.addf %695, %697 : vector<2x128xf32>
    %699 = vector.extract_strided_slice %698 {offsets = [0, 0], sizes = [2, 32], strides = [1, 1]} : vector<2x128xf32> to vector<2x32xf32>
    %700 = arith.negf %699 : vector<2x32xf32>
    %701 = math.exp %700 : vector<2x32xf32>
    %cst_178 = arith.constant 1.000000e+00 : f32
    %702 = vector.broadcast %cst_178 : f32 to vector<2x32xf32>
    %703 = arith.addf %702, %701 : vector<2x32xf32>
    %704 = arith.divf %702, %703 : vector<2x32xf32>
    %705 = vector.extract_strided_slice %698 {offsets = [0, 32], sizes = [2, 32], strides = [1, 1]} : vector<2x128xf32> to vector<2x32xf32>
    %706 = arith.negf %705 : vector<2x32xf32>
    %707 = math.exp %706 : vector<2x32xf32>
    %cst_179 = arith.constant 1.000000e+00 : f32
    %708 = vector.broadcast %cst_179 : f32 to vector<2x32xf32>
    %709 = arith.addf %708, %707 : vector<2x32xf32>
    %710 = arith.divf %708, %709 : vector<2x32xf32>
    %711 = vector.extract_strided_slice %698 {offsets = [0, 64], sizes = [2, 32], strides = [1, 1]} : vector<2x128xf32> to vector<2x32xf32>
    %712 = math.tanh %711 : vector<2x32xf32>
    %713 = vector.extract_strided_slice %698 {offsets = [0, 96], sizes = [2, 32], strides = [1, 1]} : vector<2x128xf32> to vector<2x32xf32>
    %714 = arith.negf %713 : vector<2x32xf32>
    %715 = math.exp %714 : vector<2x32xf32>
    %cst_180 = arith.constant 1.000000e+00 : f32
    %716 = vector.broadcast %cst_180 : f32 to vector<2x32xf32>
    %717 = arith.addf %716, %715 : vector<2x32xf32>
    %718 = arith.divf %716, %717 : vector<2x32xf32>
    %719 = arith.mulf %710, %621 : vector<2x32xf32>
    %720 = arith.mulf %704, %712 : vector<2x32xf32>
    %721 = arith.addf %719, %720 : vector<2x32xf32>
    %722 = math.tanh %721 : vector<2x32xf32>
    %723 = arith.mulf %718, %722 : vector<2x32xf32>
    %724 = vector.shape_cast %649 : vector<2x1xi1> to vector<2x1xi1>
    %725 = vector.broadcast %724 : vector<2x1xi1> to vector<2x32xi1>
    %726 = arith.select %725, %621, %721 : vector<2x32xi1>, vector<2x32xf32>
    %727 = vector.shape_cast %649 : vector<2x1xi1> to vector<2x1xi1>
    %728 = vector.broadcast %727 : vector<2x1xi1> to vector<2x32xi1>
    %729 = arith.select %728, %624, %723 : vector<2x32xi1>, vector<2x32xf32>
    %cst_181 = arith.constant 0.000000e+00 : f32
    %730 = vector.broadcast %cst_181 : f32 to vector<2x32xf32>
    %731 = vector.shape_cast %649 : vector<2x1xi1> to vector<2x1xi1>
    %732 = vector.broadcast %731 : vector<2x1xi1> to vector<2x32xi1>
    %733 = arith.select %732, %730, %723 : vector<2x32xi1>, vector<2x32xf32>
    %734 = arith.truncf %691 : vector<2x32xf32> to vector<2x32xbf16>
    %735 = arith.index_cast %c6_i32 : i32 to index
    %c0_182 = arith.constant 0 : index
    %c0_183 = arith.constant 0 : index
    %736 = vector.load %arg7[%735, %c0_182, %c0_183] : memref<8x2x32xbf16, #tpu.memory_space<vmem>>, vector<1x2x32xbf16>
    %737 = vector.shape_cast %736 : vector<1x2x32xbf16> to vector<2x32xbf16>
    %738 = vector.shape_cast %734 : vector<2x32xbf16> to vector<1x2x32xbf16>
    tpu.vector_store %arg7[%735, %c0_182, %c0_183], %738 {strides = array<i32>} : memref<8x2x32xbf16, #tpu.memory_space<vmem>>, vector<1x2x32xbf16>,
    %739 = arith.truncf %733 : vector<2x32xf32> to vector<2x32xbf16>
    %740 = arith.index_cast %639 : i32 to index
    %c0_184 = arith.constant 0 : index
    %c0_185 = arith.constant 0 : index
    %741 = vector.load %arg8[%740, %c0_184, %c0_185] : memref<8x2x32xbf16, #tpu.memory_space<vmem>>, vector<1x2x32xbf16>
    %742 = vector.shape_cast %741 : vector<1x2x32xbf16> to vector<2x32xbf16>
    %743 = vector.shape_cast %739 : vector<2x32xbf16> to vector<1x2x32xbf16>
    tpu.vector_store %arg8[%740, %c0_184, %c0_185], %743 {strides = array<i32>} : memref<8x2x32xbf16, #tpu.memory_space<vmem>>, vector<1x2x32xbf16>,
    %c7_i32_186 = arith.constant 7 : i32
    %c7_i32_187 = arith.constant 7 : i32
    %744 = arith.subi %c7_i32_187, %c7_i32_186 : i32
    %745 = arith.index_cast %c7_i32_186 : i32 to index
    %c0_188 = arith.constant 0 : index
    %c0_189 = arith.constant 0 : index
    %746 = vector.load %arg3[%745, %c0_188, %c0_189] : memref<8x2x1xi32, #tpu.memory_space<vmem>>, vector<1x2x1xi32>
    %747 = vector.shape_cast %746 : vector<1x2x1xi32> to vector<2x1xi32>
    %c0_i32_190 = arith.constant 0 : i32
    %748 = vector.broadcast %c0_i32_190 : i32 to vector<2x1xi32>
    %749 = arith.cmpi ne, %747, %748 : vector<2x1xi32>
    %750 = arith.index_cast %744 : i32 to index
    %c0_191 = arith.constant 0 : index
    %c0_192 = arith.constant 0 : index
    %751 = vector.load %arg4[%750, %c0_191, %c0_192] : memref<8x2x1xi32, #tpu.memory_space<vmem>>, vector<1x2x1xi32>
    %752 = vector.shape_cast %751 : vector<1x2x1xi32> to vector<2x1xi32>
    %c0_i32_193 = arith.constant 0 : i32
    %753 = vector.broadcast %c0_i32_193 : i32 to vector<2x1xi32>
    %754 = arith.cmpi ne, %752, %753 : vector<2x1xi32>
    %755 = arith.index_cast %c7_i32_186 : i32 to index
    %c0_194 = arith.constant 0 : index
    %c0_195 = arith.constant 0 : index
    %756 = vector.load %arg1[%755, %c0_194, %c0_195] : memref<8x2x128xbf16, #tpu.memory_space<vmem>>, vector<1x2x128xbf16>
    %757 = vector.shape_cast %756 : vector<1x2x128xbf16> to vector<2x128xbf16>
    %758 = arith.extf %757 : vector<2x128xbf16> to vector<2x128xf32>
    %759 = arith.truncf %687 : vector<2x32xf32> to vector<2x32xbf16>
    %cst_196 = arith.constant dense<0.000000e+00> : vector<2x128xf32>
    %760 = tpu.matmul %759, %3, %cst_196 {dimension_numbers = #tpu.dot_dimension_numbers<[1], [0], [0], [1], [0, 0, 1, 1], [], []>} : vector<2x32xbf16>, vector<32x128xbf16>, vector<2x128xf32> -> vector<2x128xf32>
    %761 = arith.addf %758, %760 : vector<2x128xf32>
    %762 = vector.extract_strided_slice %761 {offsets = [0, 0], sizes = [2, 32], strides = [1, 1]} : vector<2x128xf32> to vector<2x32xf32>
    %763 = arith.negf %762 : vector<2x32xf32>
    %764 = math.exp %763 : vector<2x32xf32>
    %cst_197 = arith.constant 1.000000e+00 : f32
    %765 = vector.broadcast %cst_197 : f32 to vector<2x32xf32>
    %766 = arith.addf %765, %764 : vector<2x32xf32>
    %767 = arith.divf %765, %766 : vector<2x32xf32>
    %768 = vector.extract_strided_slice %761 {offsets = [0, 32], sizes = [2, 32], strides = [1, 1]} : vector<2x128xf32> to vector<2x32xf32>
    %769 = arith.negf %768 : vector<2x32xf32>
    %770 = math.exp %769 : vector<2x32xf32>
    %cst_198 = arith.constant 1.000000e+00 : f32
    %771 = vector.broadcast %cst_198 : f32 to vector<2x32xf32>
    %772 = arith.addf %771, %770 : vector<2x32xf32>
    %773 = arith.divf %771, %772 : vector<2x32xf32>
    %774 = vector.extract_strided_slice %761 {offsets = [0, 64], sizes = [2, 32], strides = [1, 1]} : vector<2x128xf32> to vector<2x32xf32>
    %775 = math.tanh %774 : vector<2x32xf32>
    %776 = vector.extract_strided_slice %761 {offsets = [0, 96], sizes = [2, 32], strides = [1, 1]} : vector<2x128xf32> to vector<2x32xf32>
    %777 = arith.negf %776 : vector<2x32xf32>
    %778 = math.exp %777 : vector<2x32xf32>
    %cst_199 = arith.constant 1.000000e+00 : f32
    %779 = vector.broadcast %cst_199 : f32 to vector<2x32xf32>
    %780 = arith.addf %779, %778 : vector<2x32xf32>
    %781 = arith.divf %779, %780 : vector<2x32xf32>
    %782 = arith.mulf %773, %684 : vector<2x32xf32>
    %783 = arith.mulf %767, %775 : vector<2x32xf32>
    %784 = arith.addf %782, %783 : vector<2x32xf32>
    %785 = math.tanh %784 : vector<2x32xf32>
    %786 = arith.mulf %781, %785 : vector<2x32xf32>
    %787 = vector.shape_cast %749 : vector<2x1xi1> to vector<2x1xi1>
    %788 = vector.broadcast %787 : vector<2x1xi1> to vector<2x32xi1>
    %789 = arith.select %788, %684, %784 : vector<2x32xi1>, vector<2x32xf32>
    %790 = vector.shape_cast %749 : vector<2x1xi1> to vector<2x1xi1>
    %791 = vector.broadcast %790 : vector<2x1xi1> to vector<2x32xi1>
    %792 = arith.select %791, %687, %786 : vector<2x32xi1>, vector<2x32xf32>
    %cst_200 = arith.constant 0.000000e+00 : f32
    %793 = vector.broadcast %cst_200 : f32 to vector<2x32xf32>
    %794 = vector.shape_cast %749 : vector<2x1xi1> to vector<2x1xi1>
    %795 = vector.broadcast %794 : vector<2x1xi1> to vector<2x32xi1>
    %796 = arith.select %795, %793, %786 : vector<2x32xi1>, vector<2x32xf32>
    %797 = arith.index_cast %744 : i32 to index
    %c0_201 = arith.constant 0 : index
    %c0_202 = arith.constant 0 : index
    %798 = vector.load %arg2[%797, %c0_201, %c0_202] : memref<8x2x128xbf16, #tpu.memory_space<vmem>>, vector<1x2x128xbf16>
    %799 = vector.shape_cast %798 : vector<1x2x128xbf16> to vector<2x128xbf16>
    %800 = arith.extf %799 : vector<2x128xbf16> to vector<2x128xf32>
    %801 = arith.truncf %729 : vector<2x32xf32> to vector<2x32xbf16>
    %cst_203 = arith.constant dense<0.000000e+00> : vector<2x128xf32>
    %802 = tpu.matmul %801, %4, %cst_203 {dimension_numbers = #tpu.dot_dimension_numbers<[1], [0], [0], [1], [0, 0, 1, 1], [], []>} : vector<2x32xbf16>, vector<32x128xbf16>, vector<2x128xf32> -> vector<2x128xf32>
    %803 = arith.addf %800, %802 : vector<2x128xf32>
    %804 = vector.extract_strided_slice %803 {offsets = [0, 0], sizes = [2, 32], strides = [1, 1]} : vector<2x128xf32> to vector<2x32xf32>
    %805 = arith.negf %804 : vector<2x32xf32>
    %806 = math.exp %805 : vector<2x32xf32>
    %cst_204 = arith.constant 1.000000e+00 : f32
    %807 = vector.broadcast %cst_204 : f32 to vector<2x32xf32>
    %808 = arith.addf %807, %806 : vector<2x32xf32>
    %809 = arith.divf %807, %808 : vector<2x32xf32>
    %810 = vector.extract_strided_slice %803 {offsets = [0, 32], sizes = [2, 32], strides = [1, 1]} : vector<2x128xf32> to vector<2x32xf32>
    %811 = arith.negf %810 : vector<2x32xf32>
    %812 = math.exp %811 : vector<2x32xf32>
    %cst_205 = arith.constant 1.000000e+00 : f32
    %813 = vector.broadcast %cst_205 : f32 to vector<2x32xf32>
    %814 = arith.addf %813, %812 : vector<2x32xf32>
    %815 = arith.divf %813, %814 : vector<2x32xf32>
    %816 = vector.extract_strided_slice %803 {offsets = [0, 64], sizes = [2, 32], strides = [1, 1]} : vector<2x128xf32> to vector<2x32xf32>
    %817 = math.tanh %816 : vector<2x32xf32>
    %818 = vector.extract_strided_slice %803 {offsets = [0, 96], sizes = [2, 32], strides = [1, 1]} : vector<2x128xf32> to vector<2x32xf32>
    %819 = arith.negf %818 : vector<2x32xf32>
    %820 = math.exp %819 : vector<2x32xf32>
    %cst_206 = arith.constant 1.000000e+00 : f32
    %821 = vector.broadcast %cst_206 : f32 to vector<2x32xf32>
    %822 = arith.addf %821, %820 : vector<2x32xf32>
    %823 = arith.divf %821, %822 : vector<2x32xf32>
    %824 = arith.mulf %815, %726 : vector<2x32xf32>
    %825 = arith.mulf %809, %817 : vector<2x32xf32>
    %826 = arith.addf %824, %825 : vector<2x32xf32>
    %827 = math.tanh %826 : vector<2x32xf32>
    %828 = arith.mulf %823, %827 : vector<2x32xf32>
    %829 = vector.shape_cast %754 : vector<2x1xi1> to vector<2x1xi1>
    %830 = vector.broadcast %829 : vector<2x1xi1> to vector<2x32xi1>
    %831 = arith.select %830, %726, %826 : vector<2x32xi1>, vector<2x32xf32>
    %832 = vector.shape_cast %754 : vector<2x1xi1> to vector<2x1xi1>
    %833 = vector.broadcast %832 : vector<2x1xi1> to vector<2x32xi1>
    %834 = arith.select %833, %729, %828 : vector<2x32xi1>, vector<2x32xf32>
    %cst_207 = arith.constant 0.000000e+00 : f32
    %835 = vector.broadcast %cst_207 : f32 to vector<2x32xf32>
    %836 = vector.shape_cast %754 : vector<2x1xi1> to vector<2x1xi1>
    %837 = vector.broadcast %836 : vector<2x1xi1> to vector<2x32xi1>
    %838 = arith.select %837, %835, %828 : vector<2x32xi1>, vector<2x32xf32>
    %839 = arith.truncf %796 : vector<2x32xf32> to vector<2x32xbf16>
    %840 = arith.index_cast %c7_i32_186 : i32 to index
    %c0_208 = arith.constant 0 : index
    %c0_209 = arith.constant 0 : index
    %841 = vector.load %arg7[%840, %c0_208, %c0_209] : memref<8x2x32xbf16, #tpu.memory_space<vmem>>, vector<1x2x32xbf16>
    %842 = vector.shape_cast %841 : vector<1x2x32xbf16> to vector<2x32xbf16>
    %843 = vector.shape_cast %839 : vector<2x32xbf16> to vector<1x2x32xbf16>
    tpu.vector_store %arg7[%840, %c0_208, %c0_209], %843 {strides = array<i32>} : memref<8x2x32xbf16, #tpu.memory_space<vmem>>, vector<1x2x32xbf16>,
    %844 = arith.truncf %838 : vector<2x32xf32> to vector<2x32xbf16>
    %845 = arith.index_cast %744 : i32 to index
    %c0_210 = arith.constant 0 : index
    %c0_211 = arith.constant 0 : index
    %846 = vector.load %arg8[%845, %c0_210, %c0_211] : memref<8x2x32xbf16, #tpu.memory_space<vmem>>, vector<1x2x32xbf16>
    %847 = vector.shape_cast %846 : vector<1x2x32xbf16> to vector<2x32xbf16>
    %848 = vector.shape_cast %844 : vector<2x32xbf16> to vector<1x2x32xbf16>
    tpu.vector_store %arg8[%845, %c0_210, %c0_211], %848 {strides = array<i32>} : memref<8x2x32xbf16, #tpu.memory_space<vmem>>, vector<1x2x32xbf16>,
    %c8_i32 = arith.constant 8 : i32
    %c0_212 = arith.constant 0 : index
    %c0_213 = arith.constant 0 : index
    %849 = vector.load %arg11[%c0_212, %c0_213] : memref<2x32xf32, #tpu.memory_space<vmem>>, vector<2x32xf32>
    tpu.vector_store %arg11[%c0_212, %c0_213], %792 {strides = array<i32>} : memref<2x32xf32, #tpu.memory_space<vmem>>, vector<2x32xf32>,
    %c0_214 = arith.constant 0 : index
    %c0_215 = arith.constant 0 : index
    %850 = vector.load %arg12[%c0_214, %c0_215] : memref<2x32xf32, #tpu.memory_space<vmem>>, vector<2x32xf32>
    tpu.vector_store %arg12[%c0_214, %c0_215], %789 {strides = array<i32>} : memref<2x32xf32, #tpu.memory_space<vmem>>, vector<2x32xf32>,
    %c0_216 = arith.constant 0 : index
    %c0_217 = arith.constant 0 : index
    %851 = vector.load %arg13[%c0_216, %c0_217] : memref<2x32xf32, #tpu.memory_space<vmem>>, vector<2x32xf32>
    tpu.vector_store %arg13[%c0_216, %c0_217], %834 {strides = array<i32>} : memref<2x32xf32, #tpu.memory_space<vmem>>, vector<2x32xf32>,
    %c0_218 = arith.constant 0 : index
    %c0_219 = arith.constant 0 : index
    %852 = vector.load %arg14[%c0_218, %c0_219] : memref<2x32xf32, #tpu.memory_space<vmem>>, vector<2x32xf32>
    tpu.vector_store %arg14[%c0_218, %c0_219], %831 {strides = array<i32>} : memref<2x32xf32, #tpu.memory_space<vmem>>, vector<2x32xf32>,
    %c0_i32_220 = arith.constant 0 : i32
    %853 = arith.cmpi eq, %arg0, %c0_i32_220 : i32
    %854 = arith.extui %853 : i1 to i32
    %c0_i32_221 = arith.constant 0 : i32
    %855 = arith.cmpi ne, %854, %c0_i32_221 : i32
    scf.if %855 {
      %c0_222 = arith.constant 0 : index
      %c0_223 = arith.constant 0 : index
      %856 = vector.load %arg9[%c0_222, %c0_223] : memref<2x64xf32, #tpu.memory_space<vmem>>, vector<2x32xf32>
      tpu.vector_store %arg9[%c0_222, %c0_223], %792 {strides = array<i32>} : memref<2x64xf32, #tpu.memory_space<vmem>>, vector<2x32xf32>,
      %c0_224 = arith.constant 0 : index
      %c32 = arith.constant 32 : index
      %857 = vector.load %arg9[%c0_224, %c32] : memref<2x64xf32, #tpu.memory_space<vmem>>, vector<2x32xf32>
      tpu.vector_store %arg9[%c0_224, %c32], %834 {strides = array<i32>} : memref<2x64xf32, #tpu.memory_space<vmem>>, vector<2x32xf32>,
      %c0_225 = arith.constant 0 : index
      %c0_226 = arith.constant 0 : index
      %858 = vector.load %arg10[%c0_225, %c0_226] : memref<2x64xf32, #tpu.memory_space<vmem>>, vector<2x32xf32>
      tpu.vector_store %arg10[%c0_225, %c0_226], %789 {strides = array<i32>} : memref<2x64xf32, #tpu.memory_space<vmem>>, vector<2x32xf32>,
      %c0_227 = arith.constant 0 : index
      %c32_228 = arith.constant 32 : index
      %859 = vector.load %arg10[%c0_227, %c32_228] : memref<2x64xf32, #tpu.memory_space<vmem>>, vector<2x32xf32>
      tpu.vector_store %arg10[%c0_227, %c32_228], %831 {strides = array<i32>} : memref<2x64xf32, #tpu.memory_space<vmem>>, vector<2x32xf32>,
    } else {
    }
    return
  }
  func.func @transform_0(%arg0: i32) -> (i32, i32, i32) {
    %c0_i32 = arith.constant 0 : i32
    %c0_i32_0 = arith.constant 0 : i32
    %c0_i32_1 = arith.constant 0 : i32
    return %arg0, %c0_i32, %c0_i32_0 : i32, i32, i32
  }
  func.func @transform_1(%arg0: i32) -> (i32, i32, i32) {
    %c0_i32 = arith.constant 0 : i32
    %0 = arith.subi %c0_i32, %arg0 : i32
    %c0_i32_0 = arith.constant 0 : i32
    %c1_i32 = arith.constant 1 : i32
    %c0_i32_1 = arith.constant 0 : i32
    return %0, %c0_i32_0, %c1_i32 : i32, i32, i32
  }
  func.func @transform_2(%arg0: i32) -> (i32, i32, i32) {
    %c0_i32 = arith.constant 0 : i32
    %c0_i32_0 = arith.constant 0 : i32
    %c0_i32_1 = arith.constant 0 : i32
    return %arg0, %c0_i32, %c0_i32_0 : i32, i32, i32
  }
  func.func @transform_3(%arg0: i32) -> (i32, i32, i32) {
    %c0_i32 = arith.constant 0 : i32
    %0 = arith.subi %c0_i32, %arg0 : i32
    %c0_i32_0 = arith.constant 0 : i32
    %c0_i32_1 = arith.constant 0 : i32
    %c0_i32_2 = arith.constant 0 : i32
    return %0, %c0_i32_0, %c0_i32_1 : i32, i32, i32
  }
  func.func @transform_4(%arg0: i32) -> (i32, i32) {
    %c0_i32 = arith.constant 0 : i32
    %c0_i32_0 = arith.constant 0 : i32
    %c0_i32_1 = arith.constant 0 : i32
    return %c0_i32, %c0_i32_0 : i32, i32
  }
  func.func @transform_5(%arg0: i32) -> (i32, i32) {
    %c0_i32 = arith.constant 0 : i32
    %c0_i32_0 = arith.constant 0 : i32
    %c0_i32_1 = arith.constant 0 : i32
    return %c0_i32, %c0_i32_0 : i32, i32
  }
  func.func @transform_6(%arg0: i32) -> (i32, i32, i32) {
    %c0_i32 = arith.constant 0 : i32
    %c0_i32_0 = arith.constant 0 : i32
    %c0_i32_1 = arith.constant 0 : i32
    return %arg0, %c0_i32, %c0_i32_0 : i32, i32, i32
  }
  func.func @transform_7(%arg0: i32) -> (i32, i32, i32) {
    %c0_i32 = arith.constant 0 : i32
    %0 = arith.subi %c0_i32, %arg0 : i32
    %c0_i32_0 = arith.constant 0 : i32
    %c0_i32_1 = arith.constant 0 : i32
    %c0_i32_2 = arith.constant 0 : i32
    return %0, %c0_i32_0, %c0_i32_1 : i32, i32, i32
  }
  func.func @transform_8(%arg0: i32) -> (i32, i32) {
    %c0_i32 = arith.constant 0 : i32
    %c0_i32_0 = arith.constant 0 : i32
    %c0_i32_1 = arith.constant 0 : i32
    return %c0_i32, %c0_i32_0 : i32, i32
  }
  func.func @transform_9(%arg0: i32) -> (i32, i32) {
    %c0_i32 = arith.constant 0 : i32
    %c0_i32_0 = arith.constant 0 : i32
    %c0_i32_1 = arith.constant 0 : i32
    return %c0_i32, %c0_i32_0 : i32, i32
  }
}

module attributes {stable_mosaic.version = 11 : i64} {
  func.func @_head_kernel(%arg0: i32, %arg1: i32, %arg2: i32, %arg3: memref<16x32xbf16, #tpu.memory_space<vmem>>, %arg4: memref<16x32xbf16, #tpu.memory_space<vmem>>, %arg5: memref<32x1024xbf16, #tpu.memory_space<vmem>>, %arg6: memref<32x1024xbf16, #tpu.memory_space<vmem>>, %arg7: memref<1x1024xf32, #tpu.memory_space<vmem>>, %arg8: memref<1024x256xbf16, #tpu.memory_space<vmem>>, %arg9: memref<1x256xf32, #tpu.memory_space<vmem>>, %arg10: memref<16x1024xf32, #tpu.memory_space<vmem>>, %arg11: memref<16x256xf32, #tpu.memory_space<vmem>>, %arg12: memref<16x1024xbf16, #tpu.memory_space<vmem>>, %arg13: memref<16x1xf32, #tpu.memory_space<vmem>>, %arg14: memref<16x1xf32, #tpu.memory_space<vmem>>) attributes {dimension_semantics = [#tpu.dimension_semantics<parallel>, #tpu.dimension_semantics<arbitrary>, #tpu.dimension_semantics<arbitrary>], iteration_bounds = array<i64: 1, 2, 1>, scalar_prefetch = 0 : i64, scratch_operands = 3 : i64, tpu.core_type = #tpu.core_type<tc>, window_params = [{transform_indices = @transform_0, window_bounds = array<i64: 16, 32>}, {transform_indices = @transform_1, window_bounds = array<i64: 16, 32>}, {pipeline_mode = #tpu.pipeline_mode<synchronous>, transform_indices = @transform_2, window_bounds = array<i64: 32, 1024>}, {pipeline_mode = #tpu.pipeline_mode<synchronous>, transform_indices = @transform_3, window_bounds = array<i64: 32, 1024>}, {pipeline_mode = #tpu.pipeline_mode<synchronous>, transform_indices = @transform_4, window_bounds = array<i64: 1, 1024>}, {transform_indices = @transform_5, window_bounds = array<i64: 1024, 256>}, {transform_indices = @transform_6, window_bounds = array<i64: 1, 256>}, {transform_indices = @transform_7, window_bounds = array<i64: 16, 1024>}, {transform_indices = @transform_8, window_bounds = array<i64: 16, 256>}]} {
    %c0_i32 = arith.constant 0 : i32
    %0 = arith.cmpi eq, %arg1, %c0_i32 : i32
    %c0_i32_0 = arith.constant 0 : i32
    %1 = arith.cmpi eq, %arg2, %c0_i32_0 : i32
    %2 = arith.andi %0, %1 : i1
    %3 = arith.extui %2 : i1 to i32
    %c0_i32_1 = arith.constant 0 : i32
    %4 = arith.cmpi ne, %3, %c0_i32_1 : i32
    scf.if %4 {
      %c0_10 = arith.constant 0 : index
      %c0_11 = arith.constant 0 : index
      %17 = vector.load %arg3[%c0_10, %c0_11] : memref<16x32xbf16, #tpu.memory_space<vmem>>, vector<16x32xbf16>
      %c0_12 = arith.constant 0 : index
      %c0_13 = arith.constant 0 : index
      %18 = vector.load %arg5[%c0_12, %c0_13] : memref<32x1024xbf16, #tpu.memory_space<vmem>>, vector<32x1024xbf16>
      %cst_14 = arith.constant dense<0.000000e+00> : vector<16x1024xf32>
      %19 = tpu.matmul %17, %18, %cst_14 {dimension_numbers = #tpu.dot_dimension_numbers<[1], [0], [0], [1], [0, 0, 1, 1], [], []>} : vector<16x32xbf16>, vector<32x1024xbf16>, vector<16x1024xf32> -> vector<16x1024xf32>
      %c0_15 = arith.constant 0 : index
      %c0_16 = arith.constant 0 : index
      %20 = vector.load %arg4[%c0_15, %c0_16] : memref<16x32xbf16, #tpu.memory_space<vmem>>, vector<16x32xbf16>
      %c0_17 = arith.constant 0 : index
      %c0_18 = arith.constant 0 : index
      %21 = vector.load %arg6[%c0_17, %c0_18] : memref<32x1024xbf16, #tpu.memory_space<vmem>>, vector<32x1024xbf16>
      %cst_19 = arith.constant dense<0.000000e+00> : vector<16x1024xf32>
      %22 = tpu.matmul %20, %21, %cst_19 {dimension_numbers = #tpu.dot_dimension_numbers<[1], [0], [0], [1], [0, 0, 1, 1], [], []>} : vector<16x32xbf16>, vector<32x1024xbf16>, vector<16x1024xf32> -> vector<16x1024xf32>
      %23 = arith.addf %19, %22 : vector<16x1024xf32>
      %c0_20 = arith.constant 0 : index
      %c0_21 = arith.constant 0 : index
      %24 = vector.load %arg7[%c0_20, %c0_21] : memref<1x1024xf32, #tpu.memory_space<vmem>>, vector<1x1024xf32>
      %25 = vector.broadcast %24 : vector<1x1024xf32> to vector<16x1024xf32>
      %26 = arith.addf %23, %25 : vector<16x1024xf32>
      %cst_22 = arith.constant 0.000000e+00 : f32
      %27 = vector.broadcast %cst_22 : f32 to vector<16x1024xf32>
      %28 = arith.maximumf %26, %27 : vector<16x1024xf32>
      %c0_23 = arith.constant 0 : index
      %c0_24 = arith.constant 0 : index
      %29 = vector.load %arg10[%c0_23, %c0_24] : memref<16x1024xf32, #tpu.memory_space<vmem>>, vector<16x1024xf32>
      tpu.vector_store %arg10[%c0_23, %c0_24], %28 {strides = array<i32>} : memref<16x1024xf32, #tpu.memory_space<vmem>>, vector<16x1024xf32>,
      %30 = arith.truncf %28 : vector<16x1024xf32> to vector<16x1024xbf16>
      %c0_25 = arith.constant 0 : index
      %c0_26 = arith.constant 0 : index
      %31 = vector.load %arg12[%c0_25, %c0_26] : memref<16x1024xbf16, #tpu.memory_space<vmem>>, vector<16x1024xbf16>
      tpu.vector_store %arg12[%c0_25, %c0_26], %30 {strides = array<i32>} : memref<16x1024xbf16, #tpu.memory_space<vmem>>, vector<16x1024xbf16>,
      %cst_27 = arith.constant 0xFF800000 : f32
      %32 = vector.broadcast %cst_27 : f32 to vector<16x1xf32>
      %c0_28 = arith.constant 0 : index
      %c0_29 = arith.constant 0 : index
      %33 = vector.load %arg13[%c0_28, %c0_29] : memref<16x1xf32, #tpu.memory_space<vmem>>, vector<16x1xf32>
      tpu.vector_store %arg13[%c0_28, %c0_29], %32 {strides = array<i32>} : memref<16x1xf32, #tpu.memory_space<vmem>>, vector<16x1xf32>,
      %cst_30 = arith.constant 0.000000e+00 : f32
      %34 = vector.broadcast %cst_30 : f32 to vector<16x1xf32>
      %c0_31 = arith.constant 0 : index
      %c0_32 = arith.constant 0 : index
      %35 = vector.load %arg14[%c0_31, %c0_32] : memref<16x1xf32, #tpu.memory_space<vmem>>, vector<16x1xf32>
      tpu.vector_store %arg14[%c0_31, %c0_32], %34 {strides = array<i32>} : memref<16x1xf32, #tpu.memory_space<vmem>>, vector<16x1xf32>,
    } else {
    }
    %c0 = arith.constant 0 : index
    %c0_2 = arith.constant 0 : index
    %5 = vector.load %arg12[%c0, %c0_2] : memref<16x1024xbf16, #tpu.memory_space<vmem>>, vector<16x1024xbf16>
    %c0_3 = arith.constant 0 : index
    %c0_4 = arith.constant 0 : index
    %6 = vector.load %arg8[%c0_3, %c0_4] : memref<1024x256xbf16, #tpu.memory_space<vmem>>, vector<1024x256xbf16>
    %cst = arith.constant dense<0.000000e+00> : vector<16x256xf32>
    %7 = tpu.matmul %5, %6, %cst {dimension_numbers = #tpu.dot_dimension_numbers<[1], [0], [0], [1], [0, 0, 1, 1], [], []>} : vector<16x1024xbf16>, vector<1024x256xbf16>, vector<16x256xf32> -> vector<16x256xf32>
    %c0_5 = arith.constant 0 : index
    %c0_6 = arith.constant 0 : index
    %8 = vector.load %arg9[%c0_5, %c0_6] : memref<1x256xf32, #tpu.memory_space<vmem>>, vector<1x256xf32>
    %9 = vector.broadcast %8 : vector<1x256xf32> to vector<16x256xf32>
    %10 = arith.addf %7, %9 : vector<16x256xf32>
    %c0_i32_7 = arith.constant 0 : i32
    %11 = arith.cmpi eq, %arg1, %c0_i32_7 : i32
    %12 = arith.extui %11 : i1 to i32
    %c0_i32_8 = arith.constant 0 : i32
    %13 = arith.cmpi ne, %12, %c0_i32_8 : i32
    scf.if %13 {
      %c0_10 = arith.constant 0 : index
      %c0_11 = arith.constant 0 : index
      %17 = vector.load %arg13[%c0_10, %c0_11] : memref<16x1xf32, #tpu.memory_space<vmem>>, vector<16x1xf32>
      %cst_12 = arith.constant dense<0xFF800000> : vector<16xf32>
      %18 = vector.multi_reduction <maximumf>, %10, %cst_12 [1] : vector<16x256xf32> to vector<16xf32>
      %19 = vector.shape_cast %18 : vector<16xf32> to vector<16x1xf32>
      %20 = arith.maximumf %17, %19 : vector<16x1xf32>
      %c0_13 = arith.constant 0 : index
      %c0_14 = arith.constant 0 : index
      %21 = vector.load %arg14[%c0_13, %c0_14] : memref<16x1xf32, #tpu.memory_space<vmem>>, vector<16x1xf32>
      %22 = arith.subf %17, %20 : vector<16x1xf32>
      %23 = math.exp %22 : vector<16x1xf32>
      %24 = arith.mulf %21, %23 : vector<16x1xf32>
      %25 = vector.broadcast %20 : vector<16x1xf32> to vector<16x256xf32>
      %26 = arith.subf %10, %25 : vector<16x256xf32>
      %27 = math.exp %26 : vector<16x256xf32>
      %cst_15 = arith.constant dense<0.000000e+00> : vector<16xf32>
      %28 = vector.multi_reduction <add>, %27, %cst_15 [1] : vector<16x256xf32> to vector<16xf32>
      %29 = vector.shape_cast %28 : vector<16xf32> to vector<16x1xf32>
      %30 = arith.addf %24, %29 : vector<16x1xf32>
      %c0_16 = arith.constant 0 : index
      %c0_17 = arith.constant 0 : index
      %31 = vector.load %arg14[%c0_16, %c0_17] : memref<16x1xf32, #tpu.memory_space<vmem>>, vector<16x1xf32>
      tpu.vector_store %arg14[%c0_16, %c0_17], %30 {strides = array<i32>} : memref<16x1xf32, #tpu.memory_space<vmem>>, vector<16x1xf32>,
      %c0_18 = arith.constant 0 : index
      %c0_19 = arith.constant 0 : index
      %32 = vector.load %arg13[%c0_18, %c0_19] : memref<16x1xf32, #tpu.memory_space<vmem>>, vector<16x1xf32>
      tpu.vector_store %arg13[%c0_18, %c0_19], %20 {strides = array<i32>} : memref<16x1xf32, #tpu.memory_space<vmem>>, vector<16x1xf32>,
    } else {
    }
    %c1_i32 = arith.constant 1 : i32
    %14 = arith.cmpi eq, %arg1, %c1_i32 : i32
    %15 = arith.extui %14 : i1 to i32
    %c0_i32_9 = arith.constant 0 : i32
    %16 = arith.cmpi ne, %15, %c0_i32_9 : i32
    scf.if %16 {
      %c0_10 = arith.constant 0 : index
      %c0_11 = arith.constant 0 : index
      %17 = vector.load %arg13[%c0_10, %c0_11] : memref<16x1xf32, #tpu.memory_space<vmem>>, vector<16x1xf32>
      %c0_12 = arith.constant 0 : index
      %c0_13 = arith.constant 0 : index
      %18 = vector.load %arg14[%c0_12, %c0_13] : memref<16x1xf32, #tpu.memory_space<vmem>>, vector<16x1xf32>
      %19 = math.log %18 : vector<16x1xf32>
      %20 = arith.addf %17, %19 : vector<16x1xf32>
      %21 = vector.broadcast %20 : vector<16x1xf32> to vector<16x256xf32>
      %22 = arith.subf %10, %21 : vector<16x256xf32>
      %c0_14 = arith.constant 0 : index
      %c0_15 = arith.constant 0 : index
      %23 = vector.load %arg11[%c0_14, %c0_15] : memref<16x256xf32, #tpu.memory_space<vmem>>, vector<16x256xf32>
      tpu.vector_store %arg11[%c0_14, %c0_15], %22 {strides = array<i32>} : memref<16x256xf32, #tpu.memory_space<vmem>>, vector<16x256xf32>,
    } else {
    }
    return
  }
  func.func @transform_0(%arg0: i32, %arg1: i32, %arg2: i32) -> (i32, i32) {
    %c0_i32 = arith.constant 0 : i32
    %c0_i32_0 = arith.constant 0 : i32
    return %arg0, %c0_i32 : i32, i32
  }
  func.func @transform_1(%arg0: i32, %arg1: i32, %arg2: i32) -> (i32, i32) {
    %c0_i32 = arith.constant 0 : i32
    %c0_i32_0 = arith.constant 0 : i32
    return %arg0, %c0_i32 : i32, i32
  }
  func.func @transform_2(%arg0: i32, %arg1: i32, %arg2: i32) -> (i32, i32) {
    %c0_i32 = arith.constant 0 : i32
    %c0_i32_0 = arith.constant 0 : i32
    %c0_i32_1 = arith.constant 0 : i32
    return %c0_i32, %c0_i32_0 : i32, i32
  }
  func.func @transform_3(%arg0: i32, %arg1: i32, %arg2: i32) -> (i32, i32) {
    %c0_i32 = arith.constant 0 : i32
    %c0_i32_0 = arith.constant 0 : i32
    %c0_i32_1 = arith.constant 0 : i32
    return %c0_i32, %c0_i32_0 : i32, i32
  }
  func.func @transform_4(%arg0: i32, %arg1: i32, %arg2: i32) -> (i32, i32) {
    %c0_i32 = arith.constant 0 : i32
    %c0_i32_0 = arith.constant 0 : i32
    %c0_i32_1 = arith.constant 0 : i32
    return %c0_i32, %c0_i32_0 : i32, i32
  }
  func.func @transform_5(%arg0: i32, %arg1: i32, %arg2: i32) -> (i32, i32) {
    %c0_i32 = arith.constant 0 : i32
    %c0_i32_0 = arith.constant 0 : i32
    return %c0_i32, %arg2 : i32, i32
  }
  func.func @transform_6(%arg0: i32, %arg1: i32, %arg2: i32) -> (i32, i32) {
    %c0_i32 = arith.constant 0 : i32
    %c0_i32_0 = arith.constant 0 : i32
    return %c0_i32, %arg2 : i32, i32
  }
  func.func @transform_7(%arg0: i32, %arg1: i32, %arg2: i32) -> (i32, i32) {
    %c0_i32 = arith.constant 0 : i32
    %c0_i32_0 = arith.constant 0 : i32
    return %arg0, %c0_i32 : i32, i32
  }
  func.func @transform_8(%arg0: i32, %arg1: i32, %arg2: i32) -> (i32, i32) {
    %0 = arith.muli %arg2, %arg1 : i32
    %c0_i32 = arith.constant 0 : i32
    return %arg0, %0 : i32, i32
  }
}

</mosaic_0001>

<llo_original>
// kernel: encoder_forward.5
$region0: #{encoder_forward.5}
  #allocation0 [shape = 'u32[]', space=smem, size = 0x4, offset = 0x4, fixed_abs, tag = 'smem constant byte address 0x4 - core index']
  #allocation1 [shape = 'u32[72,128]{1,0:T(1,128)}', space=vmem, size = 0x9000, scoped, tag = 'internal scratch']
  %s0 = inlined_call_operand.vmem [shape: bf16[16,16], index: 0, kind: input, shape index: {}]
  %s1 = inlined_call_operand.hbm [shape: bf16[16,256], index: 1, kind: input, shape index: {}]
  %s2 = inlined_call_operand.hbm [shape: f32[1,256], index: 2, kind: input, shape index: {}]
  %s3 = inlined_call_operand.vmem [shape: bf16[16,256], index: 3, kind: output, shape index: {}]
  %s4 = sld [smem:[#allocation0]]
  $region30: #{encoder_forward.5} parent=0
    _
  %s6 = ssub.s32 1, %s4
  %s7 = scalar_select 0, %s6, %s4
  $region1: #{encoder_forward.5} parent=0
    #allocation2 [shape = 'u8[8192]{0}', space=vmem, size = 0x2000, scoped, tag = 'input window, operand 1, single buffered']
    #allocation3 [shape = 's32[1]{0}', space=sflag, size = 0x4, scoped, tag = 'scoped memory for encoder_forward.5']
    #allocation4 [shape = 'u8[1024]{0}', space=vmem, size = 0x400, scoped, tag = 'input window, operand 2, single buffered']
    #allocation5 [shape = 's32[1]{0}', space=sflag, size = 0x4, scoped, tag = 'scoped memory for encoder_forward.5']
    %8 = vsyncpa [#allocation3], 0
    %9 = vsyncpa [#allocation5], 0
    // Predicated region
    $region2: #{encoder_forward.5} parent=1 // pred_check
      _
    $region3: #{encoder_forward.5} parent=1 // pred_check_branch
      %11 = sbr.rel (0) target = $region5
    $region4: #{encoder_forward.5} parent=1 // pred_region
      _
    $region5: #{encoder_forward.5} parent=1 // pred_fallthru
      _
    // Predicated region
    $region6: #{encoder_forward.5} parent=1 // pred_check
      _
    $region7: #{encoder_forward.5} parent=1 // pred_check_branch
      %13 = sbr.rel (0) target = $region9
    $region8: #{encoder_forward.5} parent=1 // pred_region
      %15 = vsyncadd [#allocation3], 0
      %s16 = sshll.u32 %s1, 4
      %s17 = int_to_ptr.hbm [resolvable:$true] %s16
      %s18 = sshll.u32 [#allocation2], 4
      %s19 = int_to_ptr.vmem [resolvable:$true] %s18
      %24 = dma.hbm_to_vmem [thread:$0]  %s17, 256, %s19, [#allocation3], 128, 128, 8
    $region9: #{encoder_forward.5} parent=1 // pred_fallthru
      _
    // Predicated region
    $region10: #{encoder_forward.5} parent=1 // pred_check
      _
    $region11: #{encoder_forward.5} parent=1 // pred_check_branch
      %26 = sbr.rel (0) target = $region13
    $region12: #{encoder_forward.5} parent=1 // pred_region
      %28 = vsyncadd [#allocation5], 0
      %s30 = sshll.u32 %s2, 4
      %s31 = int_to_ptr.hbm [resolvable:$true] %s30
      %s32 = sshll.u32 [#allocation4], 4
      %s33 = int_to_ptr.vmem [resolvable:$true] %s32
      %35 = dma.hbm_to_vmem [thread:$0]  %s31, 32, %s33, [#allocation5]
    $region13: #{encoder_forward.5} parent=1 // pred_fallthru
      _
    // Predicated region
    $region14: #{encoder_forward.5} parent=1 // pred_check
      _
    $region15: #{encoder_forward.5} parent=1 // pred_check_branch
      %37 = sbr.rel (0) target = $region17
    $region16: #{encoder_forward.5} parent=1 // pred_region
      %39 = dma.done [#allocation3], 256
    $region17: #{encoder_forward.5} parent=1 // pred_fallthru
      _
    // Predicated region
    $region18: #{encoder_forward.5} parent=1 // pred_check
      _
    $region19: #{encoder_forward.5} parent=1 // pred_check_branch
      %41 = sbr.rel (0) target = $region21
    $region20: #{encoder_forward.5} parent=1 // pred_region
      %43 = dma.done [#allocation5], 32
    $region21: #{encoder_forward.5} parent=1 // pred_fallthru
      _
    %v45 = vld [vmem:[%s0] sm:$0xf]
    %v46 = vld [vmem:[%s0 + $0x4] sm:$0xf]
    %v47 = vld [vmem:[#allocation2] sm:$0xff]
    %v48 = vld [vmem:[#allocation2 + $0x8] sm:$0xff]
    %v49 = vld [vmem:[#allocation4] sm:$0x3]
    %v51 = vperm.slane %v49, 0
    %v52 = vperm.slane %v49, 1
    %v57 = vunpack.c.l.b16 %v45
    %v58 = vunpack.c.l.b16 %v46
    %v59 = vpack.c.b16 %v58, %v57
    %v62 = vunpack.c.l.b16 %v47
    %v63 = vunpack.c.h.b16 %v47
    %v64 = vunpack.c.l.b16 %v48
    %v65 = vunpack.c.h.b16 %v48
    %v66 = vpack.c.b16 %v64, %v62
    %v67 = vpack.c.b16 %v65, %v63
    %vm70 = vcmask 130048
    %v72 = vsel %vm70, %v59, 0
    %74 = vmatpush.bf16.msra.mxu0 0
    %75 = vmatpush.bf16.msra.mxu0 0
    %76 = vmatpush.bf16.msra.mxu0 0
    %77 = vmatpush.bf16.msra.mxu0 0
    %78 = vmatpush.bf16.msra.mxu0 0
    %79 = vmatpush.bf16.msra.mxu0 0
    %80 = vmatpush.bf16.msra.mxu0 0
    %81 = vmatpush.bf16.msra.mxu0 %v66
    %82 = vmatmul.bf16.gmra.mxu0 %v72
    %v83 = vpop.f32.mrf.mxu0
    %v84 = vadd.f32 %v51, %v83
    %v85 = vpop.f32.mrf.mxu0
    %v86 = vadd.f32 %v51, %v85
    %87 = vdwg.mxu0
    %88 = vmatpush.bf16.msra.mxu0 0
    %89 = vmatpush.bf16.msra.mxu0 0
    %90 = vmatpush.bf16.msra.mxu0 0
    %91 = vmatpush.bf16.msra.mxu0 0
    %92 = vmatpush.bf16.msra.mxu0 0
    %93 = vmatpush.bf16.msra.mxu0 0
    %94 = vmatpush.bf16.msra.mxu0 0
    %95 = vmatpush.bf16.msra.mxu0 %v67
    %96 = vmatmul.bf16.gmra.mxu0 %v72
    %v97 = vpop.f32.mrf.mxu0
    %v98 = vadd.f32 %v52, %v97
    %v99 = vpop.f32.mrf.mxu0
    %v100 = vadd.f32 %v52, %v99
    %101 = vdwg.mxu0
    %v102 = vpack.c.bf16 %v98, %v84
    %v103 = vpack.c.bf16 %v100, %v86
    %104 = vst [vmem:[%s3] sm:$0xff] %v102
    %105 = vst [vmem:[%s3 + $0x8] sm:$0xff] %v103
    // Predicated region
    $region22: #{encoder_forward.5} parent=1 // pred_check
      _
    $region23: #{encoder_forward.5} parent=1 // pred_check_branch
      %107 = sbr.rel (0) target = $region25
    $region24: #{encoder_forward.5} parent=1 // pred_region
      _
    $region25: #{encoder_forward.5} parent=1 // pred_fallthru
      _
    // Predicated region
    $region26: #{encoder_forward.5} parent=1 // pred_check
      _
    $region27: #{encoder_forward.5} parent=1 // pred_check_branch
      %109 = sbr.rel (0) target = $region29
    $region28: #{encoder_forward.5} parent=1 // pred_region
      _
    $region29: #{encoder_forward.5} parent=1 // pred_fallthru
      _
    %110 = vsyncpa [#allocation3], 1
    %111 = vsyncpa [#allocation5], 1

// kernel: encoder_forward.7
$region0: #{encoder_forward.7}
  #allocation0 [shape = 'u32[]', space=smem, size = 0x4, offset = 0x4, fixed_abs, tag = 'smem constant byte address 0x4 - core index']
  #allocation1 [shape = 'u32[72,128]{1,0:T(1,128)}', space=vmem, size = 0x9000, scoped, tag = 'internal scratch']
  %s0 = inlined_call_operand.vmem [shape: bf16[16,32], index: 0, kind: input, shape index: {}]
  %s1 = inlined_call_operand.vmem [shape: bf16[16,32], index: 1, kind: input, shape index: {}]
  %s2 = inlined_call_operand.hbm [shape: bf16[32,256], index: 2, kind: input, shape index: {}]
  %s3 = inlined_call_operand.hbm [shape: bf16[32,256], index: 3, kind: input, shape index: {}]
  %s4 = inlined_call_operand.hbm [shape: f32[1,256], index: 4, kind: input, shape index: {}]
  %s5 = inlined_call_operand.vmem [shape: bf16[16,256], index: 5, kind: output, shape index: {}]
  %s6 = sld [smem:[#allocation0]]
  $region42: #{encoder_forward.7} parent=0
    _
  %s8 = ssub.s32 1, %s6
  %s9 = scalar_select 0, %s8, %s6
  $region1: #{encoder_forward.7} parent=0
    #allocation2 [shape = 'u8[16384]{0}', space=vmem, size = 0x4000, scoped, tag = 'input window, operand 2, single buffered']
    #allocation3 [shape = 's32[1]{0}', space=sflag, size = 0x4, scoped, tag = 'scoped memory for encoder_forward.7']
    #allocation4 [shape = 'u8[16384]{0}', space=vmem, size = 0x4000, scoped, tag = 'input window, operand 3, single buffered']
    #allocation5 [shape = 's32[1]{0}', space=sflag, size = 0x4, scoped, tag = 'scoped memory for encoder_forward.7']
    #allocation6 [shape = 'u8[1024]{0}', space=vmem, size = 0x400, scoped, tag = 'input window, operand 4, single buffered']
    %10 = vsyncpa [#allocation3], 0
    %11 = vsyncpa [#allocation5], 0
    // Predicated region
    $region2: #{encoder_forward.7} parent=1 // pred_check
      _
    $region3: #{encoder_forward.7} parent=1 // pred_check_branch
      %13 = sbr.rel (0) target = $region5
    $region4: #{encoder_forward.7} parent=1 // pred_region
      _
    $region5: #{encoder_forward.7} parent=1 // pred_fallthru
      _
    // Predicated region
    $region6: #{encoder_forward.7} parent=1 // pred_check
      _
    $region7: #{encoder_forward.7} parent=1 // pred_check_branch
      %15 = sbr.rel (0) target = $region9
    $region8: #{encoder_forward.7} parent=1 // pred_region
      _
    $region9: #{encoder_forward.7} parent=1 // pred_fallthru
      _
    // Predicated region
    $region10: #{encoder_forward.7} parent=1 // pred_check
      _
    $region11: #{encoder_forward.7} parent=1 // pred_check_branch
      %17 = sbr.rel (0) target = $region13
    $region12: #{encoder_forward.7} parent=1 // pred_region
      %19 = vsyncadd [#allocation3], 0
      %s20 = sshll.u32 %s2, 4
      %s21 = int_to_ptr.hbm [resolvable:$true] %s20
      %s22 = sshll.u32 [#allocation2], 4
      %s23 = int_to_ptr.vmem [resolvable:$true] %s22
      %28 = dma.hbm_to_vmem [thread:$0]  %s21, 512, %s23, [#allocation3], 128, 128, 8
    $region13: #{encoder_forward.7} parent=1 // pred_fallthru
      _
    // Predicated region
    $region14: #{encoder_forward.7} parent=1 // pred_check
      _
    $region15: #{encoder_forward.7} parent=1 // pred_check_branch
      %30 = sbr.rel (0) target = $region17
    $region16: #{encoder_forward.7} parent=1 // pred_region
      %32 = vsyncadd [#allocation5], 0
      %s33 = sshll.u32 %s3, 4
      %s34 = int_to_ptr.hbm [resolvable:$true] %s33
      %s35 = sshll.u32 [#allocation4], 4
      %s36 = int_to_ptr.vmem [resolvable:$true] %s35
      %41 = dma.hbm_to_vmem [thread:$0]  %s34, 512, %s36, [#allocation5], 128, 128, 8
    $region17: #{encoder_forward.7} parent=1 // pred_fallthru
      _
    // Predicated region
    $region18: #{encoder_forward.7} parent=1 // pred_check
      _
    $region19: #{encoder_forward.7} parent=1 // pred_check_branch
      %43 = sbr.rel (0) target = $region21
    $region20: #{encoder_forward.7} parent=1 // pred_region
      %45 = vsyncadd [#allocation5], 0
      %s47 = sshll.u32 %s4, 4
      %s48 = int_to_ptr.hbm [resolvable:$true] %s47
      %s49 = sshll.u32 [#allocation6], 4
      %s50 = int_to_ptr.vmem [resolvable:$true] %s49
      %52 = dma.hbm_to_vmem [thread:$0]  %s48, 32, %s50, [#allocation5]
    $region21: #{encoder_forward.7} parent=1 // pred_fallthru
      _
    // Predicated region
    $region22: #{encoder_forward.7} parent=1 // pred_check
      _
    $region23: #{encoder_forward.7} parent=1 // pred_check_branch
      %54 = sbr.rel (0) target = $region25
    $region24: #{encoder_forward.7} parent=1 // pred_region
      %56 = dma.done [#allocation3], 512
    $region25: #{encoder_forward.7} parent=1 // pred_fallthru
      _
    // Predicated region
    $region26: #{encoder_forward.7} parent=1 // pred_check
      _
    $region27: #{encoder_forward.7} parent=1 // pred_check_branch
      %58 = sbr.rel (0) target = $region29
    $region28: #{encoder_forward.7} parent=1 // pred_region
      %60 = dma.done [#allocation5], 512
    $region29: #{encoder_forward.7} parent=1 // pred_fallthru
      _
    // Predicated region
    $region30: #{encoder_forward.7} parent=1 // pred_check
      _
    $region31: #{encoder_forward.7} parent=1 // pred_check_branch
      %62 = sbr.rel (0) target = $region33
    $region32: #{encoder_forward.7} parent=1 // pred_region
      %64 = dma.done [#allocation5], 32
    $region33: #{encoder_forward.7} parent=1 // pred_fallthru
      _
    %v66 = vld [vmem:[%s0] sm:$0xf]
    %v67 = vld [vmem:[%s0 + $0x4] sm:$0xf]
    %v68 = vld [vmem:[#allocation2] sm:$0xff]
    %v69 = vld [vmem:[#allocation2 + $0x8] sm:$0xff]
    %v70 = vld [vmem:[#allocation2 + $0x10] sm:$0xff]
    %v71 = vld [vmem:[#allocation2 + $0x18] sm:$0xff]
    %v72 = vld [vmem:[%s1] sm:$0xf]
    %v73 = vld [vmem:[%s1 + $0x4] sm:$0xf]
    %v74 = vld [vmem:[#allocation4] sm:$0xff]
    %v75 = vld [vmem:[#allocation4 + $0x8] sm:$0xff]
    %v76 = vld [vmem:[#allocation4 + $0x10] sm:$0xff]
    %v77 = vld [vmem:[#allocation4 + $0x18] sm:$0xff]
    %v80 = vunpack.c.l.b16 %v72
    %v81 = vunpack.c.l.b16 %v73
    %v82 = vpack.c.b16 %v81, %v80
    %v87 = vunpack.c.l.b16 %v74
    %v88 = vunpack.c.h.b16 %v74
    %v89 = vunpack.c.l.b16 %v75
    %v90 = vunpack.c.h.b16 %v75
    %v91 = vunpack.c.l.b16 %v76
    %v92 = vunpack.c.h.b16 %v76
    %v93 = vunpack.c.l.b16 %v77
    %v94 = vunpack.c.h.b16 %v77
    %v95 = vpack.c.b16 %v89, %v87
    %v96 = vpack.c.b16 %v90, %v88
    %v97 = vpack.c.b16 %v93, %v91
    %v98 = vpack.c.b16 %v94, %v92
    %vm103 = vcmask 261120
    %v105 = vsel %vm103, %v82, 0
    %107 = vmatpush.bf16.msra.mxu0 0
    %108 = vmatpush.bf16.msra.mxu0 0
    %109 = vmatpush.bf16.msra.mxu0 0
    %110 = vmatpush.bf16.msra.mxu0 0
    %111 = vmatpush.bf16.msra.mxu0 0
    %112 = vmatpush.bf16.msra.mxu0 0
    %113 = vmatpush.bf16.msra.mxu0 %v97
    %114 = vmatpush.bf16.msra.mxu0 %v95
    %115 = vmatmul.bf16.gmra.mxu0 %v105
    %v116 = vpop.f32.mrf.mxu0
    %v117 = vadd.f32 0.0, %v116
    %v118 = vpop.f32.mrf.mxu0
    %v119 = vadd.f32 0.0, %v118
    %120 = vdwg.mxu0
    %121 = vmatpush.bf16.msra.mxu0 0
    %122 = vmatpush.bf16.msra.mxu0 0
    %123 = vmatpush.bf16.msra.mxu0 0
    %124 = vmatpush.bf16.msra.mxu0 0
    %125 = vmatpush.bf16.msra.mxu0 0
    %126 = vmatpush.bf16.msra.mxu0 0
    %127 = vmatpush.bf16.msra.mxu0 %v98
    %128 = vmatpush.bf16.msra.mxu0 %v96
    %129 = vmatmul.bf16.gmra.mxu0 %v105
    %v130 = vpop.f32.mrf.mxu0
    %v131 = vadd.f32 0.0, %v130
    %v132 = vpop.f32.mrf.mxu0
    %v133 = vadd.f32 0.0, %v132
    %134 = vdwg.mxu0
    %v137 = vunpack.c.l.b16 %v66
    %v138 = vunpack.c.l.b16 %v67
    %v139 = vpack.c.b16 %v138, %v137
    %v144 = vunpack.c.l.b16 %v68
    %v145 = vunpack.c.h.b16 %v68
    %v146 = vunpack.c.l.b16 %v69
    %v147 = vunpack.c.h.b16 %v69
    %v148 = vunpack.c.l.b16 %v70
    %v149 = vunpack.c.h.b16 %v70
    %v150 = vunpack.c.l.b16 %v71
    %v151 = vunpack.c.h.b16 %v71
    %v152 = vpack.c.b16 %v146, %v144
    %v153 = vpack.c.b16 %v147, %v145
    %v154 = vpack.c.b16 %v150, %v148
    %v155 = vpack.c.b16 %v151, %v149
    %v161 = vsel %vm103, %v139, 0
    %163 = vmatpush.bf16.msra.mxu0 0
    %164 = vmatpush.bf16.msra.mxu0 0
    %165 = vmatpush.bf16.msra.mxu0 0
    %166 = vmatpush.bf16.msra.mxu0 0
    %167 = vmatpush.bf16.msra.mxu0 0
    %168 = vmatpush.bf16.msra.mxu0 0
    %169 = vmatpush.bf16.msra.mxu0 %v154
    %170 = vmatpush.bf16.msra.mxu0 %v152
    %171 = vmatmul.bf16.gmra.mxu0 %v161
    %v172 = vpop.f32.mrf.mxu0
    %v173 = vadd.f32 %v117, %v172
    %v174 = vpop.f32.mrf.mxu0
    %v175 = vadd.f32 %v119, %v174
    %176 = vdwg.mxu0
    %177 = vmatpush.bf16.msra.mxu0 0
    %178 = vmatpush.bf16.msra.mxu0 0
    %179 = vmatpush.bf16.msra.mxu0 0
    %180 = vmatpush.bf16.msra.mxu0 0
    %181 = vmatpush.bf16.msra.mxu0 0
    %182 = vmatpush.bf16.msra.mxu0 0
    %183 = vmatpush.bf16.msra.mxu0 %v155
    %184 = vmatpush.bf16.msra.mxu0 %v153
    %185 = vmatmul.bf16.gmra.mxu0 %v161
    %v186 = vpop.f32.mrf.mxu0
    %v187 = vadd.f32 %v131, %v186
    %v188 = vpop.f32.mrf.mxu0
    %v189 = vadd.f32 %v133, %v188
    %190 = vdwg.mxu0
    %v191 = vld [vmem:[#allocation6] sm:$0x3]
    %v193 = vperm.slane %v191, 0
    %v194 = vperm.slane %v191, 1
    %v197 = vadd.f32 %v173, %v193
    %v198 = vadd.f32 %v187, %v194
    %v199 = vadd.f32 %v175, %v193
    %v200 = vadd.f32 %v189, %v194
    %v201 = vpack.c.bf16 %v198, %v197
    %v202 = vpack.c.bf16 %v200, %v199
    %203 = vst [vmem:[%s5] sm:$0xff] %v201
    %204 = vst [vmem:[%s5 + $0x8] sm:$0xff] %v202
    // Predicated region
    $region34: #{encoder_forward.7} parent=1 // pred_check
      _
    $region35: #{encoder_forward.7} parent=1 // pred_check_branch
      %206 = sbr.rel (0) target = $region37
    $region36: #{encoder_forward.7} parent=1 // pred_region
      _
    $region37: #{encoder_forward.7} parent=1 // pred_fallthru
      _
    // Predicated region
    $region38: #{encoder_forward.7} parent=1 // pred_check
      _
    $region39: #{encoder_forward.7} parent=1 // pred_check_branch
      %208 = sbr.rel (0) target = $region41
    $region40: #{encoder_forward.7} parent=1 // pred_region
      _
    $region41: #{encoder_forward.7} parent=1 // pred_fallthru
      _
    %209 = vsyncpa [#allocation3], 1
    %210 = vsyncpa [#allocation5], 1

// kernel: encoder_forward.6
$region0: #{encoder_forward.6}
  #allocation0 [shape = 'u32[]', space=smem, size = 0x4, offset = 0x4, fixed_abs, tag = 'smem constant byte address 0x4 - core index']
  #allocation1 [shape = 'u32[72,128]{1,0:T(1,128)}', space=vmem, size = 0x9000, scoped, tag = 'internal scratch']
  #allocation2 [shape = 'f32[2,32]{1,0:T(2,128)}', space=vmem, size = 0x400, scoped, tag = 'scratch operand']
  #allocation3 [shape = 'f32[2,32]{1,0:T(2,128)}', space=vmem, size = 0x400, scoped, tag = 'scratch operand']
  #allocation4 [shape = 'f32[2,32]{1,0:T(2,128)}', space=vmem, size = 0x400, scoped, tag = 'scratch operand']
  #allocation5 [shape = 'f32[2,32]{1,0:T(2,128)}', space=vmem, size = 0x400, scoped, tag = 'scratch operand']
  %s0 = inlined_call_operand.vmem [shape: bf16[8,2,256], index: 0, kind: input, shape index: {}, may-alias: {0,1}]
  %s1 = inlined_call_operand.vmem [shape: bf16[8,2,256], index: 1, kind: input, shape index: {}, may-alias: {0,1}]
  %s2 = inlined_call_operand.vmem [shape: s32[8,2,1], index: 2, kind: input, shape index: {}, may-alias: {2,3}]
  %s3 = inlined_call_operand.vmem [shape: s32[8,2,1], index: 3, kind: input, shape index: {}, may-alias: {2,3}]
  %s4 = inlined_call_operand.hbm [shape: bf16[32,128], index: 4, kind: input, shape index: {}]
  %s5 = inlined_call_operand.hbm [shape: bf16[32,128], index: 5, kind: input, shape index: {}]
  %s6 = inlined_call_operand.vmem [shape: bf16[8,2,32], index: 6, kind: output, shape index: {0}]
  %s7 = inlined_call_operand.vmem [shape: bf16[8,2,32], index: 7, kind: output, shape index: {1}]
  %s8 = inlined_call_operand.vmem [shape: f32[2,64], index: 8, kind: output, shape index: {2}]
  %s9 = inlined_call_operand.vmem [shape: f32[2,64], index: 9, kind: output, shape index: {3}]
  %10 = xla_tuple %s6, %s7, %s8, %s9
  %s11 = sld [smem:[#allocation0]]
  $region156: #{encoder_forward.6} parent=0
    _
  %s13 = ssub.s32 1, %s11
  %s14 = scalar_select 0, %s13, %s11
  $region1: #{encoder_forward.6} parent=0
    #allocation6 [shape = 'u8[4096]{0}', space=vmem, size = 0x1000, scoped, tag = 'input window, operand 0, single buffered']
    #allocation7 [shape = 'u8[4096]{0}', space=vmem, size = 0x1000, scoped, tag = 'input window, operand 1, single buffered']
    #allocation8 [shape = 'u8[8192]{0}', space=vmem, size = 0x2000, scoped, tag = 'input window, operand 4, single buffered']
    #allocation9 [shape = 's32[1]{0}', space=sflag, size = 0x4, scoped, tag = 'scoped memory for encoder_forward.6']
    #allocation10 [shape = 'u8[8192]{0}', space=vmem, size = 0x2000, scoped, tag = 'input window, operand 5, single buffered']
    #allocation11 [shape = 's32[1]{0}', space=sflag, size = 0x4, scoped, tag = 'scoped memory for encoder_forward.6']
    %15 = vsyncpa [#allocation9], 0
    %16 = vsyncpa [#allocation11], 0
    // Predicated region
    $region2: #{encoder_forward.6} parent=1 // pred_check
      _
    $region3: #{encoder_forward.6} parent=1 // pred_check_branch
      %18 = sbr.rel (0) target = $region5
    $region4: #{encoder_forward.6} parent=1 // pred_region
      // Predicated region
      $region6: #{encoder_forward.6} parent=4 // pred_check
        _
      $region7: #{encoder_forward.6} parent=4 // pred_check_branch
        %20 = sbr.rel (0) target = $region9
      $region8: #{encoder_forward.6} parent=4 // pred_region
        // Predicated region
        $region10: #{encoder_forward.6} parent=8 // pred_check
          _
        $region11: #{encoder_forward.6} parent=8 // pred_check_branch
          %22 = sbr.rel target = $region13
        $region12: #{encoder_forward.6} parent=8 // pred_region
          // Predicated region
          $region25: #{encoder_forward.6} parent=12 // pred_check
            _
          $region26: #{encoder_forward.6} parent=12 // pred_check_branch
            %52 = sbr.rel (0) target = $region28
          $region27: #{encoder_forward.6} parent=12 // pred_region
            loop: start=0, step=1, limit=1
            $region29: #{encoder_forward.6} parent=27 // loop_pre_header
              _
            $region30: #{encoder_forward.6} parent=27 // loop_header
              %s54 = sphi 0, %s58
              %p55 = scmp.ge.s32.totalorder %s54, 1
              %s59 = sphi %s0, %s0
              %s60 = sphi [#allocation6], [#allocation6]
            $region31: #{encoder_forward.6} parent=27 // loop_header_branch
              %57 = sbr.rel (%p55) target = $region35
            $region32: #{encoder_forward.6} parent=27 // loop_body
              _
            $region33: #{encoder_forward.6} parent=27 // loop_footer
              %s58 = sadd.s32 1, %s54
            $region34: #{encoder_forward.6} parent=27 // loop_footer_branch
              %53 = sbr.rel target = $region30
            $region35: #{encoder_forward.6} parent=27 // loop_exit
              _
            %s62 = ssub.s32 2, 1
            loop: start=0, step=1, limit=1
            $region36: #{encoder_forward.6} parent=27 // loop_pre_header
              _
            $region37: #{encoder_forward.6} parent=27 // loop_header
              %s64 = sphi 0, %s68
              %p65 = scmp.ge.s32.totalorder %s64, 1
              %s69 = sphi %s0, %s0
              %s70 = sphi [#allocation6], [#allocation6]
            $region38: #{encoder_forward.6} parent=27 // loop_header_branch
              %67 = sbr.rel (%p65) target = $region42
            $region39: #{encoder_forward.6} parent=27 // loop_body
              %v71 = vld [vmem:[%s69] sm:%s62]
              %72 = vst [vmem:[%s70] sm:%s62] %v71
              %v73 = vld [vmem:[%s69 + $0x2] sm:%s62]
              %74 = vst [vmem:[%s70 + $0x1] sm:%s62] %v73
              %v75 = vld [vmem:[%s69 + $0x4] sm:%s62]
              %76 = vst [vmem:[%s70 + $0x2] sm:%s62] %v75
              %v77 = vld [vmem:[%s69 + $0x6] sm:%s62]
              %78 = vst [vmem:[%s70 + $0x3] sm:%s62] %v77
              %v79 = vld [vmem:[%s69 + $0x8] sm:%s62]
              %80 = vst [vmem:[%s70 + $0x4] sm:%s62] %v79
              %v81 = vld [vmem:[%s69 + $0xa] sm:%s62]
              %82 = vst [vmem:[%s70 + $0x5] sm:%s62] %v81
              %v83 = vld [vmem:[%s69 + $0xc] sm:%s62]
              %84 = vst [vmem:[%s70 + $0x6] sm:%s62] %v83
              %v85 = vld [vmem:[%s69 + $0xe] sm:%s62]
              %86 = vst [vmem:[%s70 + $0x7] sm:%s62] %v85
            $region40: #{encoder_forward.6} parent=27 // loop_footer
              %s68 = sadd.s32 1, %s64
            $region41: #{encoder_forward.6} parent=27 // loop_footer_branch
              %63 = sbr.rel target = $region37
            $region42: #{encoder_forward.6} parent=27 // loop_exit
              _
          $region28: #{encoder_forward.6} parent=12 // pred_fallthru
            _
        $region13: #{encoder_forward.6} parent=8 // pred_fallthru
          _
        // Predicated region
        $region14: #{encoder_forward.6} parent=8 // pred_check
          _
        $region15: #{encoder_forward.6} parent=8 // pred_check_branch
          %24 = sbr.rel (0) target = $region17
        $region16: #{encoder_forward.6} parent=8 // pred_region
          %s26 = ssub.s32 2, 1
          loop: start=0, step=1, limit=1
          $region18: #{encoder_forward.6} parent=16 // loop_pre_header
            _
          $region19: #{encoder_forward.6} parent=16 // loop_header
            %s28 = sphi 0, %s32
            %p29 = scmp.ge.s32.totalorder %s28, 1
            %s33 = sphi %s0, %s0
            %s34 = sphi [#allocation6], [#allocation6]
          $region20: #{encoder_forward.6} parent=16 // loop_header_branch
            %31 = sbr.rel (%p29) target = $region24
          $region21: #{encoder_forward.6} parent=16 // loop_body
            %v35 = vld [vmem:[%s33] sm:%s26]
            %36 = vst [vmem:[%s34] sm:%s26] %v35
            %v37 = vld [vmem:[%s33 + $0x2] sm:%s26]
            %38 = vst [vmem:[%s34 + $0x1] sm:%s26] %v37
            %v39 = vld [vmem:[%s33 + $0x4] sm:%s26]
            %40 = vst [vmem:[%s34 + $0x2] sm:%s26] %v39
            %v41 = vld [vmem:[%s33 + $0x6] sm:%s26]
            %42 = vst [vmem:[%s34 + $0x3] sm:%s26] %v41
            %v43 = vld [vmem:[%s33 + $0x8] sm:%s26]
            %44 = vst [vmem:[%s34 + $0x4] sm:%s26] %v43
            %v45 = vld [vmem:[%s33 + $0xa] sm:%s26]
            %46 = vst [vmem:[%s34 + $0x5] sm:%s26] %v45
            %v47 = vld [vmem:[%s33 + $0xc] sm:%s26]
            %48 = vst [vmem:[%s34 + $0x6] sm:%s26] %v47
            %v49 = vld [vmem:[%s33 + $0xe] sm:%s26]
            %50 = vst [vmem:[%s34 + $0x7] sm:%s26] %v49
          $region22: #{encoder_forward.6} parent=16 // loop_footer
            %s32 = sadd.s32 1, %s28
          $region23: #{encoder_forward.6} parent=16 // loop_footer_branch
            %27 = sbr.rel target = $region19
          $region24: #{encoder_forward.6} parent=16 // loop_exit
            _
        $region17: #{encoder_forward.6} parent=8 // pred_fallthru
          _
      $region9: #{encoder_forward.6} parent=4 // pred_fallthru
        _
      %87 = vnop
    $region5: #{encoder_forward.6} parent=1 // pred_fallthru
      _
    // Predicated region
    $region43: #{encoder_forward.6} parent=1 // pred_check
      _
    $region44: #{encoder_forward.6} parent=1 // pred_check_branch
      %89 = sbr.rel (0) target = $region46
    $region45: #{encoder_forward.6} parent=1 // pred_region
      %s90 = ssub.s32 0, 0
      %s91 = smul.u32 8, %s90
      %s92 = smul.addr %s91, 2
      %s93 = sadd.s32 1, %s92
      %s94 = scalar_lea.vmem %s1, %s93
      // Predicated region
      $region47: #{encoder_forward.6} parent=45 // pred_check
        _
      $region48: #{encoder_forward.6} parent=45 // pred_check_branch
        %96 = sbr.rel (0) target = $region50
      $region49: #{encoder_forward.6} parent=45 // pred_region
        // Predicated region
        $region51: #{encoder_forward.6} parent=49 // pred_check
          _
        $region52: #{encoder_forward.6} parent=49 // pred_check_branch
          %98 = sbr.rel target = $region54
        $region53: #{encoder_forward.6} parent=49 // pred_region
          // Predicated region
          $region66: #{encoder_forward.6} parent=53 // pred_check
            _
          $region67: #{encoder_forward.6} parent=53 // pred_check_branch
            %128 = sbr.rel (0) target = $region69
          $region68: #{encoder_forward.6} parent=53 // pred_region
            loop: start=0, step=1, limit=1
            $region70: #{encoder_forward.6} parent=68 // loop_pre_header
              _
            $region71: #{encoder_forward.6} parent=68 // loop_header
              %s130 = sphi 0, %s134
              %p131 = scmp.ge.s32.totalorder %s130, 1
              %s135 = sphi %s94, %s94
              %s136 = sphi [#allocation7], [#allocation7]
            $region72: #{encoder_forward.6} parent=68 // loop_header_branch
              %133 = sbr.rel (%p131) target = $region76
            $region73: #{encoder_forward.6} parent=68 // loop_body
              _
            $region74: #{encoder_forward.6} parent=68 // loop_footer
              %s134 = sadd.s32 1, %s130
            $region75: #{encoder_forward.6} parent=68 // loop_footer_branch
              %129 = sbr.rel target = $region71
            $region76: #{encoder_forward.6} parent=68 // loop_exit
              _
            %s138 = ssub.s32 2, 1
            loop: start=0, step=1, limit=1
            $region77: #{encoder_forward.6} parent=68 // loop_pre_header
              _
            $region78: #{encoder_forward.6} parent=68 // loop_header
              %s140 = sphi 0, %s144
              %p141 = scmp.ge.s32.totalorder %s140, 1
              %s145 = sphi %s94, %s94
              %s146 = sphi [#allocation7], [#allocation7]
            $region79: #{encoder_forward.6} parent=68 // loop_header_branch
              %143 = sbr.rel (%p141) target = $region83
            $region80: #{encoder_forward.6} parent=68 // loop_body
              %v147 = vld [vmem:[%s145] sm:%s138]
              %148 = vst [vmem:[%s146] sm:%s138] %v147
              %v149 = vld [vmem:[%s145 + $0x2] sm:%s138]
              %150 = vst [vmem:[%s146 + $0x1] sm:%s138] %v149
              %v151 = vld [vmem:[%s145 + $0x4] sm:%s138]
              %152 = vst [vmem:[%s146 + $0x2] sm:%s138] %v151
              %v153 = vld [vmem:[%s145 + $0x6] sm:%s138]
              %154 = vst [vmem:[%s146 + $0x3] sm:%s138] %v153
              %v155 = vld [vmem:[%s145 + $0x8] sm:%s138]
              %156 = vst [vmem:[%s146 + $0x4] sm:%s138] %v155
              %v157 = vld [vmem:[%s145 + $0xa] sm:%s138]
              %158 = vst [vmem:[%s146 + $0x5] sm:%s138] %v157
              %v159 = vld [vmem:[%s145 + $0xc] sm:%s138]
              %160 = vst [vmem:[%s146 + $0x6] sm:%s138] %v159
              %v161 = vld [vmem:[%s145 + $0xe] sm:%s138]
              %162 = vst [vmem:[%s146 + $0x7] sm:%s138] %v161
            $region81: #{encoder_forward.6} parent=68 // loop_footer
              %s144 = sadd.s32 1, %s140
            $region82: #{encoder_forward.6} parent=68 // loop_footer_branch
              %139 = sbr.rel target = $region78
            $region83: #{encoder_forward.6} parent=68 // loop_exit
              _
          $region69: #{encoder_forward.6} parent=53 // pred_fallthru
            _
        $region54: #{encoder_forward.6} parent=49 // pred_fallthru
          _
        // Predicated region
        $region55: #{encoder_forward.6} parent=49 // pred_check
          _
        $region56: #{encoder_forward.6} parent=49 // pred_check_branch
          %100 = sbr.rel (0) target = $region58
        $region57: #{encoder_forward.6} parent=49 // pred_region
          %s102 = ssub.s32 2, 1
          loop: start=0, step=1, limit=1
          $region59: #{encoder_forward.6} parent=57 // loop_pre_header
            _
          $region60: #{encoder_forward.6} parent=57 // loop_header
            %s104 = sphi 0, %s108
            %p105 = scmp.ge.s32.totalorder %s104, 1
            %s109 = sphi %s94, %s94
            %s110 = sphi [#allocation7], [#allocation7]
          $region61: #{encoder_forward.6} parent=57 // loop_header_branch
            %107 = sbr.rel (%p105) target = $region65
          $region62: #{encoder_forward.6} parent=57 // loop_body
            %v111 = vld [vmem:[%s109] sm:%s102]
            %112 = vst [vmem:[%s110] sm:%s102] %v111
            %v113 = vld [vmem:[%s109 + $0x2] sm:%s102]
            %114 = vst [vmem:[%s110 + $0x1] sm:%s102] %v113
            %v115 = vld [vmem:[%s109 + $0x4] sm:%s102]
            %116 = vst [vmem:[%s110 + $0x2] sm:%s102] %v115
            %v117 = vld [vmem:[%s109 + $0x6] sm:%s102]
            %118 = vst [vmem:[%s110 + $0x3] sm:%s102] %v117
            %v119 = vld [vmem:[%s109 + $0x8] sm:%s102]
            %120 = vst [vmem:[%s110 + $0x4] sm:%s102] %v119
            %v121 = vld [vmem:[%s109 + $0xa] sm:%s102]
            %122 = vst [vmem:[%s110 + $0x5] sm:%s102] %v121
            %v123 = vld [vmem:[%s109 + $0xc] sm:%s102]
            %124 = vst [vmem:[%s110 + $0x6] sm:%s102] %v123
            %v125 = vld [vmem:[%s109 + $0xe] sm:%s102]
            %126 = vst [vmem:[%s110 + $0x7] sm:%s102] %v125
          $region63: #{encoder_forward.6} parent=57 // loop_footer
            %s108 = sadd.s32 1, %s104
          $region64: #{encoder_forward.6} parent=57 // loop_footer_branch
            %103 = sbr.rel target = $region60
          $region65: #{encoder_forward.6} parent=57 // loop_exit
            _
        $region58: #{encoder_forward.6} parent=49 // pred_fallthru
          _
      $region50: #{encoder_forward.6} parent=45 // pred_fallthru
        _
      %163 = vnop
    $region46: #{encoder_forward.6} parent=1 // pred_fallthru
      _
    // Predicated region
    $region84: #{encoder_forward.6} parent=1 // pred_check
      _
    $region85: #{encoder_forward.6} parent=1 // pred_check_branch
      %165 = sbr.rel (0) target = $region87
    $region86: #{encoder_forward.6} parent=1 // pred_region
      _
    $region87: #{encoder_forward.6} parent=1 // pred_fallthru
      _
    // Predicated region
    $region88: #{encoder_forward.6} parent=1 // pred_check
      _
    $region89: #{encoder_forward.6} parent=1 // pred_check_branch
      %167 = sbr.rel (0) target = $region91
    $region90: #{encoder_forward.6} parent=1 // pred_region
      %s168 = ssub.s32 0, 0
      %s169 = smul.u32 8, %s168
      %p170 = scmp.lt.s32.totalorder %s169, 7
      %s171 = scalar_select %p170, %s169, 7
      %s172 = smul.addr %s171, 2
      %s173 = scalar_lea.vmem %s3, %s172
      %s174 = ssub.s32 0, 0
      %s175 = smul.u32 8, %s174
    $region91: #{encoder_forward.6} parent=1 // pred_fallthru
      _
    // Predicated region
    $region92: #{encoder_forward.6} parent=1 // pred_check
      _
    $region93: #{encoder_forward.6} parent=1 // pred_check_branch
      %177 = sbr.rel (0) target = $region95
    $region94: #{encoder_forward.6} parent=1 // pred_region
      %179 = vsyncadd [#allocation9], 0
      %s180 = sshll.u32 %s4, 4
      %s181 = int_to_ptr.hbm [resolvable:$true] %s180
      %s182 = sshll.u32 [#allocation8], 4
      %s183 = int_to_ptr.vmem [resolvable:$true] %s182
      %188 = dma.hbm_to_vmem [thread:$0]  %s181, 256, %s183, [#allocation9], 64, 64, 4
    $region95: #{encoder_forward.6} parent=1 // pred_fallthru
      _
    // Predicated region
    $region96: #{encoder_forward.6} parent=1 // pred_check
      _
    $region97: #{encoder_forward.6} parent=1 // pred_check_branch
      %190 = sbr.rel (0) target = $region99
    $region98: #{encoder_forward.6} parent=1 // pred_region
      %192 = vsyncadd [#allocation11], 0
      %s193 = sshll.u32 %s5, 4
      %s194 = int_to_ptr.hbm [resolvable:$true] %s193
      %s195 = sshll.u32 [#allocation10], 4
      %s196 = int_to_ptr.vmem [resolvable:$true] %s195
      %201 = dma.hbm_to_vmem [thread:$0]  %s194, 256, %s196, [#allocation11], 64, 64, 4
    $region99: #{encoder_forward.6} parent=1 // pred_fallthru
      _
    // Predicated region
    $region100: #{encoder_forward.6} parent=1 // pred_check
      _
    $region101: #{encoder_forward.6} parent=1 // pred_check_branch
      %203 = sbr.rel (0) target = $region103
    $region102: #{encoder_forward.6} parent=1 // pred_region
      _
    $region103: #{encoder_forward.6} parent=1 // pred_fallthru
      _
    // Predicated region
    $region104: #{encoder_forward.6} parent=1 // pred_check
      _
    $region105: #{encoder_forward.6} parent=1 // pred_check_branch
      %205 = sbr.rel (0) target = $region107
    $region106: #{encoder_forward.6} parent=1 // pred_region
      _
    $region107: #{encoder_forward.6} parent=1 // pred_fallthru
      _
    // Predicated region
    $region108: #{encoder_forward.6} parent=1 // pred_check
      _
    $region109: #{encoder_forward.6} parent=1 // pred_check_branch
      %207 = sbr.rel (0) target = $region111
    $region110: #{encoder_forward.6} parent=1 // pred_region
      %209 = dma.done [#allocation9], 256
    $region111: #{encoder_forward.6} parent=1 // pred_fallthru
      _
    // Predicated region
    $region112: #{encoder_forward.6} parent=1 // pred_check
      _
    $region113: #{encoder_forward.6} parent=1 // pred_check_branch
      %211 = sbr.rel (0) target = $region115
    $region114: #{encoder_forward.6} parent=1 // pred_region
      %213 = dma.done [#allocation11], 256
    $region115: #{encoder_forward.6} parent=1 // pred_fallthru
      _
    %s214 = ssub.s32 0, 0
    %s215 = smul.u32 8, %s214
    %p216 = scmp.lt.s32.totalorder %s215, 7
    %s217 = scalar_select %p216, %s215, 7
    %s218 = smul.addr %s217, 2
    %s219 = scalar_lea.vmem %s3, %s218
    %s220 = ssub.s32 0, 0
    %s221 = smul.u32 8, %s220
    %p222 = scmp.lt.s32.totalorder %s221, 7
    %s223 = scalar_select %p222, %s221, 7
    %s224 = scalar_lea.vmem %s7, %s223
    %s225 = ssub.s32 0, 0
    %s226 = smul.u32 8, %s225
    %s227 = ssub.s32 0, 0
    %s228 = smul.u32 8, %s227
    %p229 = scmp.lt.s32.totalorder %s228, 7
    %s230 = scalar_select %p229, %s228, 7
    %s231 = smul.addr %s230, 2
    %s232 = scalar_lea.vmem %s3, %s231
    %s233 = ssub.s32 0, 0
    %s234 = smul.u32 8, %s233
    %s235 = ssub.s32 0, 0
    %s236 = smul.u32 8, %s235
    %p237 = scmp.lt.s32.totalorder %s236, 7
    %s238 = scalar_select %p237, %s236, 7
    %s239 = scalar_lea.vmem %s7, %s238
    %s240 = ssub.s32 0, 0
    %s241 = smul.u32 8, %s240
    %p243 = scmp.eq.s32.totalorder 0, 0
    // Predicated region
    $region116: #{encoder_forward.6} parent=1 // pred_check
      %p244 = pneg %p243
    $region117: #{encoder_forward.6} parent=1 // pred_check_branch
      %246 = sbr.rel (%p244) target = $region119
    $region118: #{encoder_forward.6} parent=1 // pred_region
      %vm247 = vcmask 254976
      %248 = vst.msk [vmem:[#allocation2] sm:$0x3] %vm247, 0.0
      %249 = vst.msk [vmem:[#allocation3] sm:$0x3] %vm247, 0.0
      %250 = vst.msk [vmem:[#allocation4] sm:$0x3] %vm247, 0.0
      %251 = vst.msk [vmem:[#allocation5] sm:$0x3] %vm247, 0.0
    $region119: #{encoder_forward.6} parent=1 // pred_fallthru
      _
    %v252 = vld [vmem:[#allocation8] sm:$0xf]
    %v253 = vld [vmem:[#allocation8 + $0x4] sm:$0xf]
    %v254 = vld [vmem:[#allocation8 + $0x8] sm:$0xf]
    %v255 = vld [vmem:[#allocation8 + $0xc] sm:$0xf]
    %v256 = vld [vmem:[#allocation10] sm:$0xf]
    %v257 = vld [vmem:[#allocation10 + $0x4] sm:$0xf]
    %v258 = vld [vmem:[#allocation10 + $0x8] sm:$0xf]
    %v259 = vld [vmem:[#allocation10 + $0xc] sm:$0xf]
    %v260 = vld [vmem:[#allocation2] sm:$0x3]
    %v261 = vld [vmem:[#allocation3] sm:$0x3]
    %v262 = vld [vmem:[#allocation4] sm:$0x3]
    %v263 = vld [vmem:[#allocation5] sm:$0x3]
    %v264 = vld [vmem:[%s2] sm:$0x3]
    %vm265 = vcmp.ne.s32.totalorder %v264, 0
    %s266 = scalar_lea.vmem %s232, 14
    %v267 = vld [vmem:[%s266] sm:$0x3]
    %vm268 = vcmp.ne.s32.totalorder %v267, 0
    %v269 = vld [vmem:[#allocation6] sm:$0x1]
    %v270 = vunpack.c.l.bf16 %v269
    %v271 = vpack.c.bf16 %v260, %v260
    %v276 = vunpack.c.l.b16 %v252
    %v277 = vunpack.c.l.b16 %v253
    %v278 = vunpack.c.l.b16 %v254
    %v279 = vunpack.c.l.b16 %v255
    %v280 = vpack.c.b16 %v277, %v276
    %v281 = vpack.c.b16 %v279, %v278
    %vm284 = vcmask 261120
    %v286 = vsel %vm284, %v271, 0
    %288 = vmatpush.bf16.msra.mxu0 0
    %289 = vmatpush.bf16.msra.mxu0 0
    %290 = vmatpush.bf16.msra.mxu0 0
    %291 = vmatpush.bf16.msra.mxu0 0
    %292 = vmatpush.bf16.msra.mxu0 0
    %293 = vmatpush.bf16.msra.mxu0 0
    %294 = vmatpush.bf16.msra.mxu0 %v281
    %295 = vmatpush.bf16.msra.mxu0 %v280
    %296 = vmatmul.bf16.gmra.mxu0 %v286
    %v297 = vpop.f32.mrf.mxu0
    %v298 = vadd.f32 0.0, %v297
    %v299 = vpop.f32.mrf.mxu0
    %300 = vdwg.mxu0
    %v301 = vadd.f32 %v270, %v298
    %v302 = vxor.u32 %v301, 2147483648
    %v303 = vmul.f32 %v302, 1.442695
    %v304 = vpow.pop %v303
    %v305 = vadd.f32 %v304, 1.0
    %v306 = vrcp.pop %v305
    %v307 = vmul.f32 %v305, %v306
    %v308 = vsub.f32 1.0, %v307
    %v309 = vmul.f32 %v306, %v308
    %v310 = vadd.f32 %v306, %v309
    %vm311 = vweird.f32 %v305
    %vm312 = vweird.f32 %v306
    %vm313 = vmor %vm311, %vm312
    %v314 = vsel %vm313, %v306, %v310
    %v315 = vand.u32 2147483647, %v305
    %vm316 = vcmp.eq.f32.partialorder %v315, 8.507059e+37
    %v317 = vand.u32 %v305, 2147483648
    %v318 = vor.u32 1.1754944e-38, %v317
    %v319 = vsel %vm316, %v318, %v314
    %v320 = vmul.f32 1.0, %v319
    %v321 = vtanh.pop %v301
    %323 = vrot.lane.b32.xlu0 %v261, 32
    %v324 = vpop.permute.xlu0 %323
    %v326 = vmul.f32 %v320, %v324
    %328 = vrot.lane.b32.xlu0 %v321, 64
    %v329 = vpop.permute.xlu0 %328
    %v331 = vmul.f32 %v320, %v329
    %333 = vrot.lane.b32.xlu0 %v331, 32
    %v334 = vpop.permute.xlu0 %333
    %v336 = vadd.f32 %v326, %v334
    %v337 = vtanh.pop %v336
    %339 = vrot.lane.b32.xlu0 %v337, 64
    %v340 = vpop.permute.xlu0 %339
    %v342 = vmul.f32 %v320, %v340
    %v343 = vsel %vm265, 1, 0
    %344 = vset.pattern.permute.xlu0 0
    %345 = vperm.xlu0 %344, %v343
    %v346 = vpop.permute.xlu0 %345
    %vm347 = vcmp.eq.s32.totalorder %v346, 1
    %349 = vst [vmem:[#allocation1] ss:$4 sm:$0xff] %v336
    %v350 = vld.sshfl [vmem:[#allocation1] sm:$0xff pattern:$0x73625140]
    %351 = vrot.lane.b32.xlu0 %v350, 96
    %v352 = vpop.permute.xlu0 %351
    %v354 = vsel %vm347, %v261, %v352
    %356 = vst [vmem:[#allocation1] ss:$4 sm:$0xff] %v342
    %v357 = vld.sshfl [vmem:[#allocation1] sm:$0xff pattern:$0x73625140]
    %358 = vrot.lane.b32.xlu0 %v357, 32
    %v359 = vpop.permute.xlu0 %358
    %v361 = vsel %vm347, %v260, %v359
    %362 = vst [vmem:[#allocation1] ss:$4 sm:$0xff] %v342
    %v363 = vld.sshfl [vmem:[#allocation1] sm:$0xff pattern:$0x73625140]
    %364 = vrot.lane.b32.xlu0 %v363, 32
    %v365 = vpop.permute.xlu0 %364
    %v367 = vsel %vm347, 0.0, %v365
    %s368 = scalar_lea.vmem [#allocation7], 7
    %v369 = vld [vmem:[%s368] sm:$0x1]
    %v370 = vunpack.c.l.bf16 %v369
    %v371 = vpack.c.bf16 %v262, %v262
    %v376 = vunpack.c.l.b16 %v256
    %v377 = vunpack.c.l.b16 %v257
    %v378 = vunpack.c.l.b16 %v258
    %v379 = vunpack.c.l.b16 %v259
    %v380 = vpack.c.b16 %v377, %v376
    %v381 = vpack.c.b16 %v379, %v378
    %v385 = vsel %vm284, %v371, 0
    %387 = vmatpush.bf16.msra.mxu0 0
    %388 = vmatpush.bf16.msra.mxu0 0
    %389 = vmatpush.bf16.msra.mxu0 0
    %390 = vmatpush.bf16.msra.mxu0 0
    %391 = vmatpush.bf16.msra.mxu0 0
    %392 = vmatpush.bf16.msra.mxu0 0
    %393 = vmatpush.bf16.msra.mxu0 %v381
    %394 = vmatpush.bf16.msra.mxu0 %v380
    %395 = vmatmul.bf16.gmra.mxu0 %v385
    %v396 = vpop.f32.mrf.mxu0
    %v397 = vadd.f32 0.0, %v396
    %v398 = vpop.f32.mrf.mxu0
    %399 = vdwg.mxu0
    %v400 = vadd.f32 %v370, %v397
    %v401 = vxor.u32 %v400, 2147483648
    %v402 = vmul.f32 %v401, 1.442695
    %v403 = vpow.pop %v402
    %v404 = vadd.f32 %v403, 1.0
    %v405 = vrcp.pop %v404
    %v406 = vmul.f32 %v404, %v405
    %v407 = vsub.f32 1.0, %v406
    %v408 = vmul.f32 %v405, %v407
    %v409 = vadd.f32 %v405, %v408
    %vm410 = vweird.f32 %v404
    %vm411 = vweird.f32 %v405
    %vm412 = vmor %vm410, %vm411
    %v413 = vsel %vm412, %v405, %v409
    %v414 = vand.u32 2147483647, %v404
    %vm415 = vcmp.eq.f32.partialorder %v414, 8.507059e+37
    %v416 = vand.u32 %v404, 2147483648
    %v417 = vor.u32 1.1754944e-38, %v416
    %v418 = vsel %vm415, %v417, %v413
    %v419 = vmul.f32 1.0, %v418
    %v420 = vtanh.pop %v400
    %422 = vrot.lane.b32.xlu0 %v263, 32
    %v423 = vpop.permute.xlu0 %422
    %v425 = vmul.f32 %v419, %v423
    %427 = vrot.lane.b32.xlu0 %v420, 64
    %v428 = vpop.permute.xlu0 %427
    %v430 = vmul.f32 %v419, %v428
    %432 = vrot.lane.b32.xlu0 %v430, 32
    %v433 = vpop.permute.xlu0 %432
    %v435 = vadd.f32 %v425, %v433
    %v436 = vtanh.pop %v435
    %438 = vrot.lane.b32.xlu0 %v436, 64
    %v439 = vpop.permute.xlu0 %438
    %v441 = vmul.f32 %v419, %v439
    %v442 = vsel %vm268, 1, 0
    %443 = vset.pattern.permute.xlu0 0
    %444 = vperm.xlu0 %443, %v442
    %v445 = vpop.permute.xlu0 %444
    %vm446 = vcmp.eq.s32.totalorder %v445, 1
    %448 = vst [vmem:[#allocation1] ss:$4 sm:$0xff] %v435
    %v449 = vld.sshfl [vmem:[#allocation1] sm:$0xff pattern:$0x73625140]
    %450 = vrot.lane.b32.xlu0 %v449, 96
    %v451 = vpop.permute.xlu0 %450
    %v453 = vsel %vm446, %v263, %v451
    %455 = vst [vmem:[#allocation1] ss:$4 sm:$0xff] %v441
    %v456 = vld.sshfl [vmem:[#allocation1] sm:$0xff pattern:$0x73625140]
    %457 = vrot.lane.b32.xlu0 %v456, 32
    %v458 = vpop.permute.xlu0 %457
    %v460 = vsel %vm446, %v262, %v458
    %461 = vst [vmem:[#allocation1] ss:$4 sm:$0xff] %v441
    %v462 = vld.sshfl [vmem:[#allocation1] sm:$0xff pattern:$0x73625140]
    %463 = vrot.lane.b32.xlu0 %v462, 32
    %v464 = vpop.permute.xlu0 %463
    %v466 = vsel %vm446, 0.0, %v464
    %v467 = vpack.c.bf16 %v367, %v367
    %vm468 = vcmask 253952
    %469 = vst.msk [vmem:[%s6] sm:$0x1] %vm468, %v467
    %v470 = vpack.c.bf16 %v466, %v466
    %s471 = scalar_lea.vmem %s239, 7
    %472 = vst.msk [vmem:[%s471] sm:$0x1] %vm468, %v470
    %s473 = scalar_lea.vmem %s2, 2
    %v474 = vld [vmem:[%s473] sm:$0x3]
    %vm475 = vcmp.ne.s32.totalorder %v474, 0
    %s476 = scalar_lea.vmem %s232, 12
    %v477 = vld [vmem:[%s476] sm:$0x3]
    %vm478 = vcmp.ne.s32.totalorder %v477, 0
    %s479 = scalar_lea.vmem [#allocation6], 1
    %v480 = vld [vmem:[%s479] sm:$0x1]
    %v481 = vunpack.c.l.bf16 %v480
    %v482 = vpack.c.bf16 %v361, %v361
    %v484 = vsel %vm284, %v482, 0
    %486 = vmatpush.bf16.msra.mxu0 0
    %487 = vmatpush.bf16.msra.mxu0 0
    %488 = vmatpush.bf16.msra.mxu0 0
    %489 = vmatpush.bf16.msra.mxu0 0
    %490 = vmatpush.bf16.msra.mxu0 0
    %491 = vmatpush.bf16.msra.mxu0 0
    %492 = vmatpush.bf16.msra.mxu0 %v281
    %493 = vmatpush.bf16.msra.mxu0 %v280
    %494 = vmatmul.bf16.gmra.mxu0 %v484
    %v495 = vpop.f32.mrf.mxu0
    %v496 = vadd.f32 0.0, %v495
    %v497 = vpop.f32.mrf.mxu0
    %498 = vdwg.mxu0
    %v499 = vadd.f32 %v481, %v496
    %v500 = vxor.u32 %v499, 2147483648
    %v501 = vmul.f32 %v500, 1.442695
    %v502 = vpow.pop %v501
    %v503 = vadd.f32 %v502, 1.0
    %v504 = vrcp.pop %v503
    %v505 = vmul.f32 %v503, %v504
    %v506 = vsub.f32 1.0, %v505
    %v507 = vmul.f32 %v504, %v506
    %v508 = vadd.f32 %v504, %v507
    %vm509 = vweird.f32 %v503
    %vm510 = vweird.f32 %v504
    %vm511 = vmor %vm509, %vm510
    %v512 = vsel %vm511, %v504, %v508
    %v513 = vand.u32 2147483647, %v503
    %vm514 = vcmp.eq.f32.partialorder %v513, 8.507059e+37
    %v515 = vand.u32 %v503, 2147483648
    %v516 = vor.u32 1.1754944e-38, %v515
    %v517 = vsel %vm514, %v516, %v512
    %v518 = vmul.f32 1.0, %v517
    %v519 = vtanh.pop %v499
    %521 = vrot.lane.b32.xlu0 %v354, 32
    %v522 = vpop.permute.xlu0 %521
    %v524 = vmul.f32 %v518, %v522
    %526 = vrot.lane.b32.xlu0 %v519, 64
    %v527 = vpop.permute.xlu0 %526
    %v529 = vmul.f32 %v518, %v527
    %531 = vrot.lane.b32.xlu0 %v529, 32
    %v532 = vpop.permute.xlu0 %531
    %v534 = vadd.f32 %v524, %v532
    %v535 = vtanh.pop %v534
    %537 = vrot.lane.b32.xlu0 %v535, 64
    %v538 = vpop.permute.xlu0 %537
    %v540 = vmul.f32 %v518, %v538
    %v541 = vsel %vm475, 1, 0
    %542 = vset.pattern.permute.xlu0 0
    %543 = vperm.xlu0 %542, %v541
    %v544 = vpop.permute.xlu0 %543
    %vm545 = vcmp.eq.s32.totalorder %v544, 1
    %547 = vst [vmem:[#allocation1] ss:$4 sm:$0xff] %v534
    %v548 = vld.sshfl [vmem:[#allocation1] sm:$0xff pattern:$0x73625140]
    %549 = vrot.lane.b32.xlu0 %v548, 96
    %v550 = vpop.permute.xlu0 %549
    %v552 = vsel %vm545, %v354, %v550
    %554 = vst [vmem:[#allocation1] ss:$4 sm:$0xff] %v540
    %v555 = vld.sshfl [vmem:[#allocation1] sm:$0xff pattern:$0x73625140]
    %556 = vrot.lane.b32.xlu0 %v555, 32
    %v557 = vpop.permute.xlu0 %556
    %v559 = vsel %vm545, %v361, %v557
    %560 = vst [vmem:[#allocation1] ss:$4 sm:$0xff] %v540
    %v561 = vld.sshfl [vmem:[#allocation1] sm:$0xff pattern:$0x73625140]
    %562 = vrot.lane.b32.xlu0 %v561, 32
    %v563 = vpop.permute.xlu0 %562
    %v565 = vsel %vm545, 0.0, %v563
    %s566 = scalar_lea.vmem [#allocation7], 6
    %v567 = vld [vmem:[%s566] sm:$0x1]
    %v568 = vunpack.c.l.bf16 %v567
    %v569 = vpack.c.bf16 %v460, %v460
    %v571 = vsel %vm284, %v569, 0
    %573 = vmatpush.bf16.msra.mxu0 0
    %574 = vmatpush.bf16.msra.mxu0 0
    %575 = vmatpush.bf16.msra.mxu0 0
    %576 = vmatpush.bf16.msra.mxu0 0
    %577 = vmatpush.bf16.msra.mxu0 0
    %578 = vmatpush.bf16.msra.mxu0 0
    %579 = vmatpush.bf16.msra.mxu0 %v381
    %580 = vmatpush.bf16.msra.mxu0 %v380
    %581 = vmatmul.bf16.gmra.mxu0 %v571
    %v582 = vpop.f32.mrf.mxu0
    %v583 = vadd.f32 0.0, %v582
    %v584 = vpop.f32.mrf.mxu0
    %585 = vdwg.mxu0
    %v586 = vadd.f32 %v568, %v583
    %v587 = vxor.u32 %v586, 2147483648
    %v588 = vmul.f32 %v587, 1.442695
    %v589 = vpow.pop %v588
    %v590 = vadd.f32 %v589, 1.0
    %v591 = vrcp.pop %v590
    %v592 = vmul.f32 %v590, %v591
    %v593 = vsub.f32 1.0, %v592
    %v594 = vmul.f32 %v591, %v593
    %v595 = vadd.f32 %v591, %v594
    %vm596 = vweird.f32 %v590
    %vm597 = vweird.f32 %v591
    %vm598 = vmor %vm596, %vm597
    %v599 = vsel %vm598, %v591, %v595
    %v600 = vand.u32 2147483647, %v590
    %vm601 = vcmp.eq.f32.partialorder %v600, 8.507059e+37
    %v602 = vand.u32 %v590, 2147483648
    %v603 = vor.u32 1.1754944e-38, %v602
    %v604 = vsel %vm601, %v603, %v599
    %v605 = vmul.f32 1.0, %v604
    %v606 = vtanh.pop %v586
    %608 = vrot.lane.b32.xlu0 %v453, 32
    %v609 = vpop.permute.xlu0 %608
    %v611 = vmul.f32 %v605, %v609
    %613 = vrot.lane.b32.xlu0 %v606, 64
    %v614 = vpop.permute.xlu0 %613
    %v616 = vmul.f32 %v605, %v614
    %618 = vrot.lane.b32.xlu0 %v616, 32
    %v619 = vpop.permute.xlu0 %618
    %v621 = vadd.f32 %v611, %v619
    %v622 = vtanh.pop %v621
    %624 = vrot.lane.b32.xlu0 %v622, 64
    %v625 = vpop.permute.xlu0 %624
    %v627 = vmul.f32 %v605, %v625
    %v628 = vsel %vm478, 1, 0
    %629 = vset.pattern.permute.xlu0 0
    %630 = vperm.xlu0 %629, %v628
    %v631 = vpop.permute.xlu0 %630
    %vm632 = vcmp.eq.s32.totalorder %v631, 1
    %634 = vst [vmem:[#allocation1] ss:$4 sm:$0xff] %v621
    %v635 = vld.sshfl [vmem:[#allocation1] sm:$0xff pattern:$0x73625140]
    %636 = vrot.lane.b32.xlu0 %v635, 96
    %v637 = vpop.permute.xlu0 %636
    %v639 = vsel %vm632, %v453, %v637
    %641 = vst [vmem:[#allocation1] ss:$4 sm:$0xff] %v627
    %v642 = vld.sshfl [vmem:[#allocation1] sm:$0xff pattern:$0x73625140]
    %643 = vrot.lane.b32.xlu0 %v642, 32
    %v644 = vpop.permute.xlu0 %643
    %v646 = vsel %vm632, %v460, %v644
    %647 = vst [vmem:[#allocation1] ss:$4 sm:$0xff] %v627
    %v648 = vld.sshfl [vmem:[#allocation1] sm:$0xff pattern:$0x73625140]
    %649 = vrot.lane.b32.xlu0 %v648, 32
    %v650 = vpop.permute.xlu0 %649
    %v652 = vsel %vm632, 0.0, %v650
    %v653 = vpack.c.bf16 %v565, %v565
    %s654 = scalar_lea.vmem %s6, 1
    %655 = vst.msk [vmem:[%s654] sm:$0x1] %vm468, %v653
    %v656 = vpack.c.bf16 %v652, %v652
    %s657 = scalar_lea.vmem %s239, 6
    %658 = vst.msk [vmem:[%s657] sm:$0x1] %vm468, %v656
    %s659 = scalar_lea.vmem %s2, 4
    %v660 = vld [vmem:[%s659] sm:$0x3]
    %vm661 = vcmp.ne.s32.totalorder %v660, 0
    %s662 = scalar_lea.vmem %s232, 10
    %v663 = vld [vmem:[%s662] sm:$0x3]
    %vm664 = vcmp.ne.s32.totalorder %v663, 0
    %s665 = scalar_lea.vmem [#allocation6], 2
    %v666 = vld [vmem:[%s665] sm:$0x1]
    %v667 = vunpack.c.l.bf16 %v666
    %v668 = vpack.c.bf16 %v559, %v559
    %v670 = vsel %vm284, %v668, 0
    %672 = vmatpush.bf16.msra.mxu0 0
    %673 = vmatpush.bf16.msra.mxu0 0
    %674 = vmatpush.bf16.msra.mxu0 0
    %675 = vmatpush.bf16.msra.mxu0 0
    %676 = vmatpush.bf16.msra.mxu0 0
    %677 = vmatpush.bf16.msra.mxu0 0
    %678 = vmatpush.bf16.msra.mxu0 %v281
    %679 = vmatpush.bf16.msra.mxu0 %v280
    %680 = vmatmul.bf16.gmra.mxu0 %v670
    %v681 = vpop.f32.mrf.mxu0
    %v682 = vadd.f32 0.0, %v681
    %v683 = vpop.f32.mrf.mxu0
    %684 = vdwg.mxu0
    %v685 = vadd.f32 %v667, %v682
    %v686 = vxor.u32 %v685, 2147483648
    %v687 = vmul.f32 %v686, 1.442695
    %v688 = vpow.pop %v687
    %v689 = vadd.f32 %v688, 1.0
    %v690 = vrcp.pop %v689
    %v691 = vmul.f32 %v689, %v690
    %v692 = vsub.f32 1.0, %v691
    %v693 = vmul.f32 %v690, %v692
    %v694 = vadd.f32 %v690, %v693
    %vm695 = vweird.f32 %v689
    %vm696 = vweird.f32 %v690
    %vm697 = vmor %vm695, %vm696
    %v698 = vsel %vm697, %v690, %v694
    %v699 = vand.u32 2147483647, %v689
    %vm700 = vcmp.eq.f32.partialorder %v699, 8.507059e+37
    %v701 = vand.u32 %v689, 2147483648
    %v702 = vor.u32 1.1754944e-38, %v701
    %v703 = vsel %vm700, %v702, %v698
    %v704 = vmul.f32 1.0, %v703
    %v705 = vtanh.pop %v685
    %707 = vrot.lane.b32.xlu0 %v552, 32
    %v708 = vpop.permute.xlu0 %707
    %v710 = vmul.f32 %v704, %v708
    %712 = vrot.lane.b32.xlu0 %v705, 64
    %v713 = vpop.permute.xlu0 %712
    %v715 = vmul.f32 %v704, %v713
    %717 = vrot.lane.b32.xlu0 %v715, 32
    %v718 = vpop.permute.xlu0 %717
    %v720 = vadd.f32 %v710, %v718
    %v721 = vtanh.pop %v720
    %723 = vrot.lane.b32.xlu0 %v721, 64
    %v724 = vpop.permute.xlu0 %723
    %v726 = vmul.f32 %v704, %v724
    %v727 = vsel %vm661, 1, 0
    %728 = vset.pattern.permute.xlu0 0
    %729 = vperm.xlu0 %728, %v727
    %v730 = vpop.permute.xlu0 %729
    %vm731 = vcmp.eq.s32.totalorder %v730, 1
    %733 = vst [vmem:[#allocation1] ss:$4 sm:$0xff] %v720
    %v734 = vld.sshfl [vmem:[#allocation1] sm:$0xff pattern:$0x73625140]
    %735 = vrot.lane.b32.xlu0 %v734, 96
    %v736 = vpop.permute.xlu0 %735
    %v738 = vsel %vm731, %v552, %v736
    %740 = vst [vmem:[#allocation1] ss:$4 sm:$0xff] %v726
    %v741 = vld.sshfl [vmem:[#allocation1] sm:$0xff pattern:$0x73625140]
    %742 = vrot.lane.b32.xlu0 %v741, 32
    %v743 = vpop.permute.xlu0 %742
    %v745 = vsel %vm731, %v559, %v743
    %746 = vst [vmem:[#allocation1] ss:$4 sm:$0xff] %v726
    %v747 = vld.sshfl [vmem:[#allocation1] sm:$0xff pattern:$0x73625140]
    %748 = vrot.lane.b32.xlu0 %v747, 32
    %v749 = vpop.permute.xlu0 %748
    %v751 = vsel %vm731, 0.0, %v749
    %s752 = scalar_lea.vmem [#allocation7], 5
    %v753 = vld [vmem:[%s752] sm:$0x1]
    %v754 = vunpack.c.l.bf16 %v753
    %v755 = vpack.c.bf16 %v646, %v646
    %v757 = vsel %vm284, %v755, 0
    %759 = vmatpush.bf16.msra.mxu0 0
    %760 = vmatpush.bf16.msra.mxu0 0
    %761 = vmatpush.bf16.msra.mxu0 0
    %762 = vmatpush.bf16.msra.mxu0 0
    %763 = vmatpush.bf16.msra.mxu0 0
    %764 = vmatpush.bf16.msra.mxu0 0
    %765 = vmatpush.bf16.msra.mxu0 %v381
    %766 = vmatpush.bf16.msra.mxu0 %v380
    %767 = vmatmul.bf16.gmra.mxu0 %v757
    %v768 = vpop.f32.mrf.mxu0
    %v769 = vadd.f32 0.0, %v768
    %v770 = vpop.f32.mrf.mxu0
    %771 = vdwg.mxu0
    %v772 = vadd.f32 %v754, %v769
    %v773 = vxor.u32 %v772, 2147483648
    %v774 = vmul.f32 %v773, 1.442695
    %v775 = vpow.pop %v774
    %v776 = vadd.f32 %v775, 1.0
    %v777 = vrcp.pop %v776
    %v778 = vmul.f32 %v776, %v777
    %v779 = vsub.f32 1.0, %v778
    %v780 = vmul.f32 %v777, %v779
    %v781 = vadd.f32 %v777, %v780
    %vm782 = vweird.f32 %v776
    %vm783 = vweird.f32 %v777
    %vm784 = vmor %vm782, %vm783
    %v785 = vsel %vm784, %v777, %v781
    %v786 = vand.u32 2147483647, %v776
    %vm787 = vcmp.eq.f32.partialorder %v786, 8.507059e+37
    %v788 = vand.u32 %v776, 2147483648
    %v789 = vor.u32 1.1754944e-38, %v788
    %v790 = vsel %vm787, %v789, %v785
    %v791 = vmul.f32 1.0, %v790
    %v792 = vtanh.pop %v772
    %794 = vrot.lane.b32.xlu0 %v639, 32
    %v795 = vpop.permute.xlu0 %794
    %v797 = vmul.f32 %v791, %v795
    %799 = vrot.lane.b32.xlu0 %v792, 64
    %v800 = vpop.permute.xlu0 %799
    %v802 = vmul.f32 %v791, %v800
    %804 = vrot.lane.b32.xlu0 %v802, 32
    %v805 = vpop.permute.xlu0 %804
    %v807 = vadd.f32 %v797, %v805
    %v808 = vtanh.pop %v807
    %810 = vrot.lane.b32.xlu0 %v808, 64
    %v811 = vpop.permute.xlu0 %810
    %v813 = vmul.f32 %v791, %v811
    %v814 = vsel %vm664, 1, 0
    %815 = vset.pattern.permute.xlu0 0
    %816 = vperm.xlu0 %815, %v814
    %v817 = vpop.permute.xlu0 %816
    %vm818 = vcmp.eq.s32.totalorder %v817, 1
    %820 = vst [vmem:[#allocation1] ss:$4 sm:$0xff] %v807
    %v821 = vld.sshfl [vmem:[#allocation1] sm:$0xff pattern:$0x73625140]
    %822 = vrot.lane.b32.xlu0 %v821, 96
    %v823 = vpop.permute.xlu0 %822
    %v825 = vsel %vm818, %v639, %v823
    %827 = vst [vmem:[#allocation1] ss:$4 sm:$0xff] %v813
    %v828 = vld.sshfl [vmem:[#allocation1] sm:$0xff pattern:$0x73625140]
    %829 = vrot.lane.b32.xlu0 %v828, 32
    %v830 = vpop.permute.xlu0 %829
    %v832 = vsel %vm818, %v646, %v830
    %833 = vst [vmem:[#allocation1] ss:$4 sm:$0xff] %v813
    %v834 = vld.sshfl [vmem:[#allocation1] sm:$0xff pattern:$0x73625140]
    %835 = vrot.lane.b32.xlu0 %v834, 32
    %v836 = vpop.permute.xlu0 %835
    %v838 = vsel %vm818, 0.0, %v836
    %v839 = vpack.c.bf16 %v751, %v751
    %s840 = scalar_lea.vmem %s6, 2
    %841 = vst.msk [vmem:[%s840] sm:$0x1] %vm468, %v839
    %v842 = vpack.c.bf16 %v838, %v838
    %s843 = scalar_lea.vmem %s239, 5
    %844 = vst.msk [vmem:[%s843] sm:$0x1] %vm468, %v842
    %s845 = scalar_lea.vmem %s2, 6
    %v846 = vld [vmem:[%s845] sm:$0x3]
    %vm847 = vcmp.ne.s32.totalorder %v846, 0
    %s848 = scalar_lea.vmem %s232, 8
    %v849 = vld [vmem:[%s848] sm:$0x3]
    %vm850 = vcmp.ne.s32.totalorder %v849, 0
    %s851 = scalar_lea.vmem [#allocation6], 3
    %v852 = vld [vmem:[%s851] sm:$0x1]
    %v853 = vunpack.c.l.bf16 %v852
    %v854 = vpack.c.bf16 %v745, %v745
    %v856 = vsel %vm284, %v854, 0
    %858 = vmatpush.bf16.msra.mxu0 0
    %859 = vmatpush.bf16.msra.mxu0 0
    %860 = vmatpush.bf16.msra.mxu0 0
    %861 = vmatpush.bf16.msra.mxu0 0
    %862 = vmatpush.bf16.msra.mxu0 0
    %863 = vmatpush.bf16.msra.mxu0 0
    %864 = vmatpush.bf16.msra.mxu0 %v281
    %865 = vmatpush.bf16.msra.mxu0 %v280
    %866 = vmatmul.bf16.gmra.mxu0 %v856
    %v867 = vpop.f32.mrf.mxu0
    %v868 = vadd.f32 0.0, %v867
    %v869 = vpop.f32.mrf.mxu0
    %870 = vdwg.mxu0
    %v871 = vadd.f32 %v853, %v868
    %v872 = vxor.u32 %v871, 2147483648
    %v873 = vmul.f32 %v872, 1.442695
    %v874 = vpow.pop %v873
    %v875 = vadd.f32 %v874, 1.0
    %v876 = vrcp.pop %v875
    %v877 = vmul.f32 %v875, %v876
    %v878 = vsub.f32 1.0, %v877
    %v879 = vmul.f32 %v876, %v878
    %v880 = vadd.f32 %v876, %v879
    %vm881 = vweird.f32 %v875
    %vm882 = vweird.f32 %v876
    %vm883 = vmor %vm881, %vm882
    %v884 = vsel %vm883, %v876, %v880
    %v885 = vand.u32 2147483647, %v875
    %vm886 = vcmp.eq.f32.partialorder %v885, 8.507059e+37
    %v887 = vand.u32 %v875, 2147483648
    %v888 = vor.u32 1.1754944e-38, %v887
    %v889 = vsel %vm886, %v888, %v884
    %v890 = vmul.f32 1.0, %v889
    %v891 = vtanh.pop %v871
    %893 = vrot.lane.b32.xlu0 %v738, 32
    %v894 = vpop.permute.xlu0 %893
    %v896 = vmul.f32 %v890, %v894
    %898 = vrot.lane.b32.xlu0 %v891, 64
    %v899 = vpop.permute.xlu0 %898
    %v901 = vmul.f32 %v890, %v899
    %903 = vrot.lane.b32.xlu0 %v901, 32
    %v904 = vpop.permute.xlu0 %903
    %v906 = vadd.f32 %v896, %v904
    %v907 = vtanh.pop %v906
    %909 = vrot.lane.b32.xlu0 %v907, 64
    %v910 = vpop.permute.xlu0 %909
    %v912 = vmul.f32 %v890, %v910
    %v913 = vsel %vm847, 1, 0
    %914 = vset.pattern.permute.xlu0 0
    %915 = vperm.xlu0 %914, %v913
    %v916 = vpop.permute.xlu0 %915
    %vm917 = vcmp.eq.s32.totalorder %v916, 1
    %919 = vst [vmem:[#allocation1] ss:$4 sm:$0xff] %v906
    %v920 = vld.sshfl [vmem:[#allocation1] sm:$0xff pattern:$0x73625140]
    %921 = vrot.lane.b32.xlu0 %v920, 96
    %v922 = vpop.permute.xlu0 %921
    %v924 = vsel %vm917, %v738, %v922
    %926 = vst [vmem:[#allocation1] ss:$4 sm:$0xff] %v912
    %v927 = vld.sshfl [vmem:[#allocation1] sm:$0xff pattern:$0x73625140]
    %928 = vrot.lane.b32.xlu0 %v927, 32
    %v929 = vpop.permute.xlu0 %928
    %v931 = vsel %vm917, %v745, %v929
    %932 = vst [vmem:[#allocation1] ss:$4 sm:$0xff] %v912
    %v933 = vld.sshfl [vmem:[#allocation1] sm:$0xff pattern:$0x73625140]
    %934 = vrot.lane.b32.xlu0 %v933, 32
    %v935 = vpop.permute.xlu0 %934
    %v937 = vsel %vm917, 0.0, %v935
    %s938 = scalar_lea.vmem [#allocation7], 4
    %v939 = vld [vmem:[%s938] sm:$0x1]
    %v940 = vunpack.c.l.bf16 %v939
    %v941 = vpack.c.bf16 %v832, %v832
    %v943 = vsel %vm284, %v941, 0
    %945 = vmatpush.bf16.msra.mxu0 0
    %946 = vmatpush.bf16.msra.mxu0 0
    %947 = vmatpush.bf16.msra.mxu0 0
    %948 = vmatpush.bf16.msra.mxu0 0
    %949 = vmatpush.bf16.msra.mxu0 0
    %950 = vmatpush.bf16.msra.mxu0 0
    %951 = vmatpush.bf16.msra.mxu0 %v381
    %952 = vmatpush.bf16.msra.mxu0 %v380
    %953 = vmatmul.bf16.gmra.mxu0 %v943
    %v954 = vpop.f32.mrf.mxu0
    %v955 = vadd.f32 0.0, %v954
    %v956 = vpop.f32.mrf.mxu0
    %957 = vdwg.mxu0
    %v958 = vadd.f32 %v940, %v955
    %v959 = vxor.u32 %v958, 2147483648
    %v960 = vmul.f32 %v959, 1.442695
    %v961 = vpow.pop %v960
    %v962 = vadd.f32 %v961, 1.0
    %v963 = vrcp.pop %v962
    %v964 = vmul.f32 %v962, %v963
    %v965 = vsub.f32 1.0, %v964
    %v966 = vmul.f32 %v963, %v965
    %v967 = vadd.f32 %v963, %v966
    %vm968 = vweird.f32 %v962
    %vm969 = vweird.f32 %v963
    %vm970 = vmor %vm968, %vm969
    %v971 = vsel %vm970, %v963, %v967
    %v972 = vand.u32 2147483647, %v962
    %vm973 = vcmp.eq.f32.partialorder %v972, 8.507059e+37
    %v974 = vand.u32 %v962, 2147483648
    %v975 = vor.u32 1.1754944e-38, %v974
    %v976 = vsel %vm973, %v975, %v971
    %v977 = vmul.f32 1.0, %v976
    %v978 = vtanh.pop %v958
    %980 = vrot.lane.b32.xlu0 %v825, 32
    %v981 = vpop.permute.xlu0 %980
    %v983 = vmul.f32 %v977, %v981
    %985 = vrot.lane.b32.xlu0 %v978, 64
    %v986 = vpop.permute.xlu0 %985
    %v988 = vmul.f32 %v977, %v986
    %990 = vrot.lane.b32.xlu0 %v988, 32
    %v991 = vpop.permute.xlu0 %990
    %v993 = vadd.f32 %v983, %v991
    %v994 = vtanh.pop %v993
    %996 = vrot.lane.b32.xlu0 %v994, 64
    %v997 = vpop.permute.xlu0 %996
    %v999 = vmul.f32 %v977, %v997
    %v1000 = vsel %vm850, 1, 0
    %1001 = vset.pattern.permute.xlu0 0
    %1002 = vperm.xlu0 %1001, %v1000
    %v1003 = vpop.permute.xlu0 %1002
    %vm1004 = vcmp.eq.s32.totalorder %v1003, 1
    %1006 = vst [vmem:[#allocation1] ss:$4 sm:$0xff] %v993
    %v1007 = vld.sshfl [vmem:[#allocation1] sm:$0xff pattern:$0x73625140]
    %1008 = vrot.lane.b32.xlu0 %v1007, 96
    %v1009 = vpop.permute.xlu0 %1008
    %v1011 = vsel %vm1004, %v825, %v1009
    %1013 = vst [vmem:[#allocation1] ss:$4 sm:$0xff] %v999
    %v1014 = vld.sshfl [vmem:[#allocation1] sm:$0xff pattern:$0x73625140]
    %1015 = vrot.lane.b32.xlu0 %v1014, 32
    %v1016 = vpop.permute.xlu0 %1015
    %v1018 = vsel %vm1004, %v832, %v1016
    %1019 = vst [vmem:[#allocation1] ss:$4 sm:$0xff] %v999
    %v1020 = vld.sshfl [vmem:[#allocation1] sm:$0xff pattern:$0x73625140]
    %1021 = vrot.lane.b32.xlu0 %v1020, 32
    %v1022 = vpop.permute.xlu0 %1021
    %v1024 = vsel %vm1004, 0.0, %v1022
    %v1025 = vpack.c.bf16 %v937, %v937
    %s1026 = scalar_lea.vmem %s6, 3
    %1027 = vst.msk [vmem:[%s1026] sm:$0x1] %vm468, %v1025
    %v1028 = vpack.c.bf16 %v1024, %v1024
    %s1029 = scalar_lea.vmem %s239, 4
    %1030 = vst.msk [vmem:[%s1029] sm:$0x1] %vm468, %v1028
    %s1031 = scalar_lea.vmem %s2, 8
    %v1032 = vld [vmem:[%s1031] sm:$0x3]
    %vm1033 = vcmp.ne.s32.totalorder %v1032, 0
    %s1034 = scalar_lea.vmem %s232, 6
    %v1035 = vld [vmem:[%s1034] sm:$0x3]
    %vm1036 = vcmp.ne.s32.totalorder %v1035, 0
    %s1037 = scalar_lea.vmem [#allocation6], 4
    %v1038 = vld [vmem:[%s1037] sm:$0x1]
    %v1039 = vunpack.c.l.bf16 %v1038
    %v1040 = vpack.c.bf16 %v931, %v931
    %v1042 = vsel %vm284, %v1040, 0
    %1044 = vmatpush.bf16.msra.mxu0 0
    %1045 = vmatpush.bf16.msra.mxu0 0
    %1046 = vmatpush.bf16.msra.mxu0 0
    %1047 = vmatpush.bf16.msra.mxu0 0
    %1048 = vmatpush.bf16.msra.mxu0 0
    %1049 = vmatpush.bf16.msra.mxu0 0
    %1050 = vmatpush.bf16.msra.mxu0 %v281
    %1051 = vmatpush.bf16.msra.mxu0 %v280
    %1052 = vmatmul.bf16.gmra.mxu0 %v1042
    %v1053 = vpop.f32.mrf.mxu0
    %v1054 = vadd.f32 0.0, %v1053
    %v1055 = vpop.f32.mrf.mxu0
    %1056 = vdwg.mxu0
    %v1057 = vadd.f32 %v1039, %v1054
    %v1058 = vxor.u32 %v1057, 2147483648
    %v1059 = vmul.f32 %v1058, 1.442695
    %v1060 = vpow.pop %v1059
    %v1061 = vadd.f32 %v1060, 1.0
    %v1062 = vrcp.pop %v1061
    %v1063 = vmul.f32 %v1061, %v1062
    %v1064 = vsub.f32 1.0, %v1063
    %v1065 = vmul.f32 %v1062, %v1064
    %v1066 = vadd.f32 %v1062, %v1065
    %vm1067 = vweird.f32 %v1061
    %vm1068 = vweird.f32 %v1062
    %vm1069 = vmor %vm1067, %vm1068
    %v1070 = vsel %vm1069, %v1062, %v1066
    %v1071 = vand.u32 2147483647, %v1061
    %vm1072 = vcmp.eq.f32.partialorder %v1071, 8.507059e+37
    %v1073 = vand.u32 %v1061, 2147483648
    %v1074 = vor.u32 1.1754944e-38, %v1073
    %v1075 = vsel %vm1072, %v1074, %v1070
    %v1076 = vmul.f32 1.0, %v1075
    %v1077 = vtanh.pop %v1057
    %1079 = vrot.lane.b32.xlu0 %v924, 32
    %v1080 = vpop.permute.xlu0 %1079
    %v1082 = vmul.f32 %v1076, %v1080
    %1084 = vrot.lane.b32.xlu0 %v1077, 64
    %v1085 = vpop.permute.xlu0 %1084
    %v1087 = vmul.f32 %v1076, %v1085
    %1089 = vrot.lane.b32.xlu0 %v1087, 32
    %v1090 = vpop.permute.xlu0 %1089
    %v1092 = vadd.f32 %v1082, %v1090
    %v1093 = vtanh.pop %v1092
    %1095 = vrot.lane.b32.xlu0 %v1093, 64
    %v1096 = vpop.permute.xlu0 %1095
    %v1098 = vmul.f32 %v1076, %v1096
    %v1099 = vsel %vm1033, 1, 0
    %1100 = vset.pattern.permute.xlu0 0
    %1101 = vperm.xlu0 %1100, %v1099
    %v1102 = vpop.permute.xlu0 %1101
    %vm1103 = vcmp.eq.s32.totalorder %v1102, 1
    %1105 = vst [vmem:[#allocation1] ss:$4 sm:$0xff] %v1092
    %v1106 = vld.sshfl [vmem:[#allocation1] sm:$0xff pattern:$0x73625140]
    %1107 = vrot.lane.b32.xlu0 %v1106, 96
    %v1108 = vpop.permute.xlu0 %1107
    %v1110 = vsel %vm1103, %v924, %v1108
    %1112 = vst [vmem:[#allocation1] ss:$4 sm:$0xff] %v1098
    %v1113 = vld.sshfl [vmem:[#allocation1] sm:$0xff pattern:$0x73625140]
    %1114 = vrot.lane.b32.xlu0 %v1113, 32
    %v1115 = vpop.permute.xlu0 %1114
    %v1117 = vsel %vm1103, %v931, %v1115
    %1118 = vst [vmem:[#allocation1] ss:$4 sm:$0xff] %v1098
    %v1119 = vld.sshfl [vmem:[#allocation1] sm:$0xff pattern:$0x73625140]
    %1120 = vrot.lane.b32.xlu0 %v1119, 32
    %v1121 = vpop.permute.xlu0 %1120
    %v1123 = vsel %vm1103, 0.0, %v1121
    %s1124 = scalar_lea.vmem [#allocation7], 3
    %v1125 = vld [vmem:[%s1124] sm:$0x1]
    %v1126 = vunpack.c.l.bf16 %v1125
    %v1127 = vpack.c.bf16 %v1018, %v1018
    %v1129 = vsel %vm284, %v1127, 0
    %1131 = vmatpush.bf16.msra.mxu0 0
    %1132 = vmatpush.bf16.msra.mxu0 0
    %1133 = vmatpush.bf16.msra.mxu0 0
    %1134 = vmatpush.bf16.msra.mxu0 0
    %1135 = vmatpush.bf16.msra.mxu0 0
    %1136 = vmatpush.bf16.msra.mxu0 0
    %1137 = vmatpush.bf16.msra.mxu0 %v381
    %1138 = vmatpush.bf16.msra.mxu0 %v380
    %1139 = vmatmul.bf16.gmra.mxu0 %v1129
    %v1140 = vpop.f32.mrf.mxu0
    %v1141 = vadd.f32 0.0, %v1140
    %v1142 = vpop.f32.mrf.mxu0
    %1143 = vdwg.mxu0
    %v1144 = vadd.f32 %v1126, %v1141
    %v1145 = vxor.u32 %v1144, 2147483648
    %v1146 = vmul.f32 %v1145, 1.442695
    %v1147 = vpow.pop %v1146
    %v1148 = vadd.f32 %v1147, 1.0
    %v1149 = vrcp.pop %v1148
    %v1150 = vmul.f32 %v1148, %v1149
    %v1151 = vsub.f32 1.0, %v1150
    %v1152 = vmul.f32 %v1149, %v1151
    %v1153 = vadd.f32 %v1149, %v1152
    %vm1154 = vweird.f32 %v1148
    %vm1155 = vweird.f32 %v1149
    %vm1156 = vmor %vm1154, %vm1155
    %v1157 = vsel %vm1156, %v1149, %v1153
    %v1158 = vand.u32 2147483647, %v1148
    %vm1159 = vcmp.eq.f32.partialorder %v1158, 8.507059e+37
    %v1160 = vand.u32 %v1148, 2147483648
    %v1161 = vor.u32 1.1754944e-38, %v1160
    %v1162 = vsel %vm1159, %v1161, %v1157
    %v1163 = vmul.f32 1.0, %v1162
    %v1164 = vtanh.pop %v1144
    %1166 = vrot.lane.b32.xlu0 %v1011, 32
    %v1167 = vpop.permute.xlu0 %1166
    %v1169 = vmul.f32 %v1163, %v1167
    %1171 = vrot.lane.b32.xlu0 %v1164, 64
    %v1172 = vpop.permute.xlu0 %1171
    %v1174 = vmul.f32 %v1163, %v1172
    %1176 = vrot.lane.b32.xlu0 %v1174, 32
    %v1177 = vpop.permute.xlu0 %1176
    %v1179 = vadd.f32 %v1169, %v1177
    %v1180 = vtanh.pop %v1179
    %1182 = vrot.lane.b32.xlu0 %v1180, 64
    %v1183 = vpop.permute.xlu0 %1182
    %v1185 = vmul.f32 %v1163, %v1183
    %v1186 = vsel %vm1036, 1, 0
    %1187 = vset.pattern.permute.xlu0 0
    %1188 = vperm.xlu0 %1187, %v1186
    %v1189 = vpop.permute.xlu0 %1188
    %vm1190 = vcmp.eq.s32.totalorder %v1189, 1
    %1192 = vst [vmem:[#allocation1] ss:$4 sm:$0xff] %v1179
    %v1193 = vld.sshfl [vmem:[#allocation1] sm:$0xff pattern:$0x73625140]
    %1194 = vrot.lane.b32.xlu0 %v1193, 96
    %v1195 = vpop.permute.xlu0 %1194
    %v1197 = vsel %vm1190, %v1011, %v1195
    %1199 = vst [vmem:[#allocation1] ss:$4 sm:$0xff] %v1185
    %v1200 = vld.sshfl [vmem:[#allocation1] sm:$0xff pattern:$0x73625140]
    %1201 = vrot.lane.b32.xlu0 %v1200, 32
    %v1202 = vpop.permute.xlu0 %1201
    %v1204 = vsel %vm1190, %v1018, %v1202
    %1205 = vst [vmem:[#allocation1] ss:$4 sm:$0xff] %v1185
    %v1206 = vld.sshfl [vmem:[#allocation1] sm:$0xff pattern:$0x73625140]
    %1207 = vrot.lane.b32.xlu0 %v1206, 32
    %v1208 = vpop.permute.xlu0 %1207
    %v1210 = vsel %vm1190, 0.0, %v1208
    %v1211 = vpack.c.bf16 %v1123, %v1123
    %s1212 = scalar_lea.vmem %s6, 4
    %1213 = vst.msk [vmem:[%s1212] sm:$0x1] %vm468, %v1211
    %v1214 = vpack.c.bf16 %v1210, %v1210
    %s1215 = scalar_lea.vmem %s239, 3
    %1216 = vst.msk [vmem:[%s1215] sm:$0x1] %vm468, %v1214
    %s1217 = scalar_lea.vmem %s2, 10
    %v1218 = vld [vmem:[%s1217] sm:$0x3]
    %vm1219 = vcmp.ne.s32.totalorder %v1218, 0
    %s1220 = scalar_lea.vmem %s232, 4
    %v1221 = vld [vmem:[%s1220] sm:$0x3]
    %vm1222 = vcmp.ne.s32.totalorder %v1221, 0
    %s1223 = scalar_lea.vmem [#allocation6], 5
    %v1224 = vld [vmem:[%s1223] sm:$0x1]
    %v1225 = vunpack.c.l.bf16 %v1224
    %v1226 = vpack.c.bf16 %v1117, %v1117
    %v1228 = vsel %vm284, %v1226, 0
    %1230 = vmatpush.bf16.msra.mxu0 0
    %1231 = vmatpush.bf16.msra.mxu0 0
    %1232 = vmatpush.bf16.msra.mxu0 0
    %1233 = vmatpush.bf16.msra.mxu0 0
    %1234 = vmatpush.bf16.msra.mxu0 0
    %1235 = vmatpush.bf16.msra.mxu0 0
    %1236 = vmatpush.bf16.msra.mxu0 %v281
    %1237 = vmatpush.bf16.msra.mxu0 %v280
    %1238 = vmatmul.bf16.gmra.mxu0 %v1228
    %v1239 = vpop.f32.mrf.mxu0
    %v1240 = vadd.f32 0.0, %v1239
    %v1241 = vpop.f32.mrf.mxu0
    %1242 = vdwg.mxu0
    %v1243 = vadd.f32 %v1225, %v1240
    %v1244 = vxor.u32 %v1243, 2147483648
    %v1245 = vmul.f32 %v1244, 1.442695
    %v1246 = vpow.pop %v1245
    %v1247 = vadd.f32 %v1246, 1.0
    %v1248 = vrcp.pop %v1247
    %v1249 = vmul.f32 %v1247, %v1248
    %v1250 = vsub.f32 1.0, %v1249
    %v1251 = vmul.f32 %v1248, %v1250
    %v1252 = vadd.f32 %v1248, %v1251
    %vm1253 = vweird.f32 %v1247
    %vm1254 = vweird.f32 %v1248
    %vm1255 = vmor %vm1253, %vm1254
    %v1256 = vsel %vm1255, %v1248, %v1252
    %v1257 = vand.u32 2147483647, %v1247
    %vm1258 = vcmp.eq.f32.partialorder %v1257, 8.507059e+37
    %v1259 = vand.u32 %v1247, 2147483648
    %v1260 = vor.u32 1.1754944e-38, %v1259
    %v1261 = vsel %vm1258, %v1260, %v1256
    %v1262 = vmul.f32 1.0, %v1261
    %v1263 = vtanh.pop %v1243
    %1265 = vrot.lane.b32.xlu0 %v1110, 32
    %v1266 = vpop.permute.xlu0 %1265
    %v1268 = vmul.f32 %v1262, %v1266
    %1270 = vrot.lane.b32.xlu0 %v1263, 64
    %v1271 = vpop.permute.xlu0 %1270
    %v1273 = vmul.f32 %v1262, %v1271
    %1275 = vrot.lane.b32.xlu0 %v1273, 32
    %v1276 = vpop.permute.xlu0 %1275
    %v1278 = vadd.f32 %v1268, %v1276
    %v1279 = vtanh.pop %v1278
    %1281 = vrot.lane.b32.xlu0 %v1279, 64
    %v1282 = vpop.permute.xlu0 %1281
    %v1284 = vmul.f32 %v1262, %v1282
    %v1285 = vsel %vm1219, 1, 0
    %1286 = vset.pattern.permute.xlu0 0
    %1287 = vperm.xlu0 %1286, %v1285
    %v1288 = vpop.permute.xlu0 %1287
    %vm1289 = vcmp.eq.s32.totalorder %v1288, 1
    %1291 = vst [vmem:[#allocation1] ss:$4 sm:$0xff] %v1278
    %v1292 = vld.sshfl [vmem:[#allocation1] sm:$0xff pattern:$0x73625140]
    %1293 = vrot.lane.b32.xlu0 %v1292, 96
    %v1294 = vpop.permute.xlu0 %1293
    %v1296 = vsel %vm1289, %v1110, %v1294
    %1298 = vst [vmem:[#allocation1] ss:$4 sm:$0xff] %v1284
    %v1299 = vld.sshfl [vmem:[#allocation1] sm:$0xff pattern:$0x73625140]
    %1300 = vrot.lane.b32.xlu0 %v1299, 32
    %v1301 = vpop.permute.xlu0 %1300
    %v1303 = vsel %vm1289, %v1117, %v1301
    %1304 = vst [vmem:[#allocation1] ss:$4 sm:$0xff] %v1284
    %v1305 = vld.sshfl [vmem:[#allocation1] sm:$0xff pattern:$0x73625140]
    %1306 = vrot.lane.b32.xlu0 %v1305, 32
    %v1307 = vpop.permute.xlu0 %1306
    %v1309 = vsel %vm1289, 0.0, %v1307
    %s1310 = scalar_lea.vmem [#allocation7], 2
    %v1311 = vld [vmem:[%s1310] sm:$0x1]
    %v1312 = vunpack.c.l.bf16 %v1311
    %v1313 = vpack.c.bf16 %v1204, %v1204
    %v1315 = vsel %vm284, %v1313, 0
    %1317 = vmatpush.bf16.msra.mxu0 0
    %1318 = vmatpush.bf16.msra.mxu0 0
    %1319 = vmatpush.bf16.msra.mxu0 0
    %1320 = vmatpush.bf16.msra.mxu0 0
    %1321 = vmatpush.bf16.msra.mxu0 0
    %1322 = vmatpush.bf16.msra.mxu0 0
    %1323 = vmatpush.bf16.msra.mxu0 %v381
    %1324 = vmatpush.bf16.msra.mxu0 %v380
    %1325 = vmatmul.bf16.gmra.mxu0 %v1315
    %v1326 = vpop.f32.mrf.mxu0
    %v1327 = vadd.f32 0.0, %v1326
    %v1328 = vpop.f32.mrf.mxu0
    %1329 = vdwg.mxu0
    %v1330 = vadd.f32 %v1312, %v1327
    %v1331 = vxor.u32 %v1330, 2147483648
    %v1332 = vmul.f32 %v1331, 1.442695
    %v1333 = vpow.pop %v1332
    %v1334 = vadd.f32 %v1333, 1.0
    %v1335 = vrcp.pop %v1334
    %v1336 = vmul.f32 %v1334, %v1335
    %v1337 = vsub.f32 1.0, %v1336
    %v1338 = vmul.f32 %v1335, %v1337
    %v1339 = vadd.f32 %v1335, %v1338
    %vm1340 = vweird.f32 %v1334
    %vm1341 = vweird.f32 %v1335
    %vm1342 = vmor %vm1340, %vm1341
    %v1343 = vsel %vm1342, %v1335, %v1339
    %v1344 = vand.u32 2147483647, %v1334
    %vm1345 = vcmp.eq.f32.partialorder %v1344, 8.507059e+37
    %v1346 = vand.u32 %v1334, 2147483648
    %v1347 = vor.u32 1.1754944e-38, %v1346
    %v1348 = vsel %vm1345, %v1347, %v1343
    %v1349 = vmul.f32 1.0, %v1348
    %v1350 = vtanh.pop %v1330
    %1352 = vrot.lane.b32.xlu0 %v1197, 32
    %v1353 = vpop.permute.xlu0 %1352
    %v1355 = vmul.f32 %v1349, %v1353
    %1357 = vrot.lane.b32.xlu0 %v1350, 64
    %v1358 = vpop.permute.xlu0 %1357
    %v1360 = vmul.f32 %v1349, %v1358
    %1362 = vrot.lane.b32.xlu0 %v1360, 32
    %v1363 = vpop.permute.xlu0 %1362
    %v1365 = vadd.f32 %v1355, %v1363
    %v1366 = vtanh.pop %v1365
    %1368 = vrot.lane.b32.xlu0 %v1366, 64
    %v1369 = vpop.permute.xlu0 %1368
    %v1371 = vmul.f32 %v1349, %v1369
    %v1372 = vsel %vm1222, 1, 0
    %1373 = vset.pattern.permute.xlu0 0
    %1374 = vperm.xlu0 %1373, %v1372
    %v1375 = vpop.permute.xlu0 %1374
    %vm1376 = vcmp.eq.s32.totalorder %v1375, 1
    %1378 = vst [vmem:[#allocation1] ss:$4 sm:$0xff] %v1365
    %v1379 = vld.sshfl [vmem:[#allocation1] sm:$0xff pattern:$0x73625140]
    %1380 = vrot.lane.b32.xlu0 %v1379, 96
    %v1381 = vpop.permute.xlu0 %1380
    %v1383 = vsel %vm1376, %v1197, %v1381
    %1385 = vst [vmem:[#allocation1] ss:$4 sm:$0xff] %v1371
    %v1386 = vld.sshfl [vmem:[#allocation1] sm:$0xff pattern:$0x73625140]
    %1387 = vrot.lane.b32.xlu0 %v1386, 32
    %v1388 = vpop.permute.xlu0 %1387
    %v1390 = vsel %vm1376, %v1204, %v1388
    %1391 = vst [vmem:[#allocation1] ss:$4 sm:$0xff] %v1371
    %v1392 = vld.sshfl [vmem:[#allocation1] sm:$0xff pattern:$0x73625140]
    %1393 = vrot.lane.b32.xlu0 %v1392, 32
    %v1394 = vpop.permute.xlu0 %1393
    %v1396 = vsel %vm1376, 0.0, %v1394
    %v1397 = vpack.c.bf16 %v1309, %v1309
    %s1398 = scalar_lea.vmem %s6, 5
    %1399 = vst.msk [vmem:[%s1398] sm:$0x1] %vm468, %v1397
    %v1400 = vpack.c.bf16 %v1396, %v1396
    %s1401 = scalar_lea.vmem %s239, 2
    %1402 = vst.msk [vmem:[%s1401] sm:$0x1] %vm468, %v1400
    %s1403 = scalar_lea.vmem %s2, 12
    %v1404 = vld [vmem:[%s1403] sm:$0x3]
    %vm1405 = vcmp.ne.s32.totalorder %v1404, 0
    %s1406 = scalar_lea.vmem %s232, 2
    %v1407 = vld [vmem:[%s1406] sm:$0x3]
    %vm1408 = vcmp.ne.s32.totalorder %v1407, 0
    %s1409 = scalar_lea.vmem [#allocation6], 6
    %v1410 = vld [vmem:[%s1409] sm:$0x1]
    %v1411 = vunpack.c.l.bf16 %v1410
    %v1412 = vpack.c.bf16 %v1303, %v1303
    %v1414 = vsel %vm284, %v1412, 0
    %1416 = vmatpush.bf16.msra.mxu0 0
    %1417 = vmatpush.bf16.msra.mxu0 0
    %1418 = vmatpush.bf16.msra.mxu0 0
    %1419 = vmatpush.bf16.msra.mxu0 0
    %1420 = vmatpush.bf16.msra.mxu0 0
    %1421 = vmatpush.bf16.msra.mxu0 0
    %1422 = vmatpush.bf16.msra.mxu0 %v281
    %1423 = vmatpush.bf16.msra.mxu0 %v280
    %1424 = vmatmul.bf16.gmra.mxu0 %v1414
    %v1425 = vpop.f32.mrf.mxu0
    %v1426 = vadd.f32 0.0, %v1425
    %v1427 = vpop.f32.mrf.mxu0
    %1428 = vdwg.mxu0
    %v1429 = vadd.f32 %v1411, %v1426
    %v1430 = vxor.u32 %v1429, 2147483648
    %v1431 = vmul.f32 %v1430, 1.442695
    %v1432 = vpow.pop %v1431
    %v1433 = vadd.f32 %v1432, 1.0
    %v1434 = vrcp.pop %v1433
    %v1435 = vmul.f32 %v1433, %v1434
    %v1436 = vsub.f32 1.0, %v1435
    %v1437 = vmul.f32 %v1434, %v1436
    %v1438 = vadd.f32 %v1434, %v1437
    %vm1439 = vweird.f32 %v1433
    %vm1440 = vweird.f32 %v1434
    %vm1441 = vmor %vm1439, %vm1440
    %v1442 = vsel %vm1441, %v1434, %v1438
    %v1443 = vand.u32 2147483647, %v1433
    %vm1444 = vcmp.eq.f32.partialorder %v1443, 8.507059e+37
    %v1445 = vand.u32 %v1433, 2147483648
    %v1446 = vor.u32 1.1754944e-38, %v1445
    %v1447 = vsel %vm1444, %v1446, %v1442
    %v1448 = vmul.f32 1.0, %v1447
    %v1449 = vtanh.pop %v1429
    %1451 = vrot.lane.b32.xlu0 %v1296, 32
    %v1452 = vpop.permute.xlu0 %1451
    %v1454 = vmul.f32 %v1448, %v1452
    %1456 = vrot.lane.b32.xlu0 %v1449, 64
    %v1457 = vpop.permute.xlu0 %1456
    %v1459 = vmul.f32 %v1448, %v1457
    %1461 = vrot.lane.b32.xlu0 %v1459, 32
    %v1462 = vpop.permute.xlu0 %1461
    %v1464 = vadd.f32 %v1454, %v1462
    %v1465 = vtanh.pop %v1464
    %1467 = vrot.lane.b32.xlu0 %v1465, 64
    %v1468 = vpop.permute.xlu0 %1467
    %v1470 = vmul.f32 %v1448, %v1468
    %v1471 = vsel %vm1405, 1, 0
    %1472 = vset.pattern.permute.xlu0 0
    %1473 = vperm.xlu0 %1472, %v1471
    %v1474 = vpop.permute.xlu0 %1473
    %vm1475 = vcmp.eq.s32.totalorder %v1474, 1
    %1477 = vst [vmem:[#allocation1] ss:$4 sm:$0xff] %v1464
    %v1478 = vld.sshfl [vmem:[#allocation1] sm:$0xff pattern:$0x73625140]
    %1479 = vrot.lane.b32.xlu0 %v1478, 96
    %v1480 = vpop.permute.xlu0 %1479
    %v1482 = vsel %vm1475, %v1296, %v1480
    %1484 = vst [vmem:[#allocation1] ss:$4 sm:$0xff] %v1470
    %v1485 = vld.sshfl [vmem:[#allocation1] sm:$0xff pattern:$0x73625140]
    %1486 = vrot.lane.b32.xlu0 %v1485, 32
    %v1487 = vpop.permute.xlu0 %1486
    %v1489 = vsel %vm1475, %v1303, %v1487
    %1490 = vst [vmem:[#allocation1] ss:$4 sm:$0xff] %v1470
    %v1491 = vld.sshfl [vmem:[#allocation1] sm:$0xff pattern:$0x73625140]
    %1492 = vrot.lane.b32.xlu0 %v1491, 32
    %v1493 = vpop.permute.xlu0 %1492
    %v1495 = vsel %vm1475, 0.0, %v1493
    %s1496 = scalar_lea.vmem [#allocation7], 1
    %v1497 = vld [vmem:[%s1496] sm:$0x1]
    %v1498 = vunpack.c.l.bf16 %v1497
    %v1499 = vpack.c.bf16 %v1390, %v1390
    %v1501 = vsel %vm284, %v1499, 0
    %1503 = vmatpush.bf16.msra.mxu0 0
    %1504 = vmatpush.bf16.msra.mxu0 0
    %1505 = vmatpush.bf16.msra.mxu0 0
    %1506 = vmatpush.bf16.msra.mxu0 0
    %1507 = vmatpush.bf16.msra.mxu0 0
    %1508 = vmatpush.bf16.msra.mxu0 0
    %1509 = vmatpush.bf16.msra.mxu0 %v381
    %1510 = vmatpush.bf16.msra.mxu0 %v380
    %1511 = vmatmul.bf16.gmra.mxu0 %v1501
    %v1512 = vpop.f32.mrf.mxu0
    %v1513 = vadd.f32 0.0, %v1512
    %v1514 = vpop.f32.mrf.mxu0
    %1515 = vdwg.mxu0
    %v1516 = vadd.f32 %v1498, %v1513
    %v1517 = vxor.u32 %v1516, 2147483648
    %v1518 = vmul.f32 %v1517, 1.442695
    %v1519 = vpow.pop %v1518
    %v1520 = vadd.f32 %v1519, 1.0
    %v1521 = vrcp.pop %v1520
    %v1522 = vmul.f32 %v1520, %v1521
    %v1523 = vsub.f32 1.0, %v1522
    %v1524 = vmul.f32 %v1521, %v1523
    %v1525 = vadd.f32 %v1521, %v1524
    %vm1526 = vweird.f32 %v1520
    %vm1527 = vweird.f32 %v1521
    %vm1528 = vmor %vm1526, %vm1527
    %v1529 = vsel %vm1528, %v1521, %v1525
    %v1530 = vand.u32 2147483647, %v1520
    %vm1531 = vcmp.eq.f32.partialorder %v1530, 8.507059e+37
    %v1532 = vand.u32 %v1520, 2147483648
    %v1533 = vor.u32 1.1754944e-38, %v1532
    %v1534 = vsel %vm1531, %v1533, %v1529
    %v1535 = vmul.f32 1.0, %v1534
    %v1536 = vtanh.pop %v1516
    %1538 = vrot.lane.b32.xlu0 %v1383, 32
    %v1539 = vpop.permute.xlu0 %1538
    %v1541 = vmul.f32 %v1535, %v1539
    %1543 = vrot.lane.b32.xlu0 %v1536, 64
    %v1544 = vpop.permute.xlu0 %1543
    %v1546 = vmul.f32 %v1535, %v1544
    %1548 = vrot.lane.b32.xlu0 %v1546, 32
    %v1549 = vpop.permute.xlu0 %1548
    %v1551 = vadd.f32 %v1541, %v1549
    %v1552 = vtanh.pop %v1551
    %1554 = vrot.lane.b32.xlu0 %v1552, 64
    %v1555 = vpop.permute.xlu0 %1554
    %v1557 = vmul.f32 %v1535, %v1555
    %v1558 = vsel %vm1408, 1, 0
    %1559 = vset.pattern.permute.xlu0 0
    %1560 = vperm.xlu0 %1559, %v1558
    %v1561 = vpop.permute.xlu0 %1560
    %vm1562 = vcmp.eq.s32.totalorder %v1561, 1
    %1564 = vst [vmem:[#allocation1] ss:$4 sm:$0xff] %v1551
    %v1565 = vld.sshfl [vmem:[#allocation1] sm:$0xff pattern:$0x73625140]
    %1566 = vrot.lane.b32.xlu0 %v1565, 96
    %v1567 = vpop.permute.xlu0 %1566
    %v1569 = vsel %vm1562, %v1383, %v1567
    %1571 = vst [vmem:[#allocation1] ss:$4 sm:$0xff] %v1557
    %v1572 = vld.sshfl [vmem:[#allocation1] sm:$0xff pattern:$0x73625140]
    %1573 = vrot.lane.b32.xlu0 %v1572, 32
    %v1574 = vpop.permute.xlu0 %1573
    %v1576 = vsel %vm1562, %v1390, %v1574
    %1577 = vst [vmem:[#allocation1] ss:$4 sm:$0xff] %v1557
    %v1578 = vld.sshfl [vmem:[#allocation1] sm:$0xff pattern:$0x73625140]
    %1579 = vrot.lane.b32.xlu0 %v1578, 32
    %v1580 = vpop.permute.xlu0 %1579
    %v1582 = vsel %vm1562, 0.0, %v1580
    %v1583 = vpack.c.bf16 %v1495, %v1495
    %s1584 = scalar_lea.vmem %s6, 6
    %1585 = vst.msk [vmem:[%s1584] sm:$0x1] %vm468, %v1583
    %v1586 = vpack.c.bf16 %v1582, %v1582
    %s1587 = scalar_lea.vmem %s239, 1
    %1588 = vst.msk [vmem:[%s1587] sm:$0x1] %vm468, %v1586
    %s1589 = scalar_lea.vmem %s2, 14
    %v1590 = vld [vmem:[%s1589] sm:$0x3]
    %vm1591 = vcmp.ne.s32.totalorder %v1590, 0
    %v1592 = vld [vmem:[%s232] sm:$0x3]
    %vm1593 = vcmp.ne.s32.totalorder %v1592, 0
    %s1594 = scalar_lea.vmem [#allocation6], 7
    %v1595 = vld [vmem:[%s1594] sm:$0x1]
    %v1596 = vunpack.c.l.bf16 %v1595
    %v1597 = vpack.c.bf16 %v1489, %v1489
    %v1599 = vsel %vm284, %v1597, 0
    %1601 = vmatpush.bf16.msra.mxu0 0
    %1602 = vmatpush.bf16.msra.mxu0 0
    %1603 = vmatpush.bf16.msra.mxu0 0
    %1604 = vmatpush.bf16.msra.mxu0 0
    %1605 = vmatpush.bf16.msra.mxu0 0
    %1606 = vmatpush.bf16.msra.mxu0 0
    %1607 = vmatpush.bf16.msra.mxu0 %v281
    %1608 = vmatpush.bf16.msra.mxu0 %v280
    %1609 = vmatmul.bf16.gmra.mxu0 %v1599
    %v1610 = vpop.f32.mrf.mxu0
    %v1611 = vadd.f32 0.0, %v1610
    %v1612 = vpop.f32.mrf.mxu0
    %1613 = vdwg.mxu0
    %v1614 = vadd.f32 %v1596, %v1611
    %v1615 = vxor.u32 %v1614, 2147483648
    %v1616 = vmul.f32 %v1615, 1.442695
    %v1617 = vpow.pop %v1616
    %v1618 = vadd.f32 %v1617, 1.0
    %v1619 = vrcp.pop %v1618
    %v1620 = vmul.f32 %v1618, %v1619
    %v1621 = vsub.f32 1.0, %v1620
    %v1622 = vmul.f32 %v1619, %v1621
    %v1623 = vadd.f32 %v1619, %v1622
    %vm1624 = vweird.f32 %v1618
    %vm1625 = vweird.f32 %v1619
    %vm1626 = vmor %vm1624, %vm1625
    %v1627 = vsel %vm1626, %v1619, %v1623
    %v1628 = vand.u32 2147483647, %v1618
    %vm1629 = vcmp.eq.f32.partialorder %v1628, 8.507059e+37
    %v1630 = vand.u32 %v1618, 2147483648
    %v1631 = vor.u32 1.1754944e-38, %v1630
    %v1632 = vsel %vm1629, %v1631, %v1627
    %v1633 = vmul.f32 1.0, %v1632
    %v1634 = vtanh.pop %v1614
    %1636 = vrot.lane.b32.xlu0 %v1482, 32
    %v1637 = vpop.permute.xlu0 %1636
    %v1639 = vmul.f32 %v1633, %v1637
    %1641 = vrot.lane.b32.xlu0 %v1634, 64
    %v1642 = vpop.permute.xlu0 %1641
    %v1644 = vmul.f32 %v1633, %v1642
    %1646 = vrot.lane.b32.xlu0 %v1644, 32
    %v1647 = vpop.permute.xlu0 %1646
    %v1649 = vadd.f32 %v1639, %v1647
    %v1650 = vtanh.pop %v1649
    %1652 = vrot.lane.b32.xlu0 %v1650, 64
    %v1653 = vpop.permute.xlu0 %1652
    %v1655 = vmul.f32 %v1633, %v1653
    %v1656 = vsel %vm1591, 1, 0
    %1657 = vset.pattern.permute.xlu0 0
    %1658 = vperm.xlu0 %1657, %v1656
    %v1659 = vpop.permute.xlu0 %1658
    %vm1660 = vcmp.eq.s32.totalorder %v1659, 1
    %1662 = vst [vmem:[#allocation1] ss:$4 sm:$0xff] %v1649
    %v1663 = vld.sshfl [vmem:[#allocation1] sm:$0xff pattern:$0x73625140]
    %1664 = vrot.lane.b32.xlu0 %v1663, 96
    %v1665 = vpop.permute.xlu0 %1664
    %v1667 = vsel %vm1660, %v1482, %v1665
    %1669 = vst [vmem:[#allocation1] ss:$4 sm:$0xff] %v1655
    %v1670 = vld.sshfl [vmem:[#allocation1] sm:$0xff pattern:$0x73625140]
    %1671 = vrot.lane.b32.xlu0 %v1670, 32
    %v1672 = vpop.permute.xlu0 %1671
    %v1674 = vsel %vm1660, %v1489, %v1672
    %1675 = vst [vmem:[#allocation1] ss:$4 sm:$0xff] %v1655
    %v1676 = vld.sshfl [vmem:[#allocation1] sm:$0xff pattern:$0x73625140]
    %1677 = vrot.lane.b32.xlu0 %v1676, 32
    %v1678 = vpop.permute.xlu0 %1677
    %v1680 = vsel %vm1660, 0.0, %v1678
    %v1681 = vld [vmem:[#allocation7] sm:$0x1]
    %v1682 = vunpack.c.l.bf16 %v1681
    %v1683 = vpack.c.bf16 %v1576, %v1576
    %v1685 = vsel %vm284, %v1683, 0
    %1687 = vmatpush.bf16.msra.mxu0 0
    %1688 = vmatpush.bf16.msra.mxu0 0
    %1689 = vmatpush.bf16.msra.mxu0 0
    %1690 = vmatpush.bf16.msra.mxu0 0
    %1691 = vmatpush.bf16.msra.mxu0 0
    %1692 = vmatpush.bf16.msra.mxu0 0
    %1693 = vmatpush.bf16.msra.mxu0 %v381
    %1694 = vmatpush.bf16.msra.mxu0 %v380
    %1695 = vmatmul.bf16.gmra.mxu0 %v1685
    %v1696 = vpop.f32.mrf.mxu0
    %v1697 = vadd.f32 0.0, %v1696
    %v1698 = vpop.f32.mrf.mxu0
    %1699 = vdwg.mxu0
    %v1700 = vadd.f32 %v1682, %v1697
    %v1701 = vxor.u32 %v1700, 2147483648
    %v1702 = vmul.f32 %v1701, 1.442695
    %v1703 = vpow.pop %v1702
    %v1704 = vadd.f32 %v1703, 1.0
    %v1705 = vrcp.pop %v1704
    %v1706 = vmul.f32 %v1704, %v1705
    %v1707 = vsub.f32 1.0, %v1706
    %v1708 = vmul.f32 %v1705, %v1707
    %v1709 = vadd.f32 %v1705, %v1708
    %vm1710 = vweird.f32 %v1704
    %vm1711 = vweird.f32 %v1705
    %vm1712 = vmor %vm1710, %vm1711
    %v1713 = vsel %vm1712, %v1705, %v1709
    %v1714 = vand.u32 2147483647, %v1704
    %vm1715 = vcmp.eq.f32.partialorder %v1714, 8.507059e+37
    %v1716 = vand.u32 %v1704, 2147483648
    %v1717 = vor.u32 1.1754944e-38, %v1716
    %v1718 = vsel %vm1715, %v1717, %v1713
    %v1719 = vmul.f32 1.0, %v1718
    %v1720 = vtanh.pop %v1700
    %1722 = vrot.lane.b32.xlu0 %v1569, 32
    %v1723 = vpop.permute.xlu0 %1722
    %v1725 = vmul.f32 %v1719, %v1723
    %1727 = vrot.lane.b32.xlu0 %v1720, 64
    %v1728 = vpop.permute.xlu0 %1727
    %v1730 = vmul.f32 %v1719, %v1728
    %1732 = vrot.lane.b32.xlu0 %v1730, 32
    %v1733 = vpop.permute.xlu0 %1732
    %v1735 = vadd.f32 %v1725, %v1733
    %v1736 = vtanh.pop %v1735
    %1738 = vrot.lane.b32.xlu0 %v1736, 64
    %v1739 = vpop.permute.xlu0 %1738
    %v1741 = vmul.f32 %v1719, %v1739
    %v1742 = vsel %vm1593, 1, 0
    %1743 = vset.pattern.permute.xlu0 0
    %1744 = vperm.xlu0 %1743, %v1742
    %v1745 = vpop.permute.xlu0 %1744
    %vm1746 = vcmp.eq.s32.totalorder %v1745, 1
    %1748 = vst [vmem:[#allocation1] ss:$4 sm:$0xff] %v1735
    %v1749 = vld.sshfl [vmem:[#allocation1] sm:$0xff pattern:$0x73625140]
    %1750 = vrot.lane.b32.xlu0 %v1749, 96
    %v1751 = vpop.permute.xlu0 %1750
    %v1753 = vsel %vm1746, %v1569, %v1751
    %1755 = vst [vmem:[#allocation1] ss:$4 sm:$0xff] %v1741
    %v1756 = vld.sshfl [vmem:[#allocation1] sm:$0xff pattern:$0x73625140]
    %1757 = vrot.lane.b32.xlu0 %v1756, 32
    %v1758 = vpop.permute.xlu0 %1757
    %v1760 = vsel %vm1746, %v1576, %v1758
    %1761 = vst [vmem:[#allocation1] ss:$4 sm:$0xff] %v1741
    %v1762 = vld.sshfl [vmem:[#allocation1] sm:$0xff pattern:$0x73625140]
    %1763 = vrot.lane.b32.xlu0 %v1762, 32
    %v1764 = vpop.permute.xlu0 %1763
    %v1766 = vsel %vm1746, 0.0, %v1764
    %v1767 = vpack.c.bf16 %v1680, %v1680
    %s1768 = scalar_lea.vmem %s6, 7
    %1769 = vst.msk [vmem:[%s1768] sm:$0x1] %vm468, %v1767
    %v1770 = vpack.c.bf16 %v1766, %v1766
    %1771 = vst.msk [vmem:[%s239] sm:$0x1] %vm468, %v1770
    %vm1772 = vcmask 254976
    %1773 = vst.msk [vmem:[#allocation2] sm:$0x3] %vm1772, %v1674
    %1774 = vst.msk [vmem:[#allocation3] sm:$0x3] %vm1772, %v1667
    %1775 = vst.msk [vmem:[#allocation4] sm:$0x3] %vm1772, %v1760
    %1776 = vst.msk [vmem:[#allocation5] sm:$0x3] %vm1772, %v1753
    // Predicated region
    $region120: #{encoder_forward.6} parent=1 // pred_check
      %p1777 = pneg %p243
    $region121: #{encoder_forward.6} parent=1 // pred_check_branch
      %1779 = sbr.rel (%p1777) target = $region123
    $region122: #{encoder_forward.6} parent=1 // pred_region
      %1780 = vst.msk [vmem:[%s8] sm:$0x3] %vm1772, %v1674
      %1782 = vrot.lane.b32.xlu0 %v1760, 32
      %v1783 = vpop.permute.xlu0 %1782
      %vm1785 = vcmask 517376
      %1786 = vst.msk [vmem:[%s8] sm:$0x3] %vm1785, %v1783
      %1787 = vst.msk [vmem:[%s9] sm:$0x3] %vm1772, %v1667
      %1789 = vrot.lane.b32.xlu0 %v1753, 32
      %v1790 = vpop.permute.xlu0 %1789
      %1792 = vst.msk [vmem:[%s9] sm:$0x3] %vm1785, %v1790
    $region123: #{encoder_forward.6} parent=1 // pred_fallthru
      _
    %s1793 = ssub.s32 0, 0
    %s1794 = smul.u32 8, %s1793
    %p1795 = scmp.lt.s32.totalorder %s1794, 7
    %s1796 = scalar_select %p1795, %s1794, 7
    %s1797 = scalar_lea.vmem %s7, %s1796
    // Predicated region
    $region124: #{encoder_forward.6} parent=1 // pred_check
      _
    $region125: #{encoder_forward.6} parent=1 // pred_check_branch
      %1799 = sbr.rel (0) target = $region127
    $region126: #{encoder_forward.6} parent=1 // pred_region
      _
    $region127: #{encoder_forward.6} parent=1 // pred_fallthru
      _
    // Predicated region
    $region128: #{encoder_forward.6} parent=1 // pred_check
      _
    $region129: #{encoder_forward.6} parent=1 // pred_check_branch
      %1801 = sbr.rel (0) target = $region131
    $region130: #{encoder_forward.6} parent=1 // pred_region
      %s1802 = ssub.s32 0, 0
      %s1803 = smul.u32 8, %s1802
    $region131: #{encoder_forward.6} parent=1 // pred_fallthru
      _
    // Predicated region
    $region132: #{encoder_forward.6} parent=1 // pred_check
      _
    $region133: #{encoder_forward.6} parent=1 // pred_check_branch
      %1805 = sbr.rel (0) target = $region135
    $region134: #{encoder_forward.6} parent=1 // pred_region
      _
    $region135: #{encoder_forward.6} parent=1 // pred_fallthru
      _
    // Predicated region
    $region136: #{encoder_forward.6} parent=1 // pred_check
      _
    $region137: #{encoder_forward.6} parent=1 // pred_check_branch
      %1807 = sbr.rel (0) target = $region139
    $region138: #{encoder_forward.6} parent=1 // pred_region
      _
    $region139: #{encoder_forward.6} parent=1 // pred_fallthru
      _
    // Predicated region
    $region140: #{encoder_forward.6} parent=1 // pred_check
      _
    $region141: #{encoder_forward.6} parent=1 // pred_check_branch
      %1809 = sbr.rel (0) target = $region143
    $region142: #{encoder_forward.6} parent=1 // pred_region
      _
    $region143: #{encoder_forward.6} parent=1 // pred_fallthru
      _
    // Predicated region
    $region144: #{encoder_forward.6} parent=1 // pred_check
      _
    $region145: #{encoder_forward.6} parent=1 // pred_check_branch
      %1811 = sbr.rel (0) target = $region147
    $region146: #{encoder_forward.6} parent=1 // pred_region
      %s1812 = ssub.s32 0, 0
      %s1813 = smul.u32 8, %s1812
      %p1814 = scmp.lt.s32.totalorder %s1813, 7
      %s1815 = scalar_select %p1814, %s1813, 7
      %s1816 = scalar_lea.vmem %s7, %s1815
    $region147: #{encoder_forward.6} parent=1 // pred_fallthru
      _
    // Predicated region
    $region148: #{encoder_forward.6} parent=1 // pred_check
      _
    $region149: #{encoder_forward.6} parent=1 // pred_check_branch
      %1818 = sbr.rel (0) target = $region151
    $region150: #{encoder_forward.6} parent=1 // pred_region
      _
    $region151: #{encoder_forward.6} parent=1 // pred_fallthru
      _
    // Predicated region
    $region152: #{encoder_forward.6} parent=1 // pred_check
      _
    $region153: #{encoder_forward.6} parent=1 // pred_check_branch
      %1820 = sbr.rel (0) target = $region155
    $region154: #{encoder_forward.6} parent=1 // pred_region
      _
    $region155: #{encoder_forward.6} parent=1 // pred_fallthru
      _
    %1821 = vsyncpa [#allocation9], 1
    %1822 = vsyncpa [#allocation11], 1

// kernel: encoder_forward.8
$region0: #{encoder_forward.8}
  #allocation0 [shape = 'u32[]', space=smem, size = 0x4, offset = 0x4, fixed_abs, tag = 'smem constant byte address 0x4 - core index']
  #allocation1 [shape = 'u32[72,128]{1,0:T(1,128)}', space=vmem, size = 0x9000, scoped, tag = 'internal scratch']
  #allocation2 [shape = 'f32[2,32]{1,0:T(2,128)}', space=vmem, size = 0x400, scoped, tag = 'scratch operand']
  #allocation3 [shape = 'f32[2,32]{1,0:T(2,128)}', space=vmem, size = 0x400, scoped, tag = 'scratch operand']
  #allocation4 [shape = 'f32[2,32]{1,0:T(2,128)}', space=vmem, size = 0x400, scoped, tag = 'scratch operand']
  #allocation5 [shape = 'f32[2,32]{1,0:T(2,128)}', space=vmem, size = 0x400, scoped, tag = 'scratch operand']
  %s0 = inlined_call_operand.vmem [shape: bf16[8,2,256], index: 0, kind: input, shape index: {}, may-alias: {0,1}]
  %s1 = inlined_call_operand.vmem [shape: bf16[8,2,256], index: 1, kind: input, shape index: {}, may-alias: {0,1}]
  %s2 = inlined_call_operand.vmem [shape: s32[8,2,1], index: 2, kind: input, shape index: {}, may-alias: {2,3}]
  %s3 = inlined_call_operand.vmem [shape: s32[8,2,1], index: 3, kind: input, shape index: {}, may-alias: {2,3}]
  %s4 = inlined_call_operand.vmem [shape: bf16[32,128], index: 4, kind: input, shape index: {}]
  %s5 = inlined_call_operand.hbm [shape: bf16[32,128], index: 5, kind: input, shape index: {}]
  %s6 = inlined_call_operand.vmem [shape: bf16[8,2,32], index: 6, kind: output, shape index: {0}]
  %s7 = inlined_call_operand.vmem [shape: bf16[8,2,32], index: 7, kind: output, shape index: {1}]
  %s8 = inlined_call_operand.vmem [shape: f32[2,64], index: 8, kind: output, shape index: {2}]
  %s9 = inlined_call_operand.vmem [shape: f32[2,64], index: 9, kind: output, shape index: {3}]
  %10 = xla_tuple %s6, %s7, %s8, %s9
  %s11 = sld [smem:[#allocation0]]
  $region152: #{encoder_forward.8} parent=0
    _
  %s13 = ssub.s32 1, %s11
  %s14 = scalar_select 0, %s13, %s11
  $region1: #{encoder_forward.8} parent=0
    #allocation6 [shape = 'u8[4096]{0}', space=vmem, size = 0x1000, scoped, tag = 'input window, operand 0, single buffered']
    #allocation7 [shape = 'u8[4096]{0}', space=vmem, size = 0x1000, scoped, tag = 'input window, operand 1, single buffered']
    #allocation8 [shape = 'u8[8192]{0}', space=vmem, size = 0x2000, scoped, tag = 'input window, operand 5, single buffered']
    #allocation9 [shape = 's32[1]{0}', space=sflag, size = 0x4, scoped, tag = 'scoped memory for encoder_forward.8']
    %15 = vsyncpa [#allocation9], 0
    // Predicated region
    $region2: #{encoder_forward.8} parent=1 // pred_check
      _
    $region3: #{encoder_forward.8} parent=1 // pred_check_branch
      %17 = sbr.rel (0) target = $region5
    $region4: #{encoder_forward.8} parent=1 // pred_region
      // Predicated region
      $region6: #{encoder_forward.8} parent=4 // pred_check
        _
      $region7: #{encoder_forward.8} parent=4 // pred_check_branch
        %19 = sbr.rel (0) target = $region9
      $region8: #{encoder_forward.8} parent=4 // pred_region
        // Predicated region
        $region10: #{encoder_forward.8} parent=8 // pred_check
          _
        $region11: #{encoder_forward.8} parent=8 // pred_check_branch
          %21 = sbr.rel target = $region13
        $region12: #{encoder_forward.8} parent=8 // pred_region
          // Predicated region
          $region25: #{encoder_forward.8} parent=12 // pred_check
            _
          $region26: #{encoder_forward.8} parent=12 // pred_check_branch
            %51 = sbr.rel (0) target = $region28
          $region27: #{encoder_forward.8} parent=12 // pred_region
            loop: start=0, step=1, limit=1
            $region29: #{encoder_forward.8} parent=27 // loop_pre_header
              _
            $region30: #{encoder_forward.8} parent=27 // loop_header
              %s53 = sphi 0, %s57
              %p54 = scmp.ge.s32.totalorder %s53, 1
              %s58 = sphi %s0, %s0
              %s59 = sphi [#allocation6], [#allocation6]
            $region31: #{encoder_forward.8} parent=27 // loop_header_branch
              %56 = sbr.rel (%p54) target = $region35
            $region32: #{encoder_forward.8} parent=27 // loop_body
              _
            $region33: #{encoder_forward.8} parent=27 // loop_footer
              %s57 = sadd.s32 1, %s53
            $region34: #{encoder_forward.8} parent=27 // loop_footer_branch
              %52 = sbr.rel target = $region30
            $region35: #{encoder_forward.8} parent=27 // loop_exit
              _
            %s61 = ssub.s32 2, 1
            loop: start=0, step=1, limit=1
            $region36: #{encoder_forward.8} parent=27 // loop_pre_header
              _
            $region37: #{encoder_forward.8} parent=27 // loop_header
              %s63 = sphi 0, %s67
              %p64 = scmp.ge.s32.totalorder %s63, 1
              %s68 = sphi %s0, %s0
              %s69 = sphi [#allocation6], [#allocation6]
            $region38: #{encoder_forward.8} parent=27 // loop_header_branch
              %66 = sbr.rel (%p64) target = $region42
            $region39: #{encoder_forward.8} parent=27 // loop_body
              %v70 = vld [vmem:[%s68] sm:%s61]
              %71 = vst [vmem:[%s69] sm:%s61] %v70
              %v72 = vld [vmem:[%s68 + $0x2] sm:%s61]
              %73 = vst [vmem:[%s69 + $0x1] sm:%s61] %v72
              %v74 = vld [vmem:[%s68 + $0x4] sm:%s61]
              %75 = vst [vmem:[%s69 + $0x2] sm:%s61] %v74
              %v76 = vld [vmem:[%s68 + $0x6] sm:%s61]
              %77 = vst [vmem:[%s69 + $0x3] sm:%s61] %v76
              %v78 = vld [vmem:[%s68 + $0x8] sm:%s61]
              %79 = vst [vmem:[%s69 + $0x4] sm:%s61] %v78
              %v80 = vld [vmem:[%s68 + $0xa] sm:%s61]
              %81 = vst [vmem:[%s69 + $0x5] sm:%s61] %v80
              %v82 = vld [vmem:[%s68 + $0xc] sm:%s61]
              %83 = vst [vmem:[%s69 + $0x6] sm:%s61] %v82
              %v84 = vld [vmem:[%s68 + $0xe] sm:%s61]
              %85 = vst [vmem:[%s69 + $0x7] sm:%s61] %v84
            $region40: #{encoder_forward.8} parent=27 // loop_footer
              %s67 = sadd.s32 1, %s63
            $region41: #{encoder_forward.8} parent=27 // loop_footer_branch
              %62 = sbr.rel target = $region37
            $region42: #{encoder_forward.8} parent=27 // loop_exit
              _
          $region28: #{encoder_forward.8} parent=12 // pred_fallthru
            _
        $region13: #{encoder_forward.8} parent=8 // pred_fallthru
          _
        // Predicated region
        $region14: #{encoder_forward.8} parent=8 // pred_check
          _
        $region15: #{encoder_forward.8} parent=8 // pred_check_branch
          %23 = sbr.rel (0) target = $region17
        $region16: #{encoder_forward.8} parent=8 // pred_region
          %s25 = ssub.s32 2, 1
          loop: start=0, step=1, limit=1
          $region18: #{encoder_forward.8} parent=16 // loop_pre_header
            _
          $region19: #{encoder_forward.8} parent=16 // loop_header
            %s27 = sphi 0, %s31
            %p28 = scmp.ge.s32.totalorder %s27, 1
            %s32 = sphi %s0, %s0
            %s33 = sphi [#allocation6], [#allocation6]
          $region20: #{encoder_forward.8} parent=16 // loop_header_branch
            %30 = sbr.rel (%p28) target = $region24
          $region21: #{encoder_forward.8} parent=16 // loop_body
            %v34 = vld [vmem:[%s32] sm:%s25]
            %35 = vst [vmem:[%s33] sm:%s25] %v34
            %v36 = vld [vmem:[%s32 + $0x2] sm:%s25]
            %37 = vst [vmem:[%s33 + $0x1] sm:%s25] %v36
            %v38 = vld [vmem:[%s32 + $0x4] sm:%s25]
            %39 = vst [vmem:[%s33 + $0x2] sm:%s25] %v38
            %v40 = vld [vmem:[%s32 + $0x6] sm:%s25]
            %41 = vst [vmem:[%s33 + $0x3] sm:%s25] %v40
            %v42 = vld [vmem:[%s32 + $0x8] sm:%s25]
            %43 = vst [vmem:[%s33 + $0x4] sm:%s25] %v42
            %v44 = vld [vmem:[%s32 + $0xa] sm:%s25]
            %45 = vst [vmem:[%s33 + $0x5] sm:%s25] %v44
            %v46 = vld [vmem:[%s32 + $0xc] sm:%s25]
            %47 = vst [vmem:[%s33 + $0x6] sm:%s25] %v46
            %v48 = vld [vmem:[%s32 + $0xe] sm:%s25]
            %49 = vst [vmem:[%s33 + $0x7] sm:%s25] %v48
          $region22: #{encoder_forward.8} parent=16 // loop_footer
            %s31 = sadd.s32 1, %s27
          $region23: #{encoder_forward.8} parent=16 // loop_footer_branch
            %26 = sbr.rel target = $region19
          $region24: #{encoder_forward.8} parent=16 // loop_exit
            _
        $region17: #{encoder_forward.8} parent=8 // pred_fallthru
          _
      $region9: #{encoder_forward.8} parent=4 // pred_fallthru
        _
      %86 = vnop
    $region5: #{encoder_forward.8} parent=1 // pred_fallthru
      _
    // Predicated region
    $region43: #{encoder_forward.8} parent=1 // pred_check
      _
    $region44: #{encoder_forward.8} parent=1 // pred_check_branch
      %88 = sbr.rel (0) target = $region46
    $region45: #{encoder_forward.8} parent=1 // pred_region
      %s89 = ssub.s32 0, 0
      %s90 = smul.u32 8, %s89
      %s91 = smul.addr %s90, 2
      %s92 = sadd.s32 1, %s91
      %s93 = scalar_lea.vmem %s1, %s92
      // Predicated region
      $region47: #{encoder_forward.8} parent=45 // pred_check
        _
      $region48: #{encoder_forward.8} parent=45 // pred_check_branch
        %95 = sbr.rel (0) target = $region50
      $region49: #{encoder_forward.8} parent=45 // pred_region
        // Predicated region
        $region51: #{encoder_forward.8} parent=49 // pred_check
          _
        $region52: #{encoder_forward.8} parent=49 // pred_check_branch
          %97 = sbr.rel target = $region54
        $region53: #{encoder_forward.8} parent=49 // pred_region
          // Predicated region
          $region66: #{encoder_forward.8} parent=53 // pred_check
            _
          $region67: #{encoder_forward.8} parent=53 // pred_check_branch
            %127 = sbr.rel (0) target = $region69
          $region68: #{encoder_forward.8} parent=53 // pred_region
            loop: start=0, step=1, limit=1
            $region70: #{encoder_forward.8} parent=68 // loop_pre_header
              _
            $region71: #{encoder_forward.8} parent=68 // loop_header
              %s129 = sphi 0, %s133
              %p130 = scmp.ge.s32.totalorder %s129, 1
              %s134 = sphi %s93, %s93
              %s135 = sphi [#allocation7], [#allocation7]
            $region72: #{encoder_forward.8} parent=68 // loop_header_branch
              %132 = sbr.rel (%p130) target = $region76
            $region73: #{encoder_forward.8} parent=68 // loop_body
              _
            $region74: #{encoder_forward.8} parent=68 // loop_footer
              %s133 = sadd.s32 1, %s129
            $region75: #{encoder_forward.8} parent=68 // loop_footer_branch
              %128 = sbr.rel target = $region71
            $region76: #{encoder_forward.8} parent=68 // loop_exit
              _
            %s137 = ssub.s32 2, 1
            loop: start=0, step=1, limit=1
            $region77: #{encoder_forward.8} parent=68 // loop_pre_header
              _
            $region78: #{encoder_forward.8} parent=68 // loop_header
              %s139 = sphi 0, %s143
              %p140 = scmp.ge.s32.totalorder %s139, 1
              %s144 = sphi %s93, %s93
              %s145 = sphi [#allocation7], [#allocation7]
            $region79: #{encoder_forward.8} parent=68 // loop_header_branch
              %142 = sbr.rel (%p140) target = $region83
            $region80: #{encoder_forward.8} parent=68 // loop_body
              %v146 = vld [vmem:[%s144] sm:%s137]
              %147 = vst [vmem:[%s145] sm:%s137] %v146
              %v148 = vld [vmem:[%s144 + $0x2] sm:%s137]
              %149 = vst [vmem:[%s145 + $0x1] sm:%s137] %v148
              %v150 = vld [vmem:[%s144 + $0x4] sm:%s137]
              %151 = vst [vmem:[%s145 + $0x2] sm:%s137] %v150
              %v152 = vld [vmem:[%s144 + $0x6] sm:%s137]
              %153 = vst [vmem:[%s145 + $0x3] sm:%s137] %v152
              %v154 = vld [vmem:[%s144 + $0x8] sm:%s137]
              %155 = vst [vmem:[%s145 + $0x4] sm:%s137] %v154
              %v156 = vld [vmem:[%s144 + $0xa] sm:%s137]
              %157 = vst [vmem:[%s145 + $0x5] sm:%s137] %v156
              %v158 = vld [vmem:[%s144 + $0xc] sm:%s137]
              %159 = vst [vmem:[%s145 + $0x6] sm:%s137] %v158
              %v160 = vld [vmem:[%s144 + $0xe] sm:%s137]
              %161 = vst [vmem:[%s145 + $0x7] sm:%s137] %v160
            $region81: #{encoder_forward.8} parent=68 // loop_footer
              %s143 = sadd.s32 1, %s139
            $region82: #{encoder_forward.8} parent=68 // loop_footer_branch
              %138 = sbr.rel target = $region78
            $region83: #{encoder_forward.8} parent=68 // loop_exit
              _
          $region69: #{encoder_forward.8} parent=53 // pred_fallthru
            _
        $region54: #{encoder_forward.8} parent=49 // pred_fallthru
          _
        // Predicated region
        $region55: #{encoder_forward.8} parent=49 // pred_check
          _
        $region56: #{encoder_forward.8} parent=49 // pred_check_branch
          %99 = sbr.rel (0) target = $region58
        $region57: #{encoder_forward.8} parent=49 // pred_region
          %s101 = ssub.s32 2, 1
          loop: start=0, step=1, limit=1
          $region59: #{encoder_forward.8} parent=57 // loop_pre_header
            _
          $region60: #{encoder_forward.8} parent=57 // loop_header
            %s103 = sphi 0, %s107
            %p104 = scmp.ge.s32.totalorder %s103, 1
            %s108 = sphi %s93, %s93
            %s109 = sphi [#allocation7], [#allocation7]
          $region61: #{encoder_forward.8} parent=57 // loop_header_branch
            %106 = sbr.rel (%p104) target = $region65
          $region62: #{encoder_forward.8} parent=57 // loop_body
            %v110 = vld [vmem:[%s108] sm:%s101]
            %111 = vst [vmem:[%s109] sm:%s101] %v110
            %v112 = vld [vmem:[%s108 + $0x2] sm:%s101]
            %113 = vst [vmem:[%s109 + $0x1] sm:%s101] %v112
            %v114 = vld [vmem:[%s108 + $0x4] sm:%s101]
            %115 = vst [vmem:[%s109 + $0x2] sm:%s101] %v114
            %v116 = vld [vmem:[%s108 + $0x6] sm:%s101]
            %117 = vst [vmem:[%s109 + $0x3] sm:%s101] %v116
            %v118 = vld [vmem:[%s108 + $0x8] sm:%s101]
            %119 = vst [vmem:[%s109 + $0x4] sm:%s101] %v118
            %v120 = vld [vmem:[%s108 + $0xa] sm:%s101]
            %121 = vst [vmem:[%s109 + $0x5] sm:%s101] %v120
            %v122 = vld [vmem:[%s108 + $0xc] sm:%s101]
            %123 = vst [vmem:[%s109 + $0x6] sm:%s101] %v122
            %v124 = vld [vmem:[%s108 + $0xe] sm:%s101]
            %125 = vst [vmem:[%s109 + $0x7] sm:%s101] %v124
          $region63: #{encoder_forward.8} parent=57 // loop_footer
            %s107 = sadd.s32 1, %s103
          $region64: #{encoder_forward.8} parent=57 // loop_footer_branch
            %102 = sbr.rel target = $region60
          $region65: #{encoder_forward.8} parent=57 // loop_exit
            _
        $region58: #{encoder_forward.8} parent=49 // pred_fallthru
          _
      $region50: #{encoder_forward.8} parent=45 // pred_fallthru
        _
      %162 = vnop
    $region46: #{encoder_forward.8} parent=1 // pred_fallthru
      _
    // Predicated region
    $region84: #{encoder_forward.8} parent=1 // pred_check
      _
    $region85: #{encoder_forward.8} parent=1 // pred_check_branch
      %164 = sbr.rel (0) target = $region87
    $region86: #{encoder_forward.8} parent=1 // pred_region
      _
    $region87: #{encoder_forward.8} parent=1 // pred_fallthru
      _
    // Predicated region
    $region88: #{encoder_forward.8} parent=1 // pred_check
      _
    $region89: #{encoder_forward.8} parent=1 // pred_check_branch
      %166 = sbr.rel (0) target = $region91
    $region90: #{encoder_forward.8} parent=1 // pred_region
      %s167 = ssub.s32 0, 0
      %s168 = smul.u32 8, %s167
      %p169 = scmp.lt.s32.totalorder %s168, 7
      %s170 = scalar_select %p169, %s168, 7
      %s171 = smul.addr %s170, 2
      %s172 = scalar_lea.vmem %s3, %s171
      %s173 = ssub.s32 0, 0
      %s174 = smul.u32 8, %s173
    $region91: #{encoder_forward.8} parent=1 // pred_fallthru
      _
    // Predicated region
    $region92: #{encoder_forward.8} parent=1 // pred_check
      _
    $region93: #{encoder_forward.8} parent=1 // pred_check_branch
      %176 = sbr.rel (0) target = $region95
    $region94: #{encoder_forward.8} parent=1 // pred_region
      _
    $region95: #{encoder_forward.8} parent=1 // pred_fallthru
      _
    // Predicated region
    $region96: #{encoder_forward.8} parent=1 // pred_check
      _
    $region97: #{encoder_forward.8} parent=1 // pred_check_branch
      %178 = sbr.rel (0) target = $region99
    $region98: #{encoder_forward.8} parent=1 // pred_region
      %180 = vsyncadd [#allocation9], 0
      %s181 = sshll.u32 %s5, 4
      %s182 = int_to_ptr.hbm [resolvable:$true] %s181
      %s183 = sshll.u32 [#allocation8], 4
      %s184 = int_to_ptr.vmem [resolvable:$true] %s183
      %189 = dma.hbm_to_vmem [thread:$0]  %s182, 256, %s184, [#allocation9], 64, 64, 4
    $region99: #{encoder_forward.8} parent=1 // pred_fallthru
      _
    // Predicated region
    $region100: #{encoder_forward.8} parent=1 // pred_check
      _
    $region101: #{encoder_forward.8} parent=1 // pred_check_branch
      %191 = sbr.rel (0) target = $region103
    $region102: #{encoder_forward.8} parent=1 // pred_region
      _
    $region103: #{encoder_forward.8} parent=1 // pred_fallthru
      _
    // Predicated region
    $region104: #{encoder_forward.8} parent=1 // pred_check
      _
    $region105: #{encoder_forward.8} parent=1 // pred_check_branch
      %193 = sbr.rel (0) target = $region107
    $region106: #{encoder_forward.8} parent=1 // pred_region
      _
    $region107: #{encoder_forward.8} parent=1 // pred_fallthru
      _
    // Predicated region
    $region108: #{encoder_forward.8} parent=1 // pred_check
      _
    $region109: #{encoder_forward.8} parent=1 // pred_check_branch
      %195 = sbr.rel (0) target = $region111
    $region110: #{encoder_forward.8} parent=1 // pred_region
      %197 = dma.done [#allocation9], 256
    $region111: #{encoder_forward.8} parent=1 // pred_fallthru
      _
    %s198 = ssub.s32 0, 0
    %s199 = smul.u32 8, %s198
    %p200 = scmp.lt.s32.totalorder %s199, 7
    %s201 = scalar_select %p200, %s199, 7
    %s202 = smul.addr %s201, 2
    %s203 = scalar_lea.vmem %s3, %s202
    %s204 = ssub.s32 0, 0
    %s205 = smul.u32 8, %s204
    %p206 = scmp.lt.s32.totalorder %s205, 7
    %s207 = scalar_select %p206, %s205, 7
    %s208 = scalar_lea.vmem %s7, %s207
    %s209 = ssub.s32 0, 0
    %s210 = smul.u32 8, %s209
    %s211 = ssub.s32 0, 0
    %s212 = smul.u32 8, %s211
    %p213 = scmp.lt.s32.totalorder %s212, 7
    %s214 = scalar_select %p213, %s212, 7
    %s215 = smul.addr %s214, 2
    %s216 = scalar_lea.vmem %s3, %s215
    %s217 = ssub.s32 0, 0
    %s218 = smul.u32 8, %s217
    %s219 = ssub.s32 0, 0
    %s220 = smul.u32 8, %s219
    %p221 = scmp.lt.s32.totalorder %s220, 7
    %s222 = scalar_select %p221, %s220, 7
    %s223 = scalar_lea.vmem %s7, %s222
    %s224 = ssub.s32 0, 0
    %s225 = smul.u32 8, %s224
    %p227 = scmp.eq.s32.totalorder 0, 0
    // Predicated region
    $region112: #{encoder_forward.8} parent=1 // pred_check
      %p228 = pneg %p227
    $region113: #{encoder_forward.8} parent=1 // pred_check_branch
      %230 = sbr.rel (%p228) target = $region115
    $region114: #{encoder_forward.8} parent=1 // pred_region
      %vm231 = vcmask 254976
      %232 = vst.msk [vmem:[#allocation2] sm:$0x3] %vm231, 0.0
      %233 = vst.msk [vmem:[#allocation3] sm:$0x3] %vm231, 0.0
      %234 = vst.msk [vmem:[#allocation4] sm:$0x3] %vm231, 0.0
      %235 = vst.msk [vmem:[#allocation5] sm:$0x3] %vm231, 0.0
    $region115: #{encoder_forward.8} parent=1 // pred_fallthru
      _
    %v236 = vld [vmem:[%s4] sm:$0xf]
    %v237 = vld [vmem:[%s4 + $0x4] sm:$0xf]
    %v238 = vld [vmem:[%s4 + $0x8] sm:$0xf]
    %v239 = vld [vmem:[%s4 + $0xc] sm:$0xf]
    %v240 = vld [vmem:[#allocation8] sm:$0xf]
    %v241 = vld [vmem:[#allocation8 + $0x4] sm:$0xf]
    %v242 = vld [vmem:[#allocation8 + $0x8] sm:$0xf]
    %v243 = vld [vmem:[#allocation8 + $0xc] sm:$0xf]
    %v244 = vld [vmem:[#allocation2] sm:$0x3]
    %v245 = vld [vmem:[#allocation3] sm:$0x3]
    %v246 = vld [vmem:[#allocation4] sm:$0x3]
    %v247 = vld [vmem:[#allocation5] sm:$0x3]
    %v248 = vld [vmem:[%s2] sm:$0x3]
    %vm249 = vcmp.ne.s32.totalorder %v248, 0
    %s250 = scalar_lea.vmem %s216, 14
    %v251 = vld [vmem:[%s250] sm:$0x3]
    %vm252 = vcmp.ne.s32.totalorder %v251, 0
    %v253 = vld [vmem:[#allocation6] sm:$0x1]
    %v254 = vunpack.c.l.bf16 %v253
    %v255 = vpack.c.bf16 %v244, %v244
    %v260 = vunpack.c.l.b16 %v236
    %v261 = vunpack.c.l.b16 %v237
    %v262 = vunpack.c.l.b16 %v238
    %v263 = vunpack.c.l.b16 %v239
    %v264 = vpack.c.b16 %v261, %v260
    %v265 = vpack.c.b16 %v263, %v262
    %vm268 = vcmask 261120
    %v270 = vsel %vm268, %v255, 0
    %272 = vmatpush.bf16.msra.mxu0 0
    %273 = vmatpush.bf16.msra.mxu0 0
    %274 = vmatpush.bf16.msra.mxu0 0
    %275 = vmatpush.bf16.msra.mxu0 0
    %276 = vmatpush.bf16.msra.mxu0 0
    %277 = vmatpush.bf16.msra.mxu0 0
    %278 = vmatpush.bf16.msra.mxu0 %v265
    %279 = vmatpush.bf16.msra.mxu0 %v264
    %280 = vmatmul.bf16.gmra.mxu0 %v270
    %v281 = vpop.f32.mrf.mxu0
    %v282 = vadd.f32 0.0, %v281
    %v283 = vpop.f32.mrf.mxu0
    %284 = vdwg.mxu0
    %v285 = vadd.f32 %v254, %v282
    %v286 = vxor.u32 %v285, 2147483648
    %v287 = vmul.f32 %v286, 1.442695
    %v288 = vpow.pop %v287
    %v289 = vadd.f32 %v288, 1.0
    %v290 = vrcp.pop %v289
    %v291 = vmul.f32 %v289, %v290
    %v292 = vsub.f32 1.0, %v291
    %v293 = vmul.f32 %v290, %v292
    %v294 = vadd.f32 %v290, %v293
    %vm295 = vweird.f32 %v289
    %vm296 = vweird.f32 %v290
    %vm297 = vmor %vm295, %vm296
    %v298 = vsel %vm297, %v290, %v294
    %v299 = vand.u32 2147483647, %v289
    %vm300 = vcmp.eq.f32.partialorder %v299, 8.507059e+37
    %v301 = vand.u32 %v289, 2147483648
    %v302 = vor.u32 1.1754944e-38, %v301
    %v303 = vsel %vm300, %v302, %v298
    %v304 = vmul.f32 1.0, %v303
    %v305 = vtanh.pop %v285
    %307 = vrot.lane.b32.xlu0 %v245, 32
    %v308 = vpop.permute.xlu0 %307
    %v310 = vmul.f32 %v304, %v308
    %312 = vrot.lane.b32.xlu0 %v305, 64
    %v313 = vpop.permute.xlu0 %312
    %v315 = vmul.f32 %v304, %v313
    %317 = vrot.lane.b32.xlu0 %v315, 32
    %v318 = vpop.permute.xlu0 %317
    %v320 = vadd.f32 %v310, %v318
    %v321 = vtanh.pop %v320
    %323 = vrot.lane.b32.xlu0 %v321, 64
    %v324 = vpop.permute.xlu0 %323
    %v326 = vmul.f32 %v304, %v324
    %v327 = vsel %vm249, 1, 0
    %328 = vset.pattern.permute.xlu0 0
    %329 = vperm.xlu0 %328, %v327
    %v330 = vpop.permute.xlu0 %329
    %vm331 = vcmp.eq.s32.totalorder %v330, 1
    %333 = vst [vmem:[#allocation1] ss:$4 sm:$0xff] %v320
    %v334 = vld.sshfl [vmem:[#allocation1] sm:$0xff pattern:$0x73625140]
    %335 = vrot.lane.b32.xlu0 %v334, 96
    %v336 = vpop.permute.xlu0 %335
    %v338 = vsel %vm331, %v245, %v336
    %340 = vst [vmem:[#allocation1] ss:$4 sm:$0xff] %v326
    %v341 = vld.sshfl [vmem:[#allocation1] sm:$0xff pattern:$0x73625140]
    %342 = vrot.lane.b32.xlu0 %v341, 32
    %v343 = vpop.permute.xlu0 %342
    %v345 = vsel %vm331, %v244, %v343
    %346 = vst [vmem:[#allocation1] ss:$4 sm:$0xff] %v326
    %v347 = vld.sshfl [vmem:[#allocation1] sm:$0xff pattern:$0x73625140]
    %348 = vrot.lane.b32.xlu0 %v347, 32
    %v349 = vpop.permute.xlu0 %348
    %v351 = vsel %vm331, 0.0, %v349
    %s352 = scalar_lea.vmem [#allocation7], 7
    %v353 = vld [vmem:[%s352] sm:$0x1]
    %v354 = vunpack.c.l.bf16 %v353
    %v355 = vpack.c.bf16 %v246, %v246
    %v360 = vunpack.c.l.b16 %v240
    %v361 = vunpack.c.l.b16 %v241
    %v362 = vunpack.c.l.b16 %v242
    %v363 = vunpack.c.l.b16 %v243
    %v364 = vpack.c.b16 %v361, %v360
    %v365 = vpack.c.b16 %v363, %v362
    %v369 = vsel %vm268, %v355, 0
    %371 = vmatpush.bf16.msra.mxu0 0
    %372 = vmatpush.bf16.msra.mxu0 0
    %373 = vmatpush.bf16.msra.mxu0 0
    %374 = vmatpush.bf16.msra.mxu0 0
    %375 = vmatpush.bf16.msra.mxu0 0
    %376 = vmatpush.bf16.msra.mxu0 0
    %377 = vmatpush.bf16.msra.mxu0 %v365
    %378 = vmatpush.bf16.msra.mxu0 %v364
    %379 = vmatmul.bf16.gmra.mxu0 %v369
    %v380 = vpop.f32.mrf.mxu0
    %v381 = vadd.f32 0.0, %v380
    %v382 = vpop.f32.mrf.mxu0
    %383 = vdwg.mxu0
    %v384 = vadd.f32 %v354, %v381
    %v385 = vxor.u32 %v384, 2147483648
    %v386 = vmul.f32 %v385, 1.442695
    %v387 = vpow.pop %v386
    %v388 = vadd.f32 %v387, 1.0
    %v389 = vrcp.pop %v388
    %v390 = vmul.f32 %v388, %v389
    %v391 = vsub.f32 1.0, %v390
    %v392 = vmul.f32 %v389, %v391
    %v393 = vadd.f32 %v389, %v392
    %vm394 = vweird.f32 %v388
    %vm395 = vweird.f32 %v389
    %vm396 = vmor %vm394, %vm395
    %v397 = vsel %vm396, %v389, %v393
    %v398 = vand.u32 2147483647, %v388
    %vm399 = vcmp.eq.f32.partialorder %v398, 8.507059e+37
    %v400 = vand.u32 %v388, 2147483648
    %v401 = vor.u32 1.1754944e-38, %v400
    %v402 = vsel %vm399, %v401, %v397
    %v403 = vmul.f32 1.0, %v402
    %v404 = vtanh.pop %v384
    %406 = vrot.lane.b32.xlu0 %v247, 32
    %v407 = vpop.permute.xlu0 %406
    %v409 = vmul.f32 %v403, %v407
    %411 = vrot.lane.b32.xlu0 %v404, 64
    %v412 = vpop.permute.xlu0 %411
    %v414 = vmul.f32 %v403, %v412
    %416 = vrot.lane.b32.xlu0 %v414, 32
    %v417 = vpop.permute.xlu0 %416
    %v419 = vadd.f32 %v409, %v417
    %v420 = vtanh.pop %v419
    %422 = vrot.lane.b32.xlu0 %v420, 64
    %v423 = vpop.permute.xlu0 %422
    %v425 = vmul.f32 %v403, %v423
    %v426 = vsel %vm252, 1, 0
    %427 = vset.pattern.permute.xlu0 0
    %428 = vperm.xlu0 %427, %v426
    %v429 = vpop.permute.xlu0 %428
    %vm430 = vcmp.eq.s32.totalorder %v429, 1
    %432 = vst [vmem:[#allocation1] ss:$4 sm:$0xff] %v419
    %v433 = vld.sshfl [vmem:[#allocation1] sm:$0xff pattern:$0x73625140]
    %434 = vrot.lane.b32.xlu0 %v433, 96
    %v435 = vpop.permute.xlu0 %434
    %v437 = vsel %vm430, %v247, %v435
    %439 = vst [vmem:[#allocation1] ss:$4 sm:$0xff] %v425
    %v440 = vld.sshfl [vmem:[#allocation1] sm:$0xff pattern:$0x73625140]
    %441 = vrot.lane.b32.xlu0 %v440, 32
    %v442 = vpop.permute.xlu0 %441
    %v444 = vsel %vm430, %v246, %v442
    %445 = vst [vmem:[#allocation1] ss:$4 sm:$0xff] %v425
    %v446 = vld.sshfl [vmem:[#allocation1] sm:$0xff pattern:$0x73625140]
    %447 = vrot.lane.b32.xlu0 %v446, 32
    %v448 = vpop.permute.xlu0 %447
    %v450 = vsel %vm430, 0.0, %v448
    %v451 = vpack.c.bf16 %v351, %v351
    %vm452 = vcmask 253952
    %453 = vst.msk [vmem:[%s6] sm:$0x1] %vm452, %v451
    %v454 = vpack.c.bf16 %v450, %v450
    %s455 = scalar_lea.vmem %s223, 7
    %456 = vst.msk [vmem:[%s455] sm:$0x1] %vm452, %v454
    %s457 = scalar_lea.vmem %s2, 2
    %v458 = vld [vmem:[%s457] sm:$0x3]
    %vm459 = vcmp.ne.s32.totalorder %v458, 0
    %s460 = scalar_lea.vmem %s216, 12
    %v461 = vld [vmem:[%s460] sm:$0x3]
    %vm462 = vcmp.ne.s32.totalorder %v461, 0
    %s463 = scalar_lea.vmem [#allocation6], 1
    %v464 = vld [vmem:[%s463] sm:$0x1]
    %v465 = vunpack.c.l.bf16 %v464
    %v466 = vpack.c.bf16 %v345, %v345
    %v468 = vsel %vm268, %v466, 0
    %470 = vmatpush.bf16.msra.mxu0 0
    %471 = vmatpush.bf16.msra.mxu0 0
    %472 = vmatpush.bf16.msra.mxu0 0
    %473 = vmatpush.bf16.msra.mxu0 0
    %474 = vmatpush.bf16.msra.mxu0 0
    %475 = vmatpush.bf16.msra.mxu0 0
    %476 = vmatpush.bf16.msra.mxu0 %v265
    %477 = vmatpush.bf16.msra.mxu0 %v264
    %478 = vmatmul.bf16.gmra.mxu0 %v468
    %v479 = vpop.f32.mrf.mxu0
    %v480 = vadd.f32 0.0, %v479
    %v481 = vpop.f32.mrf.mxu0
    %482 = vdwg.mxu0
    %v483 = vadd.f32 %v465, %v480
    %v484 = vxor.u32 %v483, 2147483648
    %v485 = vmul.f32 %v484, 1.442695
    %v486 = vpow.pop %v485
    %v487 = vadd.f32 %v486, 1.0
    %v488 = vrcp.pop %v487
    %v489 = vmul.f32 %v487, %v488
    %v490 = vsub.f32 1.0, %v489
    %v491 = vmul.f32 %v488, %v490
    %v492 = vadd.f32 %v488, %v491
    %vm493 = vweird.f32 %v487
    %vm494 = vweird.f32 %v488
    %vm495 = vmor %vm493, %vm494
    %v496 = vsel %vm495, %v488, %v492
    %v497 = vand.u32 2147483647, %v487
    %vm498 = vcmp.eq.f32.partialorder %v497, 8.507059e+37
    %v499 = vand.u32 %v487, 2147483648
    %v500 = vor.u32 1.1754944e-38, %v499
    %v501 = vsel %vm498, %v500, %v496
    %v502 = vmul.f32 1.0, %v501
    %v503 = vtanh.pop %v483
    %505 = vrot.lane.b32.xlu0 %v338, 32
    %v506 = vpop.permute.xlu0 %505
    %v508 = vmul.f32 %v502, %v506
    %510 = vrot.lane.b32.xlu0 %v503, 64
    %v511 = vpop.permute.xlu0 %510
    %v513 = vmul.f32 %v502, %v511
    %515 = vrot.lane.b32.xlu0 %v513, 32
    %v516 = vpop.permute.xlu0 %515
    %v518 = vadd.f32 %v508, %v516
    %v519 = vtanh.pop %v518
    %521 = vrot.lane.b32.xlu0 %v519, 64
    %v522 = vpop.permute.xlu0 %521
    %v524 = vmul.f32 %v502, %v522
    %v525 = vsel %vm459, 1, 0
    %526 = vset.pattern.permute.xlu0 0
    %527 = vperm.xlu0 %526, %v525
    %v528 = vpop.permute.xlu0 %527
    %vm529 = vcmp.eq.s32.totalorder %v528, 1
    %531 = vst [vmem:[#allocation1] ss:$4 sm:$0xff] %v518
    %v532 = vld.sshfl [vmem:[#allocation1] sm:$0xff pattern:$0x73625140]
    %533 = vrot.lane.b32.xlu0 %v532, 96
    %v534 = vpop.permute.xlu0 %533
    %v536 = vsel %vm529, %v338, %v534
    %538 = vst [vmem:[#allocation1] ss:$4 sm:$0xff] %v524
    %v539 = vld.sshfl [vmem:[#allocation1] sm:$0xff pattern:$0x73625140]
    %540 = vrot.lane.b32.xlu0 %v539, 32
    %v541 = vpop.permute.xlu0 %540
    %v543 = vsel %vm529, %v345, %v541
    %544 = vst [vmem:[#allocation1] ss:$4 sm:$0xff] %v524
    %v545 = vld.sshfl [vmem:[#allocation1] sm:$0xff pattern:$0x73625140]
    %546 = vrot.lane.b32.xlu0 %v545, 32
    %v547 = vpop.permute.xlu0 %546
    %v549 = vsel %vm529, 0.0, %v547
    %s550 = scalar_lea.vmem [#allocation7], 6
    %v551 = vld [vmem:[%s550] sm:$0x1]
    %v552 = vunpack.c.l.bf16 %v551
    %v553 = vpack.c.bf16 %v444, %v444
    %v555 = vsel %vm268, %v553, 0
    %557 = vmatpush.bf16.msra.mxu0 0
    %558 = vmatpush.bf16.msra.mxu0 0
    %559 = vmatpush.bf16.msra.mxu0 0
    %560 = vmatpush.bf16.msra.mxu0 0
    %561 = vmatpush.bf16.msra.mxu0 0
    %562 = vmatpush.bf16.msra.mxu0 0
    %563 = vmatpush.bf16.msra.mxu0 %v365
    %564 = vmatpush.bf16.msra.mxu0 %v364
    %565 = vmatmul.bf16.gmra.mxu0 %v555
    %v566 = vpop.f32.mrf.mxu0
    %v567 = vadd.f32 0.0, %v566
    %v568 = vpop.f32.mrf.mxu0
    %569 = vdwg.mxu0
    %v570 = vadd.f32 %v552, %v567
    %v571 = vxor.u32 %v570, 2147483648
    %v572 = vmul.f32 %v571, 1.442695
    %v573 = vpow.pop %v572
    %v574 = vadd.f32 %v573, 1.0
    %v575 = vrcp.pop %v574
    %v576 = vmul.f32 %v574, %v575
    %v577 = vsub.f32 1.0, %v576
    %v578 = vmul.f32 %v575, %v577
    %v579 = vadd.f32 %v575, %v578
    %vm580 = vweird.f32 %v574
    %vm581 = vweird.f32 %v575
    %vm582 = vmor %vm580, %vm581
    %v583 = vsel %vm582, %v575, %v579
    %v584 = vand.u32 2147483647, %v574
    %vm585 = vcmp.eq.f32.partialorder %v584, 8.507059e+37
    %v586 = vand.u32 %v574, 2147483648
    %v587 = vor.u32 1.1754944e-38, %v586
    %v588 = vsel %vm585, %v587, %v583
    %v589 = vmul.f32 1.0, %v588
    %v590 = vtanh.pop %v570
    %592 = vrot.lane.b32.xlu0 %v437, 32
    %v593 = vpop.permute.xlu0 %592
    %v595 = vmul.f32 %v589, %v593
    %597 = vrot.lane.b32.xlu0 %v590, 64
    %v598 = vpop.permute.xlu0 %597
    %v600 = vmul.f32 %v589, %v598
    %602 = vrot.lane.b32.xlu0 %v600, 32
    %v603 = vpop.permute.xlu0 %602
    %v605 = vadd.f32 %v595, %v603
    %v606 = vtanh.pop %v605
    %608 = vrot.lane.b32.xlu0 %v606, 64
    %v609 = vpop.permute.xlu0 %608
    %v611 = vmul.f32 %v589, %v609
    %v612 = vsel %vm462, 1, 0
    %613 = vset.pattern.permute.xlu0 0
    %614 = vperm.xlu0 %613, %v612
    %v615 = vpop.permute.xlu0 %614
    %vm616 = vcmp.eq.s32.totalorder %v615, 1
    %618 = vst [vmem:[#allocation1] ss:$4 sm:$0xff] %v605
    %v619 = vld.sshfl [vmem:[#allocation1] sm:$0xff pattern:$0x73625140]
    %620 = vrot.lane.b32.xlu0 %v619, 96
    %v621 = vpop.permute.xlu0 %620
    %v623 = vsel %vm616, %v437, %v621
    %625 = vst [vmem:[#allocation1] ss:$4 sm:$0xff] %v611
    %v626 = vld.sshfl [vmem:[#allocation1] sm:$0xff pattern:$0x73625140]
    %627 = vrot.lane.b32.xlu0 %v626, 32
    %v628 = vpop.permute.xlu0 %627
    %v630 = vsel %vm616, %v444, %v628
    %631 = vst [vmem:[#allocation1] ss:$4 sm:$0xff] %v611
    %v632 = vld.sshfl [vmem:[#allocation1] sm:$0xff pattern:$0x73625140]
    %633 = vrot.lane.b32.xlu0 %v632, 32
    %v634 = vpop.permute.xlu0 %633
    %v636 = vsel %vm616, 0.0, %v634
    %v637 = vpack.c.bf16 %v549, %v549
    %s638 = scalar_lea.vmem %s6, 1
    %639 = vst.msk [vmem:[%s638] sm:$0x1] %vm452, %v637
    %v640 = vpack.c.bf16 %v636, %v636
    %s641 = scalar_lea.vmem %s223, 6
    %642 = vst.msk [vmem:[%s641] sm:$0x1] %vm452, %v640
    %s643 = scalar_lea.vmem %s2, 4
    %v644 = vld [vmem:[%s643] sm:$0x3]
    %vm645 = vcmp.ne.s32.totalorder %v644, 0
    %s646 = scalar_lea.vmem %s216, 10
    %v647 = vld [vmem:[%s646] sm:$0x3]
    %vm648 = vcmp.ne.s32.totalorder %v647, 0
    %s649 = scalar_lea.vmem [#allocation6], 2
    %v650 = vld [vmem:[%s649] sm:$0x1]
    %v651 = vunpack.c.l.bf16 %v650
    %v652 = vpack.c.bf16 %v543, %v543
    %v654 = vsel %vm268, %v652, 0
    %656 = vmatpush.bf16.msra.mxu0 0
    %657 = vmatpush.bf16.msra.mxu0 0
    %658 = vmatpush.bf16.msra.mxu0 0
    %659 = vmatpush.bf16.msra.mxu0 0
    %660 = vmatpush.bf16.msra.mxu0 0
    %661 = vmatpush.bf16.msra.mxu0 0
    %662 = vmatpush.bf16.msra.mxu0 %v265
    %663 = vmatpush.bf16.msra.mxu0 %v264
    %664 = vmatmul.bf16.gmra.mxu0 %v654
    %v665 = vpop.f32.mrf.mxu0
    %v666 = vadd.f32 0.0, %v665
    %v667 = vpop.f32.mrf.mxu0
    %668 = vdwg.mxu0
    %v669 = vadd.f32 %v651, %v666
    %v670 = vxor.u32 %v669, 2147483648
    %v671 = vmul.f32 %v670, 1.442695
    %v672 = vpow.pop %v671
    %v673 = vadd.f32 %v672, 1.0
    %v674 = vrcp.pop %v673
    %v675 = vmul.f32 %v673, %v674
    %v676 = vsub.f32 1.0, %v675
    %v677 = vmul.f32 %v674, %v676
    %v678 = vadd.f32 %v674, %v677
    %vm679 = vweird.f32 %v673
    %vm680 = vweird.f32 %v674
    %vm681 = vmor %vm679, %vm680
    %v682 = vsel %vm681, %v674, %v678
    %v683 = vand.u32 2147483647, %v673
    %vm684 = vcmp.eq.f32.partialorder %v683, 8.507059e+37
    %v685 = vand.u32 %v673, 2147483648
    %v686 = vor.u32 1.1754944e-38, %v685
    %v687 = vsel %vm684, %v686, %v682
    %v688 = vmul.f32 1.0, %v687
    %v689 = vtanh.pop %v669
    %691 = vrot.lane.b32.xlu0 %v536, 32
    %v692 = vpop.permute.xlu0 %691
    %v694 = vmul.f32 %v688, %v692
    %696 = vrot.lane.b32.xlu0 %v689, 64
    %v697 = vpop.permute.xlu0 %696
    %v699 = vmul.f32 %v688, %v697
    %701 = vrot.lane.b32.xlu0 %v699, 32
    %v702 = vpop.permute.xlu0 %701
    %v704 = vadd.f32 %v694, %v702
    %v705 = vtanh.pop %v704
    %707 = vrot.lane.b32.xlu0 %v705, 64
    %v708 = vpop.permute.xlu0 %707
    %v710 = vmul.f32 %v688, %v708
    %v711 = vsel %vm645, 1, 0
    %712 = vset.pattern.permute.xlu0 0
    %713 = vperm.xlu0 %712, %v711
    %v714 = vpop.permute.xlu0 %713
    %vm715 = vcmp.eq.s32.totalorder %v714, 1
    %717 = vst [vmem:[#allocation1] ss:$4 sm:$0xff] %v704
    %v718 = vld.sshfl [vmem:[#allocation1] sm:$0xff pattern:$0x73625140]
    %719 = vrot.lane.b32.xlu0 %v718, 96
    %v720 = vpop.permute.xlu0 %719
    %v722 = vsel %vm715, %v536, %v720
    %724 = vst [vmem:[#allocation1] ss:$4 sm:$0xff] %v710
    %v725 = vld.sshfl [vmem:[#allocation1] sm:$0xff pattern:$0x73625140]
    %726 = vrot.lane.b32.xlu0 %v725, 32
    %v727 = vpop.permute.xlu0 %726
    %v729 = vsel %vm715, %v543, %v727
    %730 = vst [vmem:[#allocation1] ss:$4 sm:$0xff] %v710
    %v731 = vld.sshfl [vmem:[#allocation1] sm:$0xff pattern:$0x73625140]
    %732 = vrot.lane.b32.xlu0 %v731, 32
    %v733 = vpop.permute.xlu0 %732
    %v735 = vsel %vm715, 0.0, %v733
    %s736 = scalar_lea.vmem [#allocation7], 5
    %v737 = vld [vmem:[%s736] sm:$0x1]
    %v738 = vunpack.c.l.bf16 %v737
    %v739 = vpack.c.bf16 %v630, %v630
    %v741 = vsel %vm268, %v739, 0
    %743 = vmatpush.bf16.msra.mxu0 0
    %744 = vmatpush.bf16.msra.mxu0 0
    %745 = vmatpush.bf16.msra.mxu0 0
    %746 = vmatpush.bf16.msra.mxu0 0
    %747 = vmatpush.bf16.msra.mxu0 0
    %748 = vmatpush.bf16.msra.mxu0 0
    %749 = vmatpush.bf16.msra.mxu0 %v365
    %750 = vmatpush.bf16.msra.mxu0 %v364
    %751 = vmatmul.bf16.gmra.mxu0 %v741
    %v752 = vpop.f32.mrf.mxu0
    %v753 = vadd.f32 0.0, %v752
    %v754 = vpop.f32.mrf.mxu0
    %755 = vdwg.mxu0
    %v756 = vadd.f32 %v738, %v753
    %v757 = vxor.u32 %v756, 2147483648
    %v758 = vmul.f32 %v757, 1.442695
    %v759 = vpow.pop %v758
    %v760 = vadd.f32 %v759, 1.0
    %v761 = vrcp.pop %v760
    %v762 = vmul.f32 %v760, %v761
    %v763 = vsub.f32 1.0, %v762
    %v764 = vmul.f32 %v761, %v763
    %v765 = vadd.f32 %v761, %v764
    %vm766 = vweird.f32 %v760
    %vm767 = vweird.f32 %v761
    %vm768 = vmor %vm766, %vm767
    %v769 = vsel %vm768, %v761, %v765
    %v770 = vand.u32 2147483647, %v760
    %vm771 = vcmp.eq.f32.partialorder %v770, 8.507059e+37
    %v772 = vand.u32 %v760, 2147483648
    %v773 = vor.u32 1.1754944e-38, %v772
    %v774 = vsel %vm771, %v773, %v769
    %v775 = vmul.f32 1.0, %v774
    %v776 = vtanh.pop %v756
    %778 = vrot.lane.b32.xlu0 %v623, 32
    %v779 = vpop.permute.xlu0 %778
    %v781 = vmul.f32 %v775, %v779
    %783 = vrot.lane.b32.xlu0 %v776, 64
    %v784 = vpop.permute.xlu0 %783
    %v786 = vmul.f32 %v775, %v784
    %788 = vrot.lane.b32.xlu0 %v786, 32
    %v789 = vpop.permute.xlu0 %788
    %v791 = vadd.f32 %v781, %v789
    %v792 = vtanh.pop %v791
    %794 = vrot.lane.b32.xlu0 %v792, 64
    %v795 = vpop.permute.xlu0 %794
    %v797 = vmul.f32 %v775, %v795
    %v798 = vsel %vm648, 1, 0
    %799 = vset.pattern.permute.xlu0 0
    %800 = vperm.xlu0 %799, %v798
    %v801 = vpop.permute.xlu0 %800
    %vm802 = vcmp.eq.s32.totalorder %v801, 1
    %804 = vst [vmem:[#allocation1] ss:$4 sm:$0xff] %v791
    %v805 = vld.sshfl [vmem:[#allocation1] sm:$0xff pattern:$0x73625140]
    %806 = vrot.lane.b32.xlu0 %v805, 96
    %v807 = vpop.permute.xlu0 %806
    %v809 = vsel %vm802, %v623, %v807
    %811 = vst [vmem:[#allocation1] ss:$4 sm:$0xff] %v797
    %v812 = vld.sshfl [vmem:[#allocation1] sm:$0xff pattern:$0x73625140]
    %813 = vrot.lane.b32.xlu0 %v812, 32
    %v814 = vpop.permute.xlu0 %813
    %v816 = vsel %vm802, %v630, %v814
    %817 = vst [vmem:[#allocation1] ss:$4 sm:$0xff] %v797
    %v818 = vld.sshfl [vmem:[#allocation1] sm:$0xff pattern:$0x73625140]
    %819 = vrot.lane.b32.xlu0 %v818, 32
    %v820 = vpop.permute.xlu0 %819
    %v822 = vsel %vm802, 0.0, %v820
    %v823 = vpack.c.bf16 %v735, %v735
    %s824 = scalar_lea.vmem %s6, 2
    %825 = vst.msk [vmem:[%s824] sm:$0x1] %vm452, %v823
    %v826 = vpack.c.bf16 %v822, %v822
    %s827 = scalar_lea.vmem %s223, 5
    %828 = vst.msk [vmem:[%s827] sm:$0x1] %vm452, %v826
    %s829 = scalar_lea.vmem %s2, 6
    %v830 = vld [vmem:[%s829] sm:$0x3]
    %vm831 = vcmp.ne.s32.totalorder %v830, 0
    %s832 = scalar_lea.vmem %s216, 8
    %v833 = vld [vmem:[%s832] sm:$0x3]
    %vm834 = vcmp.ne.s32.totalorder %v833, 0
    %s835 = scalar_lea.vmem [#allocation6], 3
    %v836 = vld [vmem:[%s835] sm:$0x1]
    %v837 = vunpack.c.l.bf16 %v836
    %v838 = vpack.c.bf16 %v729, %v729
    %v840 = vsel %vm268, %v838, 0
    %842 = vmatpush.bf16.msra.mxu0 0
    %843 = vmatpush.bf16.msra.mxu0 0
    %844 = vmatpush.bf16.msra.mxu0 0
    %845 = vmatpush.bf16.msra.mxu0 0
    %846 = vmatpush.bf16.msra.mxu0 0
    %847 = vmatpush.bf16.msra.mxu0 0
    %848 = vmatpush.bf16.msra.mxu0 %v265
    %849 = vmatpush.bf16.msra.mxu0 %v264
    %850 = vmatmul.bf16.gmra.mxu0 %v840
    %v851 = vpop.f32.mrf.mxu0
    %v852 = vadd.f32 0.0, %v851
    %v853 = vpop.f32.mrf.mxu0
    %854 = vdwg.mxu0
    %v855 = vadd.f32 %v837, %v852
    %v856 = vxor.u32 %v855, 2147483648
    %v857 = vmul.f32 %v856, 1.442695
    %v858 = vpow.pop %v857
    %v859 = vadd.f32 %v858, 1.0
    %v860 = vrcp.pop %v859
    %v861 = vmul.f32 %v859, %v860
    %v862 = vsub.f32 1.0, %v861
    %v863 = vmul.f32 %v860, %v862
    %v864 = vadd.f32 %v860, %v863
    %vm865 = vweird.f32 %v859
    %vm866 = vweird.f32 %v860
    %vm867 = vmor %vm865, %vm866
    %v868 = vsel %vm867, %v860, %v864
    %v869 = vand.u32 2147483647, %v859
    %vm870 = vcmp.eq.f32.partialorder %v869, 8.507059e+37
    %v871 = vand.u32 %v859, 2147483648
    %v872 = vor.u32 1.1754944e-38, %v871
    %v873 = vsel %vm870, %v872, %v868
    %v874 = vmul.f32 1.0, %v873
    %v875 = vtanh.pop %v855
    %877 = vrot.lane.b32.xlu0 %v722, 32
    %v878 = vpop.permute.xlu0 %877
    %v880 = vmul.f32 %v874, %v878
    %882 = vrot.lane.b32.xlu0 %v875, 64
    %v883 = vpop.permute.xlu0 %882
    %v885 = vmul.f32 %v874, %v883
    %887 = vrot.lane.b32.xlu0 %v885, 32
    %v888 = vpop.permute.xlu0 %887
    %v890 = vadd.f32 %v880, %v888
    %v891 = vtanh.pop %v890
    %893 = vrot.lane.b32.xlu0 %v891, 64
    %v894 = vpop.permute.xlu0 %893
    %v896 = vmul.f32 %v874, %v894
    %v897 = vsel %vm831, 1, 0
    %898 = vset.pattern.permute.xlu0 0
    %899 = vperm.xlu0 %898, %v897
    %v900 = vpop.permute.xlu0 %899
    %vm901 = vcmp.eq.s32.totalorder %v900, 1
    %903 = vst [vmem:[#allocation1] ss:$4 sm:$0xff] %v890
    %v904 = vld.sshfl [vmem:[#allocation1] sm:$0xff pattern:$0x73625140]
    %905 = vrot.lane.b32.xlu0 %v904, 96
    %v906 = vpop.permute.xlu0 %905
    %v908 = vsel %vm901, %v722, %v906
    %910 = vst [vmem:[#allocation1] ss:$4 sm:$0xff] %v896
    %v911 = vld.sshfl [vmem:[#allocation1] sm:$0xff pattern:$0x73625140]
    %912 = vrot.lane.b32.xlu0 %v911, 32
    %v913 = vpop.permute.xlu0 %912
    %v915 = vsel %vm901, %v729, %v913
    %916 = vst [vmem:[#allocation1] ss:$4 sm:$0xff] %v896
    %v917 = vld.sshfl [vmem:[#allocation1] sm:$0xff pattern:$0x73625140]
    %918 = vrot.lane.b32.xlu0 %v917, 32
    %v919 = vpop.permute.xlu0 %918
    %v921 = vsel %vm901, 0.0, %v919
    %s922 = scalar_lea.vmem [#allocation7], 4
    %v923 = vld [vmem:[%s922] sm:$0x1]
    %v924 = vunpack.c.l.bf16 %v923
    %v925 = vpack.c.bf16 %v816, %v816
    %v927 = vsel %vm268, %v925, 0
    %929 = vmatpush.bf16.msra.mxu0 0
    %930 = vmatpush.bf16.msra.mxu0 0
    %931 = vmatpush.bf16.msra.mxu0 0
    %932 = vmatpush.bf16.msra.mxu0 0
    %933 = vmatpush.bf16.msra.mxu0 0
    %934 = vmatpush.bf16.msra.mxu0 0
    %935 = vmatpush.bf16.msra.mxu0 %v365
    %936 = vmatpush.bf16.msra.mxu0 %v364
    %937 = vmatmul.bf16.gmra.mxu0 %v927
    %v938 = vpop.f32.mrf.mxu0
    %v939 = vadd.f32 0.0, %v938
    %v940 = vpop.f32.mrf.mxu0
    %941 = vdwg.mxu0
    %v942 = vadd.f32 %v924, %v939
    %v943 = vxor.u32 %v942, 2147483648
    %v944 = vmul.f32 %v943, 1.442695
    %v945 = vpow.pop %v944
    %v946 = vadd.f32 %v945, 1.0
    %v947 = vrcp.pop %v946
    %v948 = vmul.f32 %v946, %v947
    %v949 = vsub.f32 1.0, %v948
    %v950 = vmul.f32 %v947, %v949
    %v951 = vadd.f32 %v947, %v950
    %vm952 = vweird.f32 %v946
    %vm953 = vweird.f32 %v947
    %vm954 = vmor %vm952, %vm953
    %v955 = vsel %vm954, %v947, %v951
    %v956 = vand.u32 2147483647, %v946
    %vm957 = vcmp.eq.f32.partialorder %v956, 8.507059e+37
    %v958 = vand.u32 %v946, 2147483648
    %v959 = vor.u32 1.1754944e-38, %v958
    %v960 = vsel %vm957, %v959, %v955
    %v961 = vmul.f32 1.0, %v960
    %v962 = vtanh.pop %v942
    %964 = vrot.lane.b32.xlu0 %v809, 32
    %v965 = vpop.permute.xlu0 %964
    %v967 = vmul.f32 %v961, %v965
    %969 = vrot.lane.b32.xlu0 %v962, 64
    %v970 = vpop.permute.xlu0 %969
    %v972 = vmul.f32 %v961, %v970
    %974 = vrot.lane.b32.xlu0 %v972, 32
    %v975 = vpop.permute.xlu0 %974
    %v977 = vadd.f32 %v967, %v975
    %v978 = vtanh.pop %v977
    %980 = vrot.lane.b32.xlu0 %v978, 64
    %v981 = vpop.permute.xlu0 %980
    %v983 = vmul.f32 %v961, %v981
    %v984 = vsel %vm834, 1, 0
    %985 = vset.pattern.permute.xlu0 0
    %986 = vperm.xlu0 %985, %v984
    %v987 = vpop.permute.xlu0 %986
    %vm988 = vcmp.eq.s32.totalorder %v987, 1
    %990 = vst [vmem:[#allocation1] ss:$4 sm:$0xff] %v977
    %v991 = vld.sshfl [vmem:[#allocation1] sm:$0xff pattern:$0x73625140]
    %992 = vrot.lane.b32.xlu0 %v991, 96
    %v993 = vpop.permute.xlu0 %992
    %v995 = vsel %vm988, %v809, %v993
    %997 = vst [vmem:[#allocation1] ss:$4 sm:$0xff] %v983
    %v998 = vld.sshfl [vmem:[#allocation1] sm:$0xff pattern:$0x73625140]
    %999 = vrot.lane.b32.xlu0 %v998, 32
    %v1000 = vpop.permute.xlu0 %999
    %v1002 = vsel %vm988, %v816, %v1000
    %1003 = vst [vmem:[#allocation1] ss:$4 sm:$0xff] %v983
    %v1004 = vld.sshfl [vmem:[#allocation1] sm:$0xff pattern:$0x73625140]
    %1005 = vrot.lane.b32.xlu0 %v1004, 32
    %v1006 = vpop.permute.xlu0 %1005
    %v1008 = vsel %vm988, 0.0, %v1006
    %v1009 = vpack.c.bf16 %v921, %v921
    %s1010 = scalar_lea.vmem %s6, 3
    %1011 = vst.msk [vmem:[%s1010] sm:$0x1] %vm452, %v1009
    %v1012 = vpack.c.bf16 %v1008, %v1008
    %s1013 = scalar_lea.vmem %s223, 4
    %1014 = vst.msk [vmem:[%s1013] sm:$0x1] %vm452, %v1012
    %s1015 = scalar_lea.vmem %s2, 8
    %v1016 = vld [vmem:[%s1015] sm:$0x3]
    %vm1017 = vcmp.ne.s32.totalorder %v1016, 0
    %s1018 = scalar_lea.vmem %s216, 6
    %v1019 = vld [vmem:[%s1018] sm:$0x3]
    %vm1020 = vcmp.ne.s32.totalorder %v1019, 0
    %s1021 = scalar_lea.vmem [#allocation6], 4
    %v1022 = vld [vmem:[%s1021] sm:$0x1]
    %v1023 = vunpack.c.l.bf16 %v1022
    %v1024 = vpack.c.bf16 %v915, %v915
    %v1026 = vsel %vm268, %v1024, 0
    %1028 = vmatpush.bf16.msra.mxu0 0
    %1029 = vmatpush.bf16.msra.mxu0 0
    %1030 = vmatpush.bf16.msra.mxu0 0
    %1031 = vmatpush.bf16.msra.mxu0 0
    %1032 = vmatpush.bf16.msra.mxu0 0
    %1033 = vmatpush.bf16.msra.mxu0 0
    %1034 = vmatpush.bf16.msra.mxu0 %v265
    %1035 = vmatpush.bf16.msra.mxu0 %v264
    %1036 = vmatmul.bf16.gmra.mxu0 %v1026
    %v1037 = vpop.f32.mrf.mxu0
    %v1038 = vadd.f32 0.0, %v1037
    %v1039 = vpop.f32.mrf.mxu0
    %1040 = vdwg.mxu0
    %v1041 = vadd.f32 %v1023, %v1038
    %v1042 = vxor.u32 %v1041, 2147483648
    %v1043 = vmul.f32 %v1042, 1.442695
    %v1044 = vpow.pop %v1043
    %v1045 = vadd.f32 %v1044, 1.0
    %v1046 = vrcp.pop %v1045
    %v1047 = vmul.f32 %v1045, %v1046
    %v1048 = vsub.f32 1.0, %v1047
    %v1049 = vmul.f32 %v1046, %v1048
    %v1050 = vadd.f32 %v1046, %v1049
    %vm1051 = vweird.f32 %v1045
    %vm1052 = vweird.f32 %v1046
    %vm1053 = vmor %vm1051, %vm1052
    %v1054 = vsel %vm1053, %v1046, %v1050
    %v1055 = vand.u32 2147483647, %v1045
    %vm1056 = vcmp.eq.f32.partialorder %v1055, 8.507059e+37
    %v1057 = vand.u32 %v1045, 2147483648
    %v1058 = vor.u32 1.1754944e-38, %v1057
    %v1059 = vsel %vm1056, %v1058, %v1054
    %v1060 = vmul.f32 1.0, %v1059
    %v1061 = vtanh.pop %v1041
    %1063 = vrot.lane.b32.xlu0 %v908, 32
    %v1064 = vpop.permute.xlu0 %1063
    %v1066 = vmul.f32 %v1060, %v1064
    %1068 = vrot.lane.b32.xlu0 %v1061, 64
    %v1069 = vpop.permute.xlu0 %1068
    %v1071 = vmul.f32 %v1060, %v1069
    %1073 = vrot.lane.b32.xlu0 %v1071, 32
    %v1074 = vpop.permute.xlu0 %1073
    %v1076 = vadd.f32 %v1066, %v1074
    %v1077 = vtanh.pop %v1076
    %1079 = vrot.lane.b32.xlu0 %v1077, 64
    %v1080 = vpop.permute.xlu0 %1079
    %v1082 = vmul.f32 %v1060, %v1080
    %v1083 = vsel %vm1017, 1, 0
    %1084 = vset.pattern.permute.xlu0 0
    %1085 = vperm.xlu0 %1084, %v1083
    %v1086 = vpop.permute.xlu0 %1085
    %vm1087 = vcmp.eq.s32.totalorder %v1086, 1
    %1089 = vst [vmem:[#allocation1] ss:$4 sm:$0xff] %v1076
    %v1090 = vld.sshfl [vmem:[#allocation1] sm:$0xff pattern:$0x73625140]
    %1091 = vrot.lane.b32.xlu0 %v1090, 96
    %v1092 = vpop.permute.xlu0 %1091
    %v1094 = vsel %vm1087, %v908, %v1092
    %1096 = vst [vmem:[#allocation1] ss:$4 sm:$0xff] %v1082
    %v1097 = vld.sshfl [vmem:[#allocation1] sm:$0xff pattern:$0x73625140]
    %1098 = vrot.lane.b32.xlu0 %v1097, 32
    %v1099 = vpop.permute.xlu0 %1098
    %v1101 = vsel %vm1087, %v915, %v1099
    %1102 = vst [vmem:[#allocation1] ss:$4 sm:$0xff] %v1082
    %v1103 = vld.sshfl [vmem:[#allocation1] sm:$0xff pattern:$0x73625140]
    %1104 = vrot.lane.b32.xlu0 %v1103, 32
    %v1105 = vpop.permute.xlu0 %1104
    %v1107 = vsel %vm1087, 0.0, %v1105
    %s1108 = scalar_lea.vmem [#allocation7], 3
    %v1109 = vld [vmem:[%s1108] sm:$0x1]
    %v1110 = vunpack.c.l.bf16 %v1109
    %v1111 = vpack.c.bf16 %v1002, %v1002
    %v1113 = vsel %vm268, %v1111, 0
    %1115 = vmatpush.bf16.msra.mxu0 0
    %1116 = vmatpush.bf16.msra.mxu0 0
    %1117 = vmatpush.bf16.msra.mxu0 0
    %1118 = vmatpush.bf16.msra.mxu0 0
    %1119 = vmatpush.bf16.msra.mxu0 0
    %1120 = vmatpush.bf16.msra.mxu0 0
    %1121 = vmatpush.bf16.msra.mxu0 %v365
    %1122 = vmatpush.bf16.msra.mxu0 %v364
    %1123 = vmatmul.bf16.gmra.mxu0 %v1113
    %v1124 = vpop.f32.mrf.mxu0
    %v1125 = vadd.f32 0.0, %v1124
    %v1126 = vpop.f32.mrf.mxu0
    %1127 = vdwg.mxu0
    %v1128 = vadd.f32 %v1110, %v1125
    %v1129 = vxor.u32 %v1128, 2147483648
    %v1130 = vmul.f32 %v1129, 1.442695
    %v1131 = vpow.pop %v1130
    %v1132 = vadd.f32 %v1131, 1.0
    %v1133 = vrcp.pop %v1132
    %v1134 = vmul.f32 %v1132, %v1133
    %v1135 = vsub.f32 1.0, %v1134
    %v1136 = vmul.f32 %v1133, %v1135
    %v1137 = vadd.f32 %v1133, %v1136
    %vm1138 = vweird.f32 %v1132
    %vm1139 = vweird.f32 %v1133
    %vm1140 = vmor %vm1138, %vm1139
    %v1141 = vsel %vm1140, %v1133, %v1137
    %v1142 = vand.u32 2147483647, %v1132
    %vm1143 = vcmp.eq.f32.partialorder %v1142, 8.507059e+37
    %v1144 = vand.u32 %v1132, 2147483648
    %v1145 = vor.u32 1.1754944e-38, %v1144
    %v1146 = vsel %vm1143, %v1145, %v1141
    %v1147 = vmul.f32 1.0, %v1146
    %v1148 = vtanh.pop %v1128
    %1150 = vrot.lane.b32.xlu0 %v995, 32
    %v1151 = vpop.permute.xlu0 %1150
    %v1153 = vmul.f32 %v1147, %v1151
    %1155 = vrot.lane.b32.xlu0 %v1148, 64
    %v1156 = vpop.permute.xlu0 %1155
    %v1158 = vmul.f32 %v1147, %v1156
    %1160 = vrot.lane.b32.xlu0 %v1158, 32
    %v1161 = vpop.permute.xlu0 %1160
    %v1163 = vadd.f32 %v1153, %v1161
    %v1164 = vtanh.pop %v1163
    %1166 = vrot.lane.b32.xlu0 %v1164, 64
    %v1167 = vpop.permute.xlu0 %1166
    %v1169 = vmul.f32 %v1147, %v1167
    %v1170 = vsel %vm1020, 1, 0
    %1171 = vset.pattern.permute.xlu0 0
    %1172 = vperm.xlu0 %1171, %v1170
    %v1173 = vpop.permute.xlu0 %1172
    %vm1174 = vcmp.eq.s32.totalorder %v1173, 1
    %1176 = vst [vmem:[#allocation1] ss:$4 sm:$0xff] %v1163
    %v1177 = vld.sshfl [vmem:[#allocation1] sm:$0xff pattern:$0x73625140]
    %1178 = vrot.lane.b32.xlu0 %v1177, 96
    %v1179 = vpop.permute.xlu0 %1178
    %v1181 = vsel %vm1174, %v995, %v1179
    %1183 = vst [vmem:[#allocation1] ss:$4 sm:$0xff] %v1169
    %v1184 = vld.sshfl [vmem:[#allocation1] sm:$0xff pattern:$0x73625140]
    %1185 = vrot.lane.b32.xlu0 %v1184, 32
    %v1186 = vpop.permute.xlu0 %1185
    %v1188 = vsel %vm1174, %v1002, %v1186
    %1189 = vst [vmem:[#allocation1] ss:$4 sm:$0xff] %v1169
    %v1190 = vld.sshfl [vmem:[#allocation1] sm:$0xff pattern:$0x73625140]
    %1191 = vrot.lane.b32.xlu0 %v1190, 32
    %v1192 = vpop.permute.xlu0 %1191
    %v1194 = vsel %vm1174, 0.0, %v1192
    %v1195 = vpack.c.bf16 %v1107, %v1107
    %s1196 = scalar_lea.vmem %s6, 4
    %1197 = vst.msk [vmem:[%s1196] sm:$0x1] %vm452, %v1195
    %v1198 = vpack.c.bf16 %v1194, %v1194
    %s1199 = scalar_lea.vmem %s223, 3
    %1200 = vst.msk [vmem:[%s1199] sm:$0x1] %vm452, %v1198
    %s1201 = scalar_lea.vmem %s2, 10
    %v1202 = vld [vmem:[%s1201] sm:$0x3]
    %vm1203 = vcmp.ne.s32.totalorder %v1202, 0
    %s1204 = scalar_lea.vmem %s216, 4
    %v1205 = vld [vmem:[%s1204] sm:$0x3]
    %vm1206 = vcmp.ne.s32.totalorder %v1205, 0
    %s1207 = scalar_lea.vmem [#allocation6], 5
    %v1208 = vld [vmem:[%s1207] sm:$0x1]
    %v1209 = vunpack.c.l.bf16 %v1208
    %v1210 = vpack.c.bf16 %v1101, %v1101
    %v1212 = vsel %vm268, %v1210, 0
    %1214 = vmatpush.bf16.msra.mxu0 0
    %1215 = vmatpush.bf16.msra.mxu0 0
    %1216 = vmatpush.bf16.msra.mxu0 0
    %1217 = vmatpush.bf16.msra.mxu0 0
    %1218 = vmatpush.bf16.msra.mxu0 0
    %1219 = vmatpush.bf16.msra.mxu0 0
    %1220 = vmatpush.bf16.msra.mxu0 %v265
    %1221 = vmatpush.bf16.msra.mxu0 %v264
    %1222 = vmatmul.bf16.gmra.mxu0 %v1212
    %v1223 = vpop.f32.mrf.mxu0
    %v1224 = vadd.f32 0.0, %v1223
    %v1225 = vpop.f32.mrf.mxu0
    %1226 = vdwg.mxu0
    %v1227 = vadd.f32 %v1209, %v1224
    %v1228 = vxor.u32 %v1227, 2147483648
    %v1229 = vmul.f32 %v1228, 1.442695
    %v1230 = vpow.pop %v1229
    %v1231 = vadd.f32 %v1230, 1.0
    %v1232 = vrcp.pop %v1231
    %v1233 = vmul.f32 %v1231, %v1232
    %v1234 = vsub.f32 1.0, %v1233
    %v1235 = vmul.f32 %v1232, %v1234
    %v1236 = vadd.f32 %v1232, %v1235
    %vm1237 = vweird.f32 %v1231
    %vm1238 = vweird.f32 %v1232
    %vm1239 = vmor %vm1237, %vm1238
    %v1240 = vsel %vm1239, %v1232, %v1236
    %v1241 = vand.u32 2147483647, %v1231
    %vm1242 = vcmp.eq.f32.partialorder %v1241, 8.507059e+37
    %v1243 = vand.u32 %v1231, 2147483648
    %v1244 = vor.u32 1.1754944e-38, %v1243
    %v1245 = vsel %vm1242, %v1244, %v1240
    %v1246 = vmul.f32 1.0, %v1245
    %v1247 = vtanh.pop %v1227
    %1249 = vrot.lane.b32.xlu0 %v1094, 32
    %v1250 = vpop.permute.xlu0 %1249
    %v1252 = vmul.f32 %v1246, %v1250
    %1254 = vrot.lane.b32.xlu0 %v1247, 64
    %v1255 = vpop.permute.xlu0 %1254
    %v1257 = vmul.f32 %v1246, %v1255
    %1259 = vrot.lane.b32.xlu0 %v1257, 32
    %v1260 = vpop.permute.xlu0 %1259
    %v1262 = vadd.f32 %v1252, %v1260
    %v1263 = vtanh.pop %v1262
    %1265 = vrot.lane.b32.xlu0 %v1263, 64
    %v1266 = vpop.permute.xlu0 %1265
    %v1268 = vmul.f32 %v1246, %v1266
    %v1269 = vsel %vm1203, 1, 0
    %1270 = vset.pattern.permute.xlu0 0
    %1271 = vperm.xlu0 %1270, %v1269
    %v1272 = vpop.permute.xlu0 %1271
    %vm1273 = vcmp.eq.s32.totalorder %v1272, 1
    %1275 = vst [vmem:[#allocation1] ss:$4 sm:$0xff] %v1262
    %v1276 = vld.sshfl [vmem:[#allocation1] sm:$0xff pattern:$0x73625140]
    %1277 = vrot.lane.b32.xlu0 %v1276, 96
    %v1278 = vpop.permute.xlu0 %1277
    %v1280 = vsel %vm1273, %v1094, %v1278
    %1282 = vst [vmem:[#allocation1] ss:$4 sm:$0xff] %v1268
    %v1283 = vld.sshfl [vmem:[#allocation1] sm:$0xff pattern:$0x73625140]
    %1284 = vrot.lane.b32.xlu0 %v1283, 32
    %v1285 = vpop.permute.xlu0 %1284
    %v1287 = vsel %vm1273, %v1101, %v1285
    %1288 = vst [vmem:[#allocation1] ss:$4 sm:$0xff] %v1268
    %v1289 = vld.sshfl [vmem:[#allocation1] sm:$0xff pattern:$0x73625140]
    %1290 = vrot.lane.b32.xlu0 %v1289, 32
    %v1291 = vpop.permute.xlu0 %1290
    %v1293 = vsel %vm1273, 0.0, %v1291
    %s1294 = scalar_lea.vmem [#allocation7], 2
    %v1295 = vld [vmem:[%s1294] sm:$0x1]
    %v1296 = vunpack.c.l.bf16 %v1295
    %v1297 = vpack.c.bf16 %v1188, %v1188
    %v1299 = vsel %vm268, %v1297, 0
    %1301 = vmatpush.bf16.msra.mxu0 0
    %1302 = vmatpush.bf16.msra.mxu0 0
    %1303 = vmatpush.bf16.msra.mxu0 0
    %1304 = vmatpush.bf16.msra.mxu0 0
    %1305 = vmatpush.bf16.msra.mxu0 0
    %1306 = vmatpush.bf16.msra.mxu0 0
    %1307 = vmatpush.bf16.msra.mxu0 %v365
    %1308 = vmatpush.bf16.msra.mxu0 %v364
    %1309 = vmatmul.bf16.gmra.mxu0 %v1299
    %v1310 = vpop.f32.mrf.mxu0
    %v1311 = vadd.f32 0.0, %v1310
    %v1312 = vpop.f32.mrf.mxu0
    %1313 = vdwg.mxu0
    %v1314 = vadd.f32 %v1296, %v1311
    %v1315 = vxor.u32 %v1314, 2147483648
    %v1316 = vmul.f32 %v1315, 1.442695
    %v1317 = vpow.pop %v1316
    %v1318 = vadd.f32 %v1317, 1.0
    %v1319 = vrcp.pop %v1318
    %v1320 = vmul.f32 %v1318, %v1319
    %v1321 = vsub.f32 1.0, %v1320
    %v1322 = vmul.f32 %v1319, %v1321
    %v1323 = vadd.f32 %v1319, %v1322
    %vm1324 = vweird.f32 %v1318
    %vm1325 = vweird.f32 %v1319
    %vm1326 = vmor %vm1324, %vm1325
    %v1327 = vsel %vm1326, %v1319, %v1323
    %v1328 = vand.u32 2147483647, %v1318
    %vm1329 = vcmp.eq.f32.partialorder %v1328, 8.507059e+37
    %v1330 = vand.u32 %v1318, 2147483648
    %v1331 = vor.u32 1.1754944e-38, %v1330
    %v1332 = vsel %vm1329, %v1331, %v1327
    %v1333 = vmul.f32 1.0, %v1332
    %v1334 = vtanh.pop %v1314
    %1336 = vrot.lane.b32.xlu0 %v1181, 32
    %v1337 = vpop.permute.xlu0 %1336
    %v1339 = vmul.f32 %v1333, %v1337
    %1341 = vrot.lane.b32.xlu0 %v1334, 64
    %v1342 = vpop.permute.xlu0 %1341
    %v1344 = vmul.f32 %v1333, %v1342
    %1346 = vrot.lane.b32.xlu0 %v1344, 32
    %v1347 = vpop.permute.xlu0 %1346
    %v1349 = vadd.f32 %v1339, %v1347
    %v1350 = vtanh.pop %v1349
    %1352 = vrot.lane.b32.xlu0 %v1350, 64
    %v1353 = vpop.permute.xlu0 %1352
    %v1355 = vmul.f32 %v1333, %v1353
    %v1356 = vsel %vm1206, 1, 0
    %1357 = vset.pattern.permute.xlu0 0
    %1358 = vperm.xlu0 %1357, %v1356
    %v1359 = vpop.permute.xlu0 %1358
    %vm1360 = vcmp.eq.s32.totalorder %v1359, 1
    %1362 = vst [vmem:[#allocation1] ss:$4 sm:$0xff] %v1349
    %v1363 = vld.sshfl [vmem:[#allocation1] sm:$0xff pattern:$0x73625140]
    %1364 = vrot.lane.b32.xlu0 %v1363, 96
    %v1365 = vpop.permute.xlu0 %1364
    %v1367 = vsel %vm1360, %v1181, %v1365
    %1369 = vst [vmem:[#allocation1] ss:$4 sm:$0xff] %v1355
    %v1370 = vld.sshfl [vmem:[#allocation1] sm:$0xff pattern:$0x73625140]
    %1371 = vrot.lane.b32.xlu0 %v1370, 32
    %v1372 = vpop.permute.xlu0 %1371
    %v1374 = vsel %vm1360, %v1188, %v1372
    %1375 = vst [vmem:[#allocation1] ss:$4 sm:$0xff] %v1355
    %v1376 = vld.sshfl [vmem:[#allocation1] sm:$0xff pattern:$0x73625140]
    %1377 = vrot.lane.b32.xlu0 %v1376, 32
    %v1378 = vpop.permute.xlu0 %1377
    %v1380 = vsel %vm1360, 0.0, %v1378
    %v1381 = vpack.c.bf16 %v1293, %v1293
    %s1382 = scalar_lea.vmem %s6, 5
    %1383 = vst.msk [vmem:[%s1382] sm:$0x1] %vm452, %v1381
    %v1384 = vpack.c.bf16 %v1380, %v1380
    %s1385 = scalar_lea.vmem %s223, 2
    %1386 = vst.msk [vmem:[%s1385] sm:$0x1] %vm452, %v1384
    %s1387 = scalar_lea.vmem %s2, 12
    %v1388 = vld [vmem:[%s1387] sm:$0x3]
    %vm1389 = vcmp.ne.s32.totalorder %v1388, 0
    %s1390 = scalar_lea.vmem %s216, 2
    %v1391 = vld [vmem:[%s1390] sm:$0x3]
    %vm1392 = vcmp.ne.s32.totalorder %v1391, 0
    %s1393 = scalar_lea.vmem [#allocation6], 6
    %v1394 = vld [vmem:[%s1393] sm:$0x1]
    %v1395 = vunpack.c.l.bf16 %v1394
    %v1396 = vpack.c.bf16 %v1287, %v1287
    %v1398 = vsel %vm268, %v1396, 0
    %1400 = vmatpush.bf16.msra.mxu0 0
    %1401 = vmatpush.bf16.msra.mxu0 0
    %1402 = vmatpush.bf16.msra.mxu0 0
    %1403 = vmatpush.bf16.msra.mxu0 0
    %1404 = vmatpush.bf16.msra.mxu0 0
    %1405 = vmatpush.bf16.msra.mxu0 0
    %1406 = vmatpush.bf16.msra.mxu0 %v265
    %1407 = vmatpush.bf16.msra.mxu0 %v264
    %1408 = vmatmul.bf16.gmra.mxu0 %v1398
    %v1409 = vpop.f32.mrf.mxu0
    %v1410 = vadd.f32 0.0, %v1409
    %v1411 = vpop.f32.mrf.mxu0
    %1412 = vdwg.mxu0
    %v1413 = vadd.f32 %v1395, %v1410
    %v1414 = vxor.u32 %v1413, 2147483648
    %v1415 = vmul.f32 %v1414, 1.442695
    %v1416 = vpow.pop %v1415
    %v1417 = vadd.f32 %v1416, 1.0
    %v1418 = vrcp.pop %v1417
    %v1419 = vmul.f32 %v1417, %v1418
    %v1420 = vsub.f32 1.0, %v1419
    %v1421 = vmul.f32 %v1418, %v1420
    %v1422 = vadd.f32 %v1418, %v1421
    %vm1423 = vweird.f32 %v1417
    %vm1424 = vweird.f32 %v1418
    %vm1425 = vmor %vm1423, %vm1424
    %v1426 = vsel %vm1425, %v1418, %v1422
    %v1427 = vand.u32 2147483647, %v1417
    %vm1428 = vcmp.eq.f32.partialorder %v1427, 8.507059e+37
    %v1429 = vand.u32 %v1417, 2147483648
    %v1430 = vor.u32 1.1754944e-38, %v1429
    %v1431 = vsel %vm1428, %v1430, %v1426
    %v1432 = vmul.f32 1.0, %v1431
    %v1433 = vtanh.pop %v1413
    %1435 = vrot.lane.b32.xlu0 %v1280, 32
    %v1436 = vpop.permute.xlu0 %1435
    %v1438 = vmul.f32 %v1432, %v1436
    %1440 = vrot.lane.b32.xlu0 %v1433, 64
    %v1441 = vpop.permute.xlu0 %1440
    %v1443 = vmul.f32 %v1432, %v1441
    %1445 = vrot.lane.b32.xlu0 %v1443, 32
    %v1446 = vpop.permute.xlu0 %1445
    %v1448 = vadd.f32 %v1438, %v1446
    %v1449 = vtanh.pop %v1448
    %1451 = vrot.lane.b32.xlu0 %v1449, 64
    %v1452 = vpop.permute.xlu0 %1451
    %v1454 = vmul.f32 %v1432, %v1452
    %v1455 = vsel %vm1389, 1, 0
    %1456 = vset.pattern.permute.xlu0 0
    %1457 = vperm.xlu0 %1456, %v1455
    %v1458 = vpop.permute.xlu0 %1457
    %vm1459 = vcmp.eq.s32.totalorder %v1458, 1
    %1461 = vst [vmem:[#allocation1] ss:$4 sm:$0xff] %v1448
    %v1462 = vld.sshfl [vmem:[#allocation1] sm:$0xff pattern:$0x73625140]
    %1463 = vrot.lane.b32.xlu0 %v1462, 96
    %v1464 = vpop.permute.xlu0 %1463
    %v1466 = vsel %vm1459, %v1280, %v1464
    %1468 = vst [vmem:[#allocation1] ss:$4 sm:$0xff] %v1454
    %v1469 = vld.sshfl [vmem:[#allocation1] sm:$0xff pattern:$0x73625140]
    %1470 = vrot.lane.b32.xlu0 %v1469, 32
    %v1471 = vpop.permute.xlu0 %1470
    %v1473 = vsel %vm1459, %v1287, %v1471
    %1474 = vst [vmem:[#allocation1] ss:$4 sm:$0xff] %v1454
    %v1475 = vld.sshfl [vmem:[#allocation1] sm:$0xff pattern:$0x73625140]
    %1476 = vrot.lane.b32.xlu0 %v1475, 32
    %v1477 = vpop.permute.xlu0 %1476
    %v1479 = vsel %vm1459, 0.0, %v1477
    %s1480 = scalar_lea.vmem [#allocation7], 1
    %v1481 = vld [vmem:[%s1480] sm:$0x1]
    %v1482 = vunpack.c.l.bf16 %v1481
    %v1483 = vpack.c.bf16 %v1374, %v1374
    %v1485 = vsel %vm268, %v1483, 0
    %1487 = vmatpush.bf16.msra.mxu0 0
    %1488 = vmatpush.bf16.msra.mxu0 0
    %1489 = vmatpush.bf16.msra.mxu0 0
    %1490 = vmatpush.bf16.msra.mxu0 0
    %1491 = vmatpush.bf16.msra.mxu0 0
    %1492 = vmatpush.bf16.msra.mxu0 0
    %1493 = vmatpush.bf16.msra.mxu0 %v365
    %1494 = vmatpush.bf16.msra.mxu0 %v364
    %1495 = vmatmul.bf16.gmra.mxu0 %v1485
    %v1496 = vpop.f32.mrf.mxu0
    %v1497 = vadd.f32 0.0, %v1496
    %v1498 = vpop.f32.mrf.mxu0
    %1499 = vdwg.mxu0
    %v1500 = vadd.f32 %v1482, %v1497
    %v1501 = vxor.u32 %v1500, 2147483648
    %v1502 = vmul.f32 %v1501, 1.442695
    %v1503 = vpow.pop %v1502
    %v1504 = vadd.f32 %v1503, 1.0
    %v1505 = vrcp.pop %v1504
    %v1506 = vmul.f32 %v1504, %v1505
    %v1507 = vsub.f32 1.0, %v1506
    %v1508 = vmul.f32 %v1505, %v1507
    %v1509 = vadd.f32 %v1505, %v1508
    %vm1510 = vweird.f32 %v1504
    %vm1511 = vweird.f32 %v1505
    %vm1512 = vmor %vm1510, %vm1511
    %v1513 = vsel %vm1512, %v1505, %v1509
    %v1514 = vand.u32 2147483647, %v1504
    %vm1515 = vcmp.eq.f32.partialorder %v1514, 8.507059e+37
    %v1516 = vand.u32 %v1504, 2147483648
    %v1517 = vor.u32 1.1754944e-38, %v1516
    %v1518 = vsel %vm1515, %v1517, %v1513
    %v1519 = vmul.f32 1.0, %v1518
    %v1520 = vtanh.pop %v1500
    %1522 = vrot.lane.b32.xlu0 %v1367, 32
    %v1523 = vpop.permute.xlu0 %1522
    %v1525 = vmul.f32 %v1519, %v1523
    %1527 = vrot.lane.b32.xlu0 %v1520, 64
    %v1528 = vpop.permute.xlu0 %1527
    %v1530 = vmul.f32 %v1519, %v1528
    %1532 = vrot.lane.b32.xlu0 %v1530, 32
    %v1533 = vpop.permute.xlu0 %1532
    %v1535 = vadd.f32 %v1525, %v1533
    %v1536 = vtanh.pop %v1535
    %1538 = vrot.lane.b32.xlu0 %v1536, 64
    %v1539 = vpop.permute.xlu0 %1538
    %v1541 = vmul.f32 %v1519, %v1539
    %v1542 = vsel %vm1392, 1, 0
    %1543 = vset.pattern.permute.xlu0 0
    %1544 = vperm.xlu0 %1543, %v1542
    %v1545 = vpop.permute.xlu0 %1544
    %vm1546 = vcmp.eq.s32.totalorder %v1545, 1
    %1548 = vst [vmem:[#allocation1] ss:$4 sm:$0xff] %v1535
    %v1549 = vld.sshfl [vmem:[#allocation1] sm:$0xff pattern:$0x73625140]
    %1550 = vrot.lane.b32.xlu0 %v1549, 96
    %v1551 = vpop.permute.xlu0 %1550
    %v1553 = vsel %vm1546, %v1367, %v1551
    %1555 = vst [vmem:[#allocation1] ss:$4 sm:$0xff] %v1541
    %v1556 = vld.sshfl [vmem:[#allocation1] sm:$0xff pattern:$0x73625140]
    %1557 = vrot.lane.b32.xlu0 %v1556, 32
    %v1558 = vpop.permute.xlu0 %1557
    %v1560 = vsel %vm1546, %v1374, %v1558
    %1561 = vst [vmem:[#allocation1] ss:$4 sm:$0xff] %v1541
    %v1562 = vld.sshfl [vmem:[#allocation1] sm:$0xff pattern:$0x73625140]
    %1563 = vrot.lane.b32.xlu0 %v1562, 32
    %v1564 = vpop.permute.xlu0 %1563
    %v1566 = vsel %vm1546, 0.0, %v1564
    %v1567 = vpack.c.bf16 %v1479, %v1479
    %s1568 = scalar_lea.vmem %s6, 6
    %1569 = vst.msk [vmem:[%s1568] sm:$0x1] %vm452, %v1567
    %v1570 = vpack.c.bf16 %v1566, %v1566
    %s1571 = scalar_lea.vmem %s223, 1
    %1572 = vst.msk [vmem:[%s1571] sm:$0x1] %vm452, %v1570
    %s1573 = scalar_lea.vmem %s2, 14
    %v1574 = vld [vmem:[%s1573] sm:$0x3]
    %vm1575 = vcmp.ne.s32.totalorder %v1574, 0
    %v1576 = vld [vmem:[%s216] sm:$0x3]
    %vm1577 = vcmp.ne.s32.totalorder %v1576, 0
    %s1578 = scalar_lea.vmem [#allocation6], 7
    %v1579 = vld [vmem:[%s1578] sm:$0x1]
    %v1580 = vunpack.c.l.bf16 %v1579
    %v1581 = vpack.c.bf16 %v1473, %v1473
    %v1583 = vsel %vm268, %v1581, 0
    %1585 = vmatpush.bf16.msra.mxu0 0
    %1586 = vmatpush.bf16.msra.mxu0 0
    %1587 = vmatpush.bf16.msra.mxu0 0
    %1588 = vmatpush.bf16.msra.mxu0 0
    %1589 = vmatpush.bf16.msra.mxu0 0
    %1590 = vmatpush.bf16.msra.mxu0 0
    %1591 = vmatpush.bf16.msra.mxu0 %v265
    %1592 = vmatpush.bf16.msra.mxu0 %v264
    %1593 = vmatmul.bf16.gmra.mxu0 %v1583
    %v1594 = vpop.f32.mrf.mxu0
    %v1595 = vadd.f32 0.0, %v1594
    %v1596 = vpop.f32.mrf.mxu0
    %1597 = vdwg.mxu0
    %v1598 = vadd.f32 %v1580, %v1595
    %v1599 = vxor.u32 %v1598, 2147483648
    %v1600 = vmul.f32 %v1599, 1.442695
    %v1601 = vpow.pop %v1600
    %v1602 = vadd.f32 %v1601, 1.0
    %v1603 = vrcp.pop %v1602
    %v1604 = vmul.f32 %v1602, %v1603
    %v1605 = vsub.f32 1.0, %v1604
    %v1606 = vmul.f32 %v1603, %v1605
    %v1607 = vadd.f32 %v1603, %v1606
    %vm1608 = vweird.f32 %v1602
    %vm1609 = vweird.f32 %v1603
    %vm1610 = vmor %vm1608, %vm1609
    %v1611 = vsel %vm1610, %v1603, %v1607
    %v1612 = vand.u32 2147483647, %v1602
    %vm1613 = vcmp.eq.f32.partialorder %v1612, 8.507059e+37
    %v1614 = vand.u32 %v1602, 2147483648
    %v1615 = vor.u32 1.1754944e-38, %v1614
    %v1616 = vsel %vm1613, %v1615, %v1611
    %v1617 = vmul.f32 1.0, %v1616
    %v1618 = vtanh.pop %v1598
    %1620 = vrot.lane.b32.xlu0 %v1466, 32
    %v1621 = vpop.permute.xlu0 %1620
    %v1623 = vmul.f32 %v1617, %v1621
    %1625 = vrot.lane.b32.xlu0 %v1618, 64
    %v1626 = vpop.permute.xlu0 %1625
    %v1628 = vmul.f32 %v1617, %v1626
    %1630 = vrot.lane.b32.xlu0 %v1628, 32
    %v1631 = vpop.permute.xlu0 %1630
    %v1633 = vadd.f32 %v1623, %v1631
    %v1634 = vtanh.pop %v1633
    %1636 = vrot.lane.b32.xlu0 %v1634, 64
    %v1637 = vpop.permute.xlu0 %1636
    %v1639 = vmul.f32 %v1617, %v1637
    %v1640 = vsel %vm1575, 1, 0
    %1641 = vset.pattern.permute.xlu0 0
    %1642 = vperm.xlu0 %1641, %v1640
    %v1643 = vpop.permute.xlu0 %1642
    %vm1644 = vcmp.eq.s32.totalorder %v1643, 1
    %1646 = vst [vmem:[#allocation1] ss:$4 sm:$0xff] %v1633
    %v1647 = vld.sshfl [vmem:[#allocation1] sm:$0xff pattern:$0x73625140]
    %1648 = vrot.lane.b32.xlu0 %v1647, 96
    %v1649 = vpop.permute.xlu0 %1648
    %v1651 = vsel %vm1644, %v1466, %v1649
    %1653 = vst [vmem:[#allocation1] ss:$4 sm:$0xff] %v1639
    %v1654 = vld.sshfl [vmem:[#allocation1] sm:$0xff pattern:$0x73625140]
    %1655 = vrot.lane.b32.xlu0 %v1654, 32
    %v1656 = vpop.permute.xlu0 %1655
    %v1658 = vsel %vm1644, %v1473, %v1656
    %1659 = vst [vmem:[#allocation1] ss:$4 sm:$0xff] %v1639
    %v1660 = vld.sshfl [vmem:[#allocation1] sm:$0xff pattern:$0x73625140]
    %1661 = vrot.lane.b32.xlu0 %v1660, 32
    %v1662 = vpop.permute.xlu0 %1661
    %v1664 = vsel %vm1644, 0.0, %v1662
    %v1665 = vld [vmem:[#allocation7] sm:$0x1]
    %v1666 = vunpack.c.l.bf16 %v1665
    %v1667 = vpack.c.bf16 %v1560, %v1560
    %v1669 = vsel %vm268, %v1667, 0
    %1671 = vmatpush.bf16.msra.mxu0 0
    %1672 = vmatpush.bf16.msra.mxu0 0
    %1673 = vmatpush.bf16.msra.mxu0 0
    %1674 = vmatpush.bf16.msra.mxu0 0
    %1675 = vmatpush.bf16.msra.mxu0 0
    %1676 = vmatpush.bf16.msra.mxu0 0
    %1677 = vmatpush.bf16.msra.mxu0 %v365
    %1678 = vmatpush.bf16.msra.mxu0 %v364
    %1679 = vmatmul.bf16.gmra.mxu0 %v1669
    %v1680 = vpop.f32.mrf.mxu0
    %v1681 = vadd.f32 0.0, %v1680
    %v1682 = vpop.f32.mrf.mxu0
    %1683 = vdwg.mxu0
    %v1684 = vadd.f32 %v1666, %v1681
    %v1685 = vxor.u32 %v1684, 2147483648
    %v1686 = vmul.f32 %v1685, 1.442695
    %v1687 = vpow.pop %v1686
    %v1688 = vadd.f32 %v1687, 1.0
    %v1689 = vrcp.pop %v1688
    %v1690 = vmul.f32 %v1688, %v1689
    %v1691 = vsub.f32 1.0, %v1690
    %v1692 = vmul.f32 %v1689, %v1691
    %v1693 = vadd.f32 %v1689, %v1692
    %vm1694 = vweird.f32 %v1688
    %vm1695 = vweird.f32 %v1689
    %vm1696 = vmor %vm1694, %vm1695
    %v1697 = vsel %vm1696, %v1689, %v1693
    %v1698 = vand.u32 2147483647, %v1688
    %vm1699 = vcmp.eq.f32.partialorder %v1698, 8.507059e+37
    %v1700 = vand.u32 %v1688, 2147483648
    %v1701 = vor.u32 1.1754944e-38, %v1700
    %v1702 = vsel %vm1699, %v1701, %v1697
    %v1703 = vmul.f32 1.0, %v1702
    %v1704 = vtanh.pop %v1684
    %1706 = vrot.lane.b32.xlu0 %v1553, 32
    %v1707 = vpop.permute.xlu0 %1706
    %v1709 = vmul.f32 %v1703, %v1707
    %1711 = vrot.lane.b32.xlu0 %v1704, 64
    %v1712 = vpop.permute.xlu0 %1711
    %v1714 = vmul.f32 %v1703, %v1712
    %1716 = vrot.lane.b32.xlu0 %v1714, 32
    %v1717 = vpop.permute.xlu0 %1716
    %v1719 = vadd.f32 %v1709, %v1717
    %v1720 = vtanh.pop %v1719
    %1722 = vrot.lane.b32.xlu0 %v1720, 64
    %v1723 = vpop.permute.xlu0 %1722
    %v1725 = vmul.f32 %v1703, %v1723
    %v1726 = vsel %vm1577, 1, 0
    %1727 = vset.pattern.permute.xlu0 0
    %1728 = vperm.xlu0 %1727, %v1726
    %v1729 = vpop.permute.xlu0 %1728
    %vm1730 = vcmp.eq.s32.totalorder %v1729, 1
    %1732 = vst [vmem:[#allocation1] ss:$4 sm:$0xff] %v1719
    %v1733 = vld.sshfl [vmem:[#allocation1] sm:$0xff pattern:$0x73625140]
    %1734 = vrot.lane.b32.xlu0 %v1733, 96
    %v1735 = vpop.permute.xlu0 %1734
    %v1737 = vsel %vm1730, %v1553, %v1735
    %1739 = vst [vmem:[#allocation1] ss:$4 sm:$0xff] %v1725
    %v1740 = vld.sshfl [vmem:[#allocation1] sm:$0xff pattern:$0x73625140]
    %1741 = vrot.lane.b32.xlu0 %v1740, 32
    %v1742 = vpop.permute.xlu0 %1741
    %v1744 = vsel %vm1730, %v1560, %v1742
    %1745 = vst [vmem:[#allocation1] ss:$4 sm:$0xff] %v1725
    %v1746 = vld.sshfl [vmem:[#allocation1] sm:$0xff pattern:$0x73625140]
    %1747 = vrot.lane.b32.xlu0 %v1746, 32
    %v1748 = vpop.permute.xlu0 %1747
    %v1750 = vsel %vm1730, 0.0, %v1748
    %v1751 = vpack.c.bf16 %v1664, %v1664
    %s1752 = scalar_lea.vmem %s6, 7
    %1753 = vst.msk [vmem:[%s1752] sm:$0x1] %vm452, %v1751
    %v1754 = vpack.c.bf16 %v1750, %v1750
    %1755 = vst.msk [vmem:[%s223] sm:$0x1] %vm452, %v1754
    %vm1756 = vcmask 254976
    %1757 = vst.msk [vmem:[#allocation2] sm:$0x3] %vm1756, %v1658
    %1758 = vst.msk [vmem:[#allocation3] sm:$0x3] %vm1756, %v1651
    %1759 = vst.msk [vmem:[#allocation4] sm:$0x3] %vm1756, %v1744
    %1760 = vst.msk [vmem:[#allocation5] sm:$0x3] %vm1756, %v1737
    // Predicated region
    $region116: #{encoder_forward.8} parent=1 // pred_check
      %p1761 = pneg %p227
    $region117: #{encoder_forward.8} parent=1 // pred_check_branch
      %1763 = sbr.rel (%p1761) target = $region119
    $region118: #{encoder_forward.8} parent=1 // pred_region
      %1764 = vst.msk [vmem:[%s8] sm:$0x3] %vm1756, %v1658
      %1766 = vrot.lane.b32.xlu0 %v1744, 32
      %v1767 = vpop.permute.xlu0 %1766
      %vm1769 = vcmask 517376
      %1770 = vst.msk [vmem:[%s8] sm:$0x3] %vm1769, %v1767
      %1771 = vst.msk [vmem:[%s9] sm:$0x3] %vm1756, %v1651
      %1773 = vrot.lane.b32.xlu0 %v1737, 32
      %v1774 = vpop.permute.xlu0 %1773
      %1776 = vst.msk [vmem:[%s9] sm:$0x3] %vm1769, %v1774
    $region119: #{encoder_forward.8} parent=1 // pred_fallthru
      _
    %s1777 = ssub.s32 0, 0
    %s1778 = smul.u32 8, %s1777
    %p1779 = scmp.lt.s32.totalorder %s1778, 7
    %s1780 = scalar_select %p1779, %s1778, 7
    %s1781 = scalar_lea.vmem %s7, %s1780
    // Predicated region
    $region120: #{encoder_forward.8} parent=1 // pred_check
      _
    $region121: #{encoder_forward.8} parent=1 // pred_check_branch
      %1783 = sbr.rel (0) target = $region123
    $region122: #{encoder_forward.8} parent=1 // pred_region
      _
    $region123: #{encoder_forward.8} parent=1 // pred_fallthru
      _
    // Predicated region
    $region124: #{encoder_forward.8} parent=1 // pred_check
      _
    $region125: #{encoder_forward.8} parent=1 // pred_check_branch
      %1785 = sbr.rel (0) target = $region127
    $region126: #{encoder_forward.8} parent=1 // pred_region
      %s1786 = ssub.s32 0, 0
      %s1787 = smul.u32 8, %s1786
    $region127: #{encoder_forward.8} parent=1 // pred_fallthru
      _
    // Predicated region
    $region128: #{encoder_forward.8} parent=1 // pred_check
      _
    $region129: #{encoder_forward.8} parent=1 // pred_check_branch
      %1789 = sbr.rel (0) target = $region131
    $region130: #{encoder_forward.8} parent=1 // pred_region
      _
    $region131: #{encoder_forward.8} parent=1 // pred_fallthru
      _
    // Predicated region
    $region132: #{encoder_forward.8} parent=1 // pred_check
      _
    $region133: #{encoder_forward.8} parent=1 // pred_check_branch
      %1791 = sbr.rel (0) target = $region135
    $region134: #{encoder_forward.8} parent=1 // pred_region
      _
    $region135: #{encoder_forward.8} parent=1 // pred_fallthru
      _
    // Predicated region
    $region136: #{encoder_forward.8} parent=1 // pred_check
      _
    $region137: #{encoder_forward.8} parent=1 // pred_check_branch
      %1793 = sbr.rel (0) target = $region139
    $region138: #{encoder_forward.8} parent=1 // pred_region
      _
    $region139: #{encoder_forward.8} parent=1 // pred_fallthru
      _
    // Predicated region
    $region140: #{encoder_forward.8} parent=1 // pred_check
      _
    $region141: #{encoder_forward.8} parent=1 // pred_check_branch
      %1795 = sbr.rel (0) target = $region143
    $region142: #{encoder_forward.8} parent=1 // pred_region
      %s1796 = ssub.s32 0, 0
      %s1797 = smul.u32 8, %s1796
      %p1798 = scmp.lt.s32.totalorder %s1797, 7
      %s1799 = scalar_select %p1798, %s1797, 7
      %s1800 = scalar_lea.vmem %s7, %s1799
    $region143: #{encoder_forward.8} parent=1 // pred_fallthru
      _
    // Predicated region
    $region144: #{encoder_forward.8} parent=1 // pred_check
      _
    $region145: #{encoder_forward.8} parent=1 // pred_check_branch
      %1802 = sbr.rel (0) target = $region147
    $region146: #{encoder_forward.8} parent=1 // pred_region
      _
    $region147: #{encoder_forward.8} parent=1 // pred_fallthru
      _
    // Predicated region
    $region148: #{encoder_forward.8} parent=1 // pred_check
      _
    $region149: #{encoder_forward.8} parent=1 // pred_check_branch
      %1804 = sbr.rel (0) target = $region151
    $region150: #{encoder_forward.8} parent=1 // pred_region
      _
    $region151: #{encoder_forward.8} parent=1 // pred_fallthru
      _
    %1805 = vsyncpa [#allocation9], 1

// kernel: encoder_forward.9
$region0: #{encoder_forward.9}
  #allocation0 [shape = 'u32[]', space=smem, size = 0x4, offset = 0x4, fixed_abs, tag = 'smem constant byte address 0x4 - core index']
  #allocation1 [shape = 'u32[72,128]{1,0:T(1,128)}', space=vmem, size = 0x9000, scoped, tag = 'internal scratch']
  #allocation2 [shape = 'bf16[16,1024]{1,0:T(8,128)(2,1)}', space=vmem, size = 0x8000, scoped, tag = 'scratch operand']
  #allocation3 [shape = 'f32[16,1]{1,0:T(8,128)}', space=vmem, size = 0x2000, scoped, tag = 'scratch operand']
  #allocation4 [shape = 'f32[16,1]{1,0:T(8,128)}', space=vmem, size = 0x2000, scoped, tag = 'scratch operand']
  %s0 = inlined_call_operand.vmem [shape: bf16[16,32], index: 0, kind: input, shape index: {}]
  %s1 = inlined_call_operand.vmem [shape: bf16[16,32], index: 1, kind: input, shape index: {}]
  %s2 = inlined_call_operand.vmem [shape: bf16[32,1024], index: 2, kind: input, shape index: {}]
  %s3 = inlined_call_operand.hbm [shape: bf16[32,1024], index: 3, kind: input, shape index: {}]
  %s4 = inlined_call_operand.vmem [shape: f32[1,1024], index: 4, kind: input, shape index: {}]
  %s5 = inlined_call_operand.hbm [shape: bf16[1024,256], index: 5, kind: input, shape index: {}]
  %s6 = inlined_call_operand.vmem [shape: f32[1,256], index: 6, kind: input, shape index: {}]
  %s7 = inlined_call_operand.vmem [shape: f32[16,1024], index: 7, kind: output, shape index: {0}]
  %s8 = inlined_call_operand.vmem [shape: f32[16,256], index: 8, kind: output, shape index: {1}]
  %9 = xla_tuple %s7, %s8
  %s10 = sld [smem:[#allocation0]]
  $region89: #{encoder_forward.9} parent=0
    _
  %s12 = ssub.s32 1, %s10
  %s13 = scalar_select 0, %s12, %s10
  $region1: #{encoder_forward.9} parent=0
    #allocation5 [shape = 'u8[65536]{0}', space=vmem, size = 0x10000, scoped, tag = 'input window, operand 3, single buffered']
    #allocation6 [shape = 's32[2]{0}', space=sflag, size = 0x8, scoped, tag = 'scoped memory for encoder_forward.9']
    #allocation7 [shape = 'u8[524288]{0}', space=vmem, size = 0x80000, scoped, tag = 'input window, operand 5, single buffered']
    #allocation8 [shape = 's32[1]{0}', space=sflag, size = 0x4, scoped, tag = 'scoped memory for encoder_forward.9']
    %14 = vsyncpa [#allocation6], 0
    %15 = vsyncpa [#allocation8], 0
    loop: start=0, step=1, limit=4
    $region2: #{encoder_forward.9} parent=1 // loop_pre_header
      _
    $region3: #{encoder_forward.9} parent=1 // loop_header
      %s17 = sphi 0, %s21
      %p18 = scmp.ge.s32.totalorder %s17, 4
      %s24 = sphi 0, %s43
      %s25 = sphi 0, %s39
      %s26 = sphi 0, %s35
      %s27 = sphi 0, %s24
      %s28 = sphi 0, %s25
      %s29 = sphi 0, %s26
      %s30 = sphi 0, %s27
      %s31 = sphi 0, %s28
      %s32 = sphi 0, %s29
      %s46 = sphi 0, %s48
      %s49 = sphi 0, %s46
      %s50 = sphi 0, %s49
      %s66 = sphi 0, %s50
      %s72 = sphi 0, %s74
      %s75 = sphi 0, %s72
      %s76 = sphi 0, %s75
      %s92 = sphi 0, %s76
      %s96 = sphi 0, %s96
      %s98 = sphi 0, %s96
      %s99 = sphi 0, %s98
      %s113 = sphi 0, %s99
      %s117 = sphi 0, %s117
      %s119 = sphi 0, %s117
      %s120 = sphi 0, %s119
      %s134 = sphi 0, %s120
      %s138 = sphi 0, %s138
      %s140 = sphi 0, %s138
      %s141 = sphi 0, %s140
      %s155 = sphi 0, %s141
      %s161 = sphi 0, %s163
      %s164 = sphi 0, %s161
      %s165 = sphi 0, %s164
      %s181 = sphi 0, %s165
      %s187 = sphi 0, %s189
      %s190 = sphi 0, %s187
      %s191 = sphi 0, %s190
      %s207 = sphi 0, %s191
      %s213 = sphi 0, %s215
      %s216 = sphi 0, %s213
      %s217 = sphi 0, %s216
      %s233 = sphi 0, %s217
      %s243 = sphi 0, %s245
      %s246 = sphi 0, %s243
      %s247 = sphi 0, %s246
      %s263 = sphi 0, %s247
    $region4: #{encoder_forward.9} parent=1 // loop_header_branch
      %20 = sbr.rel (%p18) target = $region8
    $region5: #{encoder_forward.9} parent=1 // loop_body
      %s22 = ssub.s32 %s17, 1
      %s23 = ssub.s32 %s17, 2
      %s33 = sadd.s32 1, %s26
      %p34 = scmp.ge.s32.totalorder %s33, 1
      %s35 = scalar_select %p34, 0, %s33
      %s36 = sadd.s32 1, %s25
      %s37 = scalar_select %p34, %s36, %s25
      %p38 = scmp.ge.s32.totalorder %s37, 2
      %s39 = scalar_select %p38, 0, %s37
      %s40 = sadd.s32 1, %s24
      %s41 = scalar_select %p38, %s40, %s24
      %p42 = scmp.ge.s32.totalorder %s41, 1
      %s43 = scalar_select %p42, 0, %s41
      %s44 = ssub.s32 %s24, %s43
      %p45 = scmp.eq.s32.totalorder %s44, 0
      %s47 = sadd.s32 %s46, 1
      %s48 = scalar_select %p45, %s46, %s47
      %p51 = pneg %p45
      %p52 = scmp.eq.s32.totalorder %s17, 1
      %p53 = por %p51, %p52
      %p54 = scmp.ne.s32.totalorder %s46, %s49
      %p55 = scmp.eq.s32.totalorder %s17, 0
      %p56 = por %p54, %p55
      %p57 = scmp.ne.s32.totalorder %s46, %s49
      %p58 = scmp.eq.s32.totalorder %s22, 1
      %p59 = por %p57, %p58
      %p60 = scmp.ne.s32.totalorder %s49, %s50
      %p61 = scmp.eq.s32.totalorder %s22, 0
      %p62 = por %p60, %p61
      %p63 = scmp.ne.s32.totalorder %s49, %s50
      %p64 = scmp.eq.s32.totalorder %s23, 1
      %p65 = por %p63, %p64
      %p67 = scmp.ne.s32.totalorder %s50, %s66
      %p68 = scmp.eq.s32.totalorder %s23, 0
      %p69 = por %p67, %p68
      %s70 = ssub.s32 %s24, %s43
      %p71 = scmp.eq.s32.totalorder %s70, 0
      %s73 = sadd.s32 %s72, 1
      %s74 = scalar_select %p71, %s72, %s73
      %p77 = pneg %p71
      %p78 = scmp.eq.s32.totalorder %s17, 1
      %p79 = por %p77, %p78
      %p80 = scmp.ne.s32.totalorder %s72, %s75
      %p81 = scmp.eq.s32.totalorder %s17, 0
      %p82 = por %p80, %p81
      %p83 = scmp.ne.s32.totalorder %s72, %s75
      %p84 = scmp.eq.s32.totalorder %s22, 1
      %p85 = por %p83, %p84
      %p86 = scmp.ne.s32.totalorder %s75, %s76
      %p87 = scmp.eq.s32.totalorder %s22, 0
      %p88 = por %p86, %p87
      %p89 = scmp.ne.s32.totalorder %s75, %s76
      %p90 = scmp.eq.s32.totalorder %s23, 1
      %p91 = por %p89, %p90
      %p93 = scmp.ne.s32.totalorder %s76, %s92
      %p94 = scmp.eq.s32.totalorder %s23, 0
      %p95 = por %p93, %p94
      %s97 = sadd.s32 %s96, 1
      %p100 = scmp.eq.s32.totalorder %s17, 1
      %p101 = scmp.ne.s32.totalorder %s96, %s98
      %p102 = scmp.eq.s32.totalorder %s17, 0
      %p103 = por %p101, %p102
      %p104 = scmp.ne.s32.totalorder %s96, %s98
      %p105 = scmp.eq.s32.totalorder %s22, 1
      %p106 = por %p104, %p105
      %p107 = scmp.ne.s32.totalorder %s98, %s99
      %p108 = scmp.eq.s32.totalorder %s22, 0
      %p109 = por %p107, %p108
      %p110 = scmp.ne.s32.totalorder %s98, %s99
      %p111 = scmp.eq.s32.totalorder %s23, 1
      %p112 = por %p110, %p111
      %p114 = scmp.ne.s32.totalorder %s99, %s113
      %p115 = scmp.eq.s32.totalorder %s23, 0
      %p116 = por %p114, %p115
      %s118 = sadd.s32 %s117, 1
      %p121 = scmp.eq.s32.totalorder %s17, 1
      %p122 = scmp.ne.s32.totalorder %s117, %s119
      %p123 = scmp.eq.s32.totalorder %s17, 0
      %p124 = por %p122, %p123
      %p125 = scmp.ne.s32.totalorder %s117, %s119
      %p126 = scmp.eq.s32.totalorder %s22, 1
      %p127 = por %p125, %p126
      %p128 = scmp.ne.s32.totalorder %s119, %s120
      %p129 = scmp.eq.s32.totalorder %s22, 0
      %p130 = por %p128, %p129
      %p131 = scmp.ne.s32.totalorder %s119, %s120
      %p132 = scmp.eq.s32.totalorder %s23, 1
      %p133 = por %p131, %p132
      %p135 = scmp.ne.s32.totalorder %s120, %s134
      %p136 = scmp.eq.s32.totalorder %s23, 0
      %p137 = por %p135, %p136
      %s139 = sadd.s32 %s138, 1
      %p142 = scmp.eq.s32.totalorder %s17, 1
      %p143 = scmp.ne.s32.totalorder %s138, %s140
      %p144 = scmp.eq.s32.totalorder %s17, 0
      %p145 = por %p143, %p144
      %p146 = scmp.ne.s32.totalorder %s138, %s140
      %p147 = scmp.eq.s32.totalorder %s22, 1
      %p148 = por %p146, %p147
      %p149 = scmp.ne.s32.totalorder %s140, %s141
      %p150 = scmp.eq.s32.totalorder %s22, 0
      %p151 = por %p149, %p150
      %p152 = scmp.ne.s32.totalorder %s140, %s141
      %p153 = scmp.eq.s32.totalorder %s23, 1
      %p154 = por %p152, %p153
      %p156 = scmp.ne.s32.totalorder %s141, %s155
      %p157 = scmp.eq.s32.totalorder %s23, 0
      %p158 = por %p156, %p157
      %s159 = ssub.s32 %s26, %s35
      %p160 = scmp.eq.s32.totalorder %s159, 0
      %s162 = sadd.s32 %s161, 1
      %s163 = scalar_select %p160, %s161, %s162
      %p166 = pneg %p160
      %p167 = scmp.eq.s32.totalorder %s17, 1
      %p168 = por %p166, %p167
      %p169 = scmp.ne.s32.totalorder %s161, %s164
      %p170 = scmp.eq.s32.totalorder %s17, 0
      %p171 = por %p169, %p170
      %p172 = scmp.ne.s32.totalorder %s161, %s164
      %p173 = scmp.eq.s32.totalorder %s22, 1
      %p174 = por %p172, %p173
      %p175 = scmp.ne.s32.totalorder %s164, %s165
      %p176 = scmp.eq.s32.totalorder %s22, 0
      %p177 = por %p175, %p176
      %p178 = scmp.ne.s32.totalorder %s164, %s165
      %p179 = scmp.eq.s32.totalorder %s23, 1
      %p180 = por %p178, %p179
      %p182 = scmp.ne.s32.totalorder %s165, %s181
      %p183 = scmp.eq.s32.totalorder %s23, 0
      %p184 = por %p182, %p183
      %s185 = ssub.s32 %s26, %s35
      %p186 = scmp.eq.s32.totalorder %s185, 0
      %s188 = sadd.s32 %s187, 1
      %s189 = scalar_select %p186, %s187, %s188
      %p192 = pneg %p186
      %p193 = scmp.eq.s32.totalorder %s17, 1
      %p194 = por %p192, %p193
      %p195 = scmp.ne.s32.totalorder %s187, %s190
      %p196 = scmp.eq.s32.totalorder %s17, 0
      %p197 = por %p195, %p196
      %p198 = scmp.ne.s32.totalorder %s187, %s190
      %p199 = scmp.eq.s32.totalorder %s22, 1
      %p200 = por %p198, %p199
      %p201 = scmp.ne.s32.totalorder %s190, %s191
      %p202 = scmp.eq.s32.totalorder %s22, 0
      %p203 = por %p201, %p202
      %p204 = scmp.ne.s32.totalorder %s190, %s191
      %p205 = scmp.eq.s32.totalorder %s23, 1
      %p206 = por %p204, %p205
      %p208 = scmp.ne.s32.totalorder %s191, %s207
      %p209 = scmp.eq.s32.totalorder %s23, 0
      %p210 = por %p208, %p209
      %s211 = ssub.s32 %s24, %s43
      %p212 = scmp.eq.s32.totalorder %s211, 0
      %s214 = sadd.s32 %s213, 1
      %s215 = scalar_select %p212, %s213, %s214
      %p218 = pneg %p212
      %p219 = scmp.eq.s32.totalorder %s17, 1
      %p220 = por %p218, %p219
      %p221 = scmp.ne.s32.totalorder %s213, %s216
      %p222 = scmp.eq.s32.totalorder %s17, 0
      %p223 = por %p221, %p222
      %p224 = scmp.ne.s32.totalorder %s213, %s216
      %p225 = scmp.eq.s32.totalorder %s22, 1
      %p226 = por %p224, %p225
      %p227 = scmp.ne.s32.totalorder %s216, %s217
      %p228 = scmp.eq.s32.totalorder %s22, 0
      %p229 = por %p227, %p228
      %p230 = scmp.ne.s32.totalorder %s216, %s217
      %p231 = scmp.eq.s32.totalorder %s23, 1
      %p232 = por %p230, %p231
      %p234 = scmp.ne.s32.totalorder %s217, %s233
      %p235 = scmp.eq.s32.totalorder %s23, 0
      %p236 = por %p234, %p235
      %s237 = smul.u32 %s26, %s25
      %s238 = smul.u32 %s35, %s39
      %s239 = ssub.s32 %s24, %s43
      %s240 = ssub.s32 %s237, %s238
      %s241 = sor.u32 %s239, %s240
      %p242 = scmp.eq.s32.totalorder %s241, 0
      %s244 = sadd.s32 %s243, 1
      %s245 = scalar_select %p242, %s243, %s244
      %p248 = pneg %p242
      %p249 = scmp.eq.s32.totalorder %s17, 1
      %p250 = por %p248, %p249
      %p251 = scmp.ne.s32.totalorder %s243, %s246
      %p252 = scmp.eq.s32.totalorder %s17, 0
      %p253 = por %p251, %p252
      %p254 = scmp.ne.s32.totalorder %s243, %s246
      %p255 = scmp.eq.s32.totalorder %s22, 1
      %p256 = por %p254, %p255
      %p257 = scmp.ne.s32.totalorder %s246, %s247
      %p258 = scmp.eq.s32.totalorder %s22, 0
      %p259 = por %p257, %p258
      %p260 = scmp.ne.s32.totalorder %s246, %s247
      %p261 = scmp.eq.s32.totalorder %s23, 1
      %p262 = por %p260, %p261
      %p264 = scmp.ne.s32.totalorder %s247, %s263
      %p265 = scmp.eq.s32.totalorder %s23, 0
      %p266 = por %p264, %p265
      %p267 = scmp.le.s32.totalorder 1, %s17
      %p268 = scmp.lt.s32.totalorder %s17, 3
      %p269 = pnand %p267, %p268
      %p270 = pneg %p269
      // Predicated region
      $region9: #{encoder_forward.9} parent=5 // pred_check
        _
      $region10: #{encoder_forward.9} parent=5 // pred_check_branch
        %272 = sbr.rel (%p269) target = $region12
      $region11: #{encoder_forward.9} parent=5 // pred_region
        %s273 = ssub.s32 %s17, 1
        // Predicated region
        $region13: #{encoder_forward.9} parent=11 // pred_check
          %p274 = pneg %p62
        $region14: #{encoder_forward.9} parent=11 // pred_check_branch
          %276 = sbr.rel (%p274) target = $region16
        $region15: #{encoder_forward.9} parent=11 // pred_region
          %s277 = smul.u32 2, %s27
          %p278 = scmp.lt.s32.totalorder %s277, 1
          %s279 = scalar_select %p278, %s277, 1
          %s280 = smul.addr %s279, 4
          %s281 = scalar_lea.vmem %s0, %s280
          %s282 = smul.u32 2, %s27
        $region16: #{encoder_forward.9} parent=11 // pred_fallthru
          _
        // Predicated region
        $region17: #{encoder_forward.9} parent=11 // pred_check
          %p283 = pneg %p88
        $region18: #{encoder_forward.9} parent=11 // pred_check_branch
          %285 = sbr.rel (%p283) target = $region20
        $region19: #{encoder_forward.9} parent=11 // pred_region
          %s286 = smul.u32 2, %s27
          %p287 = scmp.lt.s32.totalorder %s286, 1
          %s288 = scalar_select %p287, %s286, 1
          %s289 = smul.addr %s288, 4
          %s290 = scalar_lea.vmem %s1, %s289
          %s291 = smul.u32 2, %s27
        $region20: #{encoder_forward.9} parent=11 // pred_fallthru
          _
        // Predicated region
        $region21: #{encoder_forward.9} parent=11 // pred_check
          %p292 = pneg %p109
        $region22: #{encoder_forward.9} parent=11 // pred_check_branch
          %294 = sbr.rel (%p292) target = $region24
        $region23: #{encoder_forward.9} parent=11 // pred_region
          _
        $region24: #{encoder_forward.9} parent=11 // pred_fallthru
          _
        // Predicated region
        $region25: #{encoder_forward.9} parent=11 // pred_check
          %p295 = pneg %p130
        $region26: #{encoder_forward.9} parent=11 // pred_check_branch
          %297 = sbr.rel (%p295) target = $region28
        $region27: #{encoder_forward.9} parent=11 // pred_region
          %299 = vsyncadd [#allocation6], 0
          %s300 = sshll.u32 %s3, 4
          %s301 = int_to_ptr.hbm [resolvable:$true] %s300
          %s302 = sshll.u32 [#allocation5], 4
          %s303 = int_to_ptr.vmem [resolvable:$true] %s302
          %308 = dma.hbm_to_vmem [thread:$0]  %s301, 2048, %s303, [#allocation6], 512, 512, 32
        $region28: #{encoder_forward.9} parent=11 // pred_fallthru
          _
        // Predicated region
        $region29: #{encoder_forward.9} parent=11 // pred_check
          %p309 = pneg %p151
        $region30: #{encoder_forward.9} parent=11 // pred_check_branch
          %311 = sbr.rel (%p309) target = $region32
        $region31: #{encoder_forward.9} parent=11 // pred_region
          _
        $region32: #{encoder_forward.9} parent=11 // pred_fallthru
          _
        // Predicated region
        $region33: #{encoder_forward.9} parent=11 // pred_check
          %p312 = pneg %p177
        $region34: #{encoder_forward.9} parent=11 // pred_check_branch
          %314 = sbr.rel (%p312) target = $region36
        $region35: #{encoder_forward.9} parent=11 // pred_region
          %s315 = smul.u32 2, %s29
          %317 = vsyncadd [#allocation8], 0
          %s318 = smul.addr %s315, 4
          %s319 = scalar_lea.hbm %s5, %s318
          %s320 = sshll.u32 %s319, 4
          %s321 = int_to_ptr.hbm [resolvable:$true] %s320
          %s322 = sshll.u32 [#allocation7], 4
          %s323 = int_to_ptr.vmem [resolvable:$true] %s322
          %328 = dma.hbm_to_vmem [thread:$0]  %s321, 16384, %s323, [#allocation8], 128, 128, 8
        $region36: #{encoder_forward.9} parent=11 // pred_fallthru
          _
        // Predicated region
        $region37: #{encoder_forward.9} parent=11 // pred_check
          %p329 = pneg %p203
        $region38: #{encoder_forward.9} parent=11 // pred_check_branch
          %331 = sbr.rel (%p329) target = $region40
        $region39: #{encoder_forward.9} parent=11 // pred_region
          %s332 = smul.u32 2, %s29
          %p333 = scmp.lt.s32.totalorder %s332, 1
          %s334 = scalar_select %p333, %s332, 1
          %s335 = scalar_lea.vmem %s6, %s334
          %s336 = smul.u32 2, %s29
        $region40: #{encoder_forward.9} parent=11 // pred_fallthru
          _
      $region12: #{encoder_forward.9} parent=5 // pred_fallthru
        _
      %p337 = scmp.lt.s32.totalorder %s17, 2
      // Predicated region
      $region41: #{encoder_forward.9} parent=5 // pred_check
        %p338 = pneg %p337
      $region42: #{encoder_forward.9} parent=5 // pred_check_branch
        %340 = sbr.rel (%p338) target = $region44
      $region43: #{encoder_forward.9} parent=5 // pred_region
        _
      $region44: #{encoder_forward.9} parent=5 // pred_fallthru
        _
      %p341 = scmp.le.s32.totalorder 1, %s17
      %p342 = scmp.lt.s32.totalorder %s17, 3
      %p343 = pnand %p341, %p342
      %p344 = pneg %p343
      // Predicated region
      $region45: #{encoder_forward.9} parent=5 // pred_check
        _
      $region46: #{encoder_forward.9} parent=5 // pred_check_branch
        %346 = sbr.rel (%p343) target = $region48
      $region47: #{encoder_forward.9} parent=5 // pred_region
        %s347 = ssub.s32 %s17, 1
        // Predicated region
        $region49: #{encoder_forward.9} parent=47 // pred_check
          %p348 = pneg %p130
        $region50: #{encoder_forward.9} parent=47 // pred_check_branch
          %350 = sbr.rel (%p348) target = $region52
        $region51: #{encoder_forward.9} parent=47 // pred_region
          %352 = dma.done [#allocation6], 2048
        $region52: #{encoder_forward.9} parent=47 // pred_fallthru
          _
        // Predicated region
        $region53: #{encoder_forward.9} parent=47 // pred_check
          %p353 = pneg %p177
        $region54: #{encoder_forward.9} parent=47 // pred_check_branch
          %355 = sbr.rel (%p353) target = $region56
        $region55: #{encoder_forward.9} parent=47 // pred_region
          %357 = dma.done [#allocation8], 16384
        $region56: #{encoder_forward.9} parent=47 // pred_fallthru
          _
        %s358 = smul.u32 2, %s27
        %p359 = scmp.lt.s32.totalorder %s358, 1
        %s360 = scalar_select %p359, %s358, 1
        %s361 = smul.addr %s360, 4
        %s362 = scalar_lea.vmem %s0, %s361
        %p363 = pneg %p62
        %p364 = pneg %p59
        %s365 = smul.u32 2, %s27
        %p366 = scmp.lt.s32.totalorder %s365, 1
        %s367 = scalar_select %p366, %s365, 1
        %s368 = smul.addr %s367, 4
        %s369 = scalar_lea.vmem %s1, %s368
        %p370 = pneg %p88
        %p371 = pneg %p85
        %p372 = pneg %p109
        %p373 = pneg %p106
        %p374 = pneg %p130
        %p375 = pneg %p127
        %p376 = pneg %p151
        %p377 = pneg %p148
        %p378 = pneg %p177
        %p379 = pneg %p174
        %s380 = smul.u32 2, %s29
        %p381 = scmp.lt.s32.totalorder %s380, 1
        %s382 = scalar_select %p381, %s380, 1
        %s383 = scalar_lea.vmem %s6, %s382
        %p384 = pneg %p203
        %p385 = pneg %p200
        %p386 = pneg %p229
        %p387 = pneg %p226
        %s388 = smul.u32 2, %s27
        %p389 = scmp.lt.s32.totalorder %s388, 1
        %s390 = scalar_select %p389, %s388, 1
        %s391 = smul.addr %s390, 8
        %s392 = smul.addr %s391, 8
        %s393 = scalar_lea.vmem %s7, %s392
        %p394 = pneg %p259
        %p395 = pneg %p256
        %s396 = smul.u32 %s29, %s28
        %s397 = smul.u32 2, %s27
        %s398 = smul.u32 2, %s396
        %p399 = scmp.lt.s32.totalorder %s397, 1
        %s400 = scalar_select %p399, %s397, 1
        %p401 = scmp.lt.s32.totalorder %s398, 1
        %s402 = scalar_select %p401, %s398, 1
        %s403 = smul.addr %s400, 2
        %s404 = sadd.s32 %s402, %s403
        %s405 = smul.addr %s404, 8
        %s406 = scalar_lea.vmem %s8, %s405
        %s407 = smul.u32 2, %s27
        %p408 = scmp.lt.s32.totalorder %s407, 1
        %s409 = scalar_select %p408, %s407, 1
        %s410 = smul.addr %s409, 4
        %s411 = scalar_lea.vmem %s0, %s410
        %s412 = smul.u32 2, %s27
        %s413 = smul.u32 2, %s27
        %p414 = scmp.lt.s32.totalorder %s413, 1
        %s415 = scalar_select %p414, %s413, 1
        %s416 = smul.addr %s415, 4
        %s417 = scalar_lea.vmem %s1, %s416
        %s418 = smul.u32 2, %s27
        %s419 = smul.u32 2, %s29
        %s420 = smul.u32 2, %s29
        %p421 = scmp.lt.s32.totalorder %s420, 1
        %s422 = scalar_select %p421, %s420, 1
        %s423 = scalar_lea.vmem %s6, %s422
        %s424 = smul.u32 2, %s29
        %s425 = smul.u32 2, %s27
        %p426 = scmp.lt.s32.totalorder %s425, 1
        %s427 = scalar_select %p426, %s425, 1
        %s428 = smul.addr %s427, 8
        %s429 = smul.addr %s428, 8
        %s430 = scalar_lea.vmem %s7, %s429
        %s431 = smul.u32 2, %s27
        %s432 = smul.u32 %s29, %s28
        %s433 = smul.u32 2, %s27
        %s434 = smul.u32 2, %s432
        %p435 = scmp.lt.s32.totalorder %s433, 1
        %s436 = scalar_select %p435, %s433, 1
        %p437 = scmp.lt.s32.totalorder %s434, 1
        %s438 = scalar_select %p437, %s434, 1
        %s439 = smul.addr %s436, 2
        %s440 = sadd.s32 %s438, %s439
        %s441 = smul.addr %s440, 8
        %s442 = scalar_lea.vmem %s8, %s441
        %s443 = smul.u32 %s29, %s28
        %s444 = smul.u32 2, %s27
        %s445 = smul.u32 2, %s443
        %p447 = scmp.eq.s32.totalorder %s28, 0
        %p448 = scmp.eq.s32.totalorder %s29, 0
        %p449 = pnand %p447, %p448
        %p450 = pneg %p449
        // Predicated region
        $region57: #{encoder_forward.9} parent=47 // pred_check
          _
        $region58: #{encoder_forward.9} parent=47 // pred_check_branch
          %452 = sbr.rel (%p449) target = $region60
        $region59: #{encoder_forward.9} parent=47 // pred_region
          %v453 = vld [vmem:[%s411] sm:$0xf]
          %v454 = vld [vmem:[%s411 + $0x4] sm:$0xf]
          %v455 = vld [vmem:[%s2] sm:$0xff]
          %v456 = vld [vmem:[%s2 + $0x8] sm:$0xff]
          %v457 = vld [vmem:[%s2 + $0x10] sm:$0xff]
          %v458 = vld [vmem:[%s2 + $0x18] sm:$0xff]
          %v459 = vld [vmem:[%s2 + $0x20] sm:$0xff]
          %v460 = vld [vmem:[%s2 + $0x28] sm:$0xff]
          %v461 = vld [vmem:[%s2 + $0x30] sm:$0xff]
          %v462 = vld [vmem:[%s2 + $0x38] sm:$0xff]
          %v463 = vld [vmem:[%s2 + $0x40] sm:$0xff]
          %v464 = vld [vmem:[%s2 + $0x48] sm:$0xff]
          %v465 = vld [vmem:[%s2 + $0x50] sm:$0xff]
          %v466 = vld [vmem:[%s2 + $0x58] sm:$0xff]
          %v467 = vld [vmem:[%s2 + $0x60] sm:$0xff]
          %v468 = vld [vmem:[%s2 + $0x68] sm:$0xff]
          %v469 = vld [vmem:[%s2 + $0x70] sm:$0xff]
          %v470 = vld [vmem:[%s2 + $0x78] sm:$0xff]
          %v471 = vld [vmem:[%s417] sm:$0xf]
          %v472 = vld [vmem:[%s417 + $0x4] sm:$0xf]
          %v473 = vld [vmem:[#allocation5] sm:$0xff]
          %v474 = vld [vmem:[#allocation5 + $0x8] sm:$0xff]
          %v475 = vld [vmem:[#allocation5 + $0x10] sm:$0xff]
          %v476 = vld [vmem:[#allocation5 + $0x18] sm:$0xff]
          %v477 = vld [vmem:[#allocation5 + $0x20] sm:$0xff]
          %v478 = vld [vmem:[#allocation5 + $0x28] sm:$0xff]
          %v479 = vld [vmem:[#allocation5 + $0x30] sm:$0xff]
          %v480 = vld [vmem:[#allocation5 + $0x38] sm:$0xff]
          %v481 = vld [vmem:[#allocation5 + $0x40] sm:$0xff]
          %v482 = vld [vmem:[#allocation5 + $0x48] sm:$0xff]
          %v483 = vld [vmem:[#allocation5 + $0x50] sm:$0xff]
          %v484 = vld [vmem:[#allocation5 + $0x58] sm:$0xff]
          %v485 = vld [vmem:[#allocation5 + $0x60] sm:$0xff]
          %v486 = vld [vmem:[#allocation5 + $0x68] sm:$0xff]
          %v487 = vld [vmem:[#allocation5 + $0x70] sm:$0xff]
          %v488 = vld [vmem:[#allocation5 + $0x78] sm:$0xff]
          %v491 = vunpack.c.l.b16 %v471
          %v492 = vunpack.c.l.b16 %v472
          %v493 = vpack.c.b16 %v492, %v491
          %v510 = vunpack.c.l.b16 %v473
          %v511 = vunpack.c.h.b16 %v473
          %v512 = vunpack.c.l.b16 %v474
          %v513 = vunpack.c.h.b16 %v474
          %v514 = vunpack.c.l.b16 %v475
          %v515 = vunpack.c.h.b16 %v475
          %v516 = vunpack.c.l.b16 %v476
          %v517 = vunpack.c.h.b16 %v476
          %v518 = vunpack.c.l.b16 %v477
          %v519 = vunpack.c.h.b16 %v477
          %v520 = vunpack.c.l.b16 %v478
          %v521 = vunpack.c.h.b16 %v478
          %v522 = vunpack.c.l.b16 %v479
          %v523 = vunpack.c.h.b16 %v479
          %v524 = vunpack.c.l.b16 %v480
          %v525 = vunpack.c.h.b16 %v480
          %v526 = vunpack.c.l.b16 %v481
          %v527 = vunpack.c.h.b16 %v481
          %v528 = vunpack.c.l.b16 %v482
          %v529 = vunpack.c.h.b16 %v482
          %v530 = vunpack.c.l.b16 %v483
          %v531 = vunpack.c.h.b16 %v483
          %v532 = vunpack.c.l.b16 %v484
          %v533 = vunpack.c.h.b16 %v484
          %v534 = vunpack.c.l.b16 %v485
          %v535 = vunpack.c.h.b16 %v485
          %v536 = vunpack.c.l.b16 %v486
          %v537 = vunpack.c.h.b16 %v486
          %v538 = vunpack.c.l.b16 %v487
          %v539 = vunpack.c.h.b16 %v487
          %v540 = vunpack.c.l.b16 %v488
          %v541 = vunpack.c.h.b16 %v488
          %v542 = vpack.c.b16 %v518, %v510
          %v543 = vpack.c.b16 %v519, %v511
          %v544 = vpack.c.b16 %v520, %v512
          %v545 = vpack.c.b16 %v521, %v513
          %v546 = vpack.c.b16 %v522, %v514
          %v547 = vpack.c.b16 %v523, %v515
          %v548 = vpack.c.b16 %v524, %v516
          %v549 = vpack.c.b16 %v525, %v517
          %v550 = vpack.c.b16 %v534, %v526
          %v551 = vpack.c.b16 %v535, %v527
          %v552 = vpack.c.b16 %v536, %v528
          %v553 = vpack.c.b16 %v537, %v529
          %v554 = vpack.c.b16 %v538, %v530
          %v555 = vpack.c.b16 %v539, %v531
          %v556 = vpack.c.b16 %v540, %v532
          %v557 = vpack.c.b16 %v541, %v533
          %vm574 = vcmask 261120
          %v576 = vsel %vm574, %v493, 0
          %578 = vmatpush.bf16.msra.mxu0 0
          %579 = vmatpush.bf16.msra.mxu0 0
          %580 = vmatpush.bf16.msra.mxu0 0
          %581 = vmatpush.bf16.msra.mxu0 0
          %582 = vmatpush.bf16.msra.mxu0 0
          %583 = vmatpush.bf16.msra.mxu0 0
          %584 = vmatpush.bf16.msra.mxu0 %v550
          %585 = vmatpush.bf16.msra.mxu0 %v542
          %586 = vmatmul.bf16.gmra.mxu0 %v576
          %v587 = vpop.f32.mrf.mxu0
          %v588 = vadd.f32 0.0, %v587
          %v589 = vpop.f32.mrf.mxu0
          %v590 = vadd.f32 0.0, %v589
          %591 = vdwg.mxu0
          %592 = vmatpush.bf16.msra.mxu0 0
          %593 = vmatpush.bf16.msra.mxu0 0
          %594 = vmatpush.bf16.msra.mxu0 0
          %595 = vmatpush.bf16.msra.mxu0 0
          %596 = vmatpush.bf16.msra.mxu0 0
          %597 = vmatpush.bf16.msra.mxu0 0
          %598 = vmatpush.bf16.msra.mxu0 %v551
          %599 = vmatpush.bf16.msra.mxu0 %v543
          %600 = vmatmul.bf16.gmra.mxu0 %v576
          %v601 = vpop.f32.mrf.mxu0
          %v602 = vadd.f32 0.0, %v601
          %v603 = vpop.f32.mrf.mxu0
          %v604 = vadd.f32 0.0, %v603
          %605 = vdwg.mxu0
          %606 = vmatpush.bf16.msra.mxu0 0
          %607 = vmatpush.bf16.msra.mxu0 0
          %608 = vmatpush.bf16.msra.mxu0 0
          %609 = vmatpush.bf16.msra.mxu0 0
          %610 = vmatpush.bf16.msra.mxu0 0
          %611 = vmatpush.bf16.msra.mxu0 0
          %612 = vmatpush.bf16.msra.mxu0 %v552
          %613 = vmatpush.bf16.msra.mxu0 %v544
          %614 = vmatmul.bf16.gmra.mxu0 %v576
          %v615 = vpop.f32.mrf.mxu0
          %v616 = vadd.f32 0.0, %v615
          %v617 = vpop.f32.mrf.mxu0
          %v618 = vadd.f32 0.0, %v617
          %619 = vdwg.mxu0
          %620 = vmatpush.bf16.msra.mxu0 0
          %621 = vmatpush.bf16.msra.mxu0 0
          %622 = vmatpush.bf16.msra.mxu0 0
          %623 = vmatpush.bf16.msra.mxu0 0
          %624 = vmatpush.bf16.msra.mxu0 0
          %625 = vmatpush.bf16.msra.mxu0 0
          %626 = vmatpush.bf16.msra.mxu0 %v553
          %627 = vmatpush.bf16.msra.mxu0 %v545
          %628 = vmatmul.bf16.gmra.mxu0 %v576
          %v629 = vpop.f32.mrf.mxu0
          %v630 = vadd.f32 0.0, %v629
          %v631 = vpop.f32.mrf.mxu0
          %v632 = vadd.f32 0.0, %v631
          %633 = vdwg.mxu0
          %634 = vmatpush.bf16.msra.mxu0 0
          %635 = vmatpush.bf16.msra.mxu0 0
          %636 = vmatpush.bf16.msra.mxu0 0
          %637 = vmatpush.bf16.msra.mxu0 0
          %638 = vmatpush.bf16.msra.mxu0 0
          %639 = vmatpush.bf16.msra.mxu0 0
          %640 = vmatpush.bf16.msra.mxu0 %v554
          %641 = vmatpush.bf16.msra.mxu0 %v546
          %642 = vmatmul.bf16.gmra.mxu0 %v576
          %v643 = vpop.f32.mrf.mxu0
          %v644 = vadd.f32 0.0, %v643
          %v645 = vpop.f32.mrf.mxu0
          %v646 = vadd.f32 0.0, %v645
          %647 = vdwg.mxu0
          %648 = vmatpush.bf16.msra.mxu0 0
          %649 = vmatpush.bf16.msra.mxu0 0
          %650 = vmatpush.bf16.msra.mxu0 0
          %651 = vmatpush.bf16.msra.mxu0 0
          %652 = vmatpush.bf16.msra.mxu0 0
          %653 = vmatpush.bf16.msra.mxu0 0
          %654 = vmatpush.bf16.msra.mxu0 %v555
          %655 = vmatpush.bf16.msra.mxu0 %v547
          %656 = vmatmul.bf16.gmra.mxu0 %v576
          %v657 = vpop.f32.mrf.mxu0
          %v658 = vadd.f32 0.0, %v657
          %v659 = vpop.f32.mrf.mxu0
          %v660 = vadd.f32 0.0, %v659
          %661 = vdwg.mxu0
          %662 = vmatpush.bf16.msra.mxu0 0
          %663 = vmatpush.bf16.msra.mxu0 0
          %664 = vmatpush.bf16.msra.mxu0 0
          %665 = vmatpush.bf16.msra.mxu0 0
          %666 = vmatpush.bf16.msra.mxu0 0
          %667 = vmatpush.bf16.msra.mxu0 0
          %668 = vmatpush.bf16.msra.mxu0 %v556
          %669 = vmatpush.bf16.msra.mxu0 %v548
          %670 = vmatmul.bf16.gmra.mxu0 %v576
          %v671 = vpop.f32.mrf.mxu0
          %v672 = vadd.f32 0.0, %v671
          %v673 = vpop.f32.mrf.mxu0
          %v674 = vadd.f32 0.0, %v673
          %675 = vdwg.mxu0
          %676 = vmatpush.bf16.msra.mxu0 0
          %677 = vmatpush.bf16.msra.mxu0 0
          %678 = vmatpush.bf16.msra.mxu0 0
          %679 = vmatpush.bf16.msra.mxu0 0
          %680 = vmatpush.bf16.msra.mxu0 0
          %681 = vmatpush.bf16.msra.mxu0 0
          %682 = vmatpush.bf16.msra.mxu0 %v557
          %683 = vmatpush.bf16.msra.mxu0 %v549
          %684 = vmatmul.bf16.gmra.mxu0 %v576
          %v685 = vpop.f32.mrf.mxu0
          %v686 = vadd.f32 0.0, %v685
          %v687 = vpop.f32.mrf.mxu0
          %v688 = vadd.f32 0.0, %v687
          %689 = vdwg.mxu0
          %v692 = vunpack.c.l.b16 %v453
          %v693 = vunpack.c.l.b16 %v454
          %v694 = vpack.c.b16 %v693, %v692
          %v711 = vunpack.c.l.b16 %v455
          %v712 = vunpack.c.h.b16 %v455
          %v713 = vunpack.c.l.b16 %v456
          %v714 = vunpack.c.h.b16 %v456
          %v715 = vunpack.c.l.b16 %v457
          %v716 = vunpack.c.h.b16 %v457
          %v717 = vunpack.c.l.b16 %v458
          %v718 = vunpack.c.h.b16 %v458
          %v719 = vunpack.c.l.b16 %v459
          %v720 = vunpack.c.h.b16 %v459
          %v721 = vunpack.c.l.b16 %v460
          %v722 = vunpack.c.h.b16 %v460
          %v723 = vunpack.c.l.b16 %v461
          %v724 = vunpack.c.h.b16 %v461
          %v725 = vunpack.c.l.b16 %v462
          %v726 = vunpack.c.h.b16 %v462
          %v727 = vunpack.c.l.b16 %v463
          %v728 = vunpack.c.h.b16 %v463
          %v729 = vunpack.c.l.b16 %v464
          %v730 = vunpack.c.h.b16 %v464
          %v731 = vunpack.c.l.b16 %v465
          %v732 = vunpack.c.h.b16 %v465
          %v733 = vunpack.c.l.b16 %v466
          %v734 = vunpack.c.h.b16 %v466
          %v735 = vunpack.c.l.b16 %v467
          %v736 = vunpack.c.h.b16 %v467
          %v737 = vunpack.c.l.b16 %v468
          %v738 = vunpack.c.h.b16 %v468
          %v739 = vunpack.c.l.b16 %v469
          %v740 = vunpack.c.h.b16 %v469
          %v741 = vunpack.c.l.b16 %v470
          %v742 = vunpack.c.h.b16 %v470
          %v743 = vpack.c.b16 %v719, %v711
          %v744 = vpack.c.b16 %v720, %v712
          %v745 = vpack.c.b16 %v721, %v713
          %v746 = vpack.c.b16 %v722, %v714
          %v747 = vpack.c.b16 %v723, %v715
          %v748 = vpack.c.b16 %v724, %v716
          %v749 = vpack.c.b16 %v725, %v717
          %v750 = vpack.c.b16 %v726, %v718
          %v751 = vpack.c.b16 %v735, %v727
          %v752 = vpack.c.b16 %v736, %v728
          %v753 = vpack.c.b16 %v737, %v729
          %v754 = vpack.c.b16 %v738, %v730
          %v755 = vpack.c.b16 %v739, %v731
          %v756 = vpack.c.b16 %v740, %v732
          %v757 = vpack.c.b16 %v741, %v733
          %v758 = vpack.c.b16 %v742, %v734
          %v776 = vsel %vm574, %v694, 0
          %778 = vmatpush.bf16.msra.mxu0 0
          %779 = vmatpush.bf16.msra.mxu0 0
          %780 = vmatpush.bf16.msra.mxu0 0
          %781 = vmatpush.bf16.msra.mxu0 0
          %782 = vmatpush.bf16.msra.mxu0 0
          %783 = vmatpush.bf16.msra.mxu0 0
          %784 = vmatpush.bf16.msra.mxu0 %v751
          %785 = vmatpush.bf16.msra.mxu0 %v743
          %786 = vmatmul.bf16.gmra.mxu0 %v776
          %v787 = vpop.f32.mrf.mxu0
          %v788 = vadd.f32 %v588, %v787
          %v789 = vpop.f32.mrf.mxu0
          %v790 = vadd.f32 %v590, %v789
          %791 = vdwg.mxu0
          %792 = vmatpush.bf16.msra.mxu0 0
          %793 = vmatpush.bf16.msra.mxu0 0
          %794 = vmatpush.bf16.msra.mxu0 0
          %795 = vmatpush.bf16.msra.mxu0 0
          %796 = vmatpush.bf16.msra.mxu0 0
          %797 = vmatpush.bf16.msra.mxu0 0
          %798 = vmatpush.bf16.msra.mxu0 %v752
          %799 = vmatpush.bf16.msra.mxu0 %v744
          %800 = vmatmul.bf16.gmra.mxu0 %v776
          %v801 = vpop.f32.mrf.mxu0
          %v802 = vadd.f32 %v602, %v801
          %v803 = vpop.f32.mrf.mxu0
          %v804 = vadd.f32 %v604, %v803
          %805 = vdwg.mxu0
          %806 = vmatpush.bf16.msra.mxu0 0
          %807 = vmatpush.bf16.msra.mxu0 0
          %808 = vmatpush.bf16.msra.mxu0 0
          %809 = vmatpush.bf16.msra.mxu0 0
          %810 = vmatpush.bf16.msra.mxu0 0
          %811 = vmatpush.bf16.msra.mxu0 0
          %812 = vmatpush.bf16.msra.mxu0 %v753
          %813 = vmatpush.bf16.msra.mxu0 %v745
          %814 = vmatmul.bf16.gmra.mxu0 %v776
          %v815 = vpop.f32.mrf.mxu0
          %v816 = vadd.f32 %v616, %v815
          %v817 = vpop.f32.mrf.mxu0
          %v818 = vadd.f32 %v618, %v817
          %819 = vdwg.mxu0
          %820 = vmatpush.bf16.msra.mxu0 0
          %821 = vmatpush.bf16.msra.mxu0 0
          %822 = vmatpush.bf16.msra.mxu0 0
          %823 = vmatpush.bf16.msra.mxu0 0
          %824 = vmatpush.bf16.msra.mxu0 0
          %825 = vmatpush.bf16.msra.mxu0 0
          %826 = vmatpush.bf16.msra.mxu0 %v754
          %827 = vmatpush.bf16.msra.mxu0 %v746
          %828 = vmatmul.bf16.gmra.mxu0 %v776
          %v829 = vpop.f32.mrf.mxu0
          %v830 = vadd.f32 %v630, %v829
          %v831 = vpop.f32.mrf.mxu0
          %v832 = vadd.f32 %v632, %v831
          %833 = vdwg.mxu0
          %834 = vmatpush.bf16.msra.mxu0 0
          %835 = vmatpush.bf16.msra.mxu0 0
          %836 = vmatpush.bf16.msra.mxu0 0
          %837 = vmatpush.bf16.msra.mxu0 0
          %838 = vmatpush.bf16.msra.mxu0 0
          %839 = vmatpush.bf16.msra.mxu0 0
          %840 = vmatpush.bf16.msra.mxu0 %v755
          %841 = vmatpush.bf16.msra.mxu0 %v747
          %842 = vmatmul.bf16.gmra.mxu0 %v776
          %v843 = vpop.f32.mrf.mxu0
          %v844 = vadd.f32 %v644, %v843
          %v845 = vpop.f32.mrf.mxu0
          %v846 = vadd.f32 %v646, %v845
          %847 = vdwg.mxu0
          %848 = vmatpush.bf16.msra.mxu0 0
          %849 = vmatpush.bf16.msra.mxu0 0
          %850 = vmatpush.bf16.msra.mxu0 0
          %851 = vmatpush.bf16.msra.mxu0 0
          %852 = vmatpush.bf16.msra.mxu0 0
          %853 = vmatpush.bf16.msra.mxu0 0
          %854 = vmatpush.bf16.msra.mxu0 %v756
          %855 = vmatpush.bf16.msra.mxu0 %v748
          %856 = vmatmul.bf16.gmra.mxu0 %v776
          %v857 = vpop.f32.mrf.mxu0
          %v858 = vadd.f32 %v658, %v857
          %v859 = vpop.f32.mrf.mxu0
          %v860 = vadd.f32 %v660, %v859
          %861 = vdwg.mxu0
          %862 = vmatpush.bf16.msra.mxu0 0
          %863 = vmatpush.bf16.msra.mxu0 0
          %864 = vmatpush.bf16.msra.mxu0 0
          %865 = vmatpush.bf16.msra.mxu0 0
          %866 = vmatpush.bf16.msra.mxu0 0
          %867 = vmatpush.bf16.msra.mxu0 0
          %868 = vmatpush.bf16.msra.mxu0 %v757
          %869 = vmatpush.bf16.msra.mxu0 %v749
          %870 = vmatmul.bf16.gmra.mxu0 %v776
          %v871 = vpop.f32.mrf.mxu0
          %v872 = vadd.f32 %v672, %v871
          %v873 = vpop.f32.mrf.mxu0
          %v874 = vadd.f32 %v674, %v873
          %875 = vdwg.mxu0
          %876 = vmatpush.bf16.msra.mxu0 0
          %877 = vmatpush.bf16.msra.mxu0 0
          %878 = vmatpush.bf16.msra.mxu0 0
          %879 = vmatpush.bf16.msra.mxu0 0
          %880 = vmatpush.bf16.msra.mxu0 0
          %881 = vmatpush.bf16.msra.mxu0 0
          %882 = vmatpush.bf16.msra.mxu0 %v758
          %883 = vmatpush.bf16.msra.mxu0 %v750
          %884 = vmatmul.bf16.gmra.mxu0 %v776
          %v885 = vpop.f32.mrf.mxu0
          %v886 = vadd.f32 %v686, %v885
          %v887 = vpop.f32.mrf.mxu0
          %v888 = vadd.f32 %v688, %v887
          %889 = vdwg.mxu0
          %v890 = vld [vmem:[%s4] sm:$0xff]
          %v892 = vperm.slane %v890, 0
          %v893 = vperm.slane %v890, 1
          %v894 = vperm.slane %v890, 2
          %v895 = vperm.slane %v890, 3
          %v896 = vperm.slane %v890, 4
          %v897 = vperm.slane %v890, 5
          %v898 = vperm.slane %v890, 6
          %v899 = vperm.slane %v890, 7
          %v908 = vadd.f32 %v788, %v892
          %v909 = vadd.f32 %v802, %v893
          %v910 = vadd.f32 %v816, %v894
          %v911 = vadd.f32 %v830, %v895
          %v912 = vadd.f32 %v844, %v896
          %v913 = vadd.f32 %v858, %v897
          %v914 = vadd.f32 %v872, %v898
          %v915 = vadd.f32 %v886, %v899
          %v916 = vadd.f32 %v790, %v892
          %v917 = vadd.f32 %v804, %v893
          %v918 = vadd.f32 %v818, %v894
          %v919 = vadd.f32 %v832, %v895
          %v920 = vadd.f32 %v846, %v896
          %v921 = vadd.f32 %v860, %v897
          %v922 = vadd.f32 %v874, %v898
          %v923 = vadd.f32 %v888, %v899
          %v924 = vmax.f32 %v908, 0.0
          %v925 = vmax.f32 %v909, 0.0
          %v926 = vmax.f32 %v910, 0.0
          %v927 = vmax.f32 %v911, 0.0
          %v928 = vmax.f32 %v912, 0.0
          %v929 = vmax.f32 %v913, 0.0
          %v930 = vmax.f32 %v914, 0.0
          %v931 = vmax.f32 %v915, 0.0
          %v932 = vmax.f32 %v916, 0.0
          %v933 = vmax.f32 %v917, 0.0
          %v934 = vmax.f32 %v918, 0.0
          %v935 = vmax.f32 %v919, 0.0
          %v936 = vmax.f32 %v920, 0.0
          %v937 = vmax.f32 %v921, 0.0
          %v938 = vmax.f32 %v922, 0.0
          %v939 = vmax.f32 %v923, 0.0
          %940 = vst [vmem:[%s430] sm:$0xff] %v924
          %941 = vst [vmem:[%s430 + $0x8] sm:$0xff] %v925
          %942 = vst [vmem:[%s430 + $0x10] sm:$0xff] %v926
          %943 = vst [vmem:[%s430 + $0x18] sm:$0xff] %v927
          %944 = vst [vmem:[%s430 + $0x20] sm:$0xff] %v928
          %945 = vst [vmem:[%s430 + $0x28] sm:$0xff] %v929
          %946 = vst [vmem:[%s430 + $0x30] sm:$0xff] %v930
          %947 = vst [vmem:[%s430 + $0x38] sm:$0xff] %v931
          %948 = vst [vmem:[%s430 + $0x40] sm:$0xff] %v932
          %949 = vst [vmem:[%s430 + $0x48] sm:$0xff] %v933
          %950 = vst [vmem:[%s430 + $0x50] sm:$0xff] %v934
          %951 = vst [vmem:[%s430 + $0x58] sm:$0xff] %v935
          %952 = vst [vmem:[%s430 + $0x60] sm:$0xff] %v936
          %953 = vst [vmem:[%s430 + $0x68] sm:$0xff] %v937
          %954 = vst [vmem:[%s430 + $0x70] sm:$0xff] %v938
          %955 = vst [vmem:[%s430 + $0x78] sm:$0xff] %v939
          %v956 = vpack.c.bf16 %v925, %v924
          %v957 = vpack.c.bf16 %v927, %v926
          %v958 = vpack.c.bf16 %v929, %v928
          %v959 = vpack.c.bf16 %v931, %v930
          %v960 = vpack.c.bf16 %v933, %v932
          %v961 = vpack.c.bf16 %v935, %v934
          %v962 = vpack.c.bf16 %v937, %v936
          %v963 = vpack.c.bf16 %v939, %v938
          %964 = vst [vmem:[#allocation2] sm:$0xff] %v956
          %965 = vst [vmem:[#allocation2 + $0x8] sm:$0xff] %v957
          %966 = vst [vmem:[#allocation2 + $0x10] sm:$0xff] %v958
          %967 = vst [vmem:[#allocation2 + $0x18] sm:$0xff] %v959
          %968 = vst [vmem:[#allocation2 + $0x20] sm:$0xff] %v960
          %969 = vst [vmem:[#allocation2 + $0x28] sm:$0xff] %v961
          %970 = vst [vmem:[#allocation2 + $0x30] sm:$0xff] %v962
          %971 = vst [vmem:[#allocation2 + $0x38] sm:$0xff] %v963
          %vm972 = vcmask 7168
          %973 = vst.msk [vmem:[#allocation3] sm:$0xff] %vm972, -inf
          %974 = vst.msk [vmem:[#allocation3 + $0x8] sm:$0xff] %vm972, -inf
          %975 = vst.msk [vmem:[#allocation4] sm:$0xff] %vm972, 0.0
          %976 = vst.msk [vmem:[#allocation4 + $0x8] sm:$0xff] %vm972, 0.0
        $region60: #{encoder_forward.9} parent=47 // pred_fallthru
          _
        %v977 = vld [vmem:[#allocation2] sm:$0xff]
        %v978 = vld [vmem:[#allocation2 + $0x8] sm:$0xff]
        %v979 = vld [vmem:[#allocation2 + $0x10] sm:$0xff]
        %v980 = vld [vmem:[#allocation2 + $0x18] sm:$0xff]
        %v981 = vld [vmem:[#allocation2 + $0x20] sm:$0xff]
        %v982 = vld [vmem:[#allocation2 + $0x28] sm:$0xff]
        %v983 = vld [vmem:[#allocation2 + $0x30] sm:$0xff]
        %v984 = vld [vmem:[#allocation2 + $0x38] sm:$0xff]
        %v985 = vld [vmem:[#allocation7] sm:$0xff]
        %v986 = vld [vmem:[#allocation7 + $0x8] sm:$0xff]
        %v987 = vld [vmem:[#allocation7 + $0x10] sm:$0xff]
        %v988 = vld [vmem:[#allocation7 + $0x18] sm:$0xff]
        %v989 = vld [vmem:[#allocation7 + $0x20] sm:$0xff]
        %v990 = vld [vmem:[#allocation7 + $0x28] sm:$0xff]
        %v991 = vld [vmem:[#allocation7 + $0x30] sm:$0xff]
        %v992 = vld [vmem:[#allocation7 + $0x38] sm:$0xff]
        %v993 = vld [vmem:[#allocation7 + $0x40] sm:$0xff]
        %v994 = vld [vmem:[#allocation7 + $0x48] sm:$0xff]
        %v995 = vld [vmem:[#allocation7 + $0x50] sm:$0xff]
        %v996 = vld [vmem:[#allocation7 + $0x58] sm:$0xff]
        %v997 = vld [vmem:[#allocation7 + $0x60] sm:$0xff]
        %v998 = vld [vmem:[#allocation7 + $0x68] sm:$0xff]
        %v999 = vld [vmem:[#allocation7 + $0x70] sm:$0xff]
        %v1000 = vld [vmem:[#allocation7 + $0x78] sm:$0xff]
        %v1001 = vld [vmem:[#allocation7 + $0x80] sm:$0xff]
        %v1002 = vld [vmem:[#allocation7 + $0x88] sm:$0xff]
        %v1003 = vld [vmem:[#allocation7 + $0x90] sm:$0xff]
        %v1004 = vld [vmem:[#allocation7 + $0x98] sm:$0xff]
        %v1005 = vld [vmem:[#allocation7 + $0xa0] sm:$0xff]
        %v1006 = vld [vmem:[#allocation7 + $0xa8] sm:$0xff]
        %v1007 = vld [vmem:[#allocation7 + $0xb0] sm:$0xff]
        %v1008 = vld [vmem:[#allocation7 + $0xb8] sm:$0xff]
        %v1009 = vld [vmem:[#allocation7 + $0xc0] sm:$0xff]
        %v1010 = vld [vmem:[#allocation7 + $0xc8] sm:$0xff]
        %v1011 = vld [vmem:[#allocation7 + $0xd0] sm:$0xff]
        %v1012 = vld [vmem:[#allocation7 + $0xd8] sm:$0xff]
        %v1013 = vld [vmem:[#allocation7 + $0xe0] sm:$0xff]
        %v1014 = vld [vmem:[#allocation7 + $0xe8] sm:$0xff]
        %v1015 = vld [vmem:[#allocation7 + $0xf0] sm:$0xff]
        %v1016 = vld [vmem:[#allocation7 + $0xf8] sm:$0xff]
        %v1017 = vld [vmem:[#allocation7 + $0x100] sm:$0xff]
        %v1018 = vld [vmem:[#allocation7 + $0x108] sm:$0xff]
        %v1019 = vld [vmem:[#allocation7 + $0x110] sm:$0xff]
        %v1020 = vld [vmem:[#allocation7 + $0x118] sm:$0xff]
        %v1021 = vld [vmem:[#allocation7 + $0x120] sm:$0xff]
        %v1022 = vld [vmem:[#allocation7 + $0x128] sm:$0xff]
        %v1023 = vld [vmem:[#allocation7 + $0x130] sm:$0xff]
        %v1024 = vld [vmem:[#allocation7 + $0x138] sm:$0xff]
        %v1025 = vld [vmem:[#allocation7 + $0x140] sm:$0xff]
        %v1026 = vld [vmem:[#allocation7 + $0x148] sm:$0xff]
        %v1027 = vld [vmem:[#allocation7 + $0x150] sm:$0xff]
        %v1028 = vld [vmem:[#allocation7 + $0x158] sm:$0xff]
        %v1029 = vld [vmem:[#allocation7 + $0x160] sm:$0xff]
        %v1030 = vld [vmem:[#allocation7 + $0x168] sm:$0xff]
        %v1031 = vld [vmem:[#allocation7 + $0x170] sm:$0xff]
        %v1032 = vld [vmem:[#allocation7 + $0x178] sm:$0xff]
        %v1033 = vld [vmem:[#allocation7 + $0x180] sm:$0xff]
        %v1034 = vld [vmem:[#allocation7 + $0x188] sm:$0xff]
        %v1035 = vld [vmem:[#allocation7 + $0x190] sm:$0xff]
        %v1036 = vld [vmem:[#allocation7 + $0x198] sm:$0xff]
        %v1037 = vld [vmem:[#allocation7 + $0x1a0] sm:$0xff]
        %v1038 = vld [vmem:[#allocation7 + $0x1a8] sm:$0xff]
        %v1039 = vld [vmem:[#allocation7 + $0x1b0] sm:$0xff]
        %v1040 = vld [vmem:[#allocation7 + $0x1b8] sm:$0xff]
        %v1041 = vld [vmem:[#allocation7 + $0x1c0] sm:$0xff]
        %v1042 = vld [vmem:[#allocation7 + $0x1c8] sm:$0xff]
        %v1043 = vld [vmem:[#allocation7 + $0x1d0] sm:$0xff]
        %v1044 = vld [vmem:[#allocation7 + $0x1d8] sm:$0xff]
        %v1045 = vld [vmem:[#allocation7 + $0x1e0] sm:$0xff]
        %v1046 = vld [vmem:[#allocation7 + $0x1e8] sm:$0xff]
        %v1047 = vld [vmem:[#allocation7 + $0x1f0] sm:$0xff]
        %v1048 = vld [vmem:[#allocation7 + $0x1f8] sm:$0xff]
        %v1049 = vld [vmem:[#allocation7 + $0x200] sm:$0xff]
        %v1050 = vld [vmem:[#allocation7 + $0x208] sm:$0xff]
        %v1051 = vld [vmem:[#allocation7 + $0x210] sm:$0xff]
        %v1052 = vld [vmem:[#allocation7 + $0x218] sm:$0xff]
        %v1053 = vld [vmem:[#allocation7 + $0x220] sm:$0xff]
        %v1054 = vld [vmem:[#allocation7 + $0x228] sm:$0xff]
        %v1055 = vld [vmem:[#allocation7 + $0x230] sm:$0xff]
        %v1056 = vld [vmem:[#allocation7 + $0x238] sm:$0xff]
        %v1057 = vld [vmem:[#allocation7 + $0x240] sm:$0xff]
        %v1058 = vld [vmem:[#allocation7 + $0x248] sm:$0xff]
        %v1059 = vld [vmem:[#allocation7 + $0x250] sm:$0xff]
        %v1060 = vld [vmem:[#allocation7 + $0x258] sm:$0xff]
        %v1061 = vld [vmem:[#allocation7 + $0x260] sm:$0xff]
        %v1062 = vld [vmem:[#allocation7 + $0x268] sm:$0xff]
        %v1063 = vld [vmem:[#allocation7 + $0x270] sm:$0xff]
        %v1064 = vld [vmem:[#allocation7 + $0x278] sm:$0xff]
        %v1065 = vld [vmem:[#allocation7 + $0x280] sm:$0xff]
        %v1066 = vld [vmem:[#allocation7 + $0x288] sm:$0xff]
        %v1067 = vld [vmem:[#allocation7 + $0x290] sm:$0xff]
        %v1068 = vld [vmem:[#allocation7 + $0x298] sm:$0xff]
        %v1069 = vld [vmem:[#allocation7 + $0x2a0] sm:$0xff]
        %v1070 = vld [vmem:[#allocation7 + $0x2a8] sm:$0xff]
        %v1071 = vld [vmem:[#allocation7 + $0x2b0] sm:$0xff]
        %v1072 = vld [vmem:[#allocation7 + $0x2b8] sm:$0xff]
        %v1073 = vld [vmem:[#allocation7 + $0x2c0] sm:$0xff]
        %v1074 = vld [vmem:[#allocation7 + $0x2c8] sm:$0xff]
        %v1075 = vld [vmem:[#allocation7 + $0x2d0] sm:$0xff]
        %v1076 = vld [vmem:[#allocation7 + $0x2d8] sm:$0xff]
        %v1077 = vld [vmem:[#allocation7 + $0x2e0] sm:$0xff]
        %v1078 = vld [vmem:[#allocation7 + $0x2e8] sm:$0xff]
        %v1079 = vld [vmem:[#allocation7 + $0x2f0] sm:$0xff]
        %v1080 = vld [vmem:[#allocation7 + $0x2f8] sm:$0xff]
        %v1081 = vld [vmem:[#allocation7 + $0x300] sm:$0xff]
        %v1082 = vld [vmem:[#allocation7 + $0x308] sm:$0xff]
        %v1083 = vld [vmem:[#allocation7 + $0x310] sm:$0xff]
        %v1084 = vld [vmem:[#allocation7 + $0x318] sm:$0xff]
        %v1085 = vld [vmem:[#allocation7 + $0x320] sm:$0xff]
        %v1086 = vld [vmem:[#allocation7 + $0x328] sm:$0xff]
        %v1087 = vld [vmem:[#allocation7 + $0x330] sm:$0xff]
        %v1088 = vld [vmem:[#allocation7 + $0x338] sm:$0xff]
        %v1089 = vld [vmem:[#allocation7 + $0x340] sm:$0xff]
        %v1090 = vld [vmem:[#allocation7 + $0x348] sm:$0xff]
        %v1091 = vld [vmem:[#allocation7 + $0x350] sm:$0xff]
        %v1092 = vld [vmem:[#allocation7 + $0x358] sm:$0xff]
        %v1093 = vld [vmem:[#allocation7 + $0x360] sm:$0xff]
        %v1094 = vld [vmem:[#allocation7 + $0x368] sm:$0xff]
        %v1095 = vld [vmem:[#allocation7 + $0x370] sm:$0xff]
        %v1096 = vld [vmem:[#allocation7 + $0x378] sm:$0xff]
        %v1097 = vld [vmem:[#allocation7 + $0x380] sm:$0xff]
        %v1098 = vld [vmem:[#allocation7 + $0x388] sm:$0xff]
        %v1099 = vld [vmem:[#allocation7 + $0x390] sm:$0xff]
        %v1100 = vld [vmem:[#allocation7 + $0x398] sm:$0xff]
        %v1101 = vld [vmem:[#allocation7 + $0x3a0] sm:$0xff]
        %v1102 = vld [vmem:[#allocation7 + $0x3a8] sm:$0xff]
        %v1103 = vld [vmem:[#allocation7 + $0x3b0] sm:$0xff]
        %v1104 = vld [vmem:[#allocation7 + $0x3b8] sm:$0xff]
        %v1105 = vld [vmem:[#allocation7 + $0x3c0] sm:$0xff]
        %v1106 = vld [vmem:[#allocation7 + $0x3c8] sm:$0xff]
        %v1107 = vld [vmem:[#allocation7 + $0x3d0] sm:$0xff]
        %v1108 = vld [vmem:[#allocation7 + $0x3d8] sm:$0xff]
        %v1109 = vld [vmem:[#allocation7 + $0x3e0] sm:$0xff]
        %v1110 = vld [vmem:[#allocation7 + $0x3e8] sm:$0xff]
        %v1111 = vld [vmem:[#allocation7 + $0x3f0] sm:$0xff]
        %v1112 = vld [vmem:[#allocation7 + $0x3f8] sm:$0xff]
        %v1113 = vld [vmem:[%s423] sm:$0x3]
        %v1115 = vperm.slane %v1113, 0
        %v1116 = vperm.slane %v1113, 1
        %v1127 = vunpack.c.l.b16 %v977
        %v1128 = vunpack.c.h.b16 %v977
        %v1129 = vunpack.c.l.b16 %v978
        %v1130 = vunpack.c.h.b16 %v978
        %v1131 = vunpack.c.l.b16 %v979
        %v1132 = vunpack.c.h.b16 %v979
        %v1133 = vunpack.c.l.b16 %v980
        %v1134 = vunpack.c.h.b16 %v980
        %v1135 = vunpack.c.l.b16 %v981
        %v1136 = vunpack.c.h.b16 %v981
        %v1137 = vunpack.c.l.b16 %v982
        %v1138 = vunpack.c.h.b16 %v982
        %v1139 = vunpack.c.l.b16 %v983
        %v1140 = vunpack.c.h.b16 %v983
        %v1141 = vunpack.c.l.b16 %v984
        %v1142 = vunpack.c.h.b16 %v984
        %v1143 = vpack.c.b16 %v1135, %v1127
        %v1144 = vpack.c.b16 %v1136, %v1128
        %v1145 = vpack.c.b16 %v1137, %v1129
        %v1146 = vpack.c.b16 %v1138, %v1130
        %v1147 = vpack.c.b16 %v1139, %v1131
        %v1148 = vpack.c.b16 %v1140, %v1132
        %v1149 = vpack.c.b16 %v1141, %v1133
        %v1150 = vpack.c.b16 %v1142, %v1134
        %v1287 = vunpack.c.l.b16 %v985
        %v1288 = vunpack.c.h.b16 %v985
        %v1289 = vunpack.c.l.b16 %v986
        %v1290 = vunpack.c.h.b16 %v986
        %v1291 = vunpack.c.l.b16 %v987
        %v1292 = vunpack.c.h.b16 %v987
        %v1293 = vunpack.c.l.b16 %v988
        %v1294 = vunpack.c.h.b16 %v988
        %v1295 = vunpack.c.l.b16 %v989
        %v1296 = vunpack.c.h.b16 %v989
        %v1297 = vunpack.c.l.b16 %v990
        %v1298 = vunpack.c.h.b16 %v990
        %v1299 = vunpack.c.l.b16 %v991
        %v1300 = vunpack.c.h.b16 %v991
        %v1301 = vunpack.c.l.b16 %v992
        %v1302 = vunpack.c.h.b16 %v992
        %v1303 = vunpack.c.l.b16 %v993
        %v1304 = vunpack.c.h.b16 %v993
        %v1305 = vunpack.c.l.b16 %v994
        %v1306 = vunpack.c.h.b16 %v994
        %v1307 = vunpack.c.l.b16 %v995
        %v1308 = vunpack.c.h.b16 %v995
        %v1309 = vunpack.c.l.b16 %v996
        %v1310 = vunpack.c.h.b16 %v996
        %v1311 = vunpack.c.l.b16 %v997
        %v1312 = vunpack.c.h.b16 %v997
        %v1313 = vunpack.c.l.b16 %v998
        %v1314 = vunpack.c.h.b16 %v998
        %v1315 = vunpack.c.l.b16 %v999
        %v1316 = vunpack.c.h.b16 %v999
        %v1317 = vunpack.c.l.b16 %v1000
        %v1318 = vunpack.c.h.b16 %v1000
        %v1319 = vunpack.c.l.b16 %v1001
        %v1320 = vunpack.c.h.b16 %v1001
        %v1321 = vunpack.c.l.b16 %v1002
        %v1322 = vunpack.c.h.b16 %v1002
        %v1323 = vunpack.c.l.b16 %v1003
        %v1324 = vunpack.c.h.b16 %v1003
        %v1325 = vunpack.c.l.b16 %v1004
        %v1326 = vunpack.c.h.b16 %v1004
        %v1327 = vunpack.c.l.b16 %v1005
        %v1328 = vunpack.c.h.b16 %v1005
        %v1329 = vunpack.c.l.b16 %v1006
        %v1330 = vunpack.c.h.b16 %v1006
        %v1331 = vunpack.c.l.b16 %v1007
        %v1332 = vunpack.c.h.b16 %v1007
        %v1333 = vunpack.c.l.b16 %v1008
        %v1334 = vunpack.c.h.b16 %v1008
        %v1335 = vunpack.c.l.b16 %v1009
        %v1336 = vunpack.c.h.b16 %v1009
        %v1337 = vunpack.c.l.b16 %v1010
        %v1338 = vunpack.c.h.b16 %v1010
        %v1339 = vunpack.c.l.b16 %v1011
        %v1340 = vunpack.c.h.b16 %v1011
        %v1341 = vunpack.c.l.b16 %v1012
        %v1342 = vunpack.c.h.b16 %v1012
        %v1343 = vunpack.c.l.b16 %v1013
        %v1344 = vunpack.c.h.b16 %v1013
        %v1345 = vunpack.c.l.b16 %v1014
        %v1346 = vunpack.c.h.b16 %v1014
        %v1347 = vunpack.c.l.b16 %v1015
        %v1348 = vunpack.c.h.b16 %v1015
        %v1349 = vunpack.c.l.b16 %v1016
        %v1350 = vunpack.c.h.b16 %v1016
        %v1351 = vunpack.c.l.b16 %v1017
        %v1352 = vunpack.c.h.b16 %v1017
        %v1353 = vunpack.c.l.b16 %v1018
        %v1354 = vunpack.c.h.b16 %v1018
        %v1355 = vunpack.c.l.b16 %v1019
        %v1356 = vunpack.c.h.b16 %v1019
        %v1357 = vunpack.c.l.b16 %v1020
        %v1358 = vunpack.c.h.b16 %v1020
        %v1359 = vunpack.c.l.b16 %v1021
        %v1360 = vunpack.c.h.b16 %v1021
        %v1361 = vunpack.c.l.b16 %v1022
        %v1362 = vunpack.c.h.b16 %v1022
        %v1363 = vunpack.c.l.b16 %v1023
        %v1364 = vunpack.c.h.b16 %v1023
        %v1365 = vunpack.c.l.b16 %v1024
        %v1366 = vunpack.c.h.b16 %v1024
        %v1367 = vunpack.c.l.b16 %v1025
        %v1368 = vunpack.c.h.b16 %v1025
        %v1369 = vunpack.c.l.b16 %v1026
        %v1370 = vunpack.c.h.b16 %v1026
        %v1371 = vunpack.c.l.b16 %v1027
        %v1372 = vunpack.c.h.b16 %v1027
        %v1373 = vunpack.c.l.b16 %v1028
        %v1374 = vunpack.c.h.b16 %v1028
        %v1375 = vunpack.c.l.b16 %v1029
        %v1376 = vunpack.c.h.b16 %v1029
        %v1377 = vunpack.c.l.b16 %v1030
        %v1378 = vunpack.c.h.b16 %v1030
        %v1379 = vunpack.c.l.b16 %v1031
        %v1380 = vunpack.c.h.b16 %v1031
        %v1381 = vunpack.c.l.b16 %v1032
        %v1382 = vunpack.c.h.b16 %v1032
        %v1383 = vunpack.c.l.b16 %v1033
        %v1384 = vunpack.c.h.b16 %v1033
        %v1385 = vunpack.c.l.b16 %v1034
        %v1386 = vunpack.c.h.b16 %v1034
        %v1387 = vunpack.c.l.b16 %v1035
        %v1388 = vunpack.c.h.b16 %v1035
        %v1389 = vunpack.c.l.b16 %v1036
        %v1390 = vunpack.c.h.b16 %v1036
        %v1391 = vunpack.c.l.b16 %v1037
        %v1392 = vunpack.c.h.b16 %v1037
        %v1393 = vunpack.c.l.b16 %v1038
        %v1394 = vunpack.c.h.b16 %v1038
        %v1395 = vunpack.c.l.b16 %v1039
        %v1396 = vunpack.c.h.b16 %v1039
        %v1397 = vunpack.c.l.b16 %v1040
        %v1398 = vunpack.c.h.b16 %v1040
        %v1399 = vunpack.c.l.b16 %v1041
        %v1400 = vunpack.c.h.b16 %v1041
        %v1401 = vunpack.c.l.b16 %v1042
        %v1402 = vunpack.c.h.b16 %v1042
        %v1403 = vunpack.c.l.b16 %v1043
        %v1404 = vunpack.c.h.b16 %v1043
        %v1405 = vunpack.c.l.b16 %v1044
        %v1406 = vunpack.c.h.b16 %v1044
        %v1407 = vunpack.c.l.b16 %v1045
        %v1408 = vunpack.c.h.b16 %v1045
        %v1409 = vunpack.c.l.b16 %v1046
        %v1410 = vunpack.c.h.b16 %v1046
        %v1411 = vunpack.c.l.b16 %v1047
        %v1412 = vunpack.c.h.b16 %v1047
        %v1413 = vunpack.c.l.b16 %v1048
        %v1414 = vunpack.c.h.b16 %v1048
        %v1415 = vunpack.c.l.b16 %v1049
        %v1416 = vunpack.c.h.b16 %v1049
        %v1417 = vunpack.c.l.b16 %v1050
        %v1418 = vunpack.c.h.b16 %v1050
        %v1419 = vunpack.c.l.b16 %v1051
        %v1420 = vunpack.c.h.b16 %v1051
        %v1421 = vunpack.c.l.b16 %v1052
        %v1422 = vunpack.c.h.b16 %v1052
        %v1423 = vunpack.c.l.b16 %v1053
        %v1424 = vunpack.c.h.b16 %v1053
        %v1425 = vunpack.c.l.b16 %v1054
        %v1426 = vunpack.c.h.b16 %v1054
        %v1427 = vunpack.c.l.b16 %v1055
        %v1428 = vunpack.c.h.b16 %v1055
        %v1429 = vunpack.c.l.b16 %v1056
        %v1430 = vunpack.c.h.b16 %v1056
        %v1431 = vunpack.c.l.b16 %v1057
        %v1432 = vunpack.c.h.b16 %v1057
        %v1433 = vunpack.c.l.b16 %v1058
        %v1434 = vunpack.c.h.b16 %v1058
        %v1435 = vunpack.c.l.b16 %v1059
        %v1436 = vunpack.c.h.b16 %v1059
        %v1437 = vunpack.c.l.b16 %v1060
        %v1438 = vunpack.c.h.b16 %v1060
        %v1439 = vunpack.c.l.b16 %v1061
        %v1440 = vunpack.c.h.b16 %v1061
        %v1441 = vunpack.c.l.b16 %v1062
        %v1442 = vunpack.c.h.b16 %v1062
        %v1443 = vunpack.c.l.b16 %v1063
        %v1444 = vunpack.c.h.b16 %v1063
        %v1445 = vunpack.c.l.b16 %v1064
        %v1446 = vunpack.c.h.b16 %v1064
        %v1447 = vunpack.c.l.b16 %v1065
        %v1448 = vunpack.c.h.b16 %v1065
        %v1449 = vunpack.c.l.b16 %v1066
        %v1450 = vunpack.c.h.b16 %v1066
        %v1451 = vunpack.c.l.b16 %v1067
        %v1452 = vunpack.c.h.b16 %v1067
        %v1453 = vunpack.c.l.b16 %v1068
        %v1454 = vunpack.c.h.b16 %v1068
        %v1455 = vunpack.c.l.b16 %v1069
        %v1456 = vunpack.c.h.b16 %v1069
        %v1457 = vunpack.c.l.b16 %v1070
        %v1458 = vunpack.c.h.b16 %v1070
        %v1459 = vunpack.c.l.b16 %v1071
        %v1460 = vunpack.c.h.b16 %v1071
        %v1461 = vunpack.c.l.b16 %v1072
        %v1462 = vunpack.c.h.b16 %v1072
        %v1463 = vunpack.c.l.b16 %v1073
        %v1464 = vunpack.c.h.b16 %v1073
        %v1465 = vunpack.c.l.b16 %v1074
        %v1466 = vunpack.c.h.b16 %v1074
        %v1467 = vunpack.c.l.b16 %v1075
        %v1468 = vunpack.c.h.b16 %v1075
        %v1469 = vunpack.c.l.b16 %v1076
        %v1470 = vunpack.c.h.b16 %v1076
        %v1471 = vunpack.c.l.b16 %v1077
        %v1472 = vunpack.c.h.b16 %v1077
        %v1473 = vunpack.c.l.b16 %v1078
        %v1474 = vunpack.c.h.b16 %v1078
        %v1475 = vunpack.c.l.b16 %v1079
        %v1476 = vunpack.c.h.b16 %v1079
        %v1477 = vunpack.c.l.b16 %v1080
        %v1478 = vunpack.c.h.b16 %v1080
        %v1479 = vunpack.c.l.b16 %v1081
        %v1480 = vunpack.c.h.b16 %v1081
        %v1481 = vunpack.c.l.b16 %v1082
        %v1482 = vunpack.c.h.b16 %v1082
        %v1483 = vunpack.c.l.b16 %v1083
        %v1484 = vunpack.c.h.b16 %v1083
        %v1485 = vunpack.c.l.b16 %v1084
        %v1486 = vunpack.c.h.b16 %v1084
        %v1487 = vunpack.c.l.b16 %v1085
        %v1488 = vunpack.c.h.b16 %v1085
        %v1489 = vunpack.c.l.b16 %v1086
        %v1490 = vunpack.c.h.b16 %v1086
        %v1491 = vunpack.c.l.b16 %v1087
        %v1492 = vunpack.c.h.b16 %v1087
        %v1493 = vunpack.c.l.b16 %v1088
        %v1494 = vunpack.c.h.b16 %v1088
        %v1495 = vunpack.c.l.b16 %v1089
        %v1496 = vunpack.c.h.b16 %v1089
        %v1497 = vunpack.c.l.b16 %v1090
        %v1498 = vunpack.c.h.b16 %v1090
        %v1499 = vunpack.c.l.b16 %v1091
        %v1500 = vunpack.c.h.b16 %v1091
        %v1501 = vunpack.c.l.b16 %v1092
        %v1502 = vunpack.c.h.b16 %v1092
        %v1503 = vunpack.c.l.b16 %v1093
        %v1504 = vunpack.c.h.b16 %v1093
        %v1505 = vunpack.c.l.b16 %v1094
        %v1506 = vunpack.c.h.b16 %v1094
        %v1507 = vunpack.c.l.b16 %v1095
        %v1508 = vunpack.c.h.b16 %v1095
        %v1509 = vunpack.c.l.b16 %v1096
        %v1510 = vunpack.c.h.b16 %v1096
        %v1511 = vunpack.c.l.b16 %v1097
        %v1512 = vunpack.c.h.b16 %v1097
        %v1513 = vunpack.c.l.b16 %v1098
        %v1514 = vunpack.c.h.b16 %v1098
        %v1515 = vunpack.c.l.b16 %v1099
        %v1516 = vunpack.c.h.b16 %v1099
        %v1517 = vunpack.c.l.b16 %v1100
        %v1518 = vunpack.c.h.b16 %v1100
        %v1519 = vunpack.c.l.b16 %v1101
        %v1520 = vunpack.c.h.b16 %v1101
        %v1521 = vunpack.c.l.b16 %v1102
        %v1522 = vunpack.c.h.b16 %v1102
        %v1523 = vunpack.c.l.b16 %v1103
        %v1524 = vunpack.c.h.b16 %v1103
        %v1525 = vunpack.c.l.b16 %v1104
        %v1526 = vunpack.c.h.b16 %v1104
        %v1527 = vunpack.c.l.b16 %v1105
        %v1528 = vunpack.c.h.b16 %v1105
        %v1529 = vunpack.c.l.b16 %v1106
        %v1530 = vunpack.c.h.b16 %v1106
        %v1531 = vunpack.c.l.b16 %v1107
        %v1532 = vunpack.c.h.b16 %v1107
        %v1533 = vunpack.c.l.b16 %v1108
        %v1534 = vunpack.c.h.b16 %v1108
        %v1535 = vunpack.c.l.b16 %v1109
        %v1536 = vunpack.c.h.b16 %v1109
        %v1537 = vunpack.c.l.b16 %v1110
        %v1538 = vunpack.c.h.b16 %v1110
        %v1539 = vunpack.c.l.b16 %v1111
        %v1540 = vunpack.c.h.b16 %v1111
        %v1541 = vunpack.c.l.b16 %v1112
        %v1542 = vunpack.c.h.b16 %v1112
        %v1543 = vpack.c.b16 %v1289, %v1287
        %v1544 = vpack.c.b16 %v1290, %v1288
        %v1545 = vpack.c.b16 %v1293, %v1291
        %v1546 = vpack.c.b16 %v1294, %v1292
        %v1547 = vpack.c.b16 %v1297, %v1295
        %v1548 = vpack.c.b16 %v1298, %v1296
        %v1549 = vpack.c.b16 %v1301, %v1299
        %v1550 = vpack.c.b16 %v1302, %v1300
        %v1551 = vpack.c.b16 %v1305, %v1303
        %v1552 = vpack.c.b16 %v1306, %v1304
        %v1553 = vpack.c.b16 %v1309, %v1307
        %v1554 = vpack.c.b16 %v1310, %v1308
        %v1555 = vpack.c.b16 %v1313, %v1311
        %v1556 = vpack.c.b16 %v1314, %v1312
        %v1557 = vpack.c.b16 %v1317, %v1315
        %v1558 = vpack.c.b16 %v1318, %v1316
        %v1559 = vpack.c.b16 %v1321, %v1319
        %v1560 = vpack.c.b16 %v1322, %v1320
        %v1561 = vpack.c.b16 %v1325, %v1323
        %v1562 = vpack.c.b16 %v1326, %v1324
        %v1563 = vpack.c.b16 %v1329, %v1327
        %v1564 = vpack.c.b16 %v1330, %v1328
        %v1565 = vpack.c.b16 %v1333, %v1331
        %v1566 = vpack.c.b16 %v1334, %v1332
        %v1567 = vpack.c.b16 %v1337, %v1335
        %v1568 = vpack.c.b16 %v1338, %v1336
        %v1569 = vpack.c.b16 %v1341, %v1339
        %v1570 = vpack.c.b16 %v1342, %v1340
        %v1571 = vpack.c.b16 %v1345, %v1343
        %v1572 = vpack.c.b16 %v1346, %v1344
        %v1573 = vpack.c.b16 %v1349, %v1347
        %v1574 = vpack.c.b16 %v1350, %v1348
        %v1575 = vpack.c.b16 %v1353, %v1351
        %v1576 = vpack.c.b16 %v1354, %v1352
        %v1577 = vpack.c.b16 %v1357, %v1355
        %v1578 = vpack.c.b16 %v1358, %v1356
        %v1579 = vpack.c.b16 %v1361, %v1359
        %v1580 = vpack.c.b16 %v1362, %v1360
        %v1581 = vpack.c.b16 %v1365, %v1363
        %v1582 = vpack.c.b16 %v1366, %v1364
        %v1583 = vpack.c.b16 %v1369, %v1367
        %v1584 = vpack.c.b16 %v1370, %v1368
        %v1585 = vpack.c.b16 %v1373, %v1371
        %v1586 = vpack.c.b16 %v1374, %v1372
        %v1587 = vpack.c.b16 %v1377, %v1375
        %v1588 = vpack.c.b16 %v1378, %v1376
        %v1589 = vpack.c.b16 %v1381, %v1379
        %v1590 = vpack.c.b16 %v1382, %v1380
        %v1591 = vpack.c.b16 %v1385, %v1383
        %v1592 = vpack.c.b16 %v1386, %v1384
        %v1593 = vpack.c.b16 %v1389, %v1387
        %v1594 = vpack.c.b16 %v1390, %v1388
        %v1595 = vpack.c.b16 %v1393, %v1391
        %v1596 = vpack.c.b16 %v1394, %v1392
        %v1597 = vpack.c.b16 %v1397, %v1395
        %v1598 = vpack.c.b16 %v1398, %v1396
        %v1599 = vpack.c.b16 %v1401, %v1399
        %v1600 = vpack.c.b16 %v1402, %v1400
        %v1601 = vpack.c.b16 %v1405, %v1403
        %v1602 = vpack.c.b16 %v1406, %v1404
        %v1603 = vpack.c.b16 %v1409, %v1407
        %v1604 = vpack.c.b16 %v1410, %v1408
        %v1605 = vpack.c.b16 %v1413, %v1411
        %v1606 = vpack.c.b16 %v1414, %v1412
        %v1607 = vpack.c.b16 %v1417, %v1415
        %v1608 = vpack.c.b16 %v1418, %v1416
        %v1609 = vpack.c.b16 %v1421, %v1419
        %v1610 = vpack.c.b16 %v1422, %v1420
        %v1611 = vpack.c.b16 %v1425, %v1423
        %v1612 = vpack.c.b16 %v1426, %v1424
        %v1613 = vpack.c.b16 %v1429, %v1427
        %v1614 = vpack.c.b16 %v1430, %v1428
        %v1615 = vpack.c.b16 %v1433, %v1431
        %v1616 = vpack.c.b16 %v1434, %v1432
        %v1617 = vpack.c.b16 %v1437, %v1435
        %v1618 = vpack.c.b16 %v1438, %v1436
        %v1619 = vpack.c.b16 %v1441, %v1439
        %v1620 = vpack.c.b16 %v1442, %v1440
        %v1621 = vpack.c.b16 %v1445, %v1443
        %v1622 = vpack.c.b16 %v1446, %v1444
        %v1623 = vpack.c.b16 %v1449, %v1447
        %v1624 = vpack.c.b16 %v1450, %v1448
        %v1625 = vpack.c.b16 %v1453, %v1451
        %v1626 = vpack.c.b16 %v1454, %v1452
        %v1627 = vpack.c.b16 %v1457, %v1455
        %v1628 = vpack.c.b16 %v1458, %v1456
        %v1629 = vpack.c.b16 %v1461, %v1459
        %v1630 = vpack.c.b16 %v1462, %v1460
        %v1631 = vpack.c.b16 %v1465, %v1463
        %v1632 = vpack.c.b16 %v1466, %v1464
        %v1633 = vpack.c.b16 %v1469, %v1467
        %v1634 = vpack.c.b16 %v1470, %v1468
        %v1635 = vpack.c.b16 %v1473, %v1471
        %v1636 = vpack.c.b16 %v1474, %v1472
        %v1637 = vpack.c.b16 %v1477, %v1475
        %v1638 = vpack.c.b16 %v1478, %v1476
        %v1639 = vpack.c.b16 %v1481, %v1479
        %v1640 = vpack.c.b16 %v1482, %v1480
        %v1641 = vpack.c.b16 %v1485, %v1483
        %v1642 = vpack.c.b16 %v1486, %v1484
        %v1643 = vpack.c.b16 %v1489, %v1487
        %v1644 = vpack.c.b16 %v1490, %v1488
        %v1645 = vpack.c.b16 %v1493, %v1491
        %v1646 = vpack.c.b16 %v1494, %v1492
        %v1647 = vpack.c.b16 %v1497, %v1495
        %v1648 = vpack.c.b16 %v1498, %v1496
        %v1649 = vpack.c.b16 %v1501, %v1499
        %v1650 = vpack.c.b16 %v1502, %v1500
        %v1651 = vpack.c.b16 %v1505, %v1503
        %v1652 = vpack.c.b16 %v1506, %v1504
        %v1653 = vpack.c.b16 %v1509, %v1507
        %v1654 = vpack.c.b16 %v1510, %v1508
        %v1655 = vpack.c.b16 %v1513, %v1511
        %v1656 = vpack.c.b16 %v1514, %v1512
        %v1657 = vpack.c.b16 %v1517, %v1515
        %v1658 = vpack.c.b16 %v1518, %v1516
        %v1659 = vpack.c.b16 %v1521, %v1519
        %v1660 = vpack.c.b16 %v1522, %v1520
        %v1661 = vpack.c.b16 %v1525, %v1523
        %v1662 = vpack.c.b16 %v1526, %v1524
        %v1663 = vpack.c.b16 %v1529, %v1527
        %v1664 = vpack.c.b16 %v1530, %v1528
        %v1665 = vpack.c.b16 %v1533, %v1531
        %v1666 = vpack.c.b16 %v1534, %v1532
        %v1667 = vpack.c.b16 %v1537, %v1535
        %v1668 = vpack.c.b16 %v1538, %v1536
        %v1669 = vpack.c.b16 %v1541, %v1539
        %v1670 = vpack.c.b16 %v1542, %v1540
        %1799 = vmatpush.bf16.msra.mxu0 %v1557
        %1800 = vmatpush.bf16.msra.mxu0 %v1555
        %1801 = vmatpush.bf16.msra.mxu0 %v1553
        %1802 = vmatpush.bf16.msra.mxu0 %v1551
        %1803 = vmatpush.bf16.msra.mxu0 %v1549
        %1804 = vmatpush.bf16.msra.mxu0 %v1547
        %1805 = vmatpush.bf16.msra.mxu0 %v1545
        %1806 = vmatpush.bf16.msra.mxu0 %v1543
        %1807 = vmatmul.bf16.gmra.mxu0 %v1143
        %v1808 = vpop.f32.mrf.mxu0
        %v1809 = vadd.f32 %v1115, %v1808
        %v1810 = vpop.f32.mrf.mxu0
        %v1811 = vadd.f32 %v1115, %v1810
        %1812 = vdwg.mxu0
        %1813 = vmatpush.bf16.msra.mxu0 %v1573
        %1814 = vmatpush.bf16.msra.mxu0 %v1571
        %1815 = vmatpush.bf16.msra.mxu0 %v1569
        %1816 = vmatpush.bf16.msra.mxu0 %v1567
        %1817 = vmatpush.bf16.msra.mxu0 %v1565
        %1818 = vmatpush.bf16.msra.mxu0 %v1563
        %1819 = vmatpush.bf16.msra.mxu0 %v1561
        %1820 = vmatpush.bf16.msra.mxu0 %v1559
        %1821 = vmatmul.bf16.gmra.mxu0 %v1144
        %v1822 = vpop.f32.mrf.mxu0
        %v1823 = vadd.f32 %v1809, %v1822
        %v1824 = vpop.f32.mrf.mxu0
        %v1825 = vadd.f32 %v1811, %v1824
        %1826 = vdwg.mxu0
        %1827 = vmatpush.bf16.msra.mxu0 %v1589
        %1828 = vmatpush.bf16.msra.mxu0 %v1587
        %1829 = vmatpush.bf16.msra.mxu0 %v1585
        %1830 = vmatpush.bf16.msra.mxu0 %v1583
        %1831 = vmatpush.bf16.msra.mxu0 %v1581
        %1832 = vmatpush.bf16.msra.mxu0 %v1579
        %1833 = vmatpush.bf16.msra.mxu0 %v1577
        %1834 = vmatpush.bf16.msra.mxu0 %v1575
        %1835 = vmatmul.bf16.gmra.mxu0 %v1145
        %v1836 = vpop.f32.mrf.mxu0
        %v1837 = vadd.f32 %v1823, %v1836
        %v1838 = vpop.f32.mrf.mxu0
        %v1839 = vadd.f32 %v1825, %v1838
        %1840 = vdwg.mxu0
        %1841 = vmatpush.bf16.msra.mxu0 %v1605
        %1842 = vmatpush.bf16.msra.mxu0 %v1603
        %1843 = vmatpush.bf16.msra.mxu0 %v1601
        %1844 = vmatpush.bf16.msra.mxu0 %v1599
        %1845 = vmatpush.bf16.msra.mxu0 %v1597
        %1846 = vmatpush.bf16.msra.mxu0 %v1595
        %1847 = vmatpush.bf16.msra.mxu0 %v1593
        %1848 = vmatpush.bf16.msra.mxu0 %v1591
        %1849 = vmatmul.bf16.gmra.mxu0 %v1146
        %v1850 = vpop.f32.mrf.mxu0
        %v1851 = vadd.f32 %v1837, %v1850
        %v1852 = vpop.f32.mrf.mxu0
        %v1853 = vadd.f32 %v1839, %v1852
        %1854 = vdwg.mxu0
        %1855 = vmatpush.bf16.msra.mxu0 %v1621
        %1856 = vmatpush.bf16.msra.mxu0 %v1619
        %1857 = vmatpush.bf16.msra.mxu0 %v1617
        %1858 = vmatpush.bf16.msra.mxu0 %v1615
        %1859 = vmatpush.bf16.msra.mxu0 %v1613
        %1860 = vmatpush.bf16.msra.mxu0 %v1611
        %1861 = vmatpush.bf16.msra.mxu0 %v1609
        %1862 = vmatpush.bf16.msra.mxu0 %v1607
        %1863 = vmatmul.bf16.gmra.mxu0 %v1147
        %v1864 = vpop.f32.mrf.mxu0
        %v1865 = vadd.f32 %v1851, %v1864
        %v1866 = vpop.f32.mrf.mxu0
        %v1867 = vadd.f32 %v1853, %v1866
        %1868 = vdwg.mxu0
        %1869 = vmatpush.bf16.msra.mxu0 %v1637
        %1870 = vmatpush.bf16.msra.mxu0 %v1635
        %1871 = vmatpush.bf16.msra.mxu0 %v1633
        %1872 = vmatpush.bf16.msra.mxu0 %v1631
        %1873 = vmatpush.bf16.msra.mxu0 %v1629
        %1874 = vmatpush.bf16.msra.mxu0 %v1627
        %1875 = vmatpush.bf16.msra.mxu0 %v1625
        %1876 = vmatpush.bf16.msra.mxu0 %v1623
        %1877 = vmatmul.bf16.gmra.mxu0 %v1148
        %v1878 = vpop.f32.mrf.mxu0
        %v1879 = vadd.f32 %v1865, %v1878
        %v1880 = vpop.f32.mrf.mxu0
        %v1881 = vadd.f32 %v1867, %v1880
        %1882 = vdwg.mxu0
        %1883 = vmatpush.bf16.msra.mxu0 %v1653
        %1884 = vmatpush.bf16.msra.mxu0 %v1651
        %1885 = vmatpush.bf16.msra.mxu0 %v1649
        %1886 = vmatpush.bf16.msra.mxu0 %v1647
        %1887 = vmatpush.bf16.msra.mxu0 %v1645
        %1888 = vmatpush.bf16.msra.mxu0 %v1643
        %1889 = vmatpush.bf16.msra.mxu0 %v1641
        %1890 = vmatpush.bf16.msra.mxu0 %v1639
        %1891 = vmatmul.bf16.gmra.mxu0 %v1149
        %v1892 = vpop.f32.mrf.mxu0
        %v1893 = vadd.f32 %v1879, %v1892
        %v1894 = vpop.f32.mrf.mxu0
        %v1895 = vadd.f32 %v1881, %v1894
        %1896 = vdwg.mxu0
        %1897 = vmatpush.bf16.msra.mxu0 %v1669
        %1898 = vmatpush.bf16.msra.mxu0 %v1667
        %1899 = vmatpush.bf16.msra.mxu0 %v1665
        %1900 = vmatpush.bf16.msra.mxu0 %v1663
        %1901 = vmatpush.bf16.msra.mxu0 %v1661
        %1902 = vmatpush.bf16.msra.mxu0 %v1659
        %1903 = vmatpush.bf16.msra.mxu0 %v1657
        %1904 = vmatpush.bf16.msra.mxu0 %v1655
        %1905 = vmatmul.bf16.gmra.mxu0 %v1150
        %v1906 = vpop.f32.mrf.mxu0
        %v1907 = vadd.f32 %v1893, %v1906
        %v1908 = vpop.f32.mrf.mxu0
        %v1909 = vadd.f32 %v1895, %v1908
        %1910 = vdwg.mxu0
        %1911 = vmatpush.bf16.msra.mxu0 %v1558
        %1912 = vmatpush.bf16.msra.mxu0 %v1556
        %1913 = vmatpush.bf16.msra.mxu0 %v1554
        %1914 = vmatpush.bf16.msra.mxu0 %v1552
        %1915 = vmatpush.bf16.msra.mxu0 %v1550
        %1916 = vmatpush.bf16.msra.mxu0 %v1548
        %1917 = vmatpush.bf16.msra.mxu0 %v1546
        %1918 = vmatpush.bf16.msra.mxu0 %v1544
        %1919 = vmatmul.bf16.gmra.mxu0 %v1143
        %v1920 = vpop.f32.mrf.mxu0
        %v1921 = vadd.f32 %v1116, %v1920
        %v1922 = vpop.f32.mrf.mxu0
        %v1923 = vadd.f32 %v1116, %v1922
        %1924 = vdwg.mxu0
        %1925 = vmatpush.bf16.msra.mxu0 %v1574
        %1926 = vmatpush.bf16.msra.mxu0 %v1572
        %1927 = vmatpush.bf16.msra.mxu0 %v1570
        %1928 = vmatpush.bf16.msra.mxu0 %v1568
        %1929 = vmatpush.bf16.msra.mxu0 %v1566
        %1930 = vmatpush.bf16.msra.mxu0 %v1564
        %1931 = vmatpush.bf16.msra.mxu0 %v1562
        %1932 = vmatpush.bf16.msra.mxu0 %v1560
        %1933 = vmatmul.bf16.gmra.mxu0 %v1144
        %v1934 = vpop.f32.mrf.mxu0
        %v1935 = vadd.f32 %v1921, %v1934
        %v1936 = vpop.f32.mrf.mxu0
        %v1937 = vadd.f32 %v1923, %v1936
        %1938 = vdwg.mxu0
        %1939 = vmatpush.bf16.msra.mxu0 %v1590
        %1940 = vmatpush.bf16.msra.mxu0 %v1588
        %1941 = vmatpush.bf16.msra.mxu0 %v1586
        %1942 = vmatpush.bf16.msra.mxu0 %v1584
        %1943 = vmatpush.bf16.msra.mxu0 %v1582
        %1944 = vmatpush.bf16.msra.mxu0 %v1580
        %1945 = vmatpush.bf16.msra.mxu0 %v1578
        %1946 = vmatpush.bf16.msra.mxu0 %v1576
        %1947 = vmatmul.bf16.gmra.mxu0 %v1145
        %v1948 = vpop.f32.mrf.mxu0
        %v1949 = vadd.f32 %v1935, %v1948
        %v1950 = vpop.f32.mrf.mxu0
        %v1951 = vadd.f32 %v1937, %v1950
        %1952 = vdwg.mxu0
        %1953 = vmatpush.bf16.msra.mxu0 %v1606
        %1954 = vmatpush.bf16.msra.mxu0 %v1604
        %1955 = vmatpush.bf16.msra.mxu0 %v1602
        %1956 = vmatpush.bf16.msra.mxu0 %v1600
        %1957 = vmatpush.bf16.msra.mxu0 %v1598
        %1958 = vmatpush.bf16.msra.mxu0 %v1596
        %1959 = vmatpush.bf16.msra.mxu0 %v1594
        %1960 = vmatpush.bf16.msra.mxu0 %v1592
        %1961 = vmatmul.bf16.gmra.mxu0 %v1146
        %v1962 = vpop.f32.mrf.mxu0
        %v1963 = vadd.f32 %v1949, %v1962
        %v1964 = vpop.f32.mrf.mxu0
        %v1965 = vadd.f32 %v1951, %v1964
        %1966 = vdwg.mxu0
        %1967 = vmatpush.bf16.msra.mxu0 %v1622
        %1968 = vmatpush.bf16.msra.mxu0 %v1620
        %1969 = vmatpush.bf16.msra.mxu0 %v1618
        %1970 = vmatpush.bf16.msra.mxu0 %v1616
        %1971 = vmatpush.bf16.msra.mxu0 %v1614
        %1972 = vmatpush.bf16.msra.mxu0 %v1612
        %1973 = vmatpush.bf16.msra.mxu0 %v1610
        %1974 = vmatpush.bf16.msra.mxu0 %v1608
        %1975 = vmatmul.bf16.gmra.mxu0 %v1147
        %v1976 = vpop.f32.mrf.mxu0
        %v1977 = vadd.f32 %v1963, %v1976
        %v1978 = vpop.f32.mrf.mxu0
        %v1979 = vadd.f32 %v1965, %v1978
        %1980 = vdwg.mxu0
        %1981 = vmatpush.bf16.msra.mxu0 %v1638
        %1982 = vmatpush.bf16.msra.mxu0 %v1636
        %1983 = vmatpush.bf16.msra.mxu0 %v1634
        %1984 = vmatpush.bf16.msra.mxu0 %v1632
        %1985 = vmatpush.bf16.msra.mxu0 %v1630
        %1986 = vmatpush.bf16.msra.mxu0 %v1628
        %1987 = vmatpush.bf16.msra.mxu0 %v1626
        %1988 = vmatpush.bf16.msra.mxu0 %v1624
        %1989 = vmatmul.bf16.gmra.mxu0 %v1148
        %v1990 = vpop.f32.mrf.mxu0
        %v1991 = vadd.f32 %v1977, %v1990
        %v1992 = vpop.f32.mrf.mxu0
        %v1993 = vadd.f32 %v1979, %v1992
        %1994 = vdwg.mxu0
        %1995 = vmatpush.bf16.msra.mxu0 %v1654
        %1996 = vmatpush.bf16.msra.mxu0 %v1652
        %1997 = vmatpush.bf16.msra.mxu0 %v1650
        %1998 = vmatpush.bf16.msra.mxu0 %v1648
        %1999 = vmatpush.bf16.msra.mxu0 %v1646
        %2000 = vmatpush.bf16.msra.mxu0 %v1644
        %2001 = vmatpush.bf16.msra.mxu0 %v1642
        %2002 = vmatpush.bf16.msra.mxu0 %v1640
        %2003 = vmatmul.bf16.gmra.mxu0 %v1149
        %v2004 = vpop.f32.mrf.mxu0
        %v2005 = vadd.f32 %v1991, %v2004
        %v2006 = vpop.f32.mrf.mxu0
        %v2007 = vadd.f32 %v1993, %v2006
        %2008 = vdwg.mxu0
        %2009 = vmatpush.bf16.msra.mxu0 %v1670
        %2010 = vmatpush.bf16.msra.mxu0 %v1668
        %2011 = vmatpush.bf16.msra.mxu0 %v1666
        %2012 = vmatpush.bf16.msra.mxu0 %v1664
        %2013 = vmatpush.bf16.msra.mxu0 %v1662
        %2014 = vmatpush.bf16.msra.mxu0 %v1660
        %2015 = vmatpush.bf16.msra.mxu0 %v1658
        %2016 = vmatpush.bf16.msra.mxu0 %v1656
        %2017 = vmatmul.bf16.gmra.mxu0 %v1150
        %v2018 = vpop.f32.mrf.mxu0
        %v2019 = vadd.f32 %v2005, %v2018
        %v2020 = vpop.f32.mrf.mxu0
        %v2021 = vadd.f32 %v2007, %v2020
        %2022 = vdwg.mxu0
        // Predicated region
        $region61: #{encoder_forward.9} parent=47 // pred_check
          %p2023 = pneg %p447
        $region62: #{encoder_forward.9} parent=47 // pred_check_branch
          %2025 = sbr.rel (%p2023) target = $region64
        $region63: #{encoder_forward.9} parent=47 // pred_region
          %v2026 = vld [vmem:[#allocation3] sm:$0xff]
          %v2027 = vld [vmem:[#allocation3 + $0x8] sm:$0xff]
          %v2028 = vmax.f32 %v1907, %v2019
          %2029 = vmax.xlane.f32.xlu0 %v2028
          %v2030 = vpop.xlane.xlu0 %2029
          %v2031 = vmax.f32 %v1909, %v2021
          %2032 = vmax.xlane.f32.xlu0 %v2031
          %v2033 = vpop.xlane.xlu0 %2032
          %v2034 = vmax.f32 %v2026, %v2030
          %v2035 = vmax.f32 %v2027, %v2033
          %v2036 = vld [vmem:[#allocation4] sm:$0xff]
          %v2037 = vld [vmem:[#allocation4 + $0x8] sm:$0xff]
          %v2038 = vsub.f32 %v2026, %v2034
          %v2039 = vsub.f32 %v2027, %v2035
          %v2040 = vmul.f32 %v2038, 1.442695
          %v2041 = vpow.pop %v2040
          %v2042 = vmul.f32 %v2039, 1.442695
          %v2043 = vpow.pop %v2042
          %v2044 = vmul.f32 %v2036, %v2041
          %v2045 = vmul.f32 %v2037, %v2043
          %2047 = vset.pattern.permute.xlu0 0
          %2048 = vperm.xlu0 %2047, %v2034
          %v2049 = vpop.permute.xlu0 %2048
          %2052 = vset.pattern.permute.xlu0 0
          %2053 = vperm.xlu0 %2052, %v2035
          %v2054 = vpop.permute.xlu0 %2053
          %v2056 = vsub.f32 %v1907, %v2049
          %v2057 = vsub.f32 %v2019, %v2049
          %v2058 = vsub.f32 %v1909, %v2054
          %v2059 = vsub.f32 %v2021, %v2054
          %v2060 = vmul.f32 %v2056, 1.442695
          %v2061 = vpow.pop %v2060
          %v2062 = vmul.f32 %v2057, 1.442695
          %v2063 = vpow.pop %v2062
          %v2064 = vmul.f32 %v2058, 1.442695
          %v2065 = vpow.pop %v2064
          %v2066 = vmul.f32 %v2059, 1.442695
          %v2067 = vpow.pop %v2066
          %v2068 = vadd.f32 %v2061, %v2063
          %2069 = vadd.xlane.f32.xlu0 %v2068
          %v2070 = vpop.xlane.xlu0 %2069
          %v2071 = vadd.f32 %v2065, %v2067
          %2072 = vadd.xlane.f32.xlu0 %v2071
          %v2073 = vpop.xlane.xlu0 %2072
          %v2074 = vadd.f32 %v2044, %v2070
          %v2075 = vadd.f32 %v2045, %v2073
          %vm2076 = vcmask 7168
          %2077 = vst.msk [vmem:[#allocation4] sm:$0xff] %vm2076, %v2074
          %2078 = vst.msk [vmem:[#allocation4 + $0x8] sm:$0xff] %vm2076, %v2075
          %2079 = vst.msk [vmem:[#allocation3] sm:$0xff] %vm2076, %v2034
          %2080 = vst.msk [vmem:[#allocation3 + $0x8] sm:$0xff] %vm2076, %v2035
        $region64: #{encoder_forward.9} parent=47 // pred_fallthru
          _
        %p2081 = scmp.eq.s32.totalorder %s28, 1
        // Predicated region
        $region65: #{encoder_forward.9} parent=47 // pred_check
          %p2082 = pneg %p2081
        $region66: #{encoder_forward.9} parent=47 // pred_check_branch
          %2084 = sbr.rel (%p2082) target = $region68
        $region67: #{encoder_forward.9} parent=47 // pred_region
          %v2085 = vld [vmem:[#allocation3] sm:$0xff]
          %v2086 = vld [vmem:[#allocation3 + $0x8] sm:$0xff]
          %v2087 = vld [vmem:[#allocation4] sm:$0xff]
          %v2088 = vld [vmem:[#allocation4 + $0x8] sm:$0xff]
          %v2089 = vlog2.pop %v2087
          %v2090 = vmul.f32 %v2089, 0.6931472
          %v2091 = vlog2.pop %v2088
          %v2092 = vmul.f32 %v2091, 0.6931472
          %v2093 = vadd.f32 %v2085, %v2090
          %v2094 = vadd.f32 %v2086, %v2092
          %2096 = vset.pattern.permute.xlu0 0
          %2097 = vperm.xlu0 %2096, %v2093
          %v2098 = vpop.permute.xlu0 %2097
          %2101 = vset.pattern.permute.xlu0 0
          %2102 = vperm.xlu0 %2101, %v2094
          %v2103 = vpop.permute.xlu0 %2102
          %v2105 = vsub.f32 %v1907, %v2098
          %v2106 = vsub.f32 %v2019, %v2098
          %v2107 = vsub.f32 %v1909, %v2103
          %v2108 = vsub.f32 %v2021, %v2103
          %2109 = vst [vmem:[%s442] sm:$0xff] %v2105
          %2110 = vst [vmem:[%s442 + $0x8] sm:$0xff] %v2106
          %2111 = vst [vmem:[%s442 + $0x10] sm:$0xff] %v2107
          %2112 = vst [vmem:[%s442 + $0x18] sm:$0xff] %v2108
        $region68: #{encoder_forward.9} parent=47 // pred_fallthru
          _
        %s2113 = smul.u32 2, %s27
        %p2114 = scmp.lt.s32.totalorder %s2113, 1
        %s2115 = scalar_select %p2114, %s2113, 1
        %s2116 = smul.addr %s2115, 8
        %s2117 = smul.addr %s2116, 8
        %s2118 = scalar_lea.vmem %s7, %s2117
        %s2119 = smul.u32 %s29, %s28
        %s2120 = smul.u32 2, %s27
        %s2121 = smul.u32 2, %s2119
        %p2122 = scmp.lt.s32.totalorder %s2120, 1
        %s2123 = scalar_select %p2122, %s2120, 1
        %p2124 = scmp.lt.s32.totalorder %s2121, 1
        %s2125 = scalar_select %p2124, %s2121, 1
        %s2126 = smul.addr %s2123, 2
        %s2127 = sadd.s32 %s2125, %s2126
        %s2128 = smul.addr %s2127, 8
        %s2129 = scalar_lea.vmem %s8, %s2128
        // Predicated region
        $region69: #{encoder_forward.9} parent=47 // pred_check
          %p2130 = pneg %p226
        $region70: #{encoder_forward.9} parent=47 // pred_check_branch
          %2132 = sbr.rel (%p2130) target = $region72
        $region71: #{encoder_forward.9} parent=47 // pred_region
          %s2133 = smul.u32 2, %s27
        $region72: #{encoder_forward.9} parent=47 // pred_fallthru
          _
        // Predicated region
        $region73: #{encoder_forward.9} parent=47 // pred_check
          %p2134 = pneg %p256
        $region74: #{encoder_forward.9} parent=47 // pred_check_branch
          %2136 = sbr.rel (%p2134) target = $region76
        $region75: #{encoder_forward.9} parent=47 // pred_region
          %s2137 = smul.u32 %s29, %s28
          %s2138 = smul.u32 2, %s27
          %s2139 = smul.u32 2, %s2137
        $region76: #{encoder_forward.9} parent=47 // pred_fallthru
          _
        // Predicated region
        $region77: #{encoder_forward.9} parent=47 // pred_check
          %p2140 = pneg %p226
        $region78: #{encoder_forward.9} parent=47 // pred_check_branch
          %2142 = sbr.rel (%p2140) target = $region80
        $region79: #{encoder_forward.9} parent=47 // pred_region
          %s2143 = smul.u32 2, %s27
          %p2144 = scmp.lt.s32.totalorder %s2143, 1
          %s2145 = scalar_select %p2144, %s2143, 1
          %s2146 = smul.addr %s2145, 8
          %s2147 = smul.addr %s2146, 8
          %s2148 = scalar_lea.vmem %s7, %s2147
        $region80: #{encoder_forward.9} parent=47 // pred_fallthru
          _
      $region48: #{encoder_forward.9} parent=5 // pred_fallthru
        _
      %p2149 = scmp.le.s32.totalorder 2, %s17
      // Predicated region
      $region81: #{encoder_forward.9} parent=5 // pred_check
        %p2150 = pneg %p2149
      $region82: #{encoder_forward.9} parent=5 // pred_check_branch
        %2152 = sbr.rel (%p2150) target = $region84
      $region83: #{encoder_forward.9} parent=5 // pred_region
        %s2153 = ssub.s32 %s17, 2
        // Predicated region
        $region85: #{encoder_forward.9} parent=83 // pred_check
          %p2154 = pneg %p262
        $region86: #{encoder_forward.9} parent=83 // pred_check_branch
          %2156 = sbr.rel (%p2154) target = $region88
        $region87: #{encoder_forward.9} parent=83 // pred_region
          %s2157 = smul.u32 %s32, %s31
          %s2158 = smul.u32 2, %s30
          %s2159 = smul.u32 2, %s2157
          %p2160 = scmp.lt.s32.totalorder %s2158, 1
          %s2161 = scalar_select %p2160, %s2158, 1
          %p2162 = scmp.lt.s32.totalorder %s2159, 1
          %s2163 = scalar_select %p2162, %s2159, 1
          %s2164 = smul.addr %s2161, 2
          %s2165 = sadd.s32 %s2163, %s2164
          %s2166 = smul.addr %s2165, 8
          %s2167 = scalar_lea.vmem %s8, %s2166
        $region88: #{encoder_forward.9} parent=83 // pred_fallthru
          _
      $region84: #{encoder_forward.9} parent=5 // pred_fallthru
        _
    $region6: #{encoder_forward.9} parent=1 // loop_footer
      %s21 = sadd.s32 1, %s17
    $region7: #{encoder_forward.9} parent=1 // loop_footer_branch
      %16 = sbr.rel target = $region3
    $region8: #{encoder_forward.9} parent=1 // loop_exit
      _
    %2168 = vsyncpa [#allocation6], 1
    %s2169 = scalar_lea.sflag [#allocation6], 1
    %2170 = vsyncpa %s2169, 1
    %2171 = vsyncpa [#allocation8], 1

</llo_original>
